<compile_context>
chip_gen: v7x
topology: tpu7x:2x2x1
jax: 0.10.0
libtpu: 0.0.40
codegen_flags: <defaults>
</compile_context>

<pallas_src>
import functools

import numpy as np
import jax
import jax.numpy as jnp
from jax.experimental import pallas as pl
from jax.experimental.pallas import tpu as pltpu

LEAKY_SLOPE = 0.2
BN_EPS = 1e-5

# Sub-pixel tap grouping: for output parity p, tap 0 / tap 1 collect these original
# 3x3 kernel indices (rows and columns are symmetric):
#   parity 0:  tap0 <- {0},    tap1 <- {1, 2}
#   parity 1:  tap0 <- {0, 1}, tap1 <- {2}
_TAP_GROUPS = {0: ((0,), (1, 2)), 1: ((0, 1), (2,))}


def _subpixel_kernel(xm_ref, h0_ref, h1_ref, w_ref, b_ref, o_ref, slab_ref):
    """One (batch, row-tile) grid step.

    xm_ref  : (1, TH, Wp, Cin)    main strip of the zero-padded input (rows t*TH .. +TH)
    h0_ref  : (1, 1,  Wp, Cin)    halo row t*TH + TH
    h1_ref  : (1, 1,  Wp, Cin)    halo row t*TH + TH + 1
    w_ref   : (16, Cin, Cout)     folded sub-pixel weights, index = ((pa*2+pb)*2+rt)*2+ct
    b_ref   : (1, Cout)           folded conv-bias + BN shift (f32)
    o_ref   : (4, TH, W, Cout)    phase-major output, phase = 2*pa + pb
    slab_ref: (3, (TH+2)*W, Cin)  scratch: column-shifted, row-flattened strips (dc=0,1,2)
    """
    _, TH, Wp, Cin = xm_ref.shape
    _, _, W, Cout = o_ref.shape

    bias = b_ref[...].astype(jnp.float32)                     # (1, Cout)

    xm = xm_ref[0]                                             # (TH, Wp, Cin)
    h0 = h0_ref[0, 0]                                          # (Wp, Cin)
    h1 = h1_ref[0, 0]                                          # (Wp, Cin)

    # Build the 3 column-shifted slabs once (dc in {0,1,2}).  All later tap accesses are
    # contiguous, W-aligned row slices of these slabs.
    for dc in range(3):
        slab_ref[dc, 0:TH * W, :] = xm[:, dc:dc + W, :].reshape(TH * W, Cin)
        slab_ref[dc, TH * W:(TH + 1) * W, :] = h0[dc:dc + W, :]
        slab_ref[dc, (TH + 1) * W:(TH + 2) * W, :] = h1[dc:dc + W, :]

    # 4 output parities x 4 taps = 16 MXU matmuls on original-resolution patches
    # (vs 9 matmuls on the 4x-larger upsampled image before: 2.25x fewer MACs).
    for pa in range(2):
        for pb in range(2):
            acc = jnp.zeros((TH * W, Cout), jnp.float32)
            for rt in range(2):
                for ct in range(2):
                    dr = pa + rt                                # strip-row offset 0..2
                    dc = pb + ct                                # column offset 0..2
                    widx = ((pa * 2 + pb) * 2 + rt) * 2 + ct
                    patch = slab_ref[dc, dr * W:(dr + TH) * W, :]   # (TH*W, Cin)
                    acc = acc + jnp.dot(patch, w_ref[widx],
                                        preferred_element_type=jnp.float32)
            y = acc + bias                                      # f32 epilogue (v5e-safe)
            y = jnp.where(y > 0, y, LEAKY_SLOPE * y)            # LeakyReLU(0.2)
            o_ref[2 * pa + pb] = y.reshape(TH, W, Cout).astype(o_ref.dtype)


def _fold_subpixel_weights(conv_w_oihw, scale):
    """OIHW 3x3 conv weights + per-channel BN scale -> (16, Cin, Cout) sub-pixel taps."""
    w = jnp.transpose(conv_w_oihw, (2, 3, 1, 0))                # (3, 3, Cin, Cout) HWIO
    w = w * scale[None, None, None, :]                          # fold BN scale into weights
    taps = []
    for pa in range(2):
        for pb in range(2):
            for rt in range(2):
                for ct in range(2):
                    acc = None
                    for kh in _TAP_GROUPS[pa][rt]:
                        for kw in _TAP_GROUPS[pb][ct]:
                            acc = w[kh, kw] if acc is None else acc + w[kh, kw]
                    taps.append(acc)                            # (Cin, Cout)
    return jnp.stack(taps, axis=0)                              # (16, Cin, Cout)


def _pick_tile_h(H, W, Cin, Cout, esize, budget_bytes):
    """Largest divisor of H whose per-step VMEM footprint (lane-padding aware,
    double-buffered) fits the budget."""
    Wp = W + 2
    cin_p = ((Cin + 127) // 128) * 128
    cout_p = ((Cout + 127) // 128) * 128
    best = 1
    for th in range(1, H + 1):
        if H % th:
            continue
        in_b = 2 * th * Wp * cin_p * esize            # main strip, double buffered
        halo_b = 4 * Wp * cin_p * esize               # two 1-row halos, double buffered
        out_b = 2 * 4 * th * W * cout_p * 4           # f32 phase-major output block
        slab_b = 3 * (th + 2) * W * cin_p * esize     # scratch slabs
        acc_b = 2 * th * W * cout_p * 4               # accumulator / epilogue temps
        if in_b + halo_b + out_b + slab_b + acc_b <= budget_bytes:
            best = th
    return best


@functools.partial(jax.jit, static_argnames=("compute_dtype", "tile_h"))
def up_forward(x_nchw, conv_w_oihw, conv_b, gamma, beta, run_mean, run_var,
               *, compute_dtype=jnp.bfloat16, tile_h=None):
    """Forward of Up (nearest x2 upsample -> conv3x3 -> BN(eval) -> LeakyReLU(0.2)).

    x_nchw: (N, Cin, H, W) f32.  Returns (N, Cout, 2H, 2W) f32.
    """
    N, Cin, H, W = x_nchw.shape
    Cout = conv_w_oihw.shape[0]
    Hp, Wp = H + 2, W + 2

    esize = jnp.dtype(compute_dtype).itemsize
    if tile_h is None:
        TH = _pick_tile_h(H, W, Cin, Cout, esize, budget_bytes=10 * 1024 * 1024)
    else:
        TH = int(tile_h)
        assert H % TH == 0, "tile_h must divide H"
    n_tiles = H // TH

    # NCHW -> NHWC, cast, zero-pad the ORIGINAL-resolution input (no 4x upsampled
    # intermediate is ever materialized in HBM).
    x = jnp.transpose(x_nchw, (0, 2, 3, 1)).astype(compute_dtype)
    xp = jnp.pad(x, ((0, 0), (1, 1), (1, 1), (0, 0)))           # (N, Hp, Wp, Cin)

    # Fold BN (eval) into the conv: scale into the weights, shift into a single bias.
    scale = gamma / jnp.sqrt(run_var + BN_EPS)                  # (Cout,)
    bias = (conv_b - run_mean) * scale + beta                   # (Cout,)
    w16 = _fold_subpixel_weights(conv_w_oihw.astype(jnp.float32),
                                 scale.astype(jnp.float32)).astype(compute_dtype)
    bias2 = bias.reshape(1, Cout).astype(jnp.float32)

    flops = 2 * N * 16 * H * W * Cin * Cout
    bytes_accessed = (N * Hp * Wp * Cin * esize
                      + 16 * Cin * Cout * esize
                      + N * 4 * H * W * Cout * 4)

    out4 = pl.pallas_call(
        _subpixel_kernel,
        out_shape=jax.ShapeDtypeStruct((N * 4, H, W, Cout), jnp.float32),
        grid_spec=pltpu.PrefetchScalarGridSpec(
            num_scalar_prefetch=0,
            grid=(N, n_tiles),
            in_specs=[
                # main row strip of the padded input
                pl.BlockSpec((1, TH, Wp, Cin), lambda n, t: (n, t, 0, 0)),
                # two 1-row halo views of the same padded array
                pl.BlockSpec((1, 1, Wp, Cin), lambda n, t: (n, (t + 1) * TH, 0, 0)),
                pl.BlockSpec((1, 1, Wp, Cin), lambda n, t: (n, (t + 1) * TH + 1, 0, 0)),
                # folded sub-pixel weights and bias (resident, same block every step)
                pl.BlockSpec((16, Cin, Cout), lambda n, t: (0, 0, 0)),
                pl.BlockSpec((1, Cout), lambda n, t: (0, 0)),
            ],
            out_specs=pl.BlockSpec((4, TH, W, Cout), lambda n, t: (n, t, 0, 0)),
            scratch_shapes=[pltpu.VMEM((3, (TH + 2) * W, Cin), compute_dtype)],
        ),
        compiler_params=pltpu.CompilerParams(
            dimension_semantics=("parallel", "parallel"),
            vmem_limit_bytes=32 * 1024 * 1024),
        cost_estimate=pl.CostEstimate(flops=flops, transcendentals=0,
                                      bytes_accessed=bytes_accessed),
    )(xp, xp, xp, w16, bias2)

    # Phase-major (N*4, H, W, Cout) -> (N, Cout, 2H, 2W): one fused XLA transpose that
    # performs both the sub-pixel de-interleave and the NHWC->NCHW conversion.
    out = out4.reshape(N, 2, 2, H, W, Cout)
    out = jnp.transpose(out, (0, 5, 3, 1, 4, 2))                # (N, Cout, H, 2, W, 2)
    return out.reshape(N, Cout, 2 * H, 2 * W)


def up_reference(x_nchw, conv_w_oihw, conv_b, gamma, beta, run_mean, run_var):
    """Pure-JAX reference (nearest upsample -> conv -> BN eval -> LeakyReLU)."""
    x = jnp.transpose(x_nchw, (0, 2, 3, 1))
    x = jnp.repeat(jnp.repeat(x, 2, axis=1), 2, axis=2)
    w_hwio = jnp.transpose(conv_w_oihw, (2, 3, 1, 0))
    y = jax.lax.conv_general_dilated(
        x, w_hwio, window_strides=(1, 1), padding="SAME",
        dimension_numbers=("NHWC", "HWIO", "NHWC"))
    y = y + conv_b
    y = (y - run_mean) / jnp.sqrt(run_var + BN_EPS) * gamma + beta
    y = jnp.where(y > 0, y, LEAKY_SLOPE * y)
    return jnp.transpose(y, (0, 3, 1, 2))


if __name__ == "__main__":
    # Small shapes: batch=2, in_ch=8, out_ch=4, spatial 16 -> output spatial 32.
    N, Cin, Cout, H, W = 2, 8, 4, 16, 16

    key = jax.random.PRNGKey(0)
    kx, kw, kb, kg, kbe, km, kv = jax.random.split(key, 7)

    x = jax.random.normal(kx, (N, Cin, H, W), dtype=jnp.float32)

    # Deterministic synthetic parameters (not a checkpoint).
    conv_w = 0.1 * jax.random.normal(kw, (Cout, Cin, 3, 3), dtype=jnp.float32)   # OIHW
    conv_b = 0.1 * jax.random.normal(kb, (Cout,), dtype=jnp.float32)
    gamma = 1.0 + 0.1 * jax.random.normal(kg, (Cout,), dtype=jnp.float32)
    beta = 0.1 * jax.random.normal(kbe, (Cout,), dtype=jnp.float32)
    run_mean = 0.1 * jax.random.normal(km, (Cout,), dtype=jnp.float32)
    run_var = jnp.abs(1.0 + 0.1 * jax.random.normal(kv, (Cout,), dtype=jnp.float32))

    ref = jax.block_until_ready(
        up_reference(x, conv_w, conv_b, gamma, beta, run_mean, run_var))

    # 1) f32 path, auto tile size: tight tolerance.
    out_f32 = jax.block_until_ready(
        up_forward(x, conv_w, conv_b, gamma, beta, run_mean, run_var,
                   compute_dtype=jnp.float32))
    assert out_f32.shape == (N, Cout, 2 * H, 2 * W), out_f32.shape
    np.testing.assert_allclose(np.asarray(out_f32), np.asarray(ref),
                               rtol=1e-4, atol=1e-4)

    # 2) f32 path with forced spatial tiling (exercises the halo-row BlockSpecs).
    out_tiled = jax.block_until_ready(
        up_forward(x, conv_w, conv_b, gamma, beta, run_mean, run_var,
                   compute_dtype=jnp.float32, tile_h=4))
    np.testing.assert_allclose(np.asarray(out_tiled), np.asarray(ref),
                               rtol=1e-4, atol=1e-4)

    # 3) Default bf16 matmul-input path (f32 accumulation + f32 epilogue).
    out_bf16 = jax.block_until_ready(
        up_forward(x, conv_w, conv_b, gamma, beta, run_mean, run_var))
    np.testing.assert_allclose(np.asarray(out_bf16), np.asarray(ref),
                               rtol=5e-2, atol=5e-2)

    print("KERNEL_OK")
</pallas_src>

<mosaic_0001>
module attributes {stable_mosaic.version = 11 : i64} {
  func.func @_subpixel_kernel(%arg0: i32, %arg1: i32, %arg2: memref<1x16x18x8xf32, #tpu.memory_space<vmem>>, %arg3: memref<1x1x18x8xf32, #tpu.memory_space<vmem>>, %arg4: memref<1x1x18x8xf32, #tpu.memory_space<vmem>>, %arg5: memref<16x8x4xf32, #tpu.memory_space<vmem>>, %arg6: memref<1x4xf32, #tpu.memory_space<vmem>>, %arg7: memref<4x16x16x4xf32, #tpu.memory_space<vmem>>, %arg8: memref<3x288x8xf32, #tpu.memory_space<vmem>>) attributes {dimension_semantics = [#tpu.dimension_semantics<parallel>, #tpu.dimension_semantics<parallel>], iteration_bounds = array<i64: 2, 1>, scalar_prefetch = 0 : i64, scratch_operands = 1 : i64, tpu.core_type = #tpu.core_type<tc>, window_params = [{transform_indices = @transform_0, window_bounds = array<i64: 1, 16, 18, 8>}, {transform_indices = @transform_1, window_bounds = array<i64: 1, 1, 18, 8>}, {transform_indices = @transform_2, window_bounds = array<i64: 1, 1, 18, 8>}, {pipeline_mode = #tpu.pipeline_mode<synchronous>, transform_indices = @transform_3, window_bounds = array<i64: 16, 8, 4>}, {pipeline_mode = #tpu.pipeline_mode<synchronous>, transform_indices = @transform_4, window_bounds = array<i64: 1, 4>}, {transform_indices = @transform_5, window_bounds = array<i64: 4, 16, 16, 4>}]} {
    %c0 = arith.constant 0 : index
    %c0_0 = arith.constant 0 : index
    %0 = vector.load %arg6[%c0, %c0_0] : memref<1x4xf32, #tpu.memory_space<vmem>>, vector<1x4xf32>
    %c0_1 = arith.constant 0 : index
    %c0_2 = arith.constant 0 : index
    %c0_3 = arith.constant 0 : index
    %c0_4 = arith.constant 0 : index
    %1 = vector.load %arg2[%c0_1, %c0_2, %c0_3, %c0_4] : memref<1x16x18x8xf32, #tpu.memory_space<vmem>>, vector<1x16x18x8xf32>
    %2 = vector.shape_cast %1 : vector<1x16x18x8xf32> to vector<16x18x8xf32>
    %c0_5 = arith.constant 0 : index
    %c0_6 = arith.constant 0 : index
    %c0_7 = arith.constant 0 : index
    %c0_8 = arith.constant 0 : index
    %3 = vector.load %arg3[%c0_5, %c0_6, %c0_7, %c0_8] : memref<1x1x18x8xf32, #tpu.memory_space<vmem>>, vector<1x1x18x8xf32>
    %4 = vector.shape_cast %3 : vector<1x1x18x8xf32> to vector<18x8xf32>
    %c0_9 = arith.constant 0 : index
    %c0_10 = arith.constant 0 : index
    %c0_11 = arith.constant 0 : index
    %c0_12 = arith.constant 0 : index
    %5 = vector.load %arg4[%c0_9, %c0_10, %c0_11, %c0_12] : memref<1x1x18x8xf32, #tpu.memory_space<vmem>>, vector<1x1x18x8xf32>
    %6 = vector.shape_cast %5 : vector<1x1x18x8xf32> to vector<18x8xf32>
    %7 = vector.extract_strided_slice %2 {offsets = [0, 0, 0], sizes = [16, 16, 8], strides = [1, 1, 1]} : vector<16x18x8xf32> to vector<16x16x8xf32>
    %8 = vector.shape_cast %7 : vector<16x16x8xf32> to vector<256x8xf32>
    %c0_13 = arith.constant 0 : index
    %c0_14 = arith.constant 0 : index
    %c0_15 = arith.constant 0 : index
    %9 = vector.load %arg8[%c0_13, %c0_14, %c0_15] : memref<3x288x8xf32, #tpu.memory_space<vmem>>, vector<1x256x8xf32>
    %10 = vector.shape_cast %9 : vector<1x256x8xf32> to vector<256x8xf32>
    %11 = vector.shape_cast %8 : vector<256x8xf32> to vector<1x256x8xf32>
    tpu.vector_store %arg8[%c0_13, %c0_14, %c0_15], %11 {strides = array<i32>} : memref<3x288x8xf32, #tpu.memory_space<vmem>>, vector<1x256x8xf32>,
    %12 = vector.extract_strided_slice %4 {offsets = [0, 0], sizes = [16, 8], strides = [1, 1]} : vector<18x8xf32> to vector<16x8xf32>
    %c0_16 = arith.constant 0 : index
    %c256 = arith.constant 256 : index
    %c0_17 = arith.constant 0 : index
    %13 = vector.load %arg8[%c0_16, %c256, %c0_17] : memref<3x288x8xf32, #tpu.memory_space<vmem>>, vector<1x16x8xf32>
    %14 = vector.shape_cast %13 : vector<1x16x8xf32> to vector<16x8xf32>
    %15 = vector.shape_cast %12 : vector<16x8xf32> to vector<1x16x8xf32>
    tpu.vector_store %arg8[%c0_16, %c256, %c0_17], %15 {strides = array<i32>} : memref<3x288x8xf32, #tpu.memory_space<vmem>>, vector<1x16x8xf32>,
    %16 = vector.extract_strided_slice %6 {offsets = [0, 0], sizes = [16, 8], strides = [1, 1]} : vector<18x8xf32> to vector<16x8xf32>
    %c0_18 = arith.constant 0 : index
    %c272 = arith.constant 272 : index
    %c0_19 = arith.constant 0 : index
    %17 = vector.load %arg8[%c0_18, %c272, %c0_19] : memref<3x288x8xf32, #tpu.memory_space<vmem>>, vector<1x16x8xf32>
    %18 = vector.shape_cast %17 : vector<1x16x8xf32> to vector<16x8xf32>
    %19 = vector.shape_cast %16 : vector<16x8xf32> to vector<1x16x8xf32>
    tpu.vector_store %arg8[%c0_18, %c272, %c0_19], %19 {strides = array<i32>} : memref<3x288x8xf32, #tpu.memory_space<vmem>>, vector<1x16x8xf32>,
    %20 = vector.extract_strided_slice %2 {offsets = [0, 1, 0], sizes = [16, 16, 8], strides = [1, 1, 1]} : vector<16x18x8xf32> to vector<16x16x8xf32>
    %21 = vector.shape_cast %20 : vector<16x16x8xf32> to vector<256x8xf32>
    %c1 = arith.constant 1 : index
    %c0_20 = arith.constant 0 : index
    %c0_21 = arith.constant 0 : index
    %22 = vector.load %arg8[%c1, %c0_20, %c0_21] : memref<3x288x8xf32, #tpu.memory_space<vmem>>, vector<1x256x8xf32>
    %23 = vector.shape_cast %22 : vector<1x256x8xf32> to vector<256x8xf32>
    %24 = vector.shape_cast %21 : vector<256x8xf32> to vector<1x256x8xf32>
    tpu.vector_store %arg8[%c1, %c0_20, %c0_21], %24 {strides = array<i32>} : memref<3x288x8xf32, #tpu.memory_space<vmem>>, vector<1x256x8xf32>,
    %25 = vector.extract_strided_slice %4 {offsets = [1, 0], sizes = [16, 8], strides = [1, 1]} : vector<18x8xf32> to vector<16x8xf32>
    %c1_22 = arith.constant 1 : index
    %c256_23 = arith.constant 256 : index
    %c0_24 = arith.constant 0 : index
    %26 = vector.load %arg8[%c1_22, %c256_23, %c0_24] : memref<3x288x8xf32, #tpu.memory_space<vmem>>, vector<1x16x8xf32>
    %27 = vector.shape_cast %26 : vector<1x16x8xf32> to vector<16x8xf32>
    %28 = vector.shape_cast %25 : vector<16x8xf32> to vector<1x16x8xf32>
    tpu.vector_store %arg8[%c1_22, %c256_23, %c0_24], %28 {strides = array<i32>} : memref<3x288x8xf32, #tpu.memory_space<vmem>>, vector<1x16x8xf32>,
    %29 = vector.extract_strided_slice %6 {offsets = [1, 0], sizes = [16, 8], strides = [1, 1]} : vector<18x8xf32> to vector<16x8xf32>
    %c1_25 = arith.constant 1 : index
    %c272_26 = arith.constant 272 : index
    %c0_27 = arith.constant 0 : index
    %30 = vector.load %arg8[%c1_25, %c272_26, %c0_27] : memref<3x288x8xf32, #tpu.memory_space<vmem>>, vector<1x16x8xf32>
    %31 = vector.shape_cast %30 : vector<1x16x8xf32> to vector<16x8xf32>
    %32 = vector.shape_cast %29 : vector<16x8xf32> to vector<1x16x8xf32>
    tpu.vector_store %arg8[%c1_25, %c272_26, %c0_27], %32 {strides = array<i32>} : memref<3x288x8xf32, #tpu.memory_space<vmem>>, vector<1x16x8xf32>,
    %33 = vector.extract_strided_slice %2 {offsets = [0, 2, 0], sizes = [16, 16, 8], strides = [1, 1, 1]} : vector<16x18x8xf32> to vector<16x16x8xf32>
    %34 = vector.shape_cast %33 : vector<16x16x8xf32> to vector<256x8xf32>
    %c2 = arith.constant 2 : index
    %c0_28 = arith.constant 0 : index
    %c0_29 = arith.constant 0 : index
    %35 = vector.load %arg8[%c2, %c0_28, %c0_29] : memref<3x288x8xf32, #tpu.memory_space<vmem>>, vector<1x256x8xf32>
    %36 = vector.shape_cast %35 : vector<1x256x8xf32> to vector<256x8xf32>
    %37 = vector.shape_cast %34 : vector<256x8xf32> to vector<1x256x8xf32>
    tpu.vector_store %arg8[%c2, %c0_28, %c0_29], %37 {strides = array<i32>} : memref<3x288x8xf32, #tpu.memory_space<vmem>>, vector<1x256x8xf32>,
    %38 = vector.extract_strided_slice %4 {offsets = [2, 0], sizes = [16, 8], strides = [1, 1]} : vector<18x8xf32> to vector<16x8xf32>
    %c2_30 = arith.constant 2 : index
    %c256_31 = arith.constant 256 : index
    %c0_32 = arith.constant 0 : index
    %39 = vector.load %arg8[%c2_30, %c256_31, %c0_32] : memref<3x288x8xf32, #tpu.memory_space<vmem>>, vector<1x16x8xf32>
    %40 = vector.shape_cast %39 : vector<1x16x8xf32> to vector<16x8xf32>
    %41 = vector.shape_cast %38 : vector<16x8xf32> to vector<1x16x8xf32>
    tpu.vector_store %arg8[%c2_30, %c256_31, %c0_32], %41 {strides = array<i32>} : memref<3x288x8xf32, #tpu.memory_space<vmem>>, vector<1x16x8xf32>,
    %42 = vector.extract_strided_slice %6 {offsets = [2, 0], sizes = [16, 8], strides = [1, 1]} : vector<18x8xf32> to vector<16x8xf32>
    %c2_33 = arith.constant 2 : index
    %c272_34 = arith.constant 272 : index
    %c0_35 = arith.constant 0 : index
    %43 = vector.load %arg8[%c2_33, %c272_34, %c0_35] : memref<3x288x8xf32, #tpu.memory_space<vmem>>, vector<1x16x8xf32>
    %44 = vector.shape_cast %43 : vector<1x16x8xf32> to vector<16x8xf32>
    %45 = vector.shape_cast %42 : vector<16x8xf32> to vector<1x16x8xf32>
    tpu.vector_store %arg8[%c2_33, %c272_34, %c0_35], %45 {strides = array<i32>} : memref<3x288x8xf32, #tpu.memory_space<vmem>>, vector<1x16x8xf32>,
    %cst = arith.constant 0.000000e+00 : f32
    %46 = vector.broadcast %cst : f32 to vector<256x4xf32>
    %c0_36 = arith.constant 0 : index
    %c0_37 = arith.constant 0 : index
    %c0_38 = arith.constant 0 : index
    %47 = vector.load %arg8[%c0_36, %c0_37, %c0_38] : memref<3x288x8xf32, #tpu.memory_space<vmem>>, vector<1x256x8xf32>
    %48 = vector.shape_cast %47 : vector<1x256x8xf32> to vector<256x8xf32>
    %c0_39 = arith.constant 0 : index
    %c0_40 = arith.constant 0 : index
    %c0_41 = arith.constant 0 : index
    %49 = vector.load %arg5[%c0_39, %c0_40, %c0_41] : memref<16x8x4xf32, #tpu.memory_space<vmem>>, vector<1x8x4xf32>
    %50 = vector.shape_cast %49 : vector<1x8x4xf32> to vector<8x4xf32>
    %cst_42 = arith.constant dense<0.000000e+00> : vector<256x4xf32>
    %51 = tpu.matmul %48, %50, %cst_42 {dimension_numbers = #tpu.dot_dimension_numbers<[1], [0], [0], [1], [0, 0, 1, 1], [], []>} : vector<256x8xf32>, vector<8x4xf32>, vector<256x4xf32> -> vector<256x4xf32>
    %52 = arith.addf %46, %51 : vector<256x4xf32>
    %c1_43 = arith.constant 1 : index
    %c0_44 = arith.constant 0 : index
    %c0_45 = arith.constant 0 : index
    %53 = vector.load %arg8[%c1_43, %c0_44, %c0_45] : memref<3x288x8xf32, #tpu.memory_space<vmem>>, vector<1x256x8xf32>
    %54 = vector.shape_cast %53 : vector<1x256x8xf32> to vector<256x8xf32>
    %c1_46 = arith.constant 1 : index
    %c0_47 = arith.constant 0 : index
    %c0_48 = arith.constant 0 : index
    %55 = vector.load %arg5[%c1_46, %c0_47, %c0_48] : memref<16x8x4xf32, #tpu.memory_space<vmem>>, vector<1x8x4xf32>
    %56 = vector.shape_cast %55 : vector<1x8x4xf32> to vector<8x4xf32>
    %cst_49 = arith.constant dense<0.000000e+00> : vector<256x4xf32>
    %57 = tpu.matmul %54, %56, %cst_49 {dimension_numbers = #tpu.dot_dimension_numbers<[1], [0], [0], [1], [0, 0, 1, 1], [], []>} : vector<256x8xf32>, vector<8x4xf32>, vector<256x4xf32> -> vector<256x4xf32>
    %58 = arith.addf %52, %57 : vector<256x4xf32>
    %c0_50 = arith.constant 0 : index
    %c16 = arith.constant 16 : index
    %c0_51 = arith.constant 0 : index
    %59 = vector.load %arg8[%c0_50, %c16, %c0_51] : memref<3x288x8xf32, #tpu.memory_space<vmem>>, vector<1x256x8xf32>
    %60 = vector.shape_cast %59 : vector<1x256x8xf32> to vector<256x8xf32>
    %c2_52 = arith.constant 2 : index
    %c0_53 = arith.constant 0 : index
    %c0_54 = arith.constant 0 : index
    %61 = vector.load %arg5[%c2_52, %c0_53, %c0_54] : memref<16x8x4xf32, #tpu.memory_space<vmem>>, vector<1x8x4xf32>
    %62 = vector.shape_cast %61 : vector<1x8x4xf32> to vector<8x4xf32>
    %cst_55 = arith.constant dense<0.000000e+00> : vector<256x4xf32>
    %63 = tpu.matmul %60, %62, %cst_55 {dimension_numbers = #tpu.dot_dimension_numbers<[1], [0], [0], [1], [0, 0, 1, 1], [], []>} : vector<256x8xf32>, vector<8x4xf32>, vector<256x4xf32> -> vector<256x4xf32>
    %64 = arith.addf %58, %63 : vector<256x4xf32>
    %c1_56 = arith.constant 1 : index
    %c16_57 = arith.constant 16 : index
    %c0_58 = arith.constant 0 : index
    %65 = vector.load %arg8[%c1_56, %c16_57, %c0_58] : memref<3x288x8xf32, #tpu.memory_space<vmem>>, vector<1x256x8xf32>
    %66 = vector.shape_cast %65 : vector<1x256x8xf32> to vector<256x8xf32>
    %c3 = arith.constant 3 : index
    %c0_59 = arith.constant 0 : index
    %c0_60 = arith.constant 0 : index
    %67 = vector.load %arg5[%c3, %c0_59, %c0_60] : memref<16x8x4xf32, #tpu.memory_space<vmem>>, vector<1x8x4xf32>
    %68 = vector.shape_cast %67 : vector<1x8x4xf32> to vector<8x4xf32>
    %cst_61 = arith.constant dense<0.000000e+00> : vector<256x4xf32>
    %69 = tpu.matmul %66, %68, %cst_61 {dimension_numbers = #tpu.dot_dimension_numbers<[1], [0], [0], [1], [0, 0, 1, 1], [], []>} : vector<256x8xf32>, vector<8x4xf32>, vector<256x4xf32> -> vector<256x4xf32>
    %70 = arith.addf %64, %69 : vector<256x4xf32>
    %71 = vector.broadcast %0 : vector<1x4xf32> to vector<256x4xf32>
    %72 = arith.addf %70, %71 : vector<256x4xf32>
    %cst_62 = arith.constant 0.000000e+00 : f32
    %73 = vector.broadcast %cst_62 : f32 to vector<256x4xf32>
    %74 = arith.cmpf ogt, %72, %73 : vector<256x4xf32>
    %cst_63 = arith.constant 2.000000e-01 : f32
    %75 = vector.broadcast %cst_63 : f32 to vector<256x4xf32>
    %76 = arith.mulf %75, %72 : vector<256x4xf32>
    %77 = arith.select %74, %72, %76 : vector<256x4xi1>, vector<256x4xf32>
    %78 = vector.shape_cast %77 : vector<256x4xf32> to vector<16x16x4xf32>
    %c0_64 = arith.constant 0 : index
    %c0_65 = arith.constant 0 : index
    %c0_66 = arith.constant 0 : index
    %c0_67 = arith.constant 0 : index
    %79 = vector.load %arg7[%c0_64, %c0_65, %c0_66, %c0_67] : memref<4x16x16x4xf32, #tpu.memory_space<vmem>>, vector<1x16x16x4xf32>
    %80 = vector.shape_cast %79 : vector<1x16x16x4xf32> to vector<16x16x4xf32>
    %81 = vector.shape_cast %78 : vector<16x16x4xf32> to vector<1x16x16x4xf32>
    tpu.vector_store %arg7[%c0_64, %c0_65, %c0_66, %c0_67], %81 {strides = array<i32>} : memref<4x16x16x4xf32, #tpu.memory_space<vmem>>, vector<1x16x16x4xf32>,
    %cst_68 = arith.constant 0.000000e+00 : f32
    %82 = vector.broadcast %cst_68 : f32 to vector<256x4xf32>
    %c1_69 = arith.constant 1 : index
    %c0_70 = arith.constant 0 : index
    %c0_71 = arith.constant 0 : index
    %83 = vector.load %arg8[%c1_69, %c0_70, %c0_71] : memref<3x288x8xf32, #tpu.memory_space<vmem>>, vector<1x256x8xf32>
    %84 = vector.shape_cast %83 : vector<1x256x8xf32> to vector<256x8xf32>
    %c4 = arith.constant 4 : index
    %c0_72 = arith.constant 0 : index
    %c0_73 = arith.constant 0 : index
    %85 = vector.load %arg5[%c4, %c0_72, %c0_73] : memref<16x8x4xf32, #tpu.memory_space<vmem>>, vector<1x8x4xf32>
    %86 = vector.shape_cast %85 : vector<1x8x4xf32> to vector<8x4xf32>
    %cst_74 = arith.constant dense<0.000000e+00> : vector<256x4xf32>
    %87 = tpu.matmul %84, %86, %cst_74 {dimension_numbers = #tpu.dot_dimension_numbers<[1], [0], [0], [1], [0, 0, 1, 1], [], []>} : vector<256x8xf32>, vector<8x4xf32>, vector<256x4xf32> -> vector<256x4xf32>
    %88 = arith.addf %82, %87 : vector<256x4xf32>
    %c2_75 = arith.constant 2 : index
    %c0_76 = arith.constant 0 : index
    %c0_77 = arith.constant 0 : index
    %89 = vector.load %arg8[%c2_75, %c0_76, %c0_77] : memref<3x288x8xf32, #tpu.memory_space<vmem>>, vector<1x256x8xf32>
    %90 = vector.shape_cast %89 : vector<1x256x8xf32> to vector<256x8xf32>
    %c5 = arith.constant 5 : index
    %c0_78 = arith.constant 0 : index
    %c0_79 = arith.constant 0 : index
    %91 = vector.load %arg5[%c5, %c0_78, %c0_79] : memref<16x8x4xf32, #tpu.memory_space<vmem>>, vector<1x8x4xf32>
    %92 = vector.shape_cast %91 : vector<1x8x4xf32> to vector<8x4xf32>
    %cst_80 = arith.constant dense<0.000000e+00> : vector<256x4xf32>
    %93 = tpu.matmul %90, %92, %cst_80 {dimension_numbers = #tpu.dot_dimension_numbers<[1], [0], [0], [1], [0, 0, 1, 1], [], []>} : vector<256x8xf32>, vector<8x4xf32>, vector<256x4xf32> -> vector<256x4xf32>
    %94 = arith.addf %88, %93 : vector<256x4xf32>
    %c1_81 = arith.constant 1 : index
    %c16_82 = arith.constant 16 : index
    %c0_83 = arith.constant 0 : index
    %95 = vector.load %arg8[%c1_81, %c16_82, %c0_83] : memref<3x288x8xf32, #tpu.memory_space<vmem>>, vector<1x256x8xf32>
    %96 = vector.shape_cast %95 : vector<1x256x8xf32> to vector<256x8xf32>
    %c6 = arith.constant 6 : index
    %c0_84 = arith.constant 0 : index
    %c0_85 = arith.constant 0 : index
    %97 = vector.load %arg5[%c6, %c0_84, %c0_85] : memref<16x8x4xf32, #tpu.memory_space<vmem>>, vector<1x8x4xf32>
    %98 = vector.shape_cast %97 : vector<1x8x4xf32> to vector<8x4xf32>
    %cst_86 = arith.constant dense<0.000000e+00> : vector<256x4xf32>
    %99 = tpu.matmul %96, %98, %cst_86 {dimension_numbers = #tpu.dot_dimension_numbers<[1], [0], [0], [1], [0, 0, 1, 1], [], []>} : vector<256x8xf32>, vector<8x4xf32>, vector<256x4xf32> -> vector<256x4xf32>
    %100 = arith.addf %94, %99 : vector<256x4xf32>
    %c2_87 = arith.constant 2 : index
    %c16_88 = arith.constant 16 : index
    %c0_89 = arith.constant 0 : index
    %101 = vector.load %arg8[%c2_87, %c16_88, %c0_89] : memref<3x288x8xf32, #tpu.memory_space<vmem>>, vector<1x256x8xf32>
    %102 = vector.shape_cast %101 : vector<1x256x8xf32> to vector<256x8xf32>
    %c7 = arith.constant 7 : index
    %c0_90 = arith.constant 0 : index
    %c0_91 = arith.constant 0 : index
    %103 = vector.load %arg5[%c7, %c0_90, %c0_91] : memref<16x8x4xf32, #tpu.memory_space<vmem>>, vector<1x8x4xf32>
    %104 = vector.shape_cast %103 : vector<1x8x4xf32> to vector<8x4xf32>
    %cst_92 = arith.constant dense<0.000000e+00> : vector<256x4xf32>
    %105 = tpu.matmul %102, %104, %cst_92 {dimension_numbers = #tpu.dot_dimension_numbers<[1], [0], [0], [1], [0, 0, 1, 1], [], []>} : vector<256x8xf32>, vector<8x4xf32>, vector<256x4xf32> -> vector<256x4xf32>
    %106 = arith.addf %100, %105 : vector<256x4xf32>
    %107 = vector.broadcast %0 : vector<1x4xf32> to vector<256x4xf32>
    %108 = arith.addf %106, %107 : vector<256x4xf32>
    %cst_93 = arith.constant 0.000000e+00 : f32
    %109 = vector.broadcast %cst_93 : f32 to vector<256x4xf32>
    %110 = arith.cmpf ogt, %108, %109 : vector<256x4xf32>
    %cst_94 = arith.constant 2.000000e-01 : f32
    %111 = vector.broadcast %cst_94 : f32 to vector<256x4xf32>
    %112 = arith.mulf %111, %108 : vector<256x4xf32>
    %113 = arith.select %110, %108, %112 : vector<256x4xi1>, vector<256x4xf32>
    %114 = vector.shape_cast %113 : vector<256x4xf32> to vector<16x16x4xf32>
    %c1_95 = arith.constant 1 : index
    %c0_96 = arith.constant 0 : index
    %c0_97 = arith.constant 0 : index
    %c0_98 = arith.constant 0 : index
    %115 = vector.load %arg7[%c1_95, %c0_96, %c0_97, %c0_98] : memref<4x16x16x4xf32, #tpu.memory_space<vmem>>, vector<1x16x16x4xf32>
    %116 = vector.shape_cast %115 : vector<1x16x16x4xf32> to vector<16x16x4xf32>
    %117 = vector.shape_cast %114 : vector<16x16x4xf32> to vector<1x16x16x4xf32>
    tpu.vector_store %arg7[%c1_95, %c0_96, %c0_97, %c0_98], %117 {strides = array<i32>} : memref<4x16x16x4xf32, #tpu.memory_space<vmem>>, vector<1x16x16x4xf32>,
    %cst_99 = arith.constant 0.000000e+00 : f32
    %118 = vector.broadcast %cst_99 : f32 to vector<256x4xf32>
    %c0_100 = arith.constant 0 : index
    %c16_101 = arith.constant 16 : index
    %c0_102 = arith.constant 0 : index
    %119 = vector.load %arg8[%c0_100, %c16_101, %c0_102] : memref<3x288x8xf32, #tpu.memory_space<vmem>>, vector<1x256x8xf32>
    %120 = vector.shape_cast %119 : vector<1x256x8xf32> to vector<256x8xf32>
    %c8 = arith.constant 8 : index
    %c0_103 = arith.constant 0 : index
    %c0_104 = arith.constant 0 : index
    %121 = vector.load %arg5[%c8, %c0_103, %c0_104] : memref<16x8x4xf32, #tpu.memory_space<vmem>>, vector<1x8x4xf32>
    %122 = vector.shape_cast %121 : vector<1x8x4xf32> to vector<8x4xf32>
    %cst_105 = arith.constant dense<0.000000e+00> : vector<256x4xf32>
    %123 = tpu.matmul %120, %122, %cst_105 {dimension_numbers = #tpu.dot_dimension_numbers<[1], [0], [0], [1], [0, 0, 1, 1], [], []>} : vector<256x8xf32>, vector<8x4xf32>, vector<256x4xf32> -> vector<256x4xf32>
    %124 = arith.addf %118, %123 : vector<256x4xf32>
    %c1_106 = arith.constant 1 : index
    %c16_107 = arith.constant 16 : index
    %c0_108 = arith.constant 0 : index
    %125 = vector.load %arg8[%c1_106, %c16_107, %c0_108] : memref<3x288x8xf32, #tpu.memory_space<vmem>>, vector<1x256x8xf32>
    %126 = vector.shape_cast %125 : vector<1x256x8xf32> to vector<256x8xf32>
    %c9 = arith.constant 9 : index
    %c0_109 = arith.constant 0 : index
    %c0_110 = arith.constant 0 : index
    %127 = vector.load %arg5[%c9, %c0_109, %c0_110] : memref<16x8x4xf32, #tpu.memory_space<vmem>>, vector<1x8x4xf32>
    %128 = vector.shape_cast %127 : vector<1x8x4xf32> to vector<8x4xf32>
    %cst_111 = arith.constant dense<0.000000e+00> : vector<256x4xf32>
    %129 = tpu.matmul %126, %128, %cst_111 {dimension_numbers = #tpu.dot_dimension_numbers<[1], [0], [0], [1], [0, 0, 1, 1], [], []>} : vector<256x8xf32>, vector<8x4xf32>, vector<256x4xf32> -> vector<256x4xf32>
    %130 = arith.addf %124, %129 : vector<256x4xf32>
    %c0_112 = arith.constant 0 : index
    %c32 = arith.constant 32 : index
    %c0_113 = arith.constant 0 : index
    %131 = vector.load %arg8[%c0_112, %c32, %c0_113] : memref<3x288x8xf32, #tpu.memory_space<vmem>>, vector<1x256x8xf32>
    %132 = vector.shape_cast %131 : vector<1x256x8xf32> to vector<256x8xf32>
    %c10 = arith.constant 10 : index
    %c0_114 = arith.constant 0 : index
    %c0_115 = arith.constant 0 : index
    %133 = vector.load %arg5[%c10, %c0_114, %c0_115] : memref<16x8x4xf32, #tpu.memory_space<vmem>>, vector<1x8x4xf32>
    %134 = vector.shape_cast %133 : vector<1x8x4xf32> to vector<8x4xf32>
    %cst_116 = arith.constant dense<0.000000e+00> : vector<256x4xf32>
    %135 = tpu.matmul %132, %134, %cst_116 {dimension_numbers = #tpu.dot_dimension_numbers<[1], [0], [0], [1], [0, 0, 1, 1], [], []>} : vector<256x8xf32>, vector<8x4xf32>, vector<256x4xf32> -> vector<256x4xf32>
    %136 = arith.addf %130, %135 : vector<256x4xf32>
    %c1_117 = arith.constant 1 : index
    %c32_118 = arith.constant 32 : index
    %c0_119 = arith.constant 0 : index
    %137 = vector.load %arg8[%c1_117, %c32_118, %c0_119] : memref<3x288x8xf32, #tpu.memory_space<vmem>>, vector<1x256x8xf32>
    %138 = vector.shape_cast %137 : vector<1x256x8xf32> to vector<256x8xf32>
    %c11 = arith.constant 11 : index
    %c0_120 = arith.constant 0 : index
    %c0_121 = arith.constant 0 : index
    %139 = vector.load %arg5[%c11, %c0_120, %c0_121] : memref<16x8x4xf32, #tpu.memory_space<vmem>>, vector<1x8x4xf32>
    %140 = vector.shape_cast %139 : vector<1x8x4xf32> to vector<8x4xf32>
    %cst_122 = arith.constant dense<0.000000e+00> : vector<256x4xf32>
    %141 = tpu.matmul %138, %140, %cst_122 {dimension_numbers = #tpu.dot_dimension_numbers<[1], [0], [0], [1], [0, 0, 1, 1], [], []>} : vector<256x8xf32>, vector<8x4xf32>, vector<256x4xf32> -> vector<256x4xf32>
    %142 = arith.addf %136, %141 : vector<256x4xf32>
    %143 = vector.broadcast %0 : vector<1x4xf32> to vector<256x4xf32>
    %144 = arith.addf %142, %143 : vector<256x4xf32>
    %cst_123 = arith.constant 0.000000e+00 : f32
    %145 = vector.broadcast %cst_123 : f32 to vector<256x4xf32>
    %146 = arith.cmpf ogt, %144, %145 : vector<256x4xf32>
    %cst_124 = arith.constant 2.000000e-01 : f32
    %147 = vector.broadcast %cst_124 : f32 to vector<256x4xf32>
    %148 = arith.mulf %147, %144 : vector<256x4xf32>
    %149 = arith.select %146, %144, %148 : vector<256x4xi1>, vector<256x4xf32>
    %150 = vector.shape_cast %149 : vector<256x4xf32> to vector<16x16x4xf32>
    %c2_125 = arith.constant 2 : index
    %c0_126 = arith.constant 0 : index
    %c0_127 = arith.constant 0 : index
    %c0_128 = arith.constant 0 : index
    %151 = vector.load %arg7[%c2_125, %c0_126, %c0_127, %c0_128] : memref<4x16x16x4xf32, #tpu.memory_space<vmem>>, vector<1x16x16x4xf32>
    %152 = vector.shape_cast %151 : vector<1x16x16x4xf32> to vector<16x16x4xf32>
    %153 = vector.shape_cast %150 : vector<16x16x4xf32> to vector<1x16x16x4xf32>
    tpu.vector_store %arg7[%c2_125, %c0_126, %c0_127, %c0_128], %153 {strides = array<i32>} : memref<4x16x16x4xf32, #tpu.memory_space<vmem>>, vector<1x16x16x4xf32>,
    %cst_129 = arith.constant 0.000000e+00 : f32
    %154 = vector.broadcast %cst_129 : f32 to vector<256x4xf32>
    %c1_130 = arith.constant 1 : index
    %c16_131 = arith.constant 16 : index
    %c0_132 = arith.constant 0 : index
    %155 = vector.load %arg8[%c1_130, %c16_131, %c0_132] : memref<3x288x8xf32, #tpu.memory_space<vmem>>, vector<1x256x8xf32>
    %156 = vector.shape_cast %155 : vector<1x256x8xf32> to vector<256x8xf32>
    %c12 = arith.constant 12 : index
    %c0_133 = arith.constant 0 : index
    %c0_134 = arith.constant 0 : index
    %157 = vector.load %arg5[%c12, %c0_133, %c0_134] : memref<16x8x4xf32, #tpu.memory_space<vmem>>, vector<1x8x4xf32>
    %158 = vector.shape_cast %157 : vector<1x8x4xf32> to vector<8x4xf32>
    %cst_135 = arith.constant dense<0.000000e+00> : vector<256x4xf32>
    %159 = tpu.matmul %156, %158, %cst_135 {dimension_numbers = #tpu.dot_dimension_numbers<[1], [0], [0], [1], [0, 0, 1, 1], [], []>} : vector<256x8xf32>, vector<8x4xf32>, vector<256x4xf32> -> vector<256x4xf32>
    %160 = arith.addf %154, %159 : vector<256x4xf32>
    %c2_136 = arith.constant 2 : index
    %c16_137 = arith.constant 16 : index
    %c0_138 = arith.constant 0 : index
    %161 = vector.load %arg8[%c2_136, %c16_137, %c0_138] : memref<3x288x8xf32, #tpu.memory_space<vmem>>, vector<1x256x8xf32>
    %162 = vector.shape_cast %161 : vector<1x256x8xf32> to vector<256x8xf32>
    %c13 = arith.constant 13 : index
    %c0_139 = arith.constant 0 : index
    %c0_140 = arith.constant 0 : index
    %163 = vector.load %arg5[%c13, %c0_139, %c0_140] : memref<16x8x4xf32, #tpu.memory_space<vmem>>, vector<1x8x4xf32>
    %164 = vector.shape_cast %163 : vector<1x8x4xf32> to vector<8x4xf32>
    %cst_141 = arith.constant dense<0.000000e+00> : vector<256x4xf32>
    %165 = tpu.matmul %162, %164, %cst_141 {dimension_numbers = #tpu.dot_dimension_numbers<[1], [0], [0], [1], [0, 0, 1, 1], [], []>} : vector<256x8xf32>, vector<8x4xf32>, vector<256x4xf32> -> vector<256x4xf32>
    %166 = arith.addf %160, %165 : vector<256x4xf32>
    %c1_142 = arith.constant 1 : index
    %c32_143 = arith.constant 32 : index
    %c0_144 = arith.constant 0 : index
    %167 = vector.load %arg8[%c1_142, %c32_143, %c0_144] : memref<3x288x8xf32, #tpu.memory_space<vmem>>, vector<1x256x8xf32>
    %168 = vector.shape_cast %167 : vector<1x256x8xf32> to vector<256x8xf32>
    %c14 = arith.constant 14 : index
    %c0_145 = arith.constant 0 : index
    %c0_146 = arith.constant 0 : index
    %169 = vector.load %arg5[%c14, %c0_145, %c0_146] : memref<16x8x4xf32, #tpu.memory_space<vmem>>, vector<1x8x4xf32>
    %170 = vector.shape_cast %169 : vector<1x8x4xf32> to vector<8x4xf32>
    %cst_147 = arith.constant dense<0.000000e+00> : vector<256x4xf32>
    %171 = tpu.matmul %168, %170, %cst_147 {dimension_numbers = #tpu.dot_dimension_numbers<[1], [0], [0], [1], [0, 0, 1, 1], [], []>} : vector<256x8xf32>, vector<8x4xf32>, vector<256x4xf32> -> vector<256x4xf32>
    %172 = arith.addf %166, %171 : vector<256x4xf32>
    %c2_148 = arith.constant 2 : index
    %c32_149 = arith.constant 32 : index
    %c0_150 = arith.constant 0 : index
    %173 = vector.load %arg8[%c2_148, %c32_149, %c0_150] : memref<3x288x8xf32, #tpu.memory_space<vmem>>, vector<1x256x8xf32>
    %174 = vector.shape_cast %173 : vector<1x256x8xf32> to vector<256x8xf32>
    %c15 = arith.constant 15 : index
    %c0_151 = arith.constant 0 : index
    %c0_152 = arith.constant 0 : index
    %175 = vector.load %arg5[%c15, %c0_151, %c0_152] : memref<16x8x4xf32, #tpu.memory_space<vmem>>, vector<1x8x4xf32>
    %176 = vector.shape_cast %175 : vector<1x8x4xf32> to vector<8x4xf32>
    %cst_153 = arith.constant dense<0.000000e+00> : vector<256x4xf32>
    %177 = tpu.matmul %174, %176, %cst_153 {dimension_numbers = #tpu.dot_dimension_numbers<[1], [0], [0], [1], [0, 0, 1, 1], [], []>} : vector<256x8xf32>, vector<8x4xf32>, vector<256x4xf32> -> vector<256x4xf32>
    %178 = arith.addf %172, %177 : vector<256x4xf32>
    %179 = vector.broadcast %0 : vector<1x4xf32> to vector<256x4xf32>
    %180 = arith.addf %178, %179 : vector<256x4xf32>
    %cst_154 = arith.constant 0.000000e+00 : f32
    %181 = vector.broadcast %cst_154 : f32 to vector<256x4xf32>
    %182 = arith.cmpf ogt, %180, %181 : vector<256x4xf32>
    %cst_155 = arith.constant 2.000000e-01 : f32
    %183 = vector.broadcast %cst_155 : f32 to vector<256x4xf32>
    %184 = arith.mulf %183, %180 : vector<256x4xf32>
    %185 = arith.select %182, %180, %184 : vector<256x4xi1>, vector<256x4xf32>
    %186 = vector.shape_cast %185 : vector<256x4xf32> to vector<16x16x4xf32>
    %c3_156 = arith.constant 3 : index
    %c0_157 = arith.constant 0 : index
    %c0_158 = arith.constant 0 : index
    %c0_159 = arith.constant 0 : index
    %187 = vector.load %arg7[%c3_156, %c0_157, %c0_158, %c0_159] : memref<4x16x16x4xf32, #tpu.memory_space<vmem>>, vector<1x16x16x4xf32>
    %188 = vector.shape_cast %187 : vector<1x16x16x4xf32> to vector<16x16x4xf32>
    %189 = vector.shape_cast %186 : vector<16x16x4xf32> to vector<1x16x16x4xf32>
    tpu.vector_store %arg7[%c3_156, %c0_157, %c0_158, %c0_159], %189 {strides = array<i32>} : memref<4x16x16x4xf32, #tpu.memory_space<vmem>>, vector<1x16x16x4xf32>,
    return
  }
  func.func @transform_0(%arg0: i32, %arg1: i32) -> (i32, i32, i32, i32) {
    %c0_i32 = arith.constant 0 : i32
    %c0_i32_0 = arith.constant 0 : i32
    %c0_i32_1 = arith.constant 0 : i32
    return %arg0, %arg1, %c0_i32, %c0_i32_0 : i32, i32, i32, i32
  }
  func.func @transform_1(%arg0: i32, %arg1: i32) -> (i32, i32, i32, i32) {
    %c1_i32 = arith.constant 1 : i32
    %0 = arith.addi %arg1, %c1_i32 : i32
    %c16_i32 = arith.constant 16 : i32
    %1 = arith.muli %0, %c16_i32 : i32
    %c0_i32 = arith.constant 0 : i32
    %c0_i32_0 = arith.constant 0 : i32
    %c0_i32_1 = arith.constant 0 : i32
    return %arg0, %1, %c0_i32, %c0_i32_0 : i32, i32, i32, i32
  }
  func.func @transform_2(%arg0: i32, %arg1: i32) -> (i32, i32, i32, i32) {
    %c1_i32 = arith.constant 1 : i32
    %0 = arith.addi %arg1, %c1_i32 : i32
    %c16_i32 = arith.constant 16 : i32
    %1 = arith.muli %0, %c16_i32 : i32
    %c1_i32_0 = arith.constant 1 : i32
    %2 = arith.addi %1, %c1_i32_0 : i32
    %c0_i32 = arith.constant 0 : i32
    %c0_i32_1 = arith.constant 0 : i32
    %c0_i32_2 = arith.constant 0 : i32
    return %arg0, %2, %c0_i32, %c0_i32_1 : i32, i32, i32, i32
  }
  func.func @transform_3(%arg0: i32, %arg1: i32) -> (i32, i32, i32) {
    %c0_i32 = arith.constant 0 : i32
    %c0_i32_0 = arith.constant 0 : i32
    %c0_i32_1 = arith.constant 0 : i32
    %c0_i32_2 = arith.constant 0 : i32
    return %c0_i32, %c0_i32_0, %c0_i32_1 : i32, i32, i32
  }
  func.func @transform_4(%arg0: i32, %arg1: i32) -> (i32, i32) {
    %c0_i32 = arith.constant 0 : i32
    %c0_i32_0 = arith.constant 0 : i32
    %c0_i32_1 = arith.constant 0 : i32
    return %c0_i32, %c0_i32_0 : i32, i32
  }
  func.func @transform_5(%arg0: i32, %arg1: i32) -> (i32, i32, i32, i32) {
    %c0_i32 = arith.constant 0 : i32
    %c0_i32_0 = arith.constant 0 : i32
    %c0_i32_1 = arith.constant 0 : i32
    return %arg0, %arg1, %c0_i32, %c0_i32_0 : i32, i32, i32, i32
  }
}

</mosaic_0001>

<llo_original>
// kernel: up_forward.1
$region0: #{up_forward.1}
  #allocation0 [shape = 'u32[]', space=smem, size = 0x4, offset = 0x4, fixed_abs, tag = 'smem constant byte address 0x4 - core index']
  #allocation1 [shape = 'u32[144,128]{1,0:T(1,128)}', space=vmem, size = 0x12000, scoped, tag = 'internal scratch']
  #allocation2 [shape = 'f32[3,288,8]{2,1,0:T(8,128)}', space=vmem, size = 0x6c000, scoped, tag = 'scratch operand']
  %s0 = inlined_call_operand.vmem [shape: f32[2,18,18,8], index: 0, kind: input, shape index: {}, may-alias: {0,1,2}]
  %s1 = inlined_call_operand.vmem [shape: f32[2,18,18,8], index: 1, kind: input, shape index: {}, may-alias: {0,1,2}]
  %s2 = inlined_call_operand.vmem [shape: f32[2,18,18,8], index: 2, kind: input, shape index: {}, may-alias: {0,1,2}]
  %s3 = inlined_call_operand.vmem [shape: f32[16,8,4], index: 3, kind: input, shape index: {}]
  %s4 = inlined_call_operand.vmem [shape: f32[1,4], index: 4, kind: input, shape index: {}]
  %s5 = inlined_call_operand.vmem [shape: f32[8,16,16,4], index: 5, kind: output, shape index: {}]
  %s6 = sld [smem:[#allocation0]]
  $region53: #{up_forward.1} parent=0
    _
  %s8 = ssub.s32 1, %s6
  %s9 = scalar_select 0, %s8, %s6
  loop: start=0, step=1, limit=4
  $region2: #{up_forward.1} parent=0 // loop_pre_header
    _
  $region3: #{up_forward.1} parent=0 // loop_header
    %s11 = sphi 0, %s15
    %p12 = scmp.ge.s32.totalorder %s11, 4
    %s18 = sphi 0, %s30
    %s19 = sphi 0, %s26
    %s20 = sphi 0, %s18
    %s21 = sphi 0, %s19
    %s22 = sphi 0, %s20
    %s23 = sphi 0, %s21
    %s35 = sphi 0, %s37
    %s38 = sphi 0, %s35
    %s39 = sphi 0, %s38
    %s55 = sphi 0, %s39
    %s67 = sphi 0, %s69
    %s70 = sphi 0, %s67
    %s71 = sphi 0, %s70
    %s87 = sphi 0, %s71
    %s101 = sphi 0, %s103
    %s104 = sphi 0, %s101
    %s105 = sphi 0, %s104
    %s121 = sphi 0, %s105
    %s125 = sphi 0, %s125
    %s127 = sphi 0, %s125
    %s128 = sphi 0, %s127
    %s142 = sphi 0, %s128
    %s146 = sphi 0, %s146
    %s148 = sphi 0, %s146
    %s149 = sphi 0, %s148
    %s163 = sphi 0, %s149
    %s171 = sphi 0, %s173
    %s174 = sphi 0, %s171
    %s175 = sphi 0, %s174
    %s191 = sphi 0, %s175
  $region4: #{up_forward.1} parent=0 // loop_header_branch
    %14 = sbr.rel (%p12) target = $region8
  $region5: #{up_forward.1} parent=0 // loop_body
    %s16 = ssub.s32 %s11, 1
    %s17 = ssub.s32 %s11, 2
    %s24 = sadd.s32 1, %s19
    %p25 = scmp.ge.s32.totalorder %s24, 1
    %s26 = scalar_select %p25, 0, %s24
    %s27 = sadd.s32 1, %s18
    %s28 = scalar_select %p25, %s27, %s18
    %p29 = scmp.ge.s32.totalorder %s28, 2
    %s30 = scalar_select %p29, 0, %s28
    %s31 = ssub.s32 %s18, %s30
    %s32 = ssub.s32 %s19, %s26
    %s33 = sor.u32 %s31, %s32
    %p34 = scmp.eq.s32.totalorder %s33, 0
    %s36 = sadd.s32 %s35, 1
    %s37 = scalar_select %p34, %s35, %s36
    %p40 = pneg %p34
    %p41 = scmp.eq.s32.totalorder %s11, 1
    %p42 = por %p40, %p41
    %p43 = scmp.ne.s32.totalorder %s35, %s38
    %p44 = scmp.eq.s32.totalorder %s11, 0
    %p45 = por %p43, %p44
    %p46 = scmp.ne.s32.totalorder %s35, %s38
    %p47 = scmp.eq.s32.totalorder %s16, 1
    %p48 = por %p46, %p47
    %p49 = scmp.ne.s32.totalorder %s38, %s39
    %p50 = scmp.eq.s32.totalorder %s16, 0
    %p51 = por %p49, %p50
    %p52 = scmp.ne.s32.totalorder %s38, %s39
    %p53 = scmp.eq.s32.totalorder %s17, 1
    %p54 = por %p52, %p53
    %p56 = scmp.ne.s32.totalorder %s39, %s55
    %p57 = scmp.eq.s32.totalorder %s17, 0
    %p58 = por %p56, %p57
    %s59 = sadd.s32 %s19, 1
    %s60 = smul.u32 %s59, 16
    %s61 = sadd.s32 %s26, 1
    %s62 = smul.u32 %s61, 16
    %s63 = ssub.s32 %s18, %s30
    %s64 = ssub.s32 %s60, %s62
    %s65 = sor.u32 %s63, %s64
    %p66 = scmp.eq.s32.totalorder %s65, 0
    %s68 = sadd.s32 %s67, 1
    %s69 = scalar_select %p66, %s67, %s68
    %p72 = pneg %p66
    %p73 = scmp.eq.s32.totalorder %s11, 1
    %p74 = por %p72, %p73
    %p75 = scmp.ne.s32.totalorder %s67, %s70
    %p76 = scmp.eq.s32.totalorder %s11, 0
    %p77 = por %p75, %p76
    %p78 = scmp.ne.s32.totalorder %s67, %s70
    %p79 = scmp.eq.s32.totalorder %s16, 1
    %p80 = por %p78, %p79
    %p81 = scmp.ne.s32.totalorder %s70, %s71
    %p82 = scmp.eq.s32.totalorder %s16, 0
    %p83 = por %p81, %p82
    %p84 = scmp.ne.s32.totalorder %s70, %s71
    %p85 = scmp.eq.s32.totalorder %s17, 1
    %p86 = por %p84, %p85
    %p88 = scmp.ne.s32.totalorder %s71, %s87
    %p89 = scmp.eq.s32.totalorder %s17, 0
    %p90 = por %p88, %p89
    %s91 = sadd.s32 %s19, 1
    %s92 = smul.u32 %s91, 16
    %s93 = sadd.s32 %s92, 1
    %s94 = sadd.s32 %s26, 1
    %s95 = smul.u32 %s94, 16
    %s96 = sadd.s32 %s95, 1
    %s97 = ssub.s32 %s18, %s30
    %s98 = ssub.s32 %s93, %s96
    %s99 = sor.u32 %s97, %s98
    %p100 = scmp.eq.s32.totalorder %s99, 0
    %s102 = sadd.s32 %s101, 1
    %s103 = scalar_select %p100, %s101, %s102
    %p106 = pneg %p100
    %p107 = scmp.eq.s32.totalorder %s11, 1
    %p108 = por %p106, %p107
    %p109 = scmp.ne.s32.totalorder %s101, %s104
    %p110 = scmp.eq.s32.totalorder %s11, 0
    %p111 = por %p109, %p110
    %p112 = scmp.ne.s32.totalorder %s101, %s104
    %p113 = scmp.eq.s32.totalorder %s16, 1
    %p114 = por %p112, %p113
    %p115 = scmp.ne.s32.totalorder %s104, %s105
    %p116 = scmp.eq.s32.totalorder %s16, 0
    %p117 = por %p115, %p116
    %p118 = scmp.ne.s32.totalorder %s104, %s105
    %p119 = scmp.eq.s32.totalorder %s17, 1
    %p120 = por %p118, %p119
    %p122 = scmp.ne.s32.totalorder %s105, %s121
    %p123 = scmp.eq.s32.totalorder %s17, 0
    %p124 = por %p122, %p123
    %s126 = sadd.s32 %s125, 1
    %p129 = scmp.eq.s32.totalorder %s11, 1
    %p130 = scmp.ne.s32.totalorder %s125, %s127
    %p131 = scmp.eq.s32.totalorder %s11, 0
    %p132 = por %p130, %p131
    %p133 = scmp.ne.s32.totalorder %s125, %s127
    %p134 = scmp.eq.s32.totalorder %s16, 1
    %p135 = por %p133, %p134
    %p136 = scmp.ne.s32.totalorder %s127, %s128
    %p137 = scmp.eq.s32.totalorder %s16, 0
    %p138 = por %p136, %p137
    %p139 = scmp.ne.s32.totalorder %s127, %s128
    %p140 = scmp.eq.s32.totalorder %s17, 1
    %p141 = por %p139, %p140
    %p143 = scmp.ne.s32.totalorder %s128, %s142
    %p144 = scmp.eq.s32.totalorder %s17, 0
    %p145 = por %p143, %p144
    %s147 = sadd.s32 %s146, 1
    %p150 = scmp.eq.s32.totalorder %s11, 1
    %p151 = scmp.ne.s32.totalorder %s146, %s148
    %p152 = scmp.eq.s32.totalorder %s11, 0
    %p153 = por %p151, %p152
    %p154 = scmp.ne.s32.totalorder %s146, %s148
    %p155 = scmp.eq.s32.totalorder %s16, 1
    %p156 = por %p154, %p155
    %p157 = scmp.ne.s32.totalorder %s148, %s149
    %p158 = scmp.eq.s32.totalorder %s16, 0
    %p159 = por %p157, %p158
    %p160 = scmp.ne.s32.totalorder %s148, %s149
    %p161 = scmp.eq.s32.totalorder %s17, 1
    %p162 = por %p160, %p161
    %p164 = scmp.ne.s32.totalorder %s149, %s163
    %p165 = scmp.eq.s32.totalorder %s17, 0
    %p166 = por %p164, %p165
    %s167 = ssub.s32 %s18, %s30
    %s168 = ssub.s32 %s19, %s26
    %s169 = sor.u32 %s167, %s168
    %p170 = scmp.eq.s32.totalorder %s169, 0
    %s172 = sadd.s32 %s171, 1
    %s173 = scalar_select %p170, %s171, %s172
    %p176 = pneg %p170
    %p177 = scmp.eq.s32.totalorder %s11, 1
    %p178 = por %p176, %p177
    %p179 = scmp.ne.s32.totalorder %s171, %s174
    %p180 = scmp.eq.s32.totalorder %s11, 0
    %p181 = por %p179, %p180
    %p182 = scmp.ne.s32.totalorder %s171, %s174
    %p183 = scmp.eq.s32.totalorder %s16, 1
    %p184 = por %p182, %p183
    %p185 = scmp.ne.s32.totalorder %s174, %s175
    %p186 = scmp.eq.s32.totalorder %s16, 0
    %p187 = por %p185, %p186
    %p188 = scmp.ne.s32.totalorder %s174, %s175
    %p189 = scmp.eq.s32.totalorder %s17, 1
    %p190 = por %p188, %p189
    %p192 = scmp.ne.s32.totalorder %s175, %s191
    %p193 = scmp.eq.s32.totalorder %s17, 0
    %p194 = por %p192, %p193
    %p195 = scmp.le.s32.totalorder 1, %s11
    %p196 = scmp.lt.s32.totalorder %s11, 3
    %p197 = pnand %p195, %p196
    %p198 = pneg %p197
    // Predicated region
    $region9: #{up_forward.1} parent=5 // pred_check
      _
    $region10: #{up_forward.1} parent=5 // pred_check_branch
      %200 = sbr.rel (%p197) target = $region12
    $region11: #{up_forward.1} parent=5 // pred_region
      %s201 = ssub.s32 %s11, 1
      // Predicated region
      $region13: #{up_forward.1} parent=11 // pred_check
        %p202 = pneg %p138
      $region14: #{up_forward.1} parent=11 // pred_check_branch
        %204 = sbr.rel (%p202) target = $region16
      $region15: #{up_forward.1} parent=11 // pred_region
        _
      $region16: #{up_forward.1} parent=11 // pred_fallthru
        _
      // Predicated region
      $region17: #{up_forward.1} parent=11 // pred_check
        %p205 = pneg %p159
      $region18: #{up_forward.1} parent=11 // pred_check_branch
        %207 = sbr.rel (%p205) target = $region20
      $region19: #{up_forward.1} parent=11 // pred_region
        _
      $region20: #{up_forward.1} parent=11 // pred_fallthru
        _
    $region12: #{up_forward.1} parent=5 // pred_fallthru
      _
    %p208 = scmp.lt.s32.totalorder %s11, 2
    // Predicated region
    $region21: #{up_forward.1} parent=5 // pred_check
      %p209 = pneg %p208
    $region22: #{up_forward.1} parent=5 // pred_check_branch
      %211 = sbr.rel (%p209) target = $region24
    $region23: #{up_forward.1} parent=5 // pred_region
      // Predicated region
      $region25: #{up_forward.1} parent=23 // pred_check
        %p212 = pneg %p45
      $region26: #{up_forward.1} parent=23 // pred_check_branch
        %214 = sbr.rel (%p212) target = $region28
      $region27: #{up_forward.1} parent=23 // pred_region
        %s215 = smul.u32 16, %s19
        %s216 = ssub.s32 18, %s215
        %p217 = scmp.lt.s32.totalorder %s216, 16
        %s218 = scalar_select %p217, %s216, 16
        %s219 = smul.u32 128, %s218
        %s220 = smul.u32 %s219, 3
        %p221 = scmp.lt.s32.totalorder %s18, 1
        %s222 = scalar_select %p221, %s18, 1
        %p223 = scmp.lt.s32.totalorder %s215, 17
        %s224 = scalar_select %p223, %s215, 17
        %s225 = smul.addr %s224, 3
        %s226 = smul.addr %s222, 54
        %s227 = sadd.s32 %s225, %s226
        %s228 = smul.addr %s227, 8
        %s229 = scalar_lea.vmem %s0, %s228
        %s230 = smul.u32 16, %s19
        %s231 = ssub.s32 18, %s230
        %p232 = scmp.lt.s32.totalorder %s231, 16
        %s233 = scalar_select %p232, %s231, 16
        %s234 = smul.u32 128, %s233
        %s235 = smul.u32 %s234, 3
      $region28: #{up_forward.1} parent=23 // pred_fallthru
        _
      // Predicated region
      $region29: #{up_forward.1} parent=23 // pred_check
        %p236 = pneg %p77
      $region30: #{up_forward.1} parent=23 // pred_check_branch
        %238 = sbr.rel (%p236) target = $region32
      $region31: #{up_forward.1} parent=23 // pred_region
        %s239 = sadd.s32 %s19, 1
        %s240 = smul.u32 %s239, 16
        %p241 = scmp.lt.s32.totalorder %s18, 1
        %s242 = scalar_select %p241, %s18, 1
        %p243 = scmp.lt.s32.totalorder %s240, 17
        %s244 = scalar_select %p243, %s240, 17
        %s245 = smul.addr %s244, 3
        %s246 = smul.addr %s242, 54
        %s247 = sadd.s32 %s245, %s246
        %s248 = smul.addr %s247, 8
        %s249 = scalar_lea.vmem %s1, %s248
        %s250 = sadd.s32 %s19, 1
        %s251 = smul.u32 %s250, 16
      $region32: #{up_forward.1} parent=23 // pred_fallthru
        _
      // Predicated region
      $region33: #{up_forward.1} parent=23 // pred_check
        %p252 = pneg %p111
      $region34: #{up_forward.1} parent=23 // pred_check_branch
        %254 = sbr.rel (%p252) target = $region36
      $region35: #{up_forward.1} parent=23 // pred_region
        %s255 = sadd.s32 %s19, 1
        %s256 = smul.u32 %s255, 16
        %s257 = sadd.s32 %s256, 1
        %p258 = scmp.lt.s32.totalorder %s18, 1
        %s259 = scalar_select %p258, %s18, 1
        %p260 = scmp.lt.s32.totalorder %s257, 17
        %s261 = scalar_select %p260, %s257, 17
        %s262 = smul.addr %s261, 3
        %s263 = smul.addr %s259, 54
        %s264 = sadd.s32 %s262, %s263
        %s265 = smul.addr %s264, 8
        %s266 = scalar_lea.vmem %s2, %s265
        %s267 = sadd.s32 %s19, 1
        %s268 = smul.u32 %s267, 16
        %s269 = sadd.s32 %s268, 1
      $region36: #{up_forward.1} parent=23 // pred_fallthru
        _
    $region24: #{up_forward.1} parent=5 // pred_fallthru
      _
    %p270 = scmp.le.s32.totalorder 1, %s11
    %p271 = scmp.lt.s32.totalorder %s11, 3
    %p272 = pnand %p270, %p271
    %p273 = pneg %p272
    // Predicated region
    $region37: #{up_forward.1} parent=5 // pred_check
      _
    $region38: #{up_forward.1} parent=5 // pred_check_branch
      %275 = sbr.rel (%p272) target = $region40
    $region39: #{up_forward.1} parent=5 // pred_region
      %s276 = ssub.s32 %s11, 1
      %s277 = smul.u32 16, %s21
      %s278 = ssub.s32 18, %s277
      %p279 = scmp.lt.s32.totalorder %s278, 16
      %s280 = scalar_select %p279, %s278, 16
      %s281 = smul.u32 128, %s280
      %s282 = smul.u32 %s281, 3
      %p283 = scmp.lt.s32.totalorder %s20, 1
      %s284 = scalar_select %p283, %s20, 1
      %p285 = scmp.lt.s32.totalorder %s277, 17
      %s286 = scalar_select %p285, %s277, 17
      %s287 = smul.addr %s286, 3
      %s288 = smul.addr %s284, 54
      %s289 = sadd.s32 %s287, %s288
      %s290 = smul.addr %s289, 8
      %s291 = scalar_lea.vmem %s0, %s290
      %p292 = pneg %p51
      %p293 = pneg %p48
      %s294 = sadd.s32 %s21, 1
      %s295 = smul.u32 %s294, 16
      %p296 = scmp.lt.s32.totalorder %s20, 1
      %s297 = scalar_select %p296, %s20, 1
      %p298 = scmp.lt.s32.totalorder %s295, 17
      %s299 = scalar_select %p298, %s295, 17
      %s300 = smul.addr %s299, 3
      %s301 = smul.addr %s297, 54
      %s302 = sadd.s32 %s300, %s301
      %s303 = smul.addr %s302, 8
      %s304 = scalar_lea.vmem %s1, %s303
      %p305 = pneg %p83
      %p306 = pneg %p80
      %s307 = sadd.s32 %s21, 1
      %s308 = smul.u32 %s307, 16
      %s309 = sadd.s32 %s308, 1
      %p310 = scmp.lt.s32.totalorder %s20, 1
      %s311 = scalar_select %p310, %s20, 1
      %p312 = scmp.lt.s32.totalorder %s309, 17
      %s313 = scalar_select %p312, %s309, 17
      %s314 = smul.addr %s313, 3
      %s315 = smul.addr %s311, 54
      %s316 = sadd.s32 %s314, %s315
      %s317 = smul.addr %s316, 8
      %s318 = scalar_lea.vmem %s2, %s317
      %p319 = pneg %p117
      %p320 = pneg %p114
      %p321 = pneg %p138
      %p322 = pneg %p135
      %p323 = pneg %p159
      %p324 = pneg %p156
      %p325 = pneg %p187
      %p326 = pneg %p184
      %s327 = smul.u32 4, %s20
      %s328 = smul.u32 16, %s21
      %p329 = scmp.lt.s32.totalorder %s327, 7
      %s330 = scalar_select %p329, %s327, 7
      %p331 = scmp.lt.s32.totalorder %s328, 15
      %s332 = scalar_select %p331, %s328, 15
      %s333 = smul.addr %s332, 2
      %s334 = smul.addr %s330, 32
      %s335 = sadd.s32 %s333, %s334
      %s336 = smul.addr %s335, 8
      %s337 = scalar_lea.vmem %s5, %s336
      %s338 = smul.u32 16, %s21
      %s339 = ssub.s32 18, %s338
      %p340 = scmp.lt.s32.totalorder %s339, 16
      %s341 = scalar_select %p340, %s339, 16
      %s342 = smul.u32 128, %s341
      %s343 = smul.u32 %s342, 3
      %p344 = scmp.lt.s32.totalorder %s20, 1
      %s345 = scalar_select %p344, %s20, 1
      %p346 = scmp.lt.s32.totalorder %s338, 17
      %s347 = scalar_select %p346, %s338, 17
      %s348 = smul.addr %s347, 3
      %s349 = smul.addr %s345, 54
      %s350 = sadd.s32 %s348, %s349
      %s351 = smul.addr %s350, 8
      %s352 = scalar_lea.vmem %s0, %s351
      %s353 = smul.u32 16, %s21
      %s354 = ssub.s32 18, %s353
      %p355 = scmp.lt.s32.totalorder %s354, 16
      %s356 = scalar_select %p355, %s354, 16
      %s357 = smul.u32 128, %s356
      %s358 = smul.u32 %s357, 3
      %s359 = sadd.s32 %s21, 1
      %s360 = smul.u32 %s359, 16
      %p361 = scmp.lt.s32.totalorder %s20, 1
      %s362 = scalar_select %p361, %s20, 1
      %p363 = scmp.lt.s32.totalorder %s360, 17
      %s364 = scalar_select %p363, %s360, 17
      %s365 = smul.addr %s364, 3
      %s366 = smul.addr %s362, 54
      %s367 = sadd.s32 %s365, %s366
      %s368 = smul.addr %s367, 8
      %s369 = scalar_lea.vmem %s1, %s368
      %s370 = sadd.s32 %s21, 1
      %s371 = smul.u32 %s370, 16
      %s372 = sadd.s32 %s21, 1
      %s373 = smul.u32 %s372, 16
      %s374 = sadd.s32 %s373, 1
      %p375 = scmp.lt.s32.totalorder %s20, 1
      %s376 = scalar_select %p375, %s20, 1
      %p377 = scmp.lt.s32.totalorder %s374, 17
      %s378 = scalar_select %p377, %s374, 17
      %s379 = smul.addr %s378, 3
      %s380 = smul.addr %s376, 54
      %s381 = sadd.s32 %s379, %s380
      %s382 = smul.addr %s381, 8
      %s383 = scalar_lea.vmem %s2, %s382
      %s384 = sadd.s32 %s21, 1
      %s385 = smul.u32 %s384, 16
      %s386 = sadd.s32 %s385, 1
      %s387 = smul.u32 4, %s20
      %s388 = smul.u32 16, %s21
      %p389 = scmp.lt.s32.totalorder %s387, 7
      %s390 = scalar_select %p389, %s387, 7
      %p391 = scmp.lt.s32.totalorder %s388, 15
      %s392 = scalar_select %p391, %s388, 15
      %s393 = smul.addr %s392, 2
      %s394 = smul.addr %s390, 32
      %s395 = sadd.s32 %s393, %s394
      %s396 = smul.addr %s395, 8
      %s397 = scalar_lea.vmem %s5, %s396
      %s398 = smul.u32 4, %s20
      %s399 = smul.u32 16, %s21
      %v400 = vld [vmem:[%s4] sm:$0x1]
      %v401 = vld [vmem:[%s352] sm:$0xff]
      %v402 = vld [vmem:[%s352 + $0x8] sm:$0xff]
      %v403 = vld [vmem:[%s352 + $0x10] sm:$0x3]
      %v404 = vld [vmem:[%s352 + $0x18] sm:$0xff]
      %v405 = vld [vmem:[%s352 + $0x20] sm:$0xff]
      %v406 = vld [vmem:[%s352 + $0x28] sm:$0x3]
      %v407 = vld [vmem:[%s352 + $0x30] sm:$0xff]
      %v408 = vld [vmem:[%s352 + $0x38] sm:$0xff]
      %v409 = vld [vmem:[%s352 + $0x40] sm:$0x3]
      %v410 = vld [vmem:[%s352 + $0x48] sm:$0xff]
      %v411 = vld [vmem:[%s352 + $0x50] sm:$0xff]
      %v412 = vld [vmem:[%s352 + $0x58] sm:$0x3]
      %v413 = vld [vmem:[%s352 + $0x60] sm:$0xff]
      %v414 = vld [vmem:[%s352 + $0x68] sm:$0xff]
      %v415 = vld [vmem:[%s352 + $0x70] sm:$0x3]
      %v416 = vld [vmem:[%s352 + $0x78] sm:$0xff]
      %v417 = vld [vmem:[%s352 + $0x80] sm:$0xff]
      %v418 = vld [vmem:[%s352 + $0x88] sm:$0x3]
      %v419 = vld [vmem:[%s352 + $0x90] sm:$0xff]
      %v420 = vld [vmem:[%s352 + $0x98] sm:$0xff]
      %v421 = vld [vmem:[%s352 + $0xa0] sm:$0x3]
      %v422 = vld [vmem:[%s352 + $0xa8] sm:$0xff]
      %v423 = vld [vmem:[%s352 + $0xb0] sm:$0xff]
      %v424 = vld [vmem:[%s352 + $0xb8] sm:$0x3]
      %v425 = vld [vmem:[%s352 + $0xc0] sm:$0xff]
      %v426 = vld [vmem:[%s352 + $0xc8] sm:$0xff]
      %v427 = vld [vmem:[%s352 + $0xd0] sm:$0x3]
      %v428 = vld [vmem:[%s352 + $0xd8] sm:$0xff]
      %v429 = vld [vmem:[%s352 + $0xe0] sm:$0xff]
      %v430 = vld [vmem:[%s352 + $0xe8] sm:$0x3]
      %v431 = vld [vmem:[%s352 + $0xf0] sm:$0xff]
      %v432 = vld [vmem:[%s352 + $0xf8] sm:$0xff]
      %v433 = vld [vmem:[%s352 + $0x100] sm:$0x3]
      %v434 = vld [vmem:[%s352 + $0x108] sm:$0xff]
      %v435 = vld [vmem:[%s352 + $0x110] sm:$0xff]
      %v436 = vld [vmem:[%s352 + $0x118] sm:$0x3]
      %v437 = vld [vmem:[%s352 + $0x120] sm:$0xff]
      %v438 = vld [vmem:[%s352 + $0x128] sm:$0xff]
      %v439 = vld [vmem:[%s352 + $0x130] sm:$0x3]
      %v440 = vld [vmem:[%s352 + $0x138] sm:$0xff]
      %v441 = vld [vmem:[%s352 + $0x140] sm:$0xff]
      %v442 = vld [vmem:[%s352 + $0x148] sm:$0x3]
      %v443 = vld [vmem:[%s352 + $0x150] sm:$0xff]
      %v444 = vld [vmem:[%s352 + $0x158] sm:$0xff]
      %v445 = vld [vmem:[%s352 + $0x160] sm:$0x3]
      %v446 = vld [vmem:[%s352 + $0x168] sm:$0xff]
      %v447 = vld [vmem:[%s352 + $0x170] sm:$0xff]
      %v448 = vld [vmem:[%s352 + $0x178] sm:$0x3]
      %v449 = vld [vmem:[%s369] sm:$0xff]
      %v450 = vld [vmem:[%s369 + $0x8] sm:$0xff]
      %v451 = vld [vmem:[%s369 + $0x10] sm:$0x3]
      %v452 = vld [vmem:[%s383] sm:$0xff]
      %v453 = vld [vmem:[%s383 + $0x8] sm:$0xff]
      %v454 = vld [vmem:[%s383 + $0x10] sm:$0x3]
      %vm455 = vcmask 64512
      %456 = vst.msk [vmem:[#allocation2] sm:$0xff] %vm455, %v401
      %457 = vst.msk [vmem:[#allocation2 + $0x8] sm:$0xff] %vm455, %v402
      %458 = vst.msk [vmem:[#allocation2 + $0x10] sm:$0xff] %vm455, %v404
      %459 = vst.msk [vmem:[#allocation2 + $0x18] sm:$0xff] %vm455, %v405
      %460 = vst.msk [vmem:[#allocation2 + $0x20] sm:$0xff] %vm455, %v407
      %461 = vst.msk [vmem:[#allocation2 + $0x28] sm:$0xff] %vm455, %v408
      %462 = vst.msk [vmem:[#allocation2 + $0x30] sm:$0xff] %vm455, %v410
      %463 = vst.msk [vmem:[#allocation2 + $0x38] sm:$0xff] %vm455, %v411
      %464 = vst.msk [vmem:[#allocation2 + $0x40] sm:$0xff] %vm455, %v413
      %465 = vst.msk [vmem:[#allocation2 + $0x48] sm:$0xff] %vm455, %v414
      %466 = vst.msk [vmem:[#allocation2 + $0x50] sm:$0xff] %vm455, %v416
      %467 = vst.msk [vmem:[#allocation2 + $0x58] sm:$0xff] %vm455, %v417
      %468 = vst.msk [vmem:[#allocation2 + $0x60] sm:$0xff] %vm455, %v419
      %469 = vst.msk [vmem:[#allocation2 + $0x68] sm:$0xff] %vm455, %v420
      %470 = vst.msk [vmem:[#allocation2 + $0x70] sm:$0xff] %vm455, %v422
      %471 = vst.msk [vmem:[#allocation2 + $0x78] sm:$0xff] %vm455, %v423
      %472 = vst.msk [vmem:[#allocation2 + $0x80] sm:$0xff] %vm455, %v425
      %473 = vst.msk [vmem:[#allocation2 + $0x88] sm:$0xff] %vm455, %v426
      %474 = vst.msk [vmem:[#allocation2 + $0x90] sm:$0xff] %vm455, %v428
      %475 = vst.msk [vmem:[#allocation2 + $0x98] sm:$0xff] %vm455, %v429
      %476 = vst.msk [vmem:[#allocation2 + $0xa0] sm:$0xff] %vm455, %v431
      %477 = vst.msk [vmem:[#allocation2 + $0xa8] sm:$0xff] %vm455, %v432
      %478 = vst.msk [vmem:[#allocation2 + $0xb0] sm:$0xff] %vm455, %v434
      %479 = vst.msk [vmem:[#allocation2 + $0xb8] sm:$0xff] %vm455, %v435
      %480 = vst.msk [vmem:[#allocation2 + $0xc0] sm:$0xff] %vm455, %v437
      %481 = vst.msk [vmem:[#allocation2 + $0xc8] sm:$0xff] %vm455, %v438
      %482 = vst.msk [vmem:[#allocation2 + $0xd0] sm:$0xff] %vm455, %v440
      %483 = vst.msk [vmem:[#allocation2 + $0xd8] sm:$0xff] %vm455, %v441
      %484 = vst.msk [vmem:[#allocation2 + $0xe0] sm:$0xff] %vm455, %v443
      %485 = vst.msk [vmem:[#allocation2 + $0xe8] sm:$0xff] %vm455, %v444
      %486 = vst.msk [vmem:[#allocation2 + $0xf0] sm:$0xff] %vm455, %v446
      %487 = vst.msk [vmem:[#allocation2 + $0xf8] sm:$0xff] %vm455, %v447
      %488 = vst.msk [vmem:[#allocation2 + $0x100] sm:$0xff] %vm455, %v449
      %489 = vst.msk [vmem:[#allocation2 + $0x108] sm:$0xff] %vm455, %v450
      %490 = vst.msk [vmem:[#allocation2 + $0x110] sm:$0xff] %vm455, %v452
      %491 = vst.msk [vmem:[#allocation2 + $0x118] sm:$0xff] %vm455, %v453
      %vm540 = vcmask 1046528
      %v541 = vrot.slane %v401, 1
      %v542 = vrot.slane %v402, 1
      %v543 = vsel %vm540, %v541, %v542
      %v544 = vrot.slane %v403, 1
      %v545 = vsel %vm540, %v542, %v544
      %v546 = vrot.slane %v404, 1
      %v547 = vrot.slane %v405, 1
      %v548 = vsel %vm540, %v546, %v547
      %v549 = vrot.slane %v406, 1
      %v550 = vsel %vm540, %v547, %v549
      %v551 = vrot.slane %v407, 1
      %v552 = vrot.slane %v408, 1
      %v553 = vsel %vm540, %v551, %v552
      %v554 = vrot.slane %v409, 1
      %v555 = vsel %vm540, %v552, %v554
      %v556 = vrot.slane %v410, 1
      %v557 = vrot.slane %v411, 1
      %v558 = vsel %vm540, %v556, %v557
      %v559 = vrot.slane %v412, 1
      %v560 = vsel %vm540, %v557, %v559
      %v561 = vrot.slane %v413, 1
      %v562 = vrot.slane %v414, 1
      %v563 = vsel %vm540, %v561, %v562
      %v564 = vrot.slane %v415, 1
      %v565 = vsel %vm540, %v562, %v564
      %v566 = vrot.slane %v416, 1
      %v567 = vrot.slane %v417, 1
      %v568 = vsel %vm540, %v566, %v567
      %v569 = vrot.slane %v418, 1
      %v570 = vsel %vm540, %v567, %v569
      %v571 = vrot.slane %v419, 1
      %v572 = vrot.slane %v420, 1
      %v573 = vsel %vm540, %v571, %v572
      %v574 = vrot.slane %v421, 1
      %v575 = vsel %vm540, %v572, %v574
      %v576 = vrot.slane %v422, 1
      %v577 = vrot.slane %v423, 1
      %v578 = vsel %vm540, %v576, %v577
      %v579 = vrot.slane %v424, 1
      %v580 = vsel %vm540, %v577, %v579
      %v581 = vrot.slane %v425, 1
      %v582 = vrot.slane %v426, 1
      %v583 = vsel %vm540, %v581, %v582
      %v584 = vrot.slane %v427, 1
      %v585 = vsel %vm540, %v582, %v584
      %v586 = vrot.slane %v428, 1
      %v587 = vrot.slane %v429, 1
      %v588 = vsel %vm540, %v586, %v587
      %v589 = vrot.slane %v430, 1
      %v590 = vsel %vm540, %v587, %v589
      %v591 = vrot.slane %v431, 1
      %v592 = vrot.slane %v432, 1
      %v593 = vsel %vm540, %v591, %v592
      %v594 = vrot.slane %v433, 1
      %v595 = vsel %vm540, %v592, %v594
      %v596 = vrot.slane %v434, 1
      %v597 = vrot.slane %v435, 1
      %v598 = vsel %vm540, %v596, %v597
      %v599 = vrot.slane %v436, 1
      %v600 = vsel %vm540, %v597, %v599
      %v601 = vrot.slane %v437, 1
      %v602 = vrot.slane %v438, 1
      %v603 = vsel %vm540, %v601, %v602
      %v604 = vrot.slane %v439, 1
      %v605 = vsel %vm540, %v602, %v604
      %v606 = vrot.slane %v440, 1
      %v607 = vrot.slane %v441, 1
      %v608 = vsel %vm540, %v606, %v607
      %v609 = vrot.slane %v442, 1
      %v610 = vsel %vm540, %v607, %v609
      %v611 = vrot.slane %v443, 1
      %v612 = vrot.slane %v444, 1
      %v613 = vsel %vm540, %v611, %v612
      %v614 = vrot.slane %v445, 1
      %v615 = vsel %vm540, %v612, %v614
      %v616 = vrot.slane %v446, 1
      %v617 = vrot.slane %v447, 1
      %v618 = vsel %vm540, %v616, %v617
      %v619 = vrot.slane %v448, 1
      %v620 = vsel %vm540, %v617, %v619
      %s653 = scalar_lea.vmem [#allocation2], 288
      %654 = vst.msk [vmem:[%s653] sm:$0xff] %vm455, %v543
      %655 = vst.msk [vmem:[%s653 + $0x8] sm:$0xff] %vm455, %v545
      %656 = vst.msk [vmem:[%s653 + $0x10] sm:$0xff] %vm455, %v548
      %657 = vst.msk [vmem:[%s653 + $0x18] sm:$0xff] %vm455, %v550
      %658 = vst.msk [vmem:[%s653 + $0x20] sm:$0xff] %vm455, %v553
      %659 = vst.msk [vmem:[%s653 + $0x28] sm:$0xff] %vm455, %v555
      %660 = vst.msk [vmem:[%s653 + $0x30] sm:$0xff] %vm455, %v558
      %661 = vst.msk [vmem:[%s653 + $0x38] sm:$0xff] %vm455, %v560
      %662 = vst.msk [vmem:[%s653 + $0x40] sm:$0xff] %vm455, %v563
      %663 = vst.msk [vmem:[%s653 + $0x48] sm:$0xff] %vm455, %v565
      %664 = vst.msk [vmem:[%s653 + $0x50] sm:$0xff] %vm455, %v568
      %665 = vst.msk [vmem:[%s653 + $0x58] sm:$0xff] %vm455, %v570
      %666 = vst.msk [vmem:[%s653 + $0x60] sm:$0xff] %vm455, %v573
      %667 = vst.msk [vmem:[%s653 + $0x68] sm:$0xff] %vm455, %v575
      %668 = vst.msk [vmem:[%s653 + $0x70] sm:$0xff] %vm455, %v578
      %669 = vst.msk [vmem:[%s653 + $0x78] sm:$0xff] %vm455, %v580
      %670 = vst.msk [vmem:[%s653 + $0x80] sm:$0xff] %vm455, %v583
      %671 = vst.msk [vmem:[%s653 + $0x88] sm:$0xff] %vm455, %v585
      %672 = vst.msk [vmem:[%s653 + $0x90] sm:$0xff] %vm455, %v588
      %673 = vst.msk [vmem:[%s653 + $0x98] sm:$0xff] %vm455, %v590
      %674 = vst.msk [vmem:[%s653 + $0xa0] sm:$0xff] %vm455, %v593
      %675 = vst.msk [vmem:[%s653 + $0xa8] sm:$0xff] %vm455, %v595
      %676 = vst.msk [vmem:[%s653 + $0xb0] sm:$0xff] %vm455, %v598
      %677 = vst.msk [vmem:[%s653 + $0xb8] sm:$0xff] %vm455, %v600
      %678 = vst.msk [vmem:[%s653 + $0xc0] sm:$0xff] %vm455, %v603
      %679 = vst.msk [vmem:[%s653 + $0xc8] sm:$0xff] %vm455, %v605
      %680 = vst.msk [vmem:[%s653 + $0xd0] sm:$0xff] %vm455, %v608
      %681 = vst.msk [vmem:[%s653 + $0xd8] sm:$0xff] %vm455, %v610
      %682 = vst.msk [vmem:[%s653 + $0xe0] sm:$0xff] %vm455, %v613
      %683 = vst.msk [vmem:[%s653 + $0xe8] sm:$0xff] %vm455, %v615
      %684 = vst.msk [vmem:[%s653 + $0xf0] sm:$0xff] %vm455, %v618
      %685 = vst.msk [vmem:[%s653 + $0xf8] sm:$0xff] %vm455, %v620
      %vm686 = vcmask 64513
      %687 = vst.msk [vmem:[%s653 + $0xff] sm:$0xfe] %vm686, %v449
      %688 = vst.msk [vmem:[%s653 + $0x107] sm:$0xff] %vm455, %v450
      %vm689 = vcmask 57344
      %690 = vst.msk [vmem:[%s653 + $0x10f] sm:$0x1] %vm689, %v451
      %691 = vst.msk [vmem:[%s653 + $0x10f] sm:$0xfe] %vm686, %v452
      %692 = vst.msk [vmem:[%s653 + $0x117] sm:$0xff] %vm455, %v453
      %693 = vst.msk [vmem:[%s653 + $0x11f] sm:$0x1] %vm689, %v454
      %vm694 = vcmask 1045504
      %v695 = vrot.slane %v401, 2
      %v696 = vrot.slane %v402, 2
      %v697 = vsel %vm694, %v695, %v696
      %v698 = vrot.slane %v403, 2
      %v699 = vsel %vm694, %v696, %v698
      %v700 = vrot.slane %v404, 2
      %v701 = vrot.slane %v405, 2
      %v702 = vsel %vm694, %v700, %v701
      %v703 = vrot.slane %v406, 2
      %v704 = vsel %vm694, %v701, %v703
      %v705 = vrot.slane %v407, 2
      %v706 = vrot.slane %v408, 2
      %v707 = vsel %vm694, %v705, %v706
      %v708 = vrot.slane %v409, 2
      %v709 = vsel %vm694, %v706, %v708
      %v710 = vrot.slane %v410, 2
      %v711 = vrot.slane %v411, 2
      %v712 = vsel %vm694, %v710, %v711
      %v713 = vrot.slane %v412, 2
      %v714 = vsel %vm694, %v711, %v713
      %v715 = vrot.slane %v413, 2
      %v716 = vrot.slane %v414, 2
      %v717 = vsel %vm694, %v715, %v716
      %v718 = vrot.slane %v415, 2
      %v719 = vsel %vm694, %v716, %v718
      %v720 = vrot.slane %v416, 2
      %v721 = vrot.slane %v417, 2
      %v722 = vsel %vm694, %v720, %v721
      %v723 = vrot.slane %v418, 2
      %v724 = vsel %vm694, %v721, %v723
      %v725 = vrot.slane %v419, 2
      %v726 = vrot.slane %v420, 2
      %v727 = vsel %vm694, %v725, %v726
      %v728 = vrot.slane %v421, 2
      %v729 = vsel %vm694, %v726, %v728
      %v730 = vrot.slane %v422, 2
      %v731 = vrot.slane %v423, 2
      %v732 = vsel %vm694, %v730, %v731
      %v733 = vrot.slane %v424, 2
      %v734 = vsel %vm694, %v731, %v733
      %v735 = vrot.slane %v425, 2
      %v736 = vrot.slane %v426, 2
      %v737 = vsel %vm694, %v735, %v736
      %v738 = vrot.slane %v427, 2
      %v739 = vsel %vm694, %v736, %v738
      %v740 = vrot.slane %v428, 2
      %v741 = vrot.slane %v429, 2
      %v742 = vsel %vm694, %v740, %v741
      %v743 = vrot.slane %v430, 2
      %v744 = vsel %vm694, %v741, %v743
      %v745 = vrot.slane %v431, 2
      %v746 = vrot.slane %v432, 2
      %v747 = vsel %vm694, %v745, %v746
      %v748 = vrot.slane %v433, 2
      %v749 = vsel %vm694, %v746, %v748
      %v750 = vrot.slane %v434, 2
      %v751 = vrot.slane %v435, 2
      %v752 = vsel %vm694, %v750, %v751
      %v753 = vrot.slane %v436, 2
      %v754 = vsel %vm694, %v751, %v753
      %v755 = vrot.slane %v437, 2
      %v756 = vrot.slane %v438, 2
      %v757 = vsel %vm694, %v755, %v756
      %v758 = vrot.slane %v439, 2
      %v759 = vsel %vm694, %v756, %v758
      %v760 = vrot.slane %v440, 2
      %v761 = vrot.slane %v441, 2
      %v762 = vsel %vm694, %v760, %v761
      %v763 = vrot.slane %v442, 2
      %v764 = vsel %vm694, %v761, %v763
      %v765 = vrot.slane %v443, 2
      %v766 = vrot.slane %v444, 2
      %v767 = vsel %vm694, %v765, %v766
      %v768 = vrot.slane %v445, 2
      %v769 = vsel %vm694, %v766, %v768
      %v770 = vrot.slane %v446, 2
      %v771 = vrot.slane %v447, 2
      %v772 = vsel %vm694, %v770, %v771
      %v773 = vrot.slane %v448, 2
      %v774 = vsel %vm694, %v771, %v773
      %s807 = scalar_lea.vmem [#allocation2], 576
      %808 = vst.msk [vmem:[%s807] sm:$0xff] %vm455, %v697
      %809 = vst.msk [vmem:[%s807 + $0x8] sm:$0xff] %vm455, %v699
      %810 = vst.msk [vmem:[%s807 + $0x10] sm:$0xff] %vm455, %v702
      %811 = vst.msk [vmem:[%s807 + $0x18] sm:$0xff] %vm455, %v704
      %812 = vst.msk [vmem:[%s807 + $0x20] sm:$0xff] %vm455, %v707
      %813 = vst.msk [vmem:[%s807 + $0x28] sm:$0xff] %vm455, %v709
      %814 = vst.msk [vmem:[%s807 + $0x30] sm:$0xff] %vm455, %v712
      %815 = vst.msk [vmem:[%s807 + $0x38] sm:$0xff] %vm455, %v714
      %816 = vst.msk [vmem:[%s807 + $0x40] sm:$0xff] %vm455, %v717
      %817 = vst.msk [vmem:[%s807 + $0x48] sm:$0xff] %vm455, %v719
      %818 = vst.msk [vmem:[%s807 + $0x50] sm:$0xff] %vm455, %v722
      %819 = vst.msk [vmem:[%s807 + $0x58] sm:$0xff] %vm455, %v724
      %820 = vst.msk [vmem:[%s807 + $0x60] sm:$0xff] %vm455, %v727
      %821 = vst.msk [vmem:[%s807 + $0x68] sm:$0xff] %vm455, %v729
      %822 = vst.msk [vmem:[%s807 + $0x70] sm:$0xff] %vm455, %v732
      %823 = vst.msk [vmem:[%s807 + $0x78] sm:$0xff] %vm455, %v734
      %824 = vst.msk [vmem:[%s807 + $0x80] sm:$0xff] %vm455, %v737
      %825 = vst.msk [vmem:[%s807 + $0x88] sm:$0xff] %vm455, %v739
      %826 = vst.msk [vmem:[%s807 + $0x90] sm:$0xff] %vm455, %v742
      %827 = vst.msk [vmem:[%s807 + $0x98] sm:$0xff] %vm455, %v744
      %828 = vst.msk [vmem:[%s807 + $0xa0] sm:$0xff] %vm455, %v747
      %829 = vst.msk [vmem:[%s807 + $0xa8] sm:$0xff] %vm455, %v749
      %830 = vst.msk [vmem:[%s807 + $0xb0] sm:$0xff] %vm455, %v752
      %831 = vst.msk [vmem:[%s807 + $0xb8] sm:$0xff] %vm455, %v754
      %832 = vst.msk [vmem:[%s807 + $0xc0] sm:$0xff] %vm455, %v757
      %833 = vst.msk [vmem:[%s807 + $0xc8] sm:$0xff] %vm455, %v759
      %834 = vst.msk [vmem:[%s807 + $0xd0] sm:$0xff] %vm455, %v762
      %835 = vst.msk [vmem:[%s807 + $0xd8] sm:$0xff] %vm455, %v764
      %836 = vst.msk [vmem:[%s807 + $0xe0] sm:$0xff] %vm455, %v767
      %837 = vst.msk [vmem:[%s807 + $0xe8] sm:$0xff] %vm455, %v769
      %838 = vst.msk [vmem:[%s807 + $0xf0] sm:$0xff] %vm455, %v772
      %839 = vst.msk [vmem:[%s807 + $0xf8] sm:$0xff] %vm455, %v774
      %vm840 = vcmask 64514
      %841 = vst.msk [vmem:[%s807 + $0xfe] sm:$0xfc] %vm840, %v449
      %842 = vst.msk [vmem:[%s807 + $0x106] sm:$0xff] %vm455, %v450
      %vm843 = vcmask 58368
      %844 = vst.msk [vmem:[%s807 + $0x10e] sm:$0x3] %vm843, %v451
      %845 = vst.msk [vmem:[%s807 + $0x10e] sm:$0xfc] %vm840, %v452
      %846 = vst.msk [vmem:[%s807 + $0x116] sm:$0xff] %vm455, %v453
      %847 = vst.msk [vmem:[%s807 + $0x11e] sm:$0x3] %vm843, %v454
      %v848 = vld [vmem:[#allocation2] sm:$0xff]
      %v849 = vld [vmem:[#allocation2 + $0x8] sm:$0xff]
      %v850 = vld [vmem:[#allocation2 + $0x10] sm:$0xff]
      %v851 = vld [vmem:[#allocation2 + $0x18] sm:$0xff]
      %v852 = vld [vmem:[#allocation2 + $0x20] sm:$0xff]
      %v853 = vld [vmem:[#allocation2 + $0x28] sm:$0xff]
      %v854 = vld [vmem:[#allocation2 + $0x30] sm:$0xff]
      %v855 = vld [vmem:[#allocation2 + $0x38] sm:$0xff]
      %v856 = vld [vmem:[#allocation2 + $0x40] sm:$0xff]
      %v857 = vld [vmem:[#allocation2 + $0x48] sm:$0xff]
      %v858 = vld [vmem:[#allocation2 + $0x50] sm:$0xff]
      %v859 = vld [vmem:[#allocation2 + $0x58] sm:$0xff]
      %v860 = vld [vmem:[#allocation2 + $0x60] sm:$0xff]
      %v861 = vld [vmem:[#allocation2 + $0x68] sm:$0xff]
      %v862 = vld [vmem:[#allocation2 + $0x70] sm:$0xff]
      %v863 = vld [vmem:[#allocation2 + $0x78] sm:$0xff]
      %v864 = vld [vmem:[#allocation2 + $0x80] sm:$0xff]
      %v865 = vld [vmem:[#allocation2 + $0x88] sm:$0xff]
      %v866 = vld [vmem:[#allocation2 + $0x90] sm:$0xff]
      %v867 = vld [vmem:[#allocation2 + $0x98] sm:$0xff]
      %v868 = vld [vmem:[#allocation2 + $0xa0] sm:$0xff]
      %v869 = vld [vmem:[#allocation2 + $0xa8] sm:$0xff]
      %v870 = vld [vmem:[#allocation2 + $0xb0] sm:$0xff]
      %v871 = vld [vmem:[#allocation2 + $0xb8] sm:$0xff]
      %v872 = vld [vmem:[#allocation2 + $0xc0] sm:$0xff]
      %v873 = vld [vmem:[#allocation2 + $0xc8] sm:$0xff]
      %v874 = vld [vmem:[#allocation2 + $0xd0] sm:$0xff]
      %v875 = vld [vmem:[#allocation2 + $0xd8] sm:$0xff]
      %v876 = vld [vmem:[#allocation2 + $0xe0] sm:$0xff]
      %v877 = vld [vmem:[#allocation2 + $0xe8] sm:$0xff]
      %v878 = vld [vmem:[#allocation2 + $0xf0] sm:$0xff]
      %v879 = vld [vmem:[#allocation2 + $0xf8] sm:$0xff]
      %v880 = vld [vmem:[%s3] sm:$0xff]
      %v881 = vld [vmem:[%s653] sm:$0xff]
      %v882 = vld [vmem:[%s653 + $0x8] sm:$0xff]
      %v883 = vld [vmem:[%s653 + $0x10] sm:$0xff]
      %v884 = vld [vmem:[%s653 + $0x18] sm:$0xff]
      %v885 = vld [vmem:[%s653 + $0x20] sm:$0xff]
      %v886 = vld [vmem:[%s653 + $0x28] sm:$0xff]
      %v887 = vld [vmem:[%s653 + $0x30] sm:$0xff]
      %v888 = vld [vmem:[%s653 + $0x38] sm:$0xff]
      %v889 = vld [vmem:[%s653 + $0x40] sm:$0xff]
      %v890 = vld [vmem:[%s653 + $0x48] sm:$0xff]
      %v891 = vld [vmem:[%s653 + $0x50] sm:$0xff]
      %v892 = vld [vmem:[%s653 + $0x58] sm:$0xff]
      %v893 = vld [vmem:[%s653 + $0x60] sm:$0xff]
      %v894 = vld [vmem:[%s653 + $0x68] sm:$0xff]
      %v895 = vld [vmem:[%s653 + $0x70] sm:$0xff]
      %v896 = vld [vmem:[%s653 + $0x78] sm:$0xff]
      %v897 = vld [vmem:[%s653 + $0x80] sm:$0xff]
      %v898 = vld [vmem:[%s653 + $0x88] sm:$0xff]
      %v899 = vld [vmem:[%s653 + $0x90] sm:$0xff]
      %v900 = vld [vmem:[%s653 + $0x98] sm:$0xff]
      %v901 = vld [vmem:[%s653 + $0xa0] sm:$0xff]
      %v902 = vld [vmem:[%s653 + $0xa8] sm:$0xff]
      %v903 = vld [vmem:[%s653 + $0xb0] sm:$0xff]
      %v904 = vld [vmem:[%s653 + $0xb8] sm:$0xff]
      %v905 = vld [vmem:[%s653 + $0xc0] sm:$0xff]
      %v906 = vld [vmem:[%s653 + $0xc8] sm:$0xff]
      %v907 = vld [vmem:[%s653 + $0xd0] sm:$0xff]
      %v908 = vld [vmem:[%s653 + $0xd8] sm:$0xff]
      %v909 = vld [vmem:[%s653 + $0xe0] sm:$0xff]
      %v910 = vld [vmem:[%s653 + $0xe8] sm:$0xff]
      %v911 = vld [vmem:[%s653 + $0xf0] sm:$0xff]
      %v912 = vld [vmem:[%s653 + $0xf8] sm:$0xff]
      %s913 = scalar_lea.vmem %s3, 8
      %v914 = vld [vmem:[%s913] sm:$0xff]
      %v916 = vsel %vm455, %v881, 0
      %v919 = vsel %vm455, %v882, 0
      %v922 = vsel %vm455, %v883, 0
      %v925 = vsel %vm455, %v884, 0
      %v928 = vsel %vm455, %v885, 0
      %v931 = vsel %vm455, %v886, 0
      %v934 = vsel %vm455, %v887, 0
      %v937 = vsel %vm455, %v888, 0
      %v940 = vsel %vm455, %v889, 0
      %v943 = vsel %vm455, %v890, 0
      %v946 = vsel %vm455, %v891, 0
      %v949 = vsel %vm455, %v892, 0
      %v952 = vsel %vm455, %v893, 0
      %v955 = vsel %vm455, %v894, 0
      %v958 = vsel %vm455, %v895, 0
      %v961 = vsel %vm455, %v896, 0
      %v964 = vsel %vm455, %v897, 0
      %v967 = vsel %vm455, %v898, 0
      %v970 = vsel %vm455, %v899, 0
      %v973 = vsel %vm455, %v900, 0
      %v976 = vsel %vm455, %v901, 0
      %v979 = vsel %vm455, %v902, 0
      %v982 = vsel %vm455, %v903, 0
      %v985 = vsel %vm455, %v904, 0
      %v988 = vsel %vm455, %v905, 0
      %v991 = vsel %vm455, %v906, 0
      %v994 = vsel %vm455, %v907, 0
      %v997 = vsel %vm455, %v908, 0
      %v1000 = vsel %vm455, %v909, 0
      %v1003 = vsel %vm455, %v910, 0
      %v1006 = vsel %vm455, %v911, 0
      %v1009 = vsel %vm455, %v912, 0
      %1011 = vmatprep.subr.mxu0 0.0
      %1012 = vmatpush1.msra.mxu0 %v914
      %1013 = vmatprep.subr.mxu0 0.0
      %1014 = vmatpush1.msra.mxu0 0.0
      %1015 = vmatprep.subr.mxu0 0.0
      %1016 = vmatpush1.msra.mxu0 0.0
      %1017 = vmatprep.subr.mxu0 0.0
      %1018 = vmatpush1.msra.mxu0 0.0
      %1019 = vmatprep.subr.mxu0 0.0
      %1020 = vmatpush1.msra.mxu0 0.0
      %1021 = vmatprep.subr.mxu0 0.0
      %1022 = vmatpush1.msra.mxu0 0.0
      %1023 = vmatprep.subr.mxu0 0.0
      %1024 = vmatpush1.msra.mxu0 0.0
      %1025 = vmatprep.subr.mxu0 0.0
      %1026 = vmatpush1.msra.mxu0 0.0
      %1027 = vmatprep.subr.mxu0 0.0
      %1028 = vmatpush1.msra.mxu0 0.0
      %1029 = vmatprep.subr.mxu0 0.0
      %1030 = vmatpush1.msra.mxu0 0.0
      %1031 = vmatprep.subr.mxu0 0.0
      %1032 = vmatpush1.msra.mxu0 0.0
      %1033 = vmatprep.subr.mxu0 0.0
      %1034 = vmatpush1.msra.mxu0 0.0
      %1035 = vmatprep.subr.mxu0 0.0
      %1036 = vmatpush1.msra.mxu0 0.0
      %1037 = vmatprep.subr.mxu0 0.0
      %1038 = vmatpush1.msra.mxu0 0.0
      %1039 = vmatprep.subr.mxu0 0.0
      %1040 = vmatpush1.msra.mxu0 0.0
      %1041 = vmatprep.subr.mxu0 0.0
      %1042 = vmatpush1.msra.mxu0 0.0
      %1043 = vmatprep.subr.mxu0 0.0
      %1044 = vmatpush1.msra.mxu0 0.0
      %1045 = vmatprep.subr.mxu0 0.0
      %1046 = vmatpush1.msra.mxu0 0.0
      %1047 = vmatprep.subr.mxu0 0.0
      %1048 = vmatpush1.msra.mxu0 0.0
      %1049 = vmatprep.subr.mxu0 0.0
      %1050 = vmatpush1.msra.mxu0 0.0
      %1051 = vmatprep.subr.mxu0 0.0
      %1052 = vmatpush1.msra.mxu0 0.0
      %1053 = vmatprep.subr.mxu0 0.0
      %1054 = vmatpush1.msra.mxu0 0.0
      %1055 = vmatprep.subr.mxu0 0.0
      %1056 = vmatpush1.msra.mxu0 0.0
      %1057 = vmatprep.subr.mxu0 0.0
      %1058 = vmatpush1.msra.mxu0 0.0
      %1059 = vmatprep.subr.mxu0 0.0
      %1060 = vmatpush1.msra.mxu0 0.0
      %1061 = vmatprep.subr.mxu0 0.0
      %1062 = vmatpush1.msra.mxu0 0.0
      %1063 = vmatprep.subr.mxu0 0.0
      %1064 = vmatpush1.msra.mxu0 0.0
      %1065 = vmatprep.subr.mxu0 0.0
      %1066 = vmatpush1.msra.mxu0 0.0
      %1067 = vmatprep.subr.mxu0 0.0
      %1068 = vmatpush1.msra.mxu0 0.0
      %1069 = vmatprep.subr.mxu0 0.0
      %1070 = vmatpush1.msra.mxu0 0.0
      %1071 = vmatprep.subr.mxu0 0.0
      %1072 = vmatpush1.msra.mxu0 0.0
      %1073 = vmatprep.subr.mxu0 0.0
      %1074 = vmatpush1.msra.mxu0 0.0
      %1075 = vmatprep.mubr.f32.mxu0 0.0
      %1076 = vmatmul.mubr.f32.gmra.mrb[0].mxu0 %v916
      %v1077 = vpop.f32.mrb[0].mxu0
      %v1078 = vadd.f32 0.0, %v1077
      %v1079 = vpop.f32.mrb[0].mxu0
      %1080 = vmatprep.mubr.f32.mxu0 0.0
      %1081 = vmatmul.mubr.f32.gmra.mrb[0].mxu0 %v919
      %v1082 = vpop.f32.mrb[0].mxu0
      %v1083 = vadd.f32 0.0, %v1082
      %v1084 = vpop.f32.mrb[0].mxu0
      %1085 = vmatprep.mubr.f32.mxu0 0.0
      %1086 = vmatmul.mubr.f32.gmra.mrb[0].mxu0 %v922
      %v1087 = vpop.f32.mrb[0].mxu0
      %v1088 = vadd.f32 0.0, %v1087
      %v1089 = vpop.f32.mrb[0].mxu0
      %1090 = vmatprep.mubr.f32.mxu0 0.0
      %1091 = vmatmul.mubr.f32.gmra.mrb[0].mxu0 %v925
      %v1092 = vpop.f32.mrb[0].mxu0
      %v1093 = vadd.f32 0.0, %v1092
      %v1094 = vpop.f32.mrb[0].mxu0
      %1095 = vmatprep.mubr.f32.mxu0 0.0
      %1096 = vmatmul.mubr.f32.gmra.mrb[0].mxu0 %v928
      %v1097 = vpop.f32.mrb[0].mxu0
      %v1098 = vadd.f32 0.0, %v1097
      %v1099 = vpop.f32.mrb[0].mxu0
      %1100 = vmatprep.mubr.f32.mxu0 0.0
      %1101 = vmatmul.mubr.f32.gmra.mrb[0].mxu0 %v931
      %v1102 = vpop.f32.mrb[0].mxu0
      %v1103 = vadd.f32 0.0, %v1102
      %v1104 = vpop.f32.mrb[0].mxu0
      %1105 = vmatprep.mubr.f32.mxu0 0.0
      %1106 = vmatmul.mubr.f32.gmra.mrb[0].mxu0 %v934
      %v1107 = vpop.f32.mrb[0].mxu0
      %v1108 = vadd.f32 0.0, %v1107
      %v1109 = vpop.f32.mrb[0].mxu0
      %1110 = vmatprep.mubr.f32.mxu0 0.0
      %1111 = vmatmul.mubr.f32.gmra.mrb[0].mxu0 %v937
      %v1112 = vpop.f32.mrb[0].mxu0
      %v1113 = vadd.f32 0.0, %v1112
      %v1114 = vpop.f32.mrb[0].mxu0
      %1115 = vmatprep.mubr.f32.mxu0 0.0
      %1116 = vmatmul.mubr.f32.gmra.mrb[0].mxu0 %v940
      %v1117 = vpop.f32.mrb[0].mxu0
      %v1118 = vadd.f32 0.0, %v1117
      %v1119 = vpop.f32.mrb[0].mxu0
      %1120 = vmatprep.mubr.f32.mxu0 0.0
      %1121 = vmatmul.mubr.f32.gmra.mrb[0].mxu0 %v943
      %v1122 = vpop.f32.mrb[0].mxu0
      %v1123 = vadd.f32 0.0, %v1122
      %v1124 = vpop.f32.mrb[0].mxu0
      %1125 = vmatprep.mubr.f32.mxu0 0.0
      %1126 = vmatmul.mubr.f32.gmra.mrb[0].mxu0 %v946
      %v1127 = vpop.f32.mrb[0].mxu0
      %v1128 = vadd.f32 0.0, %v1127
      %v1129 = vpop.f32.mrb[0].mxu0
      %1130 = vmatprep.mubr.f32.mxu0 0.0
      %1131 = vmatmul.mubr.f32.gmra.mrb[0].mxu0 %v949
      %v1132 = vpop.f32.mrb[0].mxu0
      %v1133 = vadd.f32 0.0, %v1132
      %v1134 = vpop.f32.mrb[0].mxu0
      %1135 = vmatprep.mubr.f32.mxu0 0.0
      %1136 = vmatmul.mubr.f32.gmra.mrb[0].mxu0 %v952
      %v1137 = vpop.f32.mrb[0].mxu0
      %v1138 = vadd.f32 0.0, %v1137
      %v1139 = vpop.f32.mrb[0].mxu0
      %1140 = vmatprep.mubr.f32.mxu0 0.0
      %1141 = vmatmul.mubr.f32.gmra.mrb[0].mxu0 %v955
      %v1142 = vpop.f32.mrb[0].mxu0
      %v1143 = vadd.f32 0.0, %v1142
      %v1144 = vpop.f32.mrb[0].mxu0
      %1145 = vmatprep.mubr.f32.mxu0 0.0
      %1146 = vmatmul.mubr.f32.gmra.mrb[0].mxu0 %v958
      %v1147 = vpop.f32.mrb[0].mxu0
      %v1148 = vadd.f32 0.0, %v1147
      %v1149 = vpop.f32.mrb[0].mxu0
      %1150 = vmatprep.mubr.f32.mxu0 0.0
      %1151 = vmatmul.mubr.f32.gmra.mrb[0].mxu0 %v961
      %v1152 = vpop.f32.mrb[0].mxu0
      %v1153 = vadd.f32 0.0, %v1152
      %v1154 = vpop.f32.mrb[0].mxu0
      %1155 = vmatprep.mubr.f32.mxu0 0.0
      %1156 = vmatmul.mubr.f32.gmra.mrb[0].mxu0 %v964
      %v1157 = vpop.f32.mrb[0].mxu0
      %v1158 = vadd.f32 0.0, %v1157
      %v1159 = vpop.f32.mrb[0].mxu0
      %1160 = vmatprep.mubr.f32.mxu0 0.0
      %1161 = vmatmul.mubr.f32.gmra.mrb[0].mxu0 %v967
      %v1162 = vpop.f32.mrb[0].mxu0
      %v1163 = vadd.f32 0.0, %v1162
      %v1164 = vpop.f32.mrb[0].mxu0
      %1165 = vmatprep.mubr.f32.mxu0 0.0
      %1166 = vmatmul.mubr.f32.gmra.mrb[0].mxu0 %v970
      %v1167 = vpop.f32.mrb[0].mxu0
      %v1168 = vadd.f32 0.0, %v1167
      %v1169 = vpop.f32.mrb[0].mxu0
      %1170 = vmatprep.mubr.f32.mxu0 0.0
      %1171 = vmatmul.mubr.f32.gmra.mrb[0].mxu0 %v973
      %v1172 = vpop.f32.mrb[0].mxu0
      %v1173 = vadd.f32 0.0, %v1172
      %v1174 = vpop.f32.mrb[0].mxu0
      %1175 = vmatprep.mubr.f32.mxu0 0.0
      %1176 = vmatmul.mubr.f32.gmra.mrb[0].mxu0 %v976
      %v1177 = vpop.f32.mrb[0].mxu0
      %v1178 = vadd.f32 0.0, %v1177
      %v1179 = vpop.f32.mrb[0].mxu0
      %1180 = vmatprep.mubr.f32.mxu0 0.0
      %1181 = vmatmul.mubr.f32.gmra.mrb[0].mxu0 %v979
      %v1182 = vpop.f32.mrb[0].mxu0
      %v1183 = vadd.f32 0.0, %v1182
      %v1184 = vpop.f32.mrb[0].mxu0
      %1185 = vmatprep.mubr.f32.mxu0 0.0
      %1186 = vmatmul.mubr.f32.gmra.mrb[0].mxu0 %v982
      %v1187 = vpop.f32.mrb[0].mxu0
      %v1188 = vadd.f32 0.0, %v1187
      %v1189 = vpop.f32.mrb[0].mxu0
      %1190 = vmatprep.mubr.f32.mxu0 0.0
      %1191 = vmatmul.mubr.f32.gmra.mrb[0].mxu0 %v985
      %v1192 = vpop.f32.mrb[0].mxu0
      %v1193 = vadd.f32 0.0, %v1192
      %v1194 = vpop.f32.mrb[0].mxu0
      %1195 = vmatprep.mubr.f32.mxu0 0.0
      %1196 = vmatmul.mubr.f32.gmra.mrb[0].mxu0 %v988
      %v1197 = vpop.f32.mrb[0].mxu0
      %v1198 = vadd.f32 0.0, %v1197
      %v1199 = vpop.f32.mrb[0].mxu0
      %1200 = vmatprep.mubr.f32.mxu0 0.0
      %1201 = vmatmul.mubr.f32.gmra.mrb[0].mxu0 %v991
      %v1202 = vpop.f32.mrb[0].mxu0
      %v1203 = vadd.f32 0.0, %v1202
      %v1204 = vpop.f32.mrb[0].mxu0
      %1205 = vmatprep.mubr.f32.mxu0 0.0
      %1206 = vmatmul.mubr.f32.gmra.mrb[0].mxu0 %v994
      %v1207 = vpop.f32.mrb[0].mxu0
      %v1208 = vadd.f32 0.0, %v1207
      %v1209 = vpop.f32.mrb[0].mxu0
      %1210 = vmatprep.mubr.f32.mxu0 0.0
      %1211 = vmatmul.mubr.f32.gmra.mrb[0].mxu0 %v997
      %v1212 = vpop.f32.mrb[0].mxu0
      %v1213 = vadd.f32 0.0, %v1212
      %v1214 = vpop.f32.mrb[0].mxu0
      %1215 = vmatprep.mubr.f32.mxu0 0.0
      %1216 = vmatmul.mubr.f32.gmra.mrb[0].mxu0 %v1000
      %v1217 = vpop.f32.mrb[0].mxu0
      %v1218 = vadd.f32 0.0, %v1217
      %v1219 = vpop.f32.mrb[0].mxu0
      %1220 = vmatprep.mubr.f32.mxu0 0.0
      %1221 = vmatmul.mubr.f32.gmra.mrb[0].mxu0 %v1003
      %v1222 = vpop.f32.mrb[0].mxu0
      %v1223 = vadd.f32 0.0, %v1222
      %v1224 = vpop.f32.mrb[0].mxu0
      %1225 = vmatprep.mubr.f32.mxu0 0.0
      %1226 = vmatmul.mubr.f32.gmra.mrb[0].mxu0 %v1006
      %v1227 = vpop.f32.mrb[0].mxu0
      %v1228 = vadd.f32 0.0, %v1227
      %v1229 = vpop.f32.mrb[0].mxu0
      %1230 = vmatprep.mubr.f32.mxu0 0.0
      %1231 = vmatmul.mubr.f32.gmra.mrb[0].mxu0 %v1009
      %v1232 = vpop.f32.mrb[0].mxu0
      %v1233 = vadd.f32 0.0, %v1232
      %v1234 = vpop.f32.mrb[0].mxu0
      %1235 = vdwg.mxu0
      %v1237 = vsel %vm455, %v848, 0
      %v1240 = vsel %vm455, %v849, 0
      %v1243 = vsel %vm455, %v850, 0
      %v1246 = vsel %vm455, %v851, 0
      %v1249 = vsel %vm455, %v852, 0
      %v1252 = vsel %vm455, %v853, 0
      %v1255 = vsel %vm455, %v854, 0
      %v1258 = vsel %vm455, %v855, 0
      %v1261 = vsel %vm455, %v856, 0
      %v1264 = vsel %vm455, %v857, 0
      %v1267 = vsel %vm455, %v858, 0
      %v1270 = vsel %vm455, %v859, 0
      %v1273 = vsel %vm455, %v860, 0
      %v1276 = vsel %vm455, %v861, 0
      %v1279 = vsel %vm455, %v862, 0
      %v1282 = vsel %vm455, %v863, 0
      %v1285 = vsel %vm455, %v864, 0
      %v1288 = vsel %vm455, %v865, 0
      %v1291 = vsel %vm455, %v866, 0
      %v1294 = vsel %vm455, %v867, 0
      %v1297 = vsel %vm455, %v868, 0
      %v1300 = vsel %vm455, %v869, 0
      %v1303 = vsel %vm455, %v870, 0
      %v1306 = vsel %vm455, %v871, 0
      %v1309 = vsel %vm455, %v872, 0
      %v1312 = vsel %vm455, %v873, 0
      %v1315 = vsel %vm455, %v874, 0
      %v1318 = vsel %vm455, %v875, 0
      %v1321 = vsel %vm455, %v876, 0
      %v1324 = vsel %vm455, %v877, 0
      %v1327 = vsel %vm455, %v878, 0
      %v1330 = vsel %vm455, %v879, 0
      %1332 = vmatprep.subr.mxu0 0.0
      %1333 = vmatpush1.msra.mxu0 %v880
      %1334 = vmatprep.subr.mxu0 0.0
      %1335 = vmatpush1.msra.mxu0 0.0
      %1336 = vmatprep.subr.mxu0 0.0
      %1337 = vmatpush1.msra.mxu0 0.0
      %1338 = vmatprep.subr.mxu0 0.0
      %1339 = vmatpush1.msra.mxu0 0.0
      %1340 = vmatprep.subr.mxu0 0.0
      %1341 = vmatpush1.msra.mxu0 0.0
      %1342 = vmatprep.subr.mxu0 0.0
      %1343 = vmatpush1.msra.mxu0 0.0
      %1344 = vmatprep.subr.mxu0 0.0
      %1345 = vmatpush1.msra.mxu0 0.0
      %1346 = vmatprep.subr.mxu0 0.0
      %1347 = vmatpush1.msra.mxu0 0.0
      %1348 = vmatprep.subr.mxu0 0.0
      %1349 = vmatpush1.msra.mxu0 0.0
      %1350 = vmatprep.subr.mxu0 0.0
      %1351 = vmatpush1.msra.mxu0 0.0
      %1352 = vmatprep.subr.mxu0 0.0
      %1353 = vmatpush1.msra.mxu0 0.0
      %1354 = vmatprep.subr.mxu0 0.0
      %1355 = vmatpush1.msra.mxu0 0.0
      %1356 = vmatprep.subr.mxu0 0.0
      %1357 = vmatpush1.msra.mxu0 0.0
      %1358 = vmatprep.subr.mxu0 0.0
      %1359 = vmatpush1.msra.mxu0 0.0
      %1360 = vmatprep.subr.mxu0 0.0
      %1361 = vmatpush1.msra.mxu0 0.0
      %1362 = vmatprep.subr.mxu0 0.0
      %1363 = vmatpush1.msra.mxu0 0.0
      %1364 = vmatprep.subr.mxu0 0.0
      %1365 = vmatpush1.msra.mxu0 0.0
      %1366 = vmatprep.subr.mxu0 0.0
      %1367 = vmatpush1.msra.mxu0 0.0
      %1368 = vmatprep.subr.mxu0 0.0
      %1369 = vmatpush1.msra.mxu0 0.0
      %1370 = vmatprep.subr.mxu0 0.0
      %1371 = vmatpush1.msra.mxu0 0.0
      %1372 = vmatprep.subr.mxu0 0.0
      %1373 = vmatpush1.msra.mxu0 0.0
      %1374 = vmatprep.subr.mxu0 0.0
      %1375 = vmatpush1.msra.mxu0 0.0
      %1376 = vmatprep.subr.mxu0 0.0
      %1377 = vmatpush1.msra.mxu0 0.0
      %1378 = vmatprep.subr.mxu0 0.0
      %1379 = vmatpush1.msra.mxu0 0.0
      %1380 = vmatprep.subr.mxu0 0.0
      %1381 = vmatpush1.msra.mxu0 0.0
      %1382 = vmatprep.subr.mxu0 0.0
      %1383 = vmatpush1.msra.mxu0 0.0
      %1384 = vmatprep.subr.mxu0 0.0
      %1385 = vmatpush1.msra.mxu0 0.0
      %1386 = vmatprep.subr.mxu0 0.0
      %1387 = vmatpush1.msra.mxu0 0.0
      %1388 = vmatprep.subr.mxu0 0.0
      %1389 = vmatpush1.msra.mxu0 0.0
      %1390 = vmatprep.subr.mxu0 0.0
      %1391 = vmatpush1.msra.mxu0 0.0
      %1392 = vmatprep.subr.mxu0 0.0
      %1393 = vmatpush1.msra.mxu0 0.0
      %1394 = vmatprep.subr.mxu0 0.0
      %1395 = vmatpush1.msra.mxu0 0.0
      %1396 = vmatprep.mubr.f32.mxu0 0.0
      %1397 = vmatmul.mubr.f32.gmra.mrb[0].mxu0 %v1237
      %v1398 = vpop.f32.mrb[0].mxu0
      %v1399 = vadd.f32 %v1078, %v1398
      %v1400 = vpop.f32.mrb[0].mxu0
      %1401 = vmatprep.mubr.f32.mxu0 0.0
      %1402 = vmatmul.mubr.f32.gmra.mrb[0].mxu0 %v1240
      %v1403 = vpop.f32.mrb[0].mxu0
      %v1404 = vadd.f32 %v1083, %v1403
      %v1405 = vpop.f32.mrb[0].mxu0
      %1406 = vmatprep.mubr.f32.mxu0 0.0
      %1407 = vmatmul.mubr.f32.gmra.mrb[0].mxu0 %v1243
      %v1408 = vpop.f32.mrb[0].mxu0
      %v1409 = vadd.f32 %v1088, %v1408
      %v1410 = vpop.f32.mrb[0].mxu0
      %1411 = vmatprep.mubr.f32.mxu0 0.0
      %1412 = vmatmul.mubr.f32.gmra.mrb[0].mxu0 %v1246
      %v1413 = vpop.f32.mrb[0].mxu0
      %v1414 = vadd.f32 %v1093, %v1413
      %v1415 = vpop.f32.mrb[0].mxu0
      %1416 = vmatprep.mubr.f32.mxu0 0.0
      %1417 = vmatmul.mubr.f32.gmra.mrb[0].mxu0 %v1249
      %v1418 = vpop.f32.mrb[0].mxu0
      %v1419 = vadd.f32 %v1098, %v1418
      %v1420 = vpop.f32.mrb[0].mxu0
      %1421 = vmatprep.mubr.f32.mxu0 0.0
      %1422 = vmatmul.mubr.f32.gmra.mrb[0].mxu0 %v1252
      %v1423 = vpop.f32.mrb[0].mxu0
      %v1424 = vadd.f32 %v1103, %v1423
      %v1425 = vpop.f32.mrb[0].mxu0
      %1426 = vmatprep.mubr.f32.mxu0 0.0
      %1427 = vmatmul.mubr.f32.gmra.mrb[0].mxu0 %v1255
      %v1428 = vpop.f32.mrb[0].mxu0
      %v1429 = vadd.f32 %v1108, %v1428
      %v1430 = vpop.f32.mrb[0].mxu0
      %1431 = vmatprep.mubr.f32.mxu0 0.0
      %1432 = vmatmul.mubr.f32.gmra.mrb[0].mxu0 %v1258
      %v1433 = vpop.f32.mrb[0].mxu0
      %v1434 = vadd.f32 %v1113, %v1433
      %v1435 = vpop.f32.mrb[0].mxu0
      %1436 = vmatprep.mubr.f32.mxu0 0.0
      %1437 = vmatmul.mubr.f32.gmra.mrb[0].mxu0 %v1261
      %v1438 = vpop.f32.mrb[0].mxu0
      %v1439 = vadd.f32 %v1118, %v1438
      %v1440 = vpop.f32.mrb[0].mxu0
      %1441 = vmatprep.mubr.f32.mxu0 0.0
      %1442 = vmatmul.mubr.f32.gmra.mrb[0].mxu0 %v1264
      %v1443 = vpop.f32.mrb[0].mxu0
      %v1444 = vadd.f32 %v1123, %v1443
      %v1445 = vpop.f32.mrb[0].mxu0
      %1446 = vmatprep.mubr.f32.mxu0 0.0
      %1447 = vmatmul.mubr.f32.gmra.mrb[0].mxu0 %v1267
      %v1448 = vpop.f32.mrb[0].mxu0
      %v1449 = vadd.f32 %v1128, %v1448
      %v1450 = vpop.f32.mrb[0].mxu0
      %1451 = vmatprep.mubr.f32.mxu0 0.0
      %1452 = vmatmul.mubr.f32.gmra.mrb[0].mxu0 %v1270
      %v1453 = vpop.f32.mrb[0].mxu0
      %v1454 = vadd.f32 %v1133, %v1453
      %v1455 = vpop.f32.mrb[0].mxu0
      %1456 = vmatprep.mubr.f32.mxu0 0.0
      %1457 = vmatmul.mubr.f32.gmra.mrb[0].mxu0 %v1273
      %v1458 = vpop.f32.mrb[0].mxu0
      %v1459 = vadd.f32 %v1138, %v1458
      %v1460 = vpop.f32.mrb[0].mxu0
      %1461 = vmatprep.mubr.f32.mxu0 0.0
      %1462 = vmatmul.mubr.f32.gmra.mrb[0].mxu0 %v1276
      %v1463 = vpop.f32.mrb[0].mxu0
      %v1464 = vadd.f32 %v1143, %v1463
      %v1465 = vpop.f32.mrb[0].mxu0
      %1466 = vmatprep.mubr.f32.mxu0 0.0
      %1467 = vmatmul.mubr.f32.gmra.mrb[0].mxu0 %v1279
      %v1468 = vpop.f32.mrb[0].mxu0
      %v1469 = vadd.f32 %v1148, %v1468
      %v1470 = vpop.f32.mrb[0].mxu0
      %1471 = vmatprep.mubr.f32.mxu0 0.0
      %1472 = vmatmul.mubr.f32.gmra.mrb[0].mxu0 %v1282
      %v1473 = vpop.f32.mrb[0].mxu0
      %v1474 = vadd.f32 %v1153, %v1473
      %v1475 = vpop.f32.mrb[0].mxu0
      %1476 = vmatprep.mubr.f32.mxu0 0.0
      %1477 = vmatmul.mubr.f32.gmra.mrb[0].mxu0 %v1285
      %v1478 = vpop.f32.mrb[0].mxu0
      %v1479 = vadd.f32 %v1158, %v1478
      %v1480 = vpop.f32.mrb[0].mxu0
      %1481 = vmatprep.mubr.f32.mxu0 0.0
      %1482 = vmatmul.mubr.f32.gmra.mrb[0].mxu0 %v1288
      %v1483 = vpop.f32.mrb[0].mxu0
      %v1484 = vadd.f32 %v1163, %v1483
      %v1485 = vpop.f32.mrb[0].mxu0
      %1486 = vmatprep.mubr.f32.mxu0 0.0
      %1487 = vmatmul.mubr.f32.gmra.mrb[0].mxu0 %v1291
      %v1488 = vpop.f32.mrb[0].mxu0
      %v1489 = vadd.f32 %v1168, %v1488
      %v1490 = vpop.f32.mrb[0].mxu0
      %1491 = vmatprep.mubr.f32.mxu0 0.0
      %1492 = vmatmul.mubr.f32.gmra.mrb[0].mxu0 %v1294
      %v1493 = vpop.f32.mrb[0].mxu0
      %v1494 = vadd.f32 %v1173, %v1493
      %v1495 = vpop.f32.mrb[0].mxu0
      %1496 = vmatprep.mubr.f32.mxu0 0.0
      %1497 = vmatmul.mubr.f32.gmra.mrb[0].mxu0 %v1297
      %v1498 = vpop.f32.mrb[0].mxu0
      %v1499 = vadd.f32 %v1178, %v1498
      %v1500 = vpop.f32.mrb[0].mxu0
      %1501 = vmatprep.mubr.f32.mxu0 0.0
      %1502 = vmatmul.mubr.f32.gmra.mrb[0].mxu0 %v1300
      %v1503 = vpop.f32.mrb[0].mxu0
      %v1504 = vadd.f32 %v1183, %v1503
      %v1505 = vpop.f32.mrb[0].mxu0
      %1506 = vmatprep.mubr.f32.mxu0 0.0
      %1507 = vmatmul.mubr.f32.gmra.mrb[0].mxu0 %v1303
      %v1508 = vpop.f32.mrb[0].mxu0
      %v1509 = vadd.f32 %v1188, %v1508
      %v1510 = vpop.f32.mrb[0].mxu0
      %1511 = vmatprep.mubr.f32.mxu0 0.0
      %1512 = vmatmul.mubr.f32.gmra.mrb[0].mxu0 %v1306
      %v1513 = vpop.f32.mrb[0].mxu0
      %v1514 = vadd.f32 %v1193, %v1513
      %v1515 = vpop.f32.mrb[0].mxu0
      %1516 = vmatprep.mubr.f32.mxu0 0.0
      %1517 = vmatmul.mubr.f32.gmra.mrb[0].mxu0 %v1309
      %v1518 = vpop.f32.mrb[0].mxu0
      %v1519 = vadd.f32 %v1198, %v1518
      %v1520 = vpop.f32.mrb[0].mxu0
      %1521 = vmatprep.mubr.f32.mxu0 0.0
      %1522 = vmatmul.mubr.f32.gmra.mrb[0].mxu0 %v1312
      %v1523 = vpop.f32.mrb[0].mxu0
      %v1524 = vadd.f32 %v1203, %v1523
      %v1525 = vpop.f32.mrb[0].mxu0
      %1526 = vmatprep.mubr.f32.mxu0 0.0
      %1527 = vmatmul.mubr.f32.gmra.mrb[0].mxu0 %v1315
      %v1528 = vpop.f32.mrb[0].mxu0
      %v1529 = vadd.f32 %v1208, %v1528
      %v1530 = vpop.f32.mrb[0].mxu0
      %1531 = vmatprep.mubr.f32.mxu0 0.0
      %1532 = vmatmul.mubr.f32.gmra.mrb[0].mxu0 %v1318
      %v1533 = vpop.f32.mrb[0].mxu0
      %v1534 = vadd.f32 %v1213, %v1533
      %v1535 = vpop.f32.mrb[0].mxu0
      %1536 = vmatprep.mubr.f32.mxu0 0.0
      %1537 = vmatmul.mubr.f32.gmra.mrb[0].mxu0 %v1321
      %v1538 = vpop.f32.mrb[0].mxu0
      %v1539 = vadd.f32 %v1218, %v1538
      %v1540 = vpop.f32.mrb[0].mxu0
      %1541 = vmatprep.mubr.f32.mxu0 0.0
      %1542 = vmatmul.mubr.f32.gmra.mrb[0].mxu0 %v1324
      %v1543 = vpop.f32.mrb[0].mxu0
      %v1544 = vadd.f32 %v1223, %v1543
      %v1545 = vpop.f32.mrb[0].mxu0
      %1546 = vmatprep.mubr.f32.mxu0 0.0
      %1547 = vmatmul.mubr.f32.gmra.mrb[0].mxu0 %v1327
      %v1548 = vpop.f32.mrb[0].mxu0
      %v1549 = vadd.f32 %v1228, %v1548
      %v1550 = vpop.f32.mrb[0].mxu0
      %1551 = vmatprep.mubr.f32.mxu0 0.0
      %1552 = vmatmul.mubr.f32.gmra.mrb[0].mxu0 %v1330
      %v1553 = vpop.f32.mrb[0].mxu0
      %v1554 = vadd.f32 %v1233, %v1553
      %v1555 = vpop.f32.mrb[0].mxu0
      %1556 = vdwg.mxu0
      %v1557 = vld [vmem:[#allocation2 + $0x10] sm:$0xff]
      %v1558 = vld [vmem:[#allocation2 + $0x18] sm:$0xff]
      %v1559 = vld [vmem:[#allocation2 + $0x20] sm:$0xff]
      %v1560 = vld [vmem:[#allocation2 + $0x28] sm:$0xff]
      %v1561 = vld [vmem:[#allocation2 + $0x30] sm:$0xff]
      %v1562 = vld [vmem:[#allocation2 + $0x38] sm:$0xff]
      %v1563 = vld [vmem:[#allocation2 + $0x40] sm:$0xff]
      %v1564 = vld [vmem:[#allocation2 + $0x48] sm:$0xff]
      %v1565 = vld [vmem:[#allocation2 + $0x50] sm:$0xff]
      %v1566 = vld [vmem:[#allocation2 + $0x58] sm:$0xff]
      %v1567 = vld [vmem:[#allocation2 + $0x60] sm:$0xff]
      %v1568 = vld [vmem:[#allocation2 + $0x68] sm:$0xff]
      %v1569 = vld [vmem:[#allocation2 + $0x70] sm:$0xff]
      %v1570 = vld [vmem:[#allocation2 + $0x78] sm:$0xff]
      %v1571 = vld [vmem:[#allocation2 + $0x80] sm:$0xff]
      %v1572 = vld [vmem:[#allocation2 + $0x88] sm:$0xff]
      %v1573 = vld [vmem:[#allocation2 + $0x90] sm:$0xff]
      %v1574 = vld [vmem:[#allocation2 + $0x98] sm:$0xff]
      %v1575 = vld [vmem:[#allocation2 + $0xa0] sm:$0xff]
      %v1576 = vld [vmem:[#allocation2 + $0xa8] sm:$0xff]
      %v1577 = vld [vmem:[#allocation2 + $0xb0] sm:$0xff]
      %v1578 = vld [vmem:[#allocation2 + $0xb8] sm:$0xff]
      %v1579 = vld [vmem:[#allocation2 + $0xc0] sm:$0xff]
      %v1580 = vld [vmem:[#allocation2 + $0xc8] sm:$0xff]
      %v1581 = vld [vmem:[#allocation2 + $0xd0] sm:$0xff]
      %v1582 = vld [vmem:[#allocation2 + $0xd8] sm:$0xff]
      %v1583 = vld [vmem:[#allocation2 + $0xe0] sm:$0xff]
      %v1584 = vld [vmem:[#allocation2 + $0xe8] sm:$0xff]
      %v1585 = vld [vmem:[#allocation2 + $0xf0] sm:$0xff]
      %v1586 = vld [vmem:[#allocation2 + $0xf8] sm:$0xff]
      %v1587 = vld [vmem:[#allocation2 + $0x100] sm:$0xff]
      %v1588 = vld [vmem:[#allocation2 + $0x108] sm:$0xff]
      %s1589 = scalar_lea.vmem %s3, 16
      %v1590 = vld [vmem:[%s1589] sm:$0xff]
      %v1592 = vsel %vm455, %v1557, 0
      %v1595 = vsel %vm455, %v1558, 0
      %v1598 = vsel %vm455, %v1559, 0
      %v1601 = vsel %vm455, %v1560, 0
      %v1604 = vsel %vm455, %v1561, 0
      %v1607 = vsel %vm455, %v1562, 0
      %v1610 = vsel %vm455, %v1563, 0
      %v1613 = vsel %vm455, %v1564, 0
      %v1616 = vsel %vm455, %v1565, 0
      %v1619 = vsel %vm455, %v1566, 0
      %v1622 = vsel %vm455, %v1567, 0
      %v1625 = vsel %vm455, %v1568, 0
      %v1628 = vsel %vm455, %v1569, 0
      %v1631 = vsel %vm455, %v1570, 0
      %v1634 = vsel %vm455, %v1571, 0
      %v1637 = vsel %vm455, %v1572, 0
      %v1640 = vsel %vm455, %v1573, 0
      %v1643 = vsel %vm455, %v1574, 0
      %v1646 = vsel %vm455, %v1575, 0
      %v1649 = vsel %vm455, %v1576, 0
      %v1652 = vsel %vm455, %v1577, 0
      %v1655 = vsel %vm455, %v1578, 0
      %v1658 = vsel %vm455, %v1579, 0
      %v1661 = vsel %vm455, %v1580, 0
      %v1664 = vsel %vm455, %v1581, 0
      %v1667 = vsel %vm455, %v1582, 0
      %v1670 = vsel %vm455, %v1583, 0
      %v1673 = vsel %vm455, %v1584, 0
      %v1676 = vsel %vm455, %v1585, 0
      %v1679 = vsel %vm455, %v1586, 0
      %v1682 = vsel %vm455, %v1587, 0
      %v1685 = vsel %vm455, %v1588, 0
      %1687 = vmatprep.subr.mxu0 0.0
      %1688 = vmatpush1.msra.mxu0 %v1590
      %1689 = vmatprep.subr.mxu0 0.0
      %1690 = vmatpush1.msra.mxu0 0.0
      %1691 = vmatprep.subr.mxu0 0.0
      %1692 = vmatpush1.msra.mxu0 0.0
      %1693 = vmatprep.subr.mxu0 0.0
      %1694 = vmatpush1.msra.mxu0 0.0
      %1695 = vmatprep.subr.mxu0 0.0
      %1696 = vmatpush1.msra.mxu0 0.0
      %1697 = vmatprep.subr.mxu0 0.0
      %1698 = vmatpush1.msra.mxu0 0.0
      %1699 = vmatprep.subr.mxu0 0.0
      %1700 = vmatpush1.msra.mxu0 0.0
      %1701 = vmatprep.subr.mxu0 0.0
      %1702 = vmatpush1.msra.mxu0 0.0
      %1703 = vmatprep.subr.mxu0 0.0
      %1704 = vmatpush1.msra.mxu0 0.0
      %1705 = vmatprep.subr.mxu0 0.0
      %1706 = vmatpush1.msra.mxu0 0.0
      %1707 = vmatprep.subr.mxu0 0.0
      %1708 = vmatpush1.msra.mxu0 0.0
      %1709 = vmatprep.subr.mxu0 0.0
      %1710 = vmatpush1.msra.mxu0 0.0
      %1711 = vmatprep.subr.mxu0 0.0
      %1712 = vmatpush1.msra.mxu0 0.0
      %1713 = vmatprep.subr.mxu0 0.0
      %1714 = vmatpush1.msra.mxu0 0.0
      %1715 = vmatprep.subr.mxu0 0.0
      %1716 = vmatpush1.msra.mxu0 0.0
      %1717 = vmatprep.subr.mxu0 0.0
      %1718 = vmatpush1.msra.mxu0 0.0
      %1719 = vmatprep.subr.mxu0 0.0
      %1720 = vmatpush1.msra.mxu0 0.0
      %1721 = vmatprep.subr.mxu0 0.0
      %1722 = vmatpush1.msra.mxu0 0.0
      %1723 = vmatprep.subr.mxu0 0.0
      %1724 = vmatpush1.msra.mxu0 0.0
      %1725 = vmatprep.subr.mxu0 0.0
      %1726 = vmatpush1.msra.mxu0 0.0
      %1727 = vmatprep.subr.mxu0 0.0
      %1728 = vmatpush1.msra.mxu0 0.0
      %1729 = vmatprep.subr.mxu0 0.0
      %1730 = vmatpush1.msra.mxu0 0.0
      %1731 = vmatprep.subr.mxu0 0.0
      %1732 = vmatpush1.msra.mxu0 0.0
      %1733 = vmatprep.subr.mxu0 0.0
      %1734 = vmatpush1.msra.mxu0 0.0
      %1735 = vmatprep.subr.mxu0 0.0
      %1736 = vmatpush1.msra.mxu0 0.0
      %1737 = vmatprep.subr.mxu0 0.0
      %1738 = vmatpush1.msra.mxu0 0.0
      %1739 = vmatprep.subr.mxu0 0.0
      %1740 = vmatpush1.msra.mxu0 0.0
      %1741 = vmatprep.subr.mxu0 0.0
      %1742 = vmatpush1.msra.mxu0 0.0
      %1743 = vmatprep.subr.mxu0 0.0
      %1744 = vmatpush1.msra.mxu0 0.0
      %1745 = vmatprep.subr.mxu0 0.0
      %1746 = vmatpush1.msra.mxu0 0.0
      %1747 = vmatprep.subr.mxu0 0.0
      %1748 = vmatpush1.msra.mxu0 0.0
      %1749 = vmatprep.subr.mxu0 0.0
      %1750 = vmatpush1.msra.mxu0 0.0
      %1751 = vmatprep.mubr.f32.mxu0 0.0
      %1752 = vmatmul.mubr.f32.gmra.mrb[0].mxu0 %v1592
      %v1753 = vpop.f32.mrb[0].mxu0
      %v1754 = vadd.f32 0.0, %v1753
      %v1755 = vpop.f32.mrb[0].mxu0
      %1756 = vmatprep.mubr.f32.mxu0 0.0
      %1757 = vmatmul.mubr.f32.gmra.mrb[0].mxu0 %v1595
      %v1758 = vpop.f32.mrb[0].mxu0
      %v1759 = vadd.f32 0.0, %v1758
      %v1760 = vpop.f32.mrb[0].mxu0
      %1761 = vmatprep.mubr.f32.mxu0 0.0
      %1762 = vmatmul.mubr.f32.gmra.mrb[0].mxu0 %v1598
      %v1763 = vpop.f32.mrb[0].mxu0
      %v1764 = vadd.f32 0.0, %v1763
      %v1765 = vpop.f32.mrb[0].mxu0
      %1766 = vmatprep.mubr.f32.mxu0 0.0
      %1767 = vmatmul.mubr.f32.gmra.mrb[0].mxu0 %v1601
      %v1768 = vpop.f32.mrb[0].mxu0
      %v1769 = vadd.f32 0.0, %v1768
      %v1770 = vpop.f32.mrb[0].mxu0
      %1771 = vmatprep.mubr.f32.mxu0 0.0
      %1772 = vmatmul.mubr.f32.gmra.mrb[0].mxu0 %v1604
      %v1773 = vpop.f32.mrb[0].mxu0
      %v1774 = vadd.f32 0.0, %v1773
      %v1775 = vpop.f32.mrb[0].mxu0
      %1776 = vmatprep.mubr.f32.mxu0 0.0
      %1777 = vmatmul.mubr.f32.gmra.mrb[0].mxu0 %v1607
      %v1778 = vpop.f32.mrb[0].mxu0
      %v1779 = vadd.f32 0.0, %v1778
      %v1780 = vpop.f32.mrb[0].mxu0
      %1781 = vmatprep.mubr.f32.mxu0 0.0
      %1782 = vmatmul.mubr.f32.gmra.mrb[0].mxu0 %v1610
      %v1783 = vpop.f32.mrb[0].mxu0
      %v1784 = vadd.f32 0.0, %v1783
      %v1785 = vpop.f32.mrb[0].mxu0
      %1786 = vmatprep.mubr.f32.mxu0 0.0
      %1787 = vmatmul.mubr.f32.gmra.mrb[0].mxu0 %v1613
      %v1788 = vpop.f32.mrb[0].mxu0
      %v1789 = vadd.f32 0.0, %v1788
      %v1790 = vpop.f32.mrb[0].mxu0
      %1791 = vmatprep.mubr.f32.mxu0 0.0
      %1792 = vmatmul.mubr.f32.gmra.mrb[0].mxu0 %v1616
      %v1793 = vpop.f32.mrb[0].mxu0
      %v1794 = vadd.f32 0.0, %v1793
      %v1795 = vpop.f32.mrb[0].mxu0
      %1796 = vmatprep.mubr.f32.mxu0 0.0
      %1797 = vmatmul.mubr.f32.gmra.mrb[0].mxu0 %v1619
      %v1798 = vpop.f32.mrb[0].mxu0
      %v1799 = vadd.f32 0.0, %v1798
      %v1800 = vpop.f32.mrb[0].mxu0
      %1801 = vmatprep.mubr.f32.mxu0 0.0
      %1802 = vmatmul.mubr.f32.gmra.mrb[0].mxu0 %v1622
      %v1803 = vpop.f32.mrb[0].mxu0
      %v1804 = vadd.f32 0.0, %v1803
      %v1805 = vpop.f32.mrb[0].mxu0
      %1806 = vmatprep.mubr.f32.mxu0 0.0
      %1807 = vmatmul.mubr.f32.gmra.mrb[0].mxu0 %v1625
      %v1808 = vpop.f32.mrb[0].mxu0
      %v1809 = vadd.f32 0.0, %v1808
      %v1810 = vpop.f32.mrb[0].mxu0
      %1811 = vmatprep.mubr.f32.mxu0 0.0
      %1812 = vmatmul.mubr.f32.gmra.mrb[0].mxu0 %v1628
      %v1813 = vpop.f32.mrb[0].mxu0
      %v1814 = vadd.f32 0.0, %v1813
      %v1815 = vpop.f32.mrb[0].mxu0
      %1816 = vmatprep.mubr.f32.mxu0 0.0
      %1817 = vmatmul.mubr.f32.gmra.mrb[0].mxu0 %v1631
      %v1818 = vpop.f32.mrb[0].mxu0
      %v1819 = vadd.f32 0.0, %v1818
      %v1820 = vpop.f32.mrb[0].mxu0
      %1821 = vmatprep.mubr.f32.mxu0 0.0
      %1822 = vmatmul.mubr.f32.gmra.mrb[0].mxu0 %v1634
      %v1823 = vpop.f32.mrb[0].mxu0
      %v1824 = vadd.f32 0.0, %v1823
      %v1825 = vpop.f32.mrb[0].mxu0
      %1826 = vmatprep.mubr.f32.mxu0 0.0
      %1827 = vmatmul.mubr.f32.gmra.mrb[0].mxu0 %v1637
      %v1828 = vpop.f32.mrb[0].mxu0
      %v1829 = vadd.f32 0.0, %v1828
      %v1830 = vpop.f32.mrb[0].mxu0
      %1831 = vmatprep.mubr.f32.mxu0 0.0
      %1832 = vmatmul.mubr.f32.gmra.mrb[0].mxu0 %v1640
      %v1833 = vpop.f32.mrb[0].mxu0
      %v1834 = vadd.f32 0.0, %v1833
      %v1835 = vpop.f32.mrb[0].mxu0
      %1836 = vmatprep.mubr.f32.mxu0 0.0
      %1837 = vmatmul.mubr.f32.gmra.mrb[0].mxu0 %v1643
      %v1838 = vpop.f32.mrb[0].mxu0
      %v1839 = vadd.f32 0.0, %v1838
      %v1840 = vpop.f32.mrb[0].mxu0
      %1841 = vmatprep.mubr.f32.mxu0 0.0
      %1842 = vmatmul.mubr.f32.gmra.mrb[0].mxu0 %v1646
      %v1843 = vpop.f32.mrb[0].mxu0
      %v1844 = vadd.f32 0.0, %v1843
      %v1845 = vpop.f32.mrb[0].mxu0
      %1846 = vmatprep.mubr.f32.mxu0 0.0
      %1847 = vmatmul.mubr.f32.gmra.mrb[0].mxu0 %v1649
      %v1848 = vpop.f32.mrb[0].mxu0
      %v1849 = vadd.f32 0.0, %v1848
      %v1850 = vpop.f32.mrb[0].mxu0
      %1851 = vmatprep.mubr.f32.mxu0 0.0
      %1852 = vmatmul.mubr.f32.gmra.mrb[0].mxu0 %v1652
      %v1853 = vpop.f32.mrb[0].mxu0
      %v1854 = vadd.f32 0.0, %v1853
      %v1855 = vpop.f32.mrb[0].mxu0
      %1856 = vmatprep.mubr.f32.mxu0 0.0
      %1857 = vmatmul.mubr.f32.gmra.mrb[0].mxu0 %v1655
      %v1858 = vpop.f32.mrb[0].mxu0
      %v1859 = vadd.f32 0.0, %v1858
      %v1860 = vpop.f32.mrb[0].mxu0
      %1861 = vmatprep.mubr.f32.mxu0 0.0
      %1862 = vmatmul.mubr.f32.gmra.mrb[0].mxu0 %v1658
      %v1863 = vpop.f32.mrb[0].mxu0
      %v1864 = vadd.f32 0.0, %v1863
      %v1865 = vpop.f32.mrb[0].mxu0
      %1866 = vmatprep.mubr.f32.mxu0 0.0
      %1867 = vmatmul.mubr.f32.gmra.mrb[0].mxu0 %v1661
      %v1868 = vpop.f32.mrb[0].mxu0
      %v1869 = vadd.f32 0.0, %v1868
      %v1870 = vpop.f32.mrb[0].mxu0
      %1871 = vmatprep.mubr.f32.mxu0 0.0
      %1872 = vmatmul.mubr.f32.gmra.mrb[0].mxu0 %v1664
      %v1873 = vpop.f32.mrb[0].mxu0
      %v1874 = vadd.f32 0.0, %v1873
      %v1875 = vpop.f32.mrb[0].mxu0
      %1876 = vmatprep.mubr.f32.mxu0 0.0
      %1877 = vmatmul.mubr.f32.gmra.mrb[0].mxu0 %v1667
      %v1878 = vpop.f32.mrb[0].mxu0
      %v1879 = vadd.f32 0.0, %v1878
      %v1880 = vpop.f32.mrb[0].mxu0
      %1881 = vmatprep.mubr.f32.mxu0 0.0
      %1882 = vmatmul.mubr.f32.gmra.mrb[0].mxu0 %v1670
      %v1883 = vpop.f32.mrb[0].mxu0
      %v1884 = vadd.f32 0.0, %v1883
      %v1885 = vpop.f32.mrb[0].mxu0
      %1886 = vmatprep.mubr.f32.mxu0 0.0
      %1887 = vmatmul.mubr.f32.gmra.mrb[0].mxu0 %v1673
      %v1888 = vpop.f32.mrb[0].mxu0
      %v1889 = vadd.f32 0.0, %v1888
      %v1890 = vpop.f32.mrb[0].mxu0
      %1891 = vmatprep.mubr.f32.mxu0 0.0
      %1892 = vmatmul.mubr.f32.gmra.mrb[0].mxu0 %v1676
      %v1893 = vpop.f32.mrb[0].mxu0
      %v1894 = vadd.f32 0.0, %v1893
      %v1895 = vpop.f32.mrb[0].mxu0
      %1896 = vmatprep.mubr.f32.mxu0 0.0
      %1897 = vmatmul.mubr.f32.gmra.mrb[0].mxu0 %v1679
      %v1898 = vpop.f32.mrb[0].mxu0
      %v1899 = vadd.f32 0.0, %v1898
      %v1900 = vpop.f32.mrb[0].mxu0
      %1901 = vmatprep.mubr.f32.mxu0 0.0
      %1902 = vmatmul.mubr.f32.gmra.mrb[0].mxu0 %v1682
      %v1903 = vpop.f32.mrb[0].mxu0
      %v1904 = vadd.f32 0.0, %v1903
      %v1905 = vpop.f32.mrb[0].mxu0
      %1906 = vmatprep.mubr.f32.mxu0 0.0
      %1907 = vmatmul.mubr.f32.gmra.mrb[0].mxu0 %v1685
      %v1908 = vpop.f32.mrb[0].mxu0
      %v1909 = vadd.f32 0.0, %v1908
      %v1910 = vpop.f32.mrb[0].mxu0
      %1911 = vdwg.mxu0
      %v1912 = vadd.f32 %v1399, %v1754
      %v1913 = vadd.f32 %v1404, %v1759
      %v1914 = vadd.f32 %v1409, %v1764
      %v1915 = vadd.f32 %v1414, %v1769
      %v1916 = vadd.f32 %v1419, %v1774
      %v1917 = vadd.f32 %v1424, %v1779
      %v1918 = vadd.f32 %v1429, %v1784
      %v1919 = vadd.f32 %v1434, %v1789
      %v1920 = vadd.f32 %v1439, %v1794
      %v1921 = vadd.f32 %v1444, %v1799
      %v1922 = vadd.f32 %v1449, %v1804
      %v1923 = vadd.f32 %v1454, %v1809
      %v1924 = vadd.f32 %v1459, %v1814
      %v1925 = vadd.f32 %v1464, %v1819
      %v1926 = vadd.f32 %v1469, %v1824
      %v1927 = vadd.f32 %v1474, %v1829
      %v1928 = vadd.f32 %v1479, %v1834
      %v1929 = vadd.f32 %v1484, %v1839
      %v1930 = vadd.f32 %v1489, %v1844
      %v1931 = vadd.f32 %v1494, %v1849
      %v1932 = vadd.f32 %v1499, %v1854
      %v1933 = vadd.f32 %v1504, %v1859
      %v1934 = vadd.f32 %v1509, %v1864
      %v1935 = vadd.f32 %v1514, %v1869
      %v1936 = vadd.f32 %v1519, %v1874
      %v1937 = vadd.f32 %v1524, %v1879
      %v1938 = vadd.f32 %v1529, %v1884
      %v1939 = vadd.f32 %v1534, %v1889
      %v1940 = vadd.f32 %v1539, %v1894
      %v1941 = vadd.f32 %v1544, %v1899
      %v1942 = vadd.f32 %v1549, %v1904
      %v1943 = vadd.f32 %v1554, %v1909
      %v1944 = vld [vmem:[%s653 + $0x10] sm:$0xff]
      %v1945 = vld [vmem:[%s653 + $0x18] sm:$0xff]
      %v1946 = vld [vmem:[%s653 + $0x20] sm:$0xff]
      %v1947 = vld [vmem:[%s653 + $0x28] sm:$0xff]
      %v1948 = vld [vmem:[%s653 + $0x30] sm:$0xff]
      %v1949 = vld [vmem:[%s653 + $0x38] sm:$0xff]
      %v1950 = vld [vmem:[%s653 + $0x40] sm:$0xff]
      %v1951 = vld [vmem:[%s653 + $0x48] sm:$0xff]
      %v1952 = vld [vmem:[%s653 + $0x50] sm:$0xff]
      %v1953 = vld [vmem:[%s653 + $0x58] sm:$0xff]
      %v1954 = vld [vmem:[%s653 + $0x60] sm:$0xff]
      %v1955 = vld [vmem:[%s653 + $0x68] sm:$0xff]
      %v1956 = vld [vmem:[%s653 + $0x70] sm:$0xff]
      %v1957 = vld [vmem:[%s653 + $0x78] sm:$0xff]
      %v1958 = vld [vmem:[%s653 + $0x80] sm:$0xff]
      %v1959 = vld [vmem:[%s653 + $0x88] sm:$0xff]
      %v1960 = vld [vmem:[%s653 + $0x90] sm:$0xff]
      %v1961 = vld [vmem:[%s653 + $0x98] sm:$0xff]
      %v1962 = vld [vmem:[%s653 + $0xa0] sm:$0xff]
      %v1963 = vld [vmem:[%s653 + $0xa8] sm:$0xff]
      %v1964 = vld [vmem:[%s653 + $0xb0] sm:$0xff]
      %v1965 = vld [vmem:[%s653 + $0xb8] sm:$0xff]
      %v1966 = vld [vmem:[%s653 + $0xc0] sm:$0xff]
      %v1967 = vld [vmem:[%s653 + $0xc8] sm:$0xff]
      %v1968 = vld [vmem:[%s653 + $0xd0] sm:$0xff]
      %v1969 = vld [vmem:[%s653 + $0xd8] sm:$0xff]
      %v1970 = vld [vmem:[%s653 + $0xe0] sm:$0xff]
      %v1971 = vld [vmem:[%s653 + $0xe8] sm:$0xff]
      %v1972 = vld [vmem:[%s653 + $0xf0] sm:$0xff]
      %v1973 = vld [vmem:[%s653 + $0xf8] sm:$0xff]
      %v1974 = vld [vmem:[%s653 + $0x100] sm:$0xff]
      %v1975 = vld [vmem:[%s653 + $0x108] sm:$0xff]
      %s1976 = scalar_lea.vmem %s3, 24
      %v1977 = vld [vmem:[%s1976] sm:$0xff]
      %v1979 = vsel %vm455, %v1944, 0
      %v1982 = vsel %vm455, %v1945, 0
      %v1985 = vsel %vm455, %v1946, 0
      %v1988 = vsel %vm455, %v1947, 0
      %v1991 = vsel %vm455, %v1948, 0
      %v1994 = vsel %vm455, %v1949, 0
      %v1997 = vsel %vm455, %v1950, 0
      %v2000 = vsel %vm455, %v1951, 0
      %v2003 = vsel %vm455, %v1952, 0
      %v2006 = vsel %vm455, %v1953, 0
      %v2009 = vsel %vm455, %v1954, 0
      %v2012 = vsel %vm455, %v1955, 0
      %v2015 = vsel %vm455, %v1956, 0
      %v2018 = vsel %vm455, %v1957, 0
      %v2021 = vsel %vm455, %v1958, 0
      %v2024 = vsel %vm455, %v1959, 0
      %v2027 = vsel %vm455, %v1960, 0
      %v2030 = vsel %vm455, %v1961, 0
      %v2033 = vsel %vm455, %v1962, 0
      %v2036 = vsel %vm455, %v1963, 0
      %v2039 = vsel %vm455, %v1964, 0
      %v2042 = vsel %vm455, %v1965, 0
      %v2045 = vsel %vm455, %v1966, 0
      %v2048 = vsel %vm455, %v1967, 0
      %v2051 = vsel %vm455, %v1968, 0
      %v2054 = vsel %vm455, %v1969, 0
      %v2057 = vsel %vm455, %v1970, 0
      %v2060 = vsel %vm455, %v1971, 0
      %v2063 = vsel %vm455, %v1972, 0
      %v2066 = vsel %vm455, %v1973, 0
      %v2069 = vsel %vm455, %v1974, 0
      %v2072 = vsel %vm455, %v1975, 0
      %2074 = vmatprep.subr.mxu0 0.0
      %2075 = vmatpush1.msra.mxu0 %v1977
      %2076 = vmatprep.subr.mxu0 0.0
      %2077 = vmatpush1.msra.mxu0 0.0
      %2078 = vmatprep.subr.mxu0 0.0
      %2079 = vmatpush1.msra.mxu0 0.0
      %2080 = vmatprep.subr.mxu0 0.0
      %2081 = vmatpush1.msra.mxu0 0.0
      %2082 = vmatprep.subr.mxu0 0.0
      %2083 = vmatpush1.msra.mxu0 0.0
      %2084 = vmatprep.subr.mxu0 0.0
      %2085 = vmatpush1.msra.mxu0 0.0
      %2086 = vmatprep.subr.mxu0 0.0
      %2087 = vmatpush1.msra.mxu0 0.0
      %2088 = vmatprep.subr.mxu0 0.0
      %2089 = vmatpush1.msra.mxu0 0.0
      %2090 = vmatprep.subr.mxu0 0.0
      %2091 = vmatpush1.msra.mxu0 0.0
      %2092 = vmatprep.subr.mxu0 0.0
      %2093 = vmatpush1.msra.mxu0 0.0
      %2094 = vmatprep.subr.mxu0 0.0
      %2095 = vmatpush1.msra.mxu0 0.0
      %2096 = vmatprep.subr.mxu0 0.0
      %2097 = vmatpush1.msra.mxu0 0.0
      %2098 = vmatprep.subr.mxu0 0.0
      %2099 = vmatpush1.msra.mxu0 0.0
      %2100 = vmatprep.subr.mxu0 0.0
      %2101 = vmatpush1.msra.mxu0 0.0
      %2102 = vmatprep.subr.mxu0 0.0
      %2103 = vmatpush1.msra.mxu0 0.0
      %2104 = vmatprep.subr.mxu0 0.0
      %2105 = vmatpush1.msra.mxu0 0.0
      %2106 = vmatprep.subr.mxu0 0.0
      %2107 = vmatpush1.msra.mxu0 0.0
      %2108 = vmatprep.subr.mxu0 0.0
      %2109 = vmatpush1.msra.mxu0 0.0
      %2110 = vmatprep.subr.mxu0 0.0
      %2111 = vmatpush1.msra.mxu0 0.0
      %2112 = vmatprep.subr.mxu0 0.0
      %2113 = vmatpush1.msra.mxu0 0.0
      %2114 = vmatprep.subr.mxu0 0.0
      %2115 = vmatpush1.msra.mxu0 0.0
      %2116 = vmatprep.subr.mxu0 0.0
      %2117 = vmatpush1.msra.mxu0 0.0
      %2118 = vmatprep.subr.mxu0 0.0
      %2119 = vmatpush1.msra.mxu0 0.0
      %2120 = vmatprep.subr.mxu0 0.0
      %2121 = vmatpush1.msra.mxu0 0.0
      %2122 = vmatprep.subr.mxu0 0.0
      %2123 = vmatpush1.msra.mxu0 0.0
      %2124 = vmatprep.subr.mxu0 0.0
      %2125 = vmatpush1.msra.mxu0 0.0
      %2126 = vmatprep.subr.mxu0 0.0
      %2127 = vmatpush1.msra.mxu0 0.0
      %2128 = vmatprep.subr.mxu0 0.0
      %2129 = vmatpush1.msra.mxu0 0.0
      %2130 = vmatprep.subr.mxu0 0.0
      %2131 = vmatpush1.msra.mxu0 0.0
      %2132 = vmatprep.subr.mxu0 0.0
      %2133 = vmatpush1.msra.mxu0 0.0
      %2134 = vmatprep.subr.mxu0 0.0
      %2135 = vmatpush1.msra.mxu0 0.0
      %2136 = vmatprep.subr.mxu0 0.0
      %2137 = vmatpush1.msra.mxu0 0.0
      %2138 = vmatprep.mubr.f32.mxu0 0.0
      %2139 = vmatmul.mubr.f32.gmra.mrb[0].mxu0 %v1979
      %v2140 = vpop.f32.mrb[0].mxu0
      %v2141 = vadd.f32 0.0, %v2140
      %v2142 = vpop.f32.mrb[0].mxu0
      %2143 = vmatprep.mubr.f32.mxu0 0.0
      %2144 = vmatmul.mubr.f32.gmra.mrb[0].mxu0 %v1982
      %v2145 = vpop.f32.mrb[0].mxu0
      %v2146 = vadd.f32 0.0, %v2145
      %v2147 = vpop.f32.mrb[0].mxu0
      %2148 = vmatprep.mubr.f32.mxu0 0.0
      %2149 = vmatmul.mubr.f32.gmra.mrb[0].mxu0 %v1985
      %v2150 = vpop.f32.mrb[0].mxu0
      %v2151 = vadd.f32 0.0, %v2150
      %v2152 = vpop.f32.mrb[0].mxu0
      %2153 = vmatprep.mubr.f32.mxu0 0.0
      %2154 = vmatmul.mubr.f32.gmra.mrb[0].mxu0 %v1988
      %v2155 = vpop.f32.mrb[0].mxu0
      %v2156 = vadd.f32 0.0, %v2155
      %v2157 = vpop.f32.mrb[0].mxu0
      %2158 = vmatprep.mubr.f32.mxu0 0.0
      %2159 = vmatmul.mubr.f32.gmra.mrb[0].mxu0 %v1991
      %v2160 = vpop.f32.mrb[0].mxu0
      %v2161 = vadd.f32 0.0, %v2160
      %v2162 = vpop.f32.mrb[0].mxu0
      %2163 = vmatprep.mubr.f32.mxu0 0.0
      %2164 = vmatmul.mubr.f32.gmra.mrb[0].mxu0 %v1994
      %v2165 = vpop.f32.mrb[0].mxu0
      %v2166 = vadd.f32 0.0, %v2165
      %v2167 = vpop.f32.mrb[0].mxu0
      %2168 = vmatprep.mubr.f32.mxu0 0.0
      %2169 = vmatmul.mubr.f32.gmra.mrb[0].mxu0 %v1997
      %v2170 = vpop.f32.mrb[0].mxu0
      %v2171 = vadd.f32 0.0, %v2170
      %v2172 = vpop.f32.mrb[0].mxu0
      %2173 = vmatprep.mubr.f32.mxu0 0.0
      %2174 = vmatmul.mubr.f32.gmra.mrb[0].mxu0 %v2000
      %v2175 = vpop.f32.mrb[0].mxu0
      %v2176 = vadd.f32 0.0, %v2175
      %v2177 = vpop.f32.mrb[0].mxu0
      %2178 = vmatprep.mubr.f32.mxu0 0.0
      %2179 = vmatmul.mubr.f32.gmra.mrb[0].mxu0 %v2003
      %v2180 = vpop.f32.mrb[0].mxu0
      %v2181 = vadd.f32 0.0, %v2180
      %v2182 = vpop.f32.mrb[0].mxu0
      %2183 = vmatprep.mubr.f32.mxu0 0.0
      %2184 = vmatmul.mubr.f32.gmra.mrb[0].mxu0 %v2006
      %v2185 = vpop.f32.mrb[0].mxu0
      %v2186 = vadd.f32 0.0, %v2185
      %v2187 = vpop.f32.mrb[0].mxu0
      %2188 = vmatprep.mubr.f32.mxu0 0.0
      %2189 = vmatmul.mubr.f32.gmra.mrb[0].mxu0 %v2009
      %v2190 = vpop.f32.mrb[0].mxu0
      %v2191 = vadd.f32 0.0, %v2190
      %v2192 = vpop.f32.mrb[0].mxu0
      %2193 = vmatprep.mubr.f32.mxu0 0.0
      %2194 = vmatmul.mubr.f32.gmra.mrb[0].mxu0 %v2012
      %v2195 = vpop.f32.mrb[0].mxu0
      %v2196 = vadd.f32 0.0, %v2195
      %v2197 = vpop.f32.mrb[0].mxu0
      %2198 = vmatprep.mubr.f32.mxu0 0.0
      %2199 = vmatmul.mubr.f32.gmra.mrb[0].mxu0 %v2015
      %v2200 = vpop.f32.mrb[0].mxu0
      %v2201 = vadd.f32 0.0, %v2200
      %v2202 = vpop.f32.mrb[0].mxu0
      %2203 = vmatprep.mubr.f32.mxu0 0.0
      %2204 = vmatmul.mubr.f32.gmra.mrb[0].mxu0 %v2018
      %v2205 = vpop.f32.mrb[0].mxu0
      %v2206 = vadd.f32 0.0, %v2205
      %v2207 = vpop.f32.mrb[0].mxu0
      %2208 = vmatprep.mubr.f32.mxu0 0.0
      %2209 = vmatmul.mubr.f32.gmra.mrb[0].mxu0 %v2021
      %v2210 = vpop.f32.mrb[0].mxu0
      %v2211 = vadd.f32 0.0, %v2210
      %v2212 = vpop.f32.mrb[0].mxu0
      %2213 = vmatprep.mubr.f32.mxu0 0.0
      %2214 = vmatmul.mubr.f32.gmra.mrb[0].mxu0 %v2024
      %v2215 = vpop.f32.mrb[0].mxu0
      %v2216 = vadd.f32 0.0, %v2215
      %v2217 = vpop.f32.mrb[0].mxu0
      %2218 = vmatprep.mubr.f32.mxu0 0.0
      %2219 = vmatmul.mubr.f32.gmra.mrb[0].mxu0 %v2027
      %v2220 = vpop.f32.mrb[0].mxu0
      %v2221 = vadd.f32 0.0, %v2220
      %v2222 = vpop.f32.mrb[0].mxu0
      %2223 = vmatprep.mubr.f32.mxu0 0.0
      %2224 = vmatmul.mubr.f32.gmra.mrb[0].mxu0 %v2030
      %v2225 = vpop.f32.mrb[0].mxu0
      %v2226 = vadd.f32 0.0, %v2225
      %v2227 = vpop.f32.mrb[0].mxu0
      %2228 = vmatprep.mubr.f32.mxu0 0.0
      %2229 = vmatmul.mubr.f32.gmra.mrb[0].mxu0 %v2033
      %v2230 = vpop.f32.mrb[0].mxu0
      %v2231 = vadd.f32 0.0, %v2230
      %v2232 = vpop.f32.mrb[0].mxu0
      %2233 = vmatprep.mubr.f32.mxu0 0.0
      %2234 = vmatmul.mubr.f32.gmra.mrb[0].mxu0 %v2036
      %v2235 = vpop.f32.mrb[0].mxu0
      %v2236 = vadd.f32 0.0, %v2235
      %v2237 = vpop.f32.mrb[0].mxu0
      %2238 = vmatprep.mubr.f32.mxu0 0.0
      %2239 = vmatmul.mubr.f32.gmra.mrb[0].mxu0 %v2039
      %v2240 = vpop.f32.mrb[0].mxu0
      %v2241 = vadd.f32 0.0, %v2240
      %v2242 = vpop.f32.mrb[0].mxu0
      %2243 = vmatprep.mubr.f32.mxu0 0.0
      %2244 = vmatmul.mubr.f32.gmra.mrb[0].mxu0 %v2042
      %v2245 = vpop.f32.mrb[0].mxu0
      %v2246 = vadd.f32 0.0, %v2245
      %v2247 = vpop.f32.mrb[0].mxu0
      %2248 = vmatprep.mubr.f32.mxu0 0.0
      %2249 = vmatmul.mubr.f32.gmra.mrb[0].mxu0 %v2045
      %v2250 = vpop.f32.mrb[0].mxu0
      %v2251 = vadd.f32 0.0, %v2250
      %v2252 = vpop.f32.mrb[0].mxu0
      %2253 = vmatprep.mubr.f32.mxu0 0.0
      %2254 = vmatmul.mubr.f32.gmra.mrb[0].mxu0 %v2048
      %v2255 = vpop.f32.mrb[0].mxu0
      %v2256 = vadd.f32 0.0, %v2255
      %v2257 = vpop.f32.mrb[0].mxu0
      %2258 = vmatprep.mubr.f32.mxu0 0.0
      %2259 = vmatmul.mubr.f32.gmra.mrb[0].mxu0 %v2051
      %v2260 = vpop.f32.mrb[0].mxu0
      %v2261 = vadd.f32 0.0, %v2260
      %v2262 = vpop.f32.mrb[0].mxu0
      %2263 = vmatprep.mubr.f32.mxu0 0.0
      %2264 = vmatmul.mubr.f32.gmra.mrb[0].mxu0 %v2054
      %v2265 = vpop.f32.mrb[0].mxu0
      %v2266 = vadd.f32 0.0, %v2265
      %v2267 = vpop.f32.mrb[0].mxu0
      %2268 = vmatprep.mubr.f32.mxu0 0.0
      %2269 = vmatmul.mubr.f32.gmra.mrb[0].mxu0 %v2057
      %v2270 = vpop.f32.mrb[0].mxu0
      %v2271 = vadd.f32 0.0, %v2270
      %v2272 = vpop.f32.mrb[0].mxu0
      %2273 = vmatprep.mubr.f32.mxu0 0.0
      %2274 = vmatmul.mubr.f32.gmra.mrb[0].mxu0 %v2060
      %v2275 = vpop.f32.mrb[0].mxu0
      %v2276 = vadd.f32 0.0, %v2275
      %v2277 = vpop.f32.mrb[0].mxu0
      %2278 = vmatprep.mubr.f32.mxu0 0.0
      %2279 = vmatmul.mubr.f32.gmra.mrb[0].mxu0 %v2063
      %v2280 = vpop.f32.mrb[0].mxu0
      %v2281 = vadd.f32 0.0, %v2280
      %v2282 = vpop.f32.mrb[0].mxu0
      %2283 = vmatprep.mubr.f32.mxu0 0.0
      %2284 = vmatmul.mubr.f32.gmra.mrb[0].mxu0 %v2066
      %v2285 = vpop.f32.mrb[0].mxu0
      %v2286 = vadd.f32 0.0, %v2285
      %v2287 = vpop.f32.mrb[0].mxu0
      %2288 = vmatprep.mubr.f32.mxu0 0.0
      %2289 = vmatmul.mubr.f32.gmra.mrb[0].mxu0 %v2069
      %v2290 = vpop.f32.mrb[0].mxu0
      %v2291 = vadd.f32 0.0, %v2290
      %v2292 = vpop.f32.mrb[0].mxu0
      %2293 = vmatprep.mubr.f32.mxu0 0.0
      %2294 = vmatmul.mubr.f32.gmra.mrb[0].mxu0 %v2072
      %v2295 = vpop.f32.mrb[0].mxu0
      %v2296 = vadd.f32 0.0, %v2295
      %v2297 = vpop.f32.mrb[0].mxu0
      %2298 = vdwg.mxu0
      %v2299 = vadd.f32 %v1912, %v2141
      %v2300 = vadd.f32 %v1913, %v2146
      %v2301 = vadd.f32 %v1914, %v2151
      %v2302 = vadd.f32 %v1915, %v2156
      %v2303 = vadd.f32 %v1916, %v2161
      %v2304 = vadd.f32 %v1917, %v2166
      %v2305 = vadd.f32 %v1918, %v2171
      %v2306 = vadd.f32 %v1919, %v2176
      %v2307 = vadd.f32 %v1920, %v2181
      %v2308 = vadd.f32 %v1921, %v2186
      %v2309 = vadd.f32 %v1922, %v2191
      %v2310 = vadd.f32 %v1923, %v2196
      %v2311 = vadd.f32 %v1924, %v2201
      %v2312 = vadd.f32 %v1925, %v2206
      %v2313 = vadd.f32 %v1926, %v2211
      %v2314 = vadd.f32 %v1927, %v2216
      %v2315 = vadd.f32 %v1928, %v2221
      %v2316 = vadd.f32 %v1929, %v2226
      %v2317 = vadd.f32 %v1930, %v2231
      %v2318 = vadd.f32 %v1931, %v2236
      %v2319 = vadd.f32 %v1932, %v2241
      %v2320 = vadd.f32 %v1933, %v2246
      %v2321 = vadd.f32 %v1934, %v2251
      %v2322 = vadd.f32 %v1935, %v2256
      %v2323 = vadd.f32 %v1936, %v2261
      %v2324 = vadd.f32 %v1937, %v2266
      %v2325 = vadd.f32 %v1938, %v2271
      %v2326 = vadd.f32 %v1939, %v2276
      %v2327 = vadd.f32 %v1940, %v2281
      %v2328 = vadd.f32 %v1941, %v2286
      %v2329 = vadd.f32 %v1942, %v2291
      %v2330 = vadd.f32 %v1943, %v2296
      %v2332 = vlaneseq
      %v2333 = vshrl.u32 %v2332, 7
      %v2334 = vsub.s32 0, %v2333
      %v2335 = vrot.slane %v400, %v2334
      %v2337 = vadd.f32 %v2299, %v2335
      %v2338 = vadd.f32 %v2300, %v2335
      %v2339 = vadd.f32 %v2301, %v2335
      %v2340 = vadd.f32 %v2302, %v2335
      %v2341 = vadd.f32 %v2303, %v2335
      %v2342 = vadd.f32 %v2304, %v2335
      %v2343 = vadd.f32 %v2305, %v2335
      %v2344 = vadd.f32 %v2306, %v2335
      %v2345 = vadd.f32 %v2307, %v2335
      %v2346 = vadd.f32 %v2308, %v2335
      %v2347 = vadd.f32 %v2309, %v2335
      %v2348 = vadd.f32 %v2310, %v2335
      %v2349 = vadd.f32 %v2311, %v2335
      %v2350 = vadd.f32 %v2312, %v2335
      %v2351 = vadd.f32 %v2313, %v2335
      %v2352 = vadd.f32 %v2314, %v2335
      %v2353 = vadd.f32 %v2315, %v2335
      %v2354 = vadd.f32 %v2316, %v2335
      %v2355 = vadd.f32 %v2317, %v2335
      %v2356 = vadd.f32 %v2318, %v2335
      %v2357 = vadd.f32 %v2319, %v2335
      %v2358 = vadd.f32 %v2320, %v2335
      %v2359 = vadd.f32 %v2321, %v2335
      %v2360 = vadd.f32 %v2322, %v2335
      %v2361 = vadd.f32 %v2323, %v2335
      %v2362 = vadd.f32 %v2324, %v2335
      %v2363 = vadd.f32 %v2325, %v2335
      %v2364 = vadd.f32 %v2326, %v2335
      %v2365 = vadd.f32 %v2327, %v2335
      %v2366 = vadd.f32 %v2328, %v2335
      %v2367 = vadd.f32 %v2329, %v2335
      %v2368 = vadd.f32 %v2330, %v2335
      %vm2369 = vcmp.gt.f32.partialorder %v2337, 0.0
      %vm2370 = vcmp.gt.f32.partialorder %v2338, 0.0
      %vm2371 = vcmp.gt.f32.partialorder %v2339, 0.0
      %vm2372 = vcmp.gt.f32.partialorder %v2340, 0.0
      %vm2373 = vcmp.gt.f32.partialorder %v2341, 0.0
      %vm2374 = vcmp.gt.f32.partialorder %v2342, 0.0
      %vm2375 = vcmp.gt.f32.partialorder %v2343, 0.0
      %vm2376 = vcmp.gt.f32.partialorder %v2344, 0.0
      %vm2377 = vcmp.gt.f32.partialorder %v2345, 0.0
      %vm2378 = vcmp.gt.f32.partialorder %v2346, 0.0
      %vm2379 = vcmp.gt.f32.partialorder %v2347, 0.0
      %vm2380 = vcmp.gt.f32.partialorder %v2348, 0.0
      %vm2381 = vcmp.gt.f32.partialorder %v2349, 0.0
      %vm2382 = vcmp.gt.f32.partialorder %v2350, 0.0
      %vm2383 = vcmp.gt.f32.partialorder %v2351, 0.0
      %vm2384 = vcmp.gt.f32.partialorder %v2352, 0.0
      %vm2385 = vcmp.gt.f32.partialorder %v2353, 0.0
      %vm2386 = vcmp.gt.f32.partialorder %v2354, 0.0
      %vm2387 = vcmp.gt.f32.partialorder %v2355, 0.0
      %vm2388 = vcmp.gt.f32.partialorder %v2356, 0.0
      %vm2389 = vcmp.gt.f32.partialorder %v2357, 0.0
      %vm2390 = vcmp.gt.f32.partialorder %v2358, 0.0
      %vm2391 = vcmp.gt.f32.partialorder %v2359, 0.0
      %vm2392 = vcmp.gt.f32.partialorder %v2360, 0.0
      %vm2393 = vcmp.gt.f32.partialorder %v2361, 0.0
      %vm2394 = vcmp.gt.f32.partialorder %v2362, 0.0
      %vm2395 = vcmp.gt.f32.partialorder %v2363, 0.0
      %vm2396 = vcmp.gt.f32.partialorder %v2364, 0.0
      %vm2397 = vcmp.gt.f32.partialorder %v2365, 0.0
      %vm2398 = vcmp.gt.f32.partialorder %v2366, 0.0
      %vm2399 = vcmp.gt.f32.partialorder %v2367, 0.0
      %vm2400 = vcmp.gt.f32.partialorder %v2368, 0.0
      %v2401 = vmul.f32 %v2337, 0.2
      %v2402 = vmul.f32 %v2338, 0.2
      %v2403 = vmul.f32 %v2339, 0.2
      %v2404 = vmul.f32 %v2340, 0.2
      %v2405 = vmul.f32 %v2341, 0.2
      %v2406 = vmul.f32 %v2342, 0.2
      %v2407 = vmul.f32 %v2343, 0.2
      %v2408 = vmul.f32 %v2344, 0.2
      %v2409 = vmul.f32 %v2345, 0.2
      %v2410 = vmul.f32 %v2346, 0.2
      %v2411 = vmul.f32 %v2347, 0.2
      %v2412 = vmul.f32 %v2348, 0.2
      %v2413 = vmul.f32 %v2349, 0.2
      %v2414 = vmul.f32 %v2350, 0.2
      %v2415 = vmul.f32 %v2351, 0.2
      %v2416 = vmul.f32 %v2352, 0.2
      %v2417 = vmul.f32 %v2353, 0.2
      %v2418 = vmul.f32 %v2354, 0.2
      %v2419 = vmul.f32 %v2355, 0.2
      %v2420 = vmul.f32 %v2356, 0.2
      %v2421 = vmul.f32 %v2357, 0.2
      %v2422 = vmul.f32 %v2358, 0.2
      %v2423 = vmul.f32 %v2359, 0.2
      %v2424 = vmul.f32 %v2360, 0.2
      %v2425 = vmul.f32 %v2361, 0.2
      %v2426 = vmul.f32 %v2362, 0.2
      %v2427 = vmul.f32 %v2363, 0.2
      %v2428 = vmul.f32 %v2364, 0.2
      %v2429 = vmul.f32 %v2365, 0.2
      %v2430 = vmul.f32 %v2366, 0.2
      %v2431 = vmul.f32 %v2367, 0.2
      %v2432 = vmul.f32 %v2368, 0.2
      %v2433 = vsel %vm2369, %v2337, %v2401
      %v2434 = vsel %vm2370, %v2338, %v2402
      %v2435 = vsel %vm2371, %v2339, %v2403
      %v2436 = vsel %vm2372, %v2340, %v2404
      %v2437 = vsel %vm2373, %v2341, %v2405
      %v2438 = vsel %vm2374, %v2342, %v2406
      %v2439 = vsel %vm2375, %v2343, %v2407
      %v2440 = vsel %vm2376, %v2344, %v2408
      %v2441 = vsel %vm2377, %v2345, %v2409
      %v2442 = vsel %vm2378, %v2346, %v2410
      %v2443 = vsel %vm2379, %v2347, %v2411
      %v2444 = vsel %vm2380, %v2348, %v2412
      %v2445 = vsel %vm2381, %v2349, %v2413
      %v2446 = vsel %vm2382, %v2350, %v2414
      %v2447 = vsel %vm2383, %v2351, %v2415
      %v2448 = vsel %vm2384, %v2352, %v2416
      %v2449 = vsel %vm2385, %v2353, %v2417
      %v2450 = vsel %vm2386, %v2354, %v2418
      %v2451 = vsel %vm2387, %v2355, %v2419
      %v2452 = vsel %vm2388, %v2356, %v2420
      %v2453 = vsel %vm2389, %v2357, %v2421
      %v2454 = vsel %vm2390, %v2358, %v2422
      %v2455 = vsel %vm2391, %v2359, %v2423
      %v2456 = vsel %vm2392, %v2360, %v2424
      %v2457 = vsel %vm2393, %v2361, %v2425
      %v2458 = vsel %vm2394, %v2362, %v2426
      %v2459 = vsel %vm2395, %v2363, %v2427
      %v2460 = vsel %vm2396, %v2364, %v2428
      %v2461 = vsel %vm2397, %v2365, %v2429
      %v2462 = vsel %vm2398, %v2366, %v2430
      %v2463 = vsel %vm2399, %v2367, %v2431
      %v2464 = vsel %vm2400, %v2368, %v2432
      %vm2465 = vcmask 31744
      %2466 = vst.msk [vmem:[%s397] sm:$0xff] %vm2465, %v2433
      %2467 = vst.msk [vmem:[%s397 + $0x8] sm:$0xff] %vm2465, %v2434
      %2468 = vst.msk [vmem:[%s397 + $0x10] sm:$0xff] %vm2465, %v2435
      %2469 = vst.msk [vmem:[%s397 + $0x18] sm:$0xff] %vm2465, %v2436
      %2470 = vst.msk [vmem:[%s397 + $0x20] sm:$0xff] %vm2465, %v2437
      %2471 = vst.msk [vmem:[%s397 + $0x28] sm:$0xff] %vm2465, %v2438
      %2472 = vst.msk [vmem:[%s397 + $0x30] sm:$0xff] %vm2465, %v2439
      %2473 = vst.msk [vmem:[%s397 + $0x38] sm:$0xff] %vm2465, %v2440
      %2474 = vst.msk [vmem:[%s397 + $0x40] sm:$0xff] %vm2465, %v2441
      %2475 = vst.msk [vmem:[%s397 + $0x48] sm:$0xff] %vm2465, %v2442
      %2476 = vst.msk [vmem:[%s397 + $0x50] sm:$0xff] %vm2465, %v2443
      %2477 = vst.msk [vmem:[%s397 + $0x58] sm:$0xff] %vm2465, %v2444
      %2478 = vst.msk [vmem:[%s397 + $0x60] sm:$0xff] %vm2465, %v2445
      %2479 = vst.msk [vmem:[%s397 + $0x68] sm:$0xff] %vm2465, %v2446
      %2480 = vst.msk [vmem:[%s397 + $0x70] sm:$0xff] %vm2465, %v2447
      %2481 = vst.msk [vmem:[%s397 + $0x78] sm:$0xff] %vm2465, %v2448
      %2482 = vst.msk [vmem:[%s397 + $0x80] sm:$0xff] %vm2465, %v2449
      %2483 = vst.msk [vmem:[%s397 + $0x88] sm:$0xff] %vm2465, %v2450
      %2484 = vst.msk [vmem:[%s397 + $0x90] sm:$0xff] %vm2465, %v2451
      %2485 = vst.msk [vmem:[%s397 + $0x98] sm:$0xff] %vm2465, %v2452
      %2486 = vst.msk [vmem:[%s397 + $0xa0] sm:$0xff] %vm2465, %v2453
      %2487 = vst.msk [vmem:[%s397 + $0xa8] sm:$0xff] %vm2465, %v2454
      %2488 = vst.msk [vmem:[%s397 + $0xb0] sm:$0xff] %vm2465, %v2455
      %2489 = vst.msk [vmem:[%s397 + $0xb8] sm:$0xff] %vm2465, %v2456
      %2490 = vst.msk [vmem:[%s397 + $0xc0] sm:$0xff] %vm2465, %v2457
      %2491 = vst.msk [vmem:[%s397 + $0xc8] sm:$0xff] %vm2465, %v2458
      %2492 = vst.msk [vmem:[%s397 + $0xd0] sm:$0xff] %vm2465, %v2459
      %2493 = vst.msk [vmem:[%s397 + $0xd8] sm:$0xff] %vm2465, %v2460
      %2494 = vst.msk [vmem:[%s397 + $0xe0] sm:$0xff] %vm2465, %v2461
      %2495 = vst.msk [vmem:[%s397 + $0xe8] sm:$0xff] %vm2465, %v2462
      %2496 = vst.msk [vmem:[%s397 + $0xf0] sm:$0xff] %vm2465, %v2463
      %2497 = vst.msk [vmem:[%s397 + $0xf8] sm:$0xff] %vm2465, %v2464
      %v2498 = vld [vmem:[%s653] sm:$0xff]
      %v2499 = vld [vmem:[%s653 + $0x8] sm:$0xff]
      %v2500 = vld [vmem:[%s653 + $0x10] sm:$0xff]
      %v2501 = vld [vmem:[%s653 + $0x18] sm:$0xff]
      %v2502 = vld [vmem:[%s653 + $0x20] sm:$0xff]
      %v2503 = vld [vmem:[%s653 + $0x28] sm:$0xff]
      %v2504 = vld [vmem:[%s653 + $0x30] sm:$0xff]
      %v2505 = vld [vmem:[%s653 + $0x38] sm:$0xff]
      %v2506 = vld [vmem:[%s653 + $0x40] sm:$0xff]
      %v2507 = vld [vmem:[%s653 + $0x48] sm:$0xff]
      %v2508 = vld [vmem:[%s653 + $0x50] sm:$0xff]
      %v2509 = vld [vmem:[%s653 + $0x58] sm:$0xff]
      %v2510 = vld [vmem:[%s653 + $0x60] sm:$0xff]
      %v2511 = vld [vmem:[%s653 + $0x68] sm:$0xff]
      %v2512 = vld [vmem:[%s653 + $0x70] sm:$0xff]
      %v2513 = vld [vmem:[%s653 + $0x78] sm:$0xff]
      %v2514 = vld [vmem:[%s653 + $0x80] sm:$0xff]
      %v2515 = vld [vmem:[%s653 + $0x88] sm:$0xff]
      %v2516 = vld [vmem:[%s653 + $0x90] sm:$0xff]
      %v2517 = vld [vmem:[%s653 + $0x98] sm:$0xff]
      %v2518 = vld [vmem:[%s653 + $0xa0] sm:$0xff]
      %v2519 = vld [vmem:[%s653 + $0xa8] sm:$0xff]
      %v2520 = vld [vmem:[%s653 + $0xb0] sm:$0xff]
      %v2521 = vld [vmem:[%s653 + $0xb8] sm:$0xff]
      %v2522 = vld [vmem:[%s653 + $0xc0] sm:$0xff]
      %v2523 = vld [vmem:[%s653 + $0xc8] sm:$0xff]
      %v2524 = vld [vmem:[%s653 + $0xd0] sm:$0xff]
      %v2525 = vld [vmem:[%s653 + $0xd8] sm:$0xff]
      %v2526 = vld [vmem:[%s653 + $0xe0] sm:$0xff]
      %v2527 = vld [vmem:[%s653 + $0xe8] sm:$0xff]
      %v2528 = vld [vmem:[%s653 + $0xf0] sm:$0xff]
      %v2529 = vld [vmem:[%s653 + $0xf8] sm:$0xff]
      %s2530 = scalar_lea.vmem %s3, 32
      %v2531 = vld [vmem:[%s2530] sm:$0xff]
      %v2532 = vld [vmem:[%s807] sm:$0xff]
      %v2533 = vld [vmem:[%s807 + $0x8] sm:$0xff]
      %v2534 = vld [vmem:[%s807 + $0x10] sm:$0xff]
      %v2535 = vld [vmem:[%s807 + $0x18] sm:$0xff]
      %v2536 = vld [vmem:[%s807 + $0x20] sm:$0xff]
      %v2537 = vld [vmem:[%s807 + $0x28] sm:$0xff]
      %v2538 = vld [vmem:[%s807 + $0x30] sm:$0xff]
      %v2539 = vld [vmem:[%s807 + $0x38] sm:$0xff]
      %v2540 = vld [vmem:[%s807 + $0x40] sm:$0xff]
      %v2541 = vld [vmem:[%s807 + $0x48] sm:$0xff]
      %v2542 = vld [vmem:[%s807 + $0x50] sm:$0xff]
      %v2543 = vld [vmem:[%s807 + $0x58] sm:$0xff]
      %v2544 = vld [vmem:[%s807 + $0x60] sm:$0xff]
      %v2545 = vld [vmem:[%s807 + $0x68] sm:$0xff]
      %v2546 = vld [vmem:[%s807 + $0x70] sm:$0xff]
      %v2547 = vld [vmem:[%s807 + $0x78] sm:$0xff]
      %v2548 = vld [vmem:[%s807 + $0x80] sm:$0xff]
      %v2549 = vld [vmem:[%s807 + $0x88] sm:$0xff]
      %v2550 = vld [vmem:[%s807 + $0x90] sm:$0xff]
      %v2551 = vld [vmem:[%s807 + $0x98] sm:$0xff]
      %v2552 = vld [vmem:[%s807 + $0xa0] sm:$0xff]
      %v2553 = vld [vmem:[%s807 + $0xa8] sm:$0xff]
      %v2554 = vld [vmem:[%s807 + $0xb0] sm:$0xff]
      %v2555 = vld [vmem:[%s807 + $0xb8] sm:$0xff]
      %v2556 = vld [vmem:[%s807 + $0xc0] sm:$0xff]
      %v2557 = vld [vmem:[%s807 + $0xc8] sm:$0xff]
      %v2558 = vld [vmem:[%s807 + $0xd0] sm:$0xff]
      %v2559 = vld [vmem:[%s807 + $0xd8] sm:$0xff]
      %v2560 = vld [vmem:[%s807 + $0xe0] sm:$0xff]
      %v2561 = vld [vmem:[%s807 + $0xe8] sm:$0xff]
      %v2562 = vld [vmem:[%s807 + $0xf0] sm:$0xff]
      %v2563 = vld [vmem:[%s807 + $0xf8] sm:$0xff]
      %s2564 = scalar_lea.vmem %s3, 40
      %v2565 = vld [vmem:[%s2564] sm:$0xff]
      %v2567 = vsel %vm455, %v2532, 0
      %v2570 = vsel %vm455, %v2533, 0
      %v2573 = vsel %vm455, %v2534, 0
      %v2576 = vsel %vm455, %v2535, 0
      %v2579 = vsel %vm455, %v2536, 0
      %v2582 = vsel %vm455, %v2537, 0
      %v2585 = vsel %vm455, %v2538, 0
      %v2588 = vsel %vm455, %v2539, 0
      %v2591 = vsel %vm455, %v2540, 0
      %v2594 = vsel %vm455, %v2541, 0
      %v2597 = vsel %vm455, %v2542, 0
      %v2600 = vsel %vm455, %v2543, 0
      %v2603 = vsel %vm455, %v2544, 0
      %v2606 = vsel %vm455, %v2545, 0
      %v2609 = vsel %vm455, %v2546, 0
      %v2612 = vsel %vm455, %v2547, 0
      %v2615 = vsel %vm455, %v2548, 0
      %v2618 = vsel %vm455, %v2549, 0
      %v2621 = vsel %vm455, %v2550, 0
      %v2624 = vsel %vm455, %v2551, 0
      %v2627 = vsel %vm455, %v2552, 0
      %v2630 = vsel %vm455, %v2553, 0
      %v2633 = vsel %vm455, %v2554, 0
      %v2636 = vsel %vm455, %v2555, 0
      %v2639 = vsel %vm455, %v2556, 0
      %v2642 = vsel %vm455, %v2557, 0
      %v2645 = vsel %vm455, %v2558, 0
      %v2648 = vsel %vm455, %v2559, 0
      %v2651 = vsel %vm455, %v2560, 0
      %v2654 = vsel %vm455, %v2561, 0
      %v2657 = vsel %vm455, %v2562, 0
      %v2660 = vsel %vm455, %v2563, 0
      %2662 = vmatprep.subr.mxu0 0.0
      %2663 = vmatpush1.msra.mxu0 %v2565
      %2664 = vmatprep.subr.mxu0 0.0
      %2665 = vmatpush1.msra.mxu0 0.0
      %2666 = vmatprep.subr.mxu0 0.0
      %2667 = vmatpush1.msra.mxu0 0.0
      %2668 = vmatprep.subr.mxu0 0.0
      %2669 = vmatpush1.msra.mxu0 0.0
      %2670 = vmatprep.subr.mxu0 0.0
      %2671 = vmatpush1.msra.mxu0 0.0
      %2672 = vmatprep.subr.mxu0 0.0
      %2673 = vmatpush1.msra.mxu0 0.0
      %2674 = vmatprep.subr.mxu0 0.0
      %2675 = vmatpush1.msra.mxu0 0.0
      %2676 = vmatprep.subr.mxu0 0.0
      %2677 = vmatpush1.msra.mxu0 0.0
      %2678 = vmatprep.subr.mxu0 0.0
      %2679 = vmatpush1.msra.mxu0 0.0
      %2680 = vmatprep.subr.mxu0 0.0
      %2681 = vmatpush1.msra.mxu0 0.0
      %2682 = vmatprep.subr.mxu0 0.0
      %2683 = vmatpush1.msra.mxu0 0.0
      %2684 = vmatprep.subr.mxu0 0.0
      %2685 = vmatpush1.msra.mxu0 0.0
      %2686 = vmatprep.subr.mxu0 0.0
      %2687 = vmatpush1.msra.mxu0 0.0
      %2688 = vmatprep.subr.mxu0 0.0
      %2689 = vmatpush1.msra.mxu0 0.0
      %2690 = vmatprep.subr.mxu0 0.0
      %2691 = vmatpush1.msra.mxu0 0.0
      %2692 = vmatprep.subr.mxu0 0.0
      %2693 = vmatpush1.msra.mxu0 0.0
      %2694 = vmatprep.subr.mxu0 0.0
      %2695 = vmatpush1.msra.mxu0 0.0
      %2696 = vmatprep.subr.mxu0 0.0
      %2697 = vmatpush1.msra.mxu0 0.0
      %2698 = vmatprep.subr.mxu0 0.0
      %2699 = vmatpush1.msra.mxu0 0.0
      %2700 = vmatprep.subr.mxu0 0.0
      %2701 = vmatpush1.msra.mxu0 0.0
      %2702 = vmatprep.subr.mxu0 0.0
      %2703 = vmatpush1.msra.mxu0 0.0
      %2704 = vmatprep.subr.mxu0 0.0
      %2705 = vmatpush1.msra.mxu0 0.0
      %2706 = vmatprep.subr.mxu0 0.0
      %2707 = vmatpush1.msra.mxu0 0.0
      %2708 = vmatprep.subr.mxu0 0.0
      %2709 = vmatpush1.msra.mxu0 0.0
      %2710 = vmatprep.subr.mxu0 0.0
      %2711 = vmatpush1.msra.mxu0 0.0
      %2712 = vmatprep.subr.mxu0 0.0
      %2713 = vmatpush1.msra.mxu0 0.0
      %2714 = vmatprep.subr.mxu0 0.0
      %2715 = vmatpush1.msra.mxu0 0.0
      %2716 = vmatprep.subr.mxu0 0.0
      %2717 = vmatpush1.msra.mxu0 0.0
      %2718 = vmatprep.subr.mxu0 0.0
      %2719 = vmatpush1.msra.mxu0 0.0
      %2720 = vmatprep.subr.mxu0 0.0
      %2721 = vmatpush1.msra.mxu0 0.0
      %2722 = vmatprep.subr.mxu0 0.0
      %2723 = vmatpush1.msra.mxu0 0.0
      %2724 = vmatprep.subr.mxu0 0.0
      %2725 = vmatpush1.msra.mxu0 0.0
      %2726 = vmatprep.mubr.f32.mxu0 0.0
      %2727 = vmatmul.mubr.f32.gmra.mrb[0].mxu0 %v2567
      %v2728 = vpop.f32.mrb[0].mxu0
      %v2729 = vadd.f32 0.0, %v2728
      %v2730 = vpop.f32.mrb[0].mxu0
      %2731 = vmatprep.mubr.f32.mxu0 0.0
      %2732 = vmatmul.mubr.f32.gmra.mrb[0].mxu0 %v2570
      %v2733 = vpop.f32.mrb[0].mxu0
      %v2734 = vadd.f32 0.0, %v2733
      %v2735 = vpop.f32.mrb[0].mxu0
      %2736 = vmatprep.mubr.f32.mxu0 0.0
      %2737 = vmatmul.mubr.f32.gmra.mrb[0].mxu0 %v2573
      %v2738 = vpop.f32.mrb[0].mxu0
      %v2739 = vadd.f32 0.0, %v2738
      %v2740 = vpop.f32.mrb[0].mxu0
      %2741 = vmatprep.mubr.f32.mxu0 0.0
      %2742 = vmatmul.mubr.f32.gmra.mrb[0].mxu0 %v2576
      %v2743 = vpop.f32.mrb[0].mxu0
      %v2744 = vadd.f32 0.0, %v2743
      %v2745 = vpop.f32.mrb[0].mxu0
      %2746 = vmatprep.mubr.f32.mxu0 0.0
      %2747 = vmatmul.mubr.f32.gmra.mrb[0].mxu0 %v2579
      %v2748 = vpop.f32.mrb[0].mxu0
      %v2749 = vadd.f32 0.0, %v2748
      %v2750 = vpop.f32.mrb[0].mxu0
      %2751 = vmatprep.mubr.f32.mxu0 0.0
      %2752 = vmatmul.mubr.f32.gmra.mrb[0].mxu0 %v2582
      %v2753 = vpop.f32.mrb[0].mxu0
      %v2754 = vadd.f32 0.0, %v2753
      %v2755 = vpop.f32.mrb[0].mxu0
      %2756 = vmatprep.mubr.f32.mxu0 0.0
      %2757 = vmatmul.mubr.f32.gmra.mrb[0].mxu0 %v2585
      %v2758 = vpop.f32.mrb[0].mxu0
      %v2759 = vadd.f32 0.0, %v2758
      %v2760 = vpop.f32.mrb[0].mxu0
      %2761 = vmatprep.mubr.f32.mxu0 0.0
      %2762 = vmatmul.mubr.f32.gmra.mrb[0].mxu0 %v2588
      %v2763 = vpop.f32.mrb[0].mxu0
      %v2764 = vadd.f32 0.0, %v2763
      %v2765 = vpop.f32.mrb[0].mxu0
      %2766 = vmatprep.mubr.f32.mxu0 0.0
      %2767 = vmatmul.mubr.f32.gmra.mrb[0].mxu0 %v2591
      %v2768 = vpop.f32.mrb[0].mxu0
      %v2769 = vadd.f32 0.0, %v2768
      %v2770 = vpop.f32.mrb[0].mxu0
      %2771 = vmatprep.mubr.f32.mxu0 0.0
      %2772 = vmatmul.mubr.f32.gmra.mrb[0].mxu0 %v2594
      %v2773 = vpop.f32.mrb[0].mxu0
      %v2774 = vadd.f32 0.0, %v2773
      %v2775 = vpop.f32.mrb[0].mxu0
      %2776 = vmatprep.mubr.f32.mxu0 0.0
      %2777 = vmatmul.mubr.f32.gmra.mrb[0].mxu0 %v2597
      %v2778 = vpop.f32.mrb[0].mxu0
      %v2779 = vadd.f32 0.0, %v2778
      %v2780 = vpop.f32.mrb[0].mxu0
      %2781 = vmatprep.mubr.f32.mxu0 0.0
      %2782 = vmatmul.mubr.f32.gmra.mrb[0].mxu0 %v2600
      %v2783 = vpop.f32.mrb[0].mxu0
      %v2784 = vadd.f32 0.0, %v2783
      %v2785 = vpop.f32.mrb[0].mxu0
      %2786 = vmatprep.mubr.f32.mxu0 0.0
      %2787 = vmatmul.mubr.f32.gmra.mrb[0].mxu0 %v2603
      %v2788 = vpop.f32.mrb[0].mxu0
      %v2789 = vadd.f32 0.0, %v2788
      %v2790 = vpop.f32.mrb[0].mxu0
      %2791 = vmatprep.mubr.f32.mxu0 0.0
      %2792 = vmatmul.mubr.f32.gmra.mrb[0].mxu0 %v2606
      %v2793 = vpop.f32.mrb[0].mxu0
      %v2794 = vadd.f32 0.0, %v2793
      %v2795 = vpop.f32.mrb[0].mxu0
      %2796 = vmatprep.mubr.f32.mxu0 0.0
      %2797 = vmatmul.mubr.f32.gmra.mrb[0].mxu0 %v2609
      %v2798 = vpop.f32.mrb[0].mxu0
      %v2799 = vadd.f32 0.0, %v2798
      %v2800 = vpop.f32.mrb[0].mxu0
      %2801 = vmatprep.mubr.f32.mxu0 0.0
      %2802 = vmatmul.mubr.f32.gmra.mrb[0].mxu0 %v2612
      %v2803 = vpop.f32.mrb[0].mxu0
      %v2804 = vadd.f32 0.0, %v2803
      %v2805 = vpop.f32.mrb[0].mxu0
      %2806 = vmatprep.mubr.f32.mxu0 0.0
      %2807 = vmatmul.mubr.f32.gmra.mrb[0].mxu0 %v2615
      %v2808 = vpop.f32.mrb[0].mxu0
      %v2809 = vadd.f32 0.0, %v2808
      %v2810 = vpop.f32.mrb[0].mxu0
      %2811 = vmatprep.mubr.f32.mxu0 0.0
      %2812 = vmatmul.mubr.f32.gmra.mrb[0].mxu0 %v2618
      %v2813 = vpop.f32.mrb[0].mxu0
      %v2814 = vadd.f32 0.0, %v2813
      %v2815 = vpop.f32.mrb[0].mxu0
      %2816 = vmatprep.mubr.f32.mxu0 0.0
      %2817 = vmatmul.mubr.f32.gmra.mrb[0].mxu0 %v2621
      %v2818 = vpop.f32.mrb[0].mxu0
      %v2819 = vadd.f32 0.0, %v2818
      %v2820 = vpop.f32.mrb[0].mxu0
      %2821 = vmatprep.mubr.f32.mxu0 0.0
      %2822 = vmatmul.mubr.f32.gmra.mrb[0].mxu0 %v2624
      %v2823 = vpop.f32.mrb[0].mxu0
      %v2824 = vadd.f32 0.0, %v2823
      %v2825 = vpop.f32.mrb[0].mxu0
      %2826 = vmatprep.mubr.f32.mxu0 0.0
      %2827 = vmatmul.mubr.f32.gmra.mrb[0].mxu0 %v2627
      %v2828 = vpop.f32.mrb[0].mxu0
      %v2829 = vadd.f32 0.0, %v2828
      %v2830 = vpop.f32.mrb[0].mxu0
      %2831 = vmatprep.mubr.f32.mxu0 0.0
      %2832 = vmatmul.mubr.f32.gmra.mrb[0].mxu0 %v2630
      %v2833 = vpop.f32.mrb[0].mxu0
      %v2834 = vadd.f32 0.0, %v2833
      %v2835 = vpop.f32.mrb[0].mxu0
      %2836 = vmatprep.mubr.f32.mxu0 0.0
      %2837 = vmatmul.mubr.f32.gmra.mrb[0].mxu0 %v2633
      %v2838 = vpop.f32.mrb[0].mxu0
      %v2839 = vadd.f32 0.0, %v2838
      %v2840 = vpop.f32.mrb[0].mxu0
      %2841 = vmatprep.mubr.f32.mxu0 0.0
      %2842 = vmatmul.mubr.f32.gmra.mrb[0].mxu0 %v2636
      %v2843 = vpop.f32.mrb[0].mxu0
      %v2844 = vadd.f32 0.0, %v2843
      %v2845 = vpop.f32.mrb[0].mxu0
      %2846 = vmatprep.mubr.f32.mxu0 0.0
      %2847 = vmatmul.mubr.f32.gmra.mrb[0].mxu0 %v2639
      %v2848 = vpop.f32.mrb[0].mxu0
      %v2849 = vadd.f32 0.0, %v2848
      %v2850 = vpop.f32.mrb[0].mxu0
      %2851 = vmatprep.mubr.f32.mxu0 0.0
      %2852 = vmatmul.mubr.f32.gmra.mrb[0].mxu0 %v2642
      %v2853 = vpop.f32.mrb[0].mxu0
      %v2854 = vadd.f32 0.0, %v2853
      %v2855 = vpop.f32.mrb[0].mxu0
      %2856 = vmatprep.mubr.f32.mxu0 0.0
      %2857 = vmatmul.mubr.f32.gmra.mrb[0].mxu0 %v2645
      %v2858 = vpop.f32.mrb[0].mxu0
      %v2859 = vadd.f32 0.0, %v2858
      %v2860 = vpop.f32.mrb[0].mxu0
      %2861 = vmatprep.mubr.f32.mxu0 0.0
      %2862 = vmatmul.mubr.f32.gmra.mrb[0].mxu0 %v2648
      %v2863 = vpop.f32.mrb[0].mxu0
      %v2864 = vadd.f32 0.0, %v2863
      %v2865 = vpop.f32.mrb[0].mxu0
      %2866 = vmatprep.mubr.f32.mxu0 0.0
      %2867 = vmatmul.mubr.f32.gmra.mrb[0].mxu0 %v2651
      %v2868 = vpop.f32.mrb[0].mxu0
      %v2869 = vadd.f32 0.0, %v2868
      %v2870 = vpop.f32.mrb[0].mxu0
      %2871 = vmatprep.mubr.f32.mxu0 0.0
      %2872 = vmatmul.mubr.f32.gmra.mrb[0].mxu0 %v2654
      %v2873 = vpop.f32.mrb[0].mxu0
      %v2874 = vadd.f32 0.0, %v2873
      %v2875 = vpop.f32.mrb[0].mxu0
      %2876 = vmatprep.mubr.f32.mxu0 0.0
      %2877 = vmatmul.mubr.f32.gmra.mrb[0].mxu0 %v2657
      %v2878 = vpop.f32.mrb[0].mxu0
      %v2879 = vadd.f32 0.0, %v2878
      %v2880 = vpop.f32.mrb[0].mxu0
      %2881 = vmatprep.mubr.f32.mxu0 0.0
      %2882 = vmatmul.mubr.f32.gmra.mrb[0].mxu0 %v2660
      %v2883 = vpop.f32.mrb[0].mxu0
      %v2884 = vadd.f32 0.0, %v2883
      %v2885 = vpop.f32.mrb[0].mxu0
      %2886 = vdwg.mxu0
      %v2888 = vsel %vm455, %v2498, 0
      %v2891 = vsel %vm455, %v2499, 0
      %v2894 = vsel %vm455, %v2500, 0
      %v2897 = vsel %vm455, %v2501, 0
      %v2900 = vsel %vm455, %v2502, 0
      %v2903 = vsel %vm455, %v2503, 0
      %v2906 = vsel %vm455, %v2504, 0
      %v2909 = vsel %vm455, %v2505, 0
      %v2912 = vsel %vm455, %v2506, 0
      %v2915 = vsel %vm455, %v2507, 0
      %v2918 = vsel %vm455, %v2508, 0
      %v2921 = vsel %vm455, %v2509, 0
      %v2924 = vsel %vm455, %v2510, 0
      %v2927 = vsel %vm455, %v2511, 0
      %v2930 = vsel %vm455, %v2512, 0
      %v2933 = vsel %vm455, %v2513, 0
      %v2936 = vsel %vm455, %v2514, 0
      %v2939 = vsel %vm455, %v2515, 0
      %v2942 = vsel %vm455, %v2516, 0
      %v2945 = vsel %vm455, %v2517, 0
      %v2948 = vsel %vm455, %v2518, 0
      %v2951 = vsel %vm455, %v2519, 0
      %v2954 = vsel %vm455, %v2520, 0
      %v2957 = vsel %vm455, %v2521, 0
      %v2960 = vsel %vm455, %v2522, 0
      %v2963 = vsel %vm455, %v2523, 0
      %v2966 = vsel %vm455, %v2524, 0
      %v2969 = vsel %vm455, %v2525, 0
      %v2972 = vsel %vm455, %v2526, 0
      %v2975 = vsel %vm455, %v2527, 0
      %v2978 = vsel %vm455, %v2528, 0
      %v2981 = vsel %vm455, %v2529, 0
      %2983 = vmatprep.subr.mxu0 0.0
      %2984 = vmatpush1.msra.mxu0 %v2531
      %2985 = vmatprep.subr.mxu0 0.0
      %2986 = vmatpush1.msra.mxu0 0.0
      %2987 = vmatprep.subr.mxu0 0.0
      %2988 = vmatpush1.msra.mxu0 0.0
      %2989 = vmatprep.subr.mxu0 0.0
      %2990 = vmatpush1.msra.mxu0 0.0
      %2991 = vmatprep.subr.mxu0 0.0
      %2992 = vmatpush1.msra.mxu0 0.0
      %2993 = vmatprep.subr.mxu0 0.0
      %2994 = vmatpush1.msra.mxu0 0.0
      %2995 = vmatprep.subr.mxu0 0.0
      %2996 = vmatpush1.msra.mxu0 0.0
      %2997 = vmatprep.subr.mxu0 0.0
      %2998 = vmatpush1.msra.mxu0 0.0
      %2999 = vmatprep.subr.mxu0 0.0
      %3000 = vmatpush1.msra.mxu0 0.0
      %3001 = vmatprep.subr.mxu0 0.0
      %3002 = vmatpush1.msra.mxu0 0.0
      %3003 = vmatprep.subr.mxu0 0.0
      %3004 = vmatpush1.msra.mxu0 0.0
      %3005 = vmatprep.subr.mxu0 0.0
      %3006 = vmatpush1.msra.mxu0 0.0
      %3007 = vmatprep.subr.mxu0 0.0
      %3008 = vmatpush1.msra.mxu0 0.0
      %3009 = vmatprep.subr.mxu0 0.0
      %3010 = vmatpush1.msra.mxu0 0.0
      %3011 = vmatprep.subr.mxu0 0.0
      %3012 = vmatpush1.msra.mxu0 0.0
      %3013 = vmatprep.subr.mxu0 0.0
      %3014 = vmatpush1.msra.mxu0 0.0
      %3015 = vmatprep.subr.mxu0 0.0
      %3016 = vmatpush1.msra.mxu0 0.0
      %3017 = vmatprep.subr.mxu0 0.0
      %3018 = vmatpush1.msra.mxu0 0.0
      %3019 = vmatprep.subr.mxu0 0.0
      %3020 = vmatpush1.msra.mxu0 0.0
      %3021 = vmatprep.subr.mxu0 0.0
      %3022 = vmatpush1.msra.mxu0 0.0
      %3023 = vmatprep.subr.mxu0 0.0
      %3024 = vmatpush1.msra.mxu0 0.0
      %3025 = vmatprep.subr.mxu0 0.0
      %3026 = vmatpush1.msra.mxu0 0.0
      %3027 = vmatprep.subr.mxu0 0.0
      %3028 = vmatpush1.msra.mxu0 0.0
      %3029 = vmatprep.subr.mxu0 0.0
      %3030 = vmatpush1.msra.mxu0 0.0
      %3031 = vmatprep.subr.mxu0 0.0
      %3032 = vmatpush1.msra.mxu0 0.0
      %3033 = vmatprep.subr.mxu0 0.0
      %3034 = vmatpush1.msra.mxu0 0.0
      %3035 = vmatprep.subr.mxu0 0.0
      %3036 = vmatpush1.msra.mxu0 0.0
      %3037 = vmatprep.subr.mxu0 0.0
      %3038 = vmatpush1.msra.mxu0 0.0
      %3039 = vmatprep.subr.mxu0 0.0
      %3040 = vmatpush1.msra.mxu0 0.0
      %3041 = vmatprep.subr.mxu0 0.0
      %3042 = vmatpush1.msra.mxu0 0.0
      %3043 = vmatprep.subr.mxu0 0.0
      %3044 = vmatpush1.msra.mxu0 0.0
      %3045 = vmatprep.subr.mxu0 0.0
      %3046 = vmatpush1.msra.mxu0 0.0
      %3047 = vmatprep.mubr.f32.mxu0 0.0
      %3048 = vmatmul.mubr.f32.gmra.mrb[0].mxu0 %v2888
      %v3049 = vpop.f32.mrb[0].mxu0
      %v3050 = vadd.f32 %v2729, %v3049
      %v3051 = vpop.f32.mrb[0].mxu0
      %3052 = vmatprep.mubr.f32.mxu0 0.0
      %3053 = vmatmul.mubr.f32.gmra.mrb[0].mxu0 %v2891
      %v3054 = vpop.f32.mrb[0].mxu0
      %v3055 = vadd.f32 %v2734, %v3054
      %v3056 = vpop.f32.mrb[0].mxu0
      %3057 = vmatprep.mubr.f32.mxu0 0.0
      %3058 = vmatmul.mubr.f32.gmra.mrb[0].mxu0 %v2894
      %v3059 = vpop.f32.mrb[0].mxu0
      %v3060 = vadd.f32 %v2739, %v3059
      %v3061 = vpop.f32.mrb[0].mxu0
      %3062 = vmatprep.mubr.f32.mxu0 0.0
      %3063 = vmatmul.mubr.f32.gmra.mrb[0].mxu0 %v2897
      %v3064 = vpop.f32.mrb[0].mxu0
      %v3065 = vadd.f32 %v2744, %v3064
      %v3066 = vpop.f32.mrb[0].mxu0
      %3067 = vmatprep.mubr.f32.mxu0 0.0
      %3068 = vmatmul.mubr.f32.gmra.mrb[0].mxu0 %v2900
      %v3069 = vpop.f32.mrb[0].mxu0
      %v3070 = vadd.f32 %v2749, %v3069
      %v3071 = vpop.f32.mrb[0].mxu0
      %3072 = vmatprep.mubr.f32.mxu0 0.0
      %3073 = vmatmul.mubr.f32.gmra.mrb[0].mxu0 %v2903
      %v3074 = vpop.f32.mrb[0].mxu0
      %v3075 = vadd.f32 %v2754, %v3074
      %v3076 = vpop.f32.mrb[0].mxu0
      %3077 = vmatprep.mubr.f32.mxu0 0.0
      %3078 = vmatmul.mubr.f32.gmra.mrb[0].mxu0 %v2906
      %v3079 = vpop.f32.mrb[0].mxu0
      %v3080 = vadd.f32 %v2759, %v3079
      %v3081 = vpop.f32.mrb[0].mxu0
      %3082 = vmatprep.mubr.f32.mxu0 0.0
      %3083 = vmatmul.mubr.f32.gmra.mrb[0].mxu0 %v2909
      %v3084 = vpop.f32.mrb[0].mxu0
      %v3085 = vadd.f32 %v2764, %v3084
      %v3086 = vpop.f32.mrb[0].mxu0
      %3087 = vmatprep.mubr.f32.mxu0 0.0
      %3088 = vmatmul.mubr.f32.gmra.mrb[0].mxu0 %v2912
      %v3089 = vpop.f32.mrb[0].mxu0
      %v3090 = vadd.f32 %v2769, %v3089
      %v3091 = vpop.f32.mrb[0].mxu0
      %3092 = vmatprep.mubr.f32.mxu0 0.0
      %3093 = vmatmul.mubr.f32.gmra.mrb[0].mxu0 %v2915
      %v3094 = vpop.f32.mrb[0].mxu0
      %v3095 = vadd.f32 %v2774, %v3094
      %v3096 = vpop.f32.mrb[0].mxu0
      %3097 = vmatprep.mubr.f32.mxu0 0.0
      %3098 = vmatmul.mubr.f32.gmra.mrb[0].mxu0 %v2918
      %v3099 = vpop.f32.mrb[0].mxu0
      %v3100 = vadd.f32 %v2779, %v3099
      %v3101 = vpop.f32.mrb[0].mxu0
      %3102 = vmatprep.mubr.f32.mxu0 0.0
      %3103 = vmatmul.mubr.f32.gmra.mrb[0].mxu0 %v2921
      %v3104 = vpop.f32.mrb[0].mxu0
      %v3105 = vadd.f32 %v2784, %v3104
      %v3106 = vpop.f32.mrb[0].mxu0
      %3107 = vmatprep.mubr.f32.mxu0 0.0
      %3108 = vmatmul.mubr.f32.gmra.mrb[0].mxu0 %v2924
      %v3109 = vpop.f32.mrb[0].mxu0
      %v3110 = vadd.f32 %v2789, %v3109
      %v3111 = vpop.f32.mrb[0].mxu0
      %3112 = vmatprep.mubr.f32.mxu0 0.0
      %3113 = vmatmul.mubr.f32.gmra.mrb[0].mxu0 %v2927
      %v3114 = vpop.f32.mrb[0].mxu0
      %v3115 = vadd.f32 %v2794, %v3114
      %v3116 = vpop.f32.mrb[0].mxu0
      %3117 = vmatprep.mubr.f32.mxu0 0.0
      %3118 = vmatmul.mubr.f32.gmra.mrb[0].mxu0 %v2930
      %v3119 = vpop.f32.mrb[0].mxu0
      %v3120 = vadd.f32 %v2799, %v3119
      %v3121 = vpop.f32.mrb[0].mxu0
      %3122 = vmatprep.mubr.f32.mxu0 0.0
      %3123 = vmatmul.mubr.f32.gmra.mrb[0].mxu0 %v2933
      %v3124 = vpop.f32.mrb[0].mxu0
      %v3125 = vadd.f32 %v2804, %v3124
      %v3126 = vpop.f32.mrb[0].mxu0
      %3127 = vmatprep.mubr.f32.mxu0 0.0
      %3128 = vmatmul.mubr.f32.gmra.mrb[0].mxu0 %v2936
      %v3129 = vpop.f32.mrb[0].mxu0
      %v3130 = vadd.f32 %v2809, %v3129
      %v3131 = vpop.f32.mrb[0].mxu0
      %3132 = vmatprep.mubr.f32.mxu0 0.0
      %3133 = vmatmul.mubr.f32.gmra.mrb[0].mxu0 %v2939
      %v3134 = vpop.f32.mrb[0].mxu0
      %v3135 = vadd.f32 %v2814, %v3134
      %v3136 = vpop.f32.mrb[0].mxu0
      %3137 = vmatprep.mubr.f32.mxu0 0.0
      %3138 = vmatmul.mubr.f32.gmra.mrb[0].mxu0 %v2942
      %v3139 = vpop.f32.mrb[0].mxu0
      %v3140 = vadd.f32 %v2819, %v3139
      %v3141 = vpop.f32.mrb[0].mxu0
      %3142 = vmatprep.mubr.f32.mxu0 0.0
      %3143 = vmatmul.mubr.f32.gmra.mrb[0].mxu0 %v2945
      %v3144 = vpop.f32.mrb[0].mxu0
      %v3145 = vadd.f32 %v2824, %v3144
      %v3146 = vpop.f32.mrb[0].mxu0
      %3147 = vmatprep.mubr.f32.mxu0 0.0
      %3148 = vmatmul.mubr.f32.gmra.mrb[0].mxu0 %v2948
      %v3149 = vpop.f32.mrb[0].mxu0
      %v3150 = vadd.f32 %v2829, %v3149
      %v3151 = vpop.f32.mrb[0].mxu0
      %3152 = vmatprep.mubr.f32.mxu0 0.0
      %3153 = vmatmul.mubr.f32.gmra.mrb[0].mxu0 %v2951
      %v3154 = vpop.f32.mrb[0].mxu0
      %v3155 = vadd.f32 %v2834, %v3154
      %v3156 = vpop.f32.mrb[0].mxu0
      %3157 = vmatprep.mubr.f32.mxu0 0.0
      %3158 = vmatmul.mubr.f32.gmra.mrb[0].mxu0 %v2954
      %v3159 = vpop.f32.mrb[0].mxu0
      %v3160 = vadd.f32 %v2839, %v3159
      %v3161 = vpop.f32.mrb[0].mxu0
      %3162 = vmatprep.mubr.f32.mxu0 0.0
      %3163 = vmatmul.mubr.f32.gmra.mrb[0].mxu0 %v2957
      %v3164 = vpop.f32.mrb[0].mxu0
      %v3165 = vadd.f32 %v2844, %v3164
      %v3166 = vpop.f32.mrb[0].mxu0
      %3167 = vmatprep.mubr.f32.mxu0 0.0
      %3168 = vmatmul.mubr.f32.gmra.mrb[0].mxu0 %v2960
      %v3169 = vpop.f32.mrb[0].mxu0
      %v3170 = vadd.f32 %v2849, %v3169
      %v3171 = vpop.f32.mrb[0].mxu0
      %3172 = vmatprep.mubr.f32.mxu0 0.0
      %3173 = vmatmul.mubr.f32.gmra.mrb[0].mxu0 %v2963
      %v3174 = vpop.f32.mrb[0].mxu0
      %v3175 = vadd.f32 %v2854, %v3174
      %v3176 = vpop.f32.mrb[0].mxu0
      %3177 = vmatprep.mubr.f32.mxu0 0.0
      %3178 = vmatmul.mubr.f32.gmra.mrb[0].mxu0 %v2966
      %v3179 = vpop.f32.mrb[0].mxu0
      %v3180 = vadd.f32 %v2859, %v3179
      %v3181 = vpop.f32.mrb[0].mxu0
      %3182 = vmatprep.mubr.f32.mxu0 0.0
      %3183 = vmatmul.mubr.f32.gmra.mrb[0].mxu0 %v2969
      %v3184 = vpop.f32.mrb[0].mxu0
      %v3185 = vadd.f32 %v2864, %v3184
      %v3186 = vpop.f32.mrb[0].mxu0
      %3187 = vmatprep.mubr.f32.mxu0 0.0
      %3188 = vmatmul.mubr.f32.gmra.mrb[0].mxu0 %v2972
      %v3189 = vpop.f32.mrb[0].mxu0
      %v3190 = vadd.f32 %v2869, %v3189
      %v3191 = vpop.f32.mrb[0].mxu0
      %3192 = vmatprep.mubr.f32.mxu0 0.0
      %3193 = vmatmul.mubr.f32.gmra.mrb[0].mxu0 %v2975
      %v3194 = vpop.f32.mrb[0].mxu0
      %v3195 = vadd.f32 %v2874, %v3194
      %v3196 = vpop.f32.mrb[0].mxu0
      %3197 = vmatprep.mubr.f32.mxu0 0.0
      %3198 = vmatmul.mubr.f32.gmra.mrb[0].mxu0 %v2978
      %v3199 = vpop.f32.mrb[0].mxu0
      %v3200 = vadd.f32 %v2879, %v3199
      %v3201 = vpop.f32.mrb[0].mxu0
      %3202 = vmatprep.mubr.f32.mxu0 0.0
      %3203 = vmatmul.mubr.f32.gmra.mrb[0].mxu0 %v2981
      %v3204 = vpop.f32.mrb[0].mxu0
      %v3205 = vadd.f32 %v2884, %v3204
      %v3206 = vpop.f32.mrb[0].mxu0
      %3207 = vdwg.mxu0
      %v3208 = vld [vmem:[%s653 + $0x10] sm:$0xff]
      %v3209 = vld [vmem:[%s653 + $0x18] sm:$0xff]
      %v3210 = vld [vmem:[%s653 + $0x20] sm:$0xff]
      %v3211 = vld [vmem:[%s653 + $0x28] sm:$0xff]
      %v3212 = vld [vmem:[%s653 + $0x30] sm:$0xff]
      %v3213 = vld [vmem:[%s653 + $0x38] sm:$0xff]
      %v3214 = vld [vmem:[%s653 + $0x40] sm:$0xff]
      %v3215 = vld [vmem:[%s653 + $0x48] sm:$0xff]
      %v3216 = vld [vmem:[%s653 + $0x50] sm:$0xff]
      %v3217 = vld [vmem:[%s653 + $0x58] sm:$0xff]
      %v3218 = vld [vmem:[%s653 + $0x60] sm:$0xff]
      %v3219 = vld [vmem:[%s653 + $0x68] sm:$0xff]
      %v3220 = vld [vmem:[%s653 + $0x70] sm:$0xff]
      %v3221 = vld [vmem:[%s653 + $0x78] sm:$0xff]
      %v3222 = vld [vmem:[%s653 + $0x80] sm:$0xff]
      %v3223 = vld [vmem:[%s653 + $0x88] sm:$0xff]
      %v3224 = vld [vmem:[%s653 + $0x90] sm:$0xff]
      %v3225 = vld [vmem:[%s653 + $0x98] sm:$0xff]
      %v3226 = vld [vmem:[%s653 + $0xa0] sm:$0xff]
      %v3227 = vld [vmem:[%s653 + $0xa8] sm:$0xff]
      %v3228 = vld [vmem:[%s653 + $0xb0] sm:$0xff]
      %v3229 = vld [vmem:[%s653 + $0xb8] sm:$0xff]
      %v3230 = vld [vmem:[%s653 + $0xc0] sm:$0xff]
      %v3231 = vld [vmem:[%s653 + $0xc8] sm:$0xff]
      %v3232 = vld [vmem:[%s653 + $0xd0] sm:$0xff]
      %v3233 = vld [vmem:[%s653 + $0xd8] sm:$0xff]
      %v3234 = vld [vmem:[%s653 + $0xe0] sm:$0xff]
      %v3235 = vld [vmem:[%s653 + $0xe8] sm:$0xff]
      %v3236 = vld [vmem:[%s653 + $0xf0] sm:$0xff]
      %v3237 = vld [vmem:[%s653 + $0xf8] sm:$0xff]
      %v3238 = vld [vmem:[%s653 + $0x100] sm:$0xff]
      %v3239 = vld [vmem:[%s653 + $0x108] sm:$0xff]
      %s3240 = scalar_lea.vmem %s3, 48
      %v3241 = vld [vmem:[%s3240] sm:$0xff]
      %v3243 = vsel %vm455, %v3208, 0
      %v3246 = vsel %vm455, %v3209, 0
      %v3249 = vsel %vm455, %v3210, 0
      %v3252 = vsel %vm455, %v3211, 0
      %v3255 = vsel %vm455, %v3212, 0
      %v3258 = vsel %vm455, %v3213, 0
      %v3261 = vsel %vm455, %v3214, 0
      %v3264 = vsel %vm455, %v3215, 0
      %v3267 = vsel %vm455, %v3216, 0
      %v3270 = vsel %vm455, %v3217, 0
      %v3273 = vsel %vm455, %v3218, 0
      %v3276 = vsel %vm455, %v3219, 0
      %v3279 = vsel %vm455, %v3220, 0
      %v3282 = vsel %vm455, %v3221, 0
      %v3285 = vsel %vm455, %v3222, 0
      %v3288 = vsel %vm455, %v3223, 0
      %v3291 = vsel %vm455, %v3224, 0
      %v3294 = vsel %vm455, %v3225, 0
      %v3297 = vsel %vm455, %v3226, 0
      %v3300 = vsel %vm455, %v3227, 0
      %v3303 = vsel %vm455, %v3228, 0
      %v3306 = vsel %vm455, %v3229, 0
      %v3309 = vsel %vm455, %v3230, 0
      %v3312 = vsel %vm455, %v3231, 0
      %v3315 = vsel %vm455, %v3232, 0
      %v3318 = vsel %vm455, %v3233, 0
      %v3321 = vsel %vm455, %v3234, 0
      %v3324 = vsel %vm455, %v3235, 0
      %v3327 = vsel %vm455, %v3236, 0
      %v3330 = vsel %vm455, %v3237, 0
      %v3333 = vsel %vm455, %v3238, 0
      %v3336 = vsel %vm455, %v3239, 0
      %3338 = vmatprep.subr.mxu0 0.0
      %3339 = vmatpush1.msra.mxu0 %v3241
      %3340 = vmatprep.subr.mxu0 0.0
      %3341 = vmatpush1.msra.mxu0 0.0
      %3342 = vmatprep.subr.mxu0 0.0
      %3343 = vmatpush1.msra.mxu0 0.0
      %3344 = vmatprep.subr.mxu0 0.0
      %3345 = vmatpush1.msra.mxu0 0.0
      %3346 = vmatprep.subr.mxu0 0.0
      %3347 = vmatpush1.msra.mxu0 0.0
      %3348 = vmatprep.subr.mxu0 0.0
      %3349 = vmatpush1.msra.mxu0 0.0
      %3350 = vmatprep.subr.mxu0 0.0
      %3351 = vmatpush1.msra.mxu0 0.0
      %3352 = vmatprep.subr.mxu0 0.0
      %3353 = vmatpush1.msra.mxu0 0.0
      %3354 = vmatprep.subr.mxu0 0.0
      %3355 = vmatpush1.msra.mxu0 0.0
      %3356 = vmatprep.subr.mxu0 0.0
      %3357 = vmatpush1.msra.mxu0 0.0
      %3358 = vmatprep.subr.mxu0 0.0
      %3359 = vmatpush1.msra.mxu0 0.0
      %3360 = vmatprep.subr.mxu0 0.0
      %3361 = vmatpush1.msra.mxu0 0.0
      %3362 = vmatprep.subr.mxu0 0.0
      %3363 = vmatpush1.msra.mxu0 0.0
      %3364 = vmatprep.subr.mxu0 0.0
      %3365 = vmatpush1.msra.mxu0 0.0
      %3366 = vmatprep.subr.mxu0 0.0
      %3367 = vmatpush1.msra.mxu0 0.0
      %3368 = vmatprep.subr.mxu0 0.0
      %3369 = vmatpush1.msra.mxu0 0.0
      %3370 = vmatprep.subr.mxu0 0.0
      %3371 = vmatpush1.msra.mxu0 0.0
      %3372 = vmatprep.subr.mxu0 0.0
      %3373 = vmatpush1.msra.mxu0 0.0
      %3374 = vmatprep.subr.mxu0 0.0
      %3375 = vmatpush1.msra.mxu0 0.0
      %3376 = vmatprep.subr.mxu0 0.0
      %3377 = vmatpush1.msra.mxu0 0.0
      %3378 = vmatprep.subr.mxu0 0.0
      %3379 = vmatpush1.msra.mxu0 0.0
      %3380 = vmatprep.subr.mxu0 0.0
      %3381 = vmatpush1.msra.mxu0 0.0
      %3382 = vmatprep.subr.mxu0 0.0
      %3383 = vmatpush1.msra.mxu0 0.0
      %3384 = vmatprep.subr.mxu0 0.0
      %3385 = vmatpush1.msra.mxu0 0.0
      %3386 = vmatprep.subr.mxu0 0.0
      %3387 = vmatpush1.msra.mxu0 0.0
      %3388 = vmatprep.subr.mxu0 0.0
      %3389 = vmatpush1.msra.mxu0 0.0
      %3390 = vmatprep.subr.mxu0 0.0
      %3391 = vmatpush1.msra.mxu0 0.0
      %3392 = vmatprep.subr.mxu0 0.0
      %3393 = vmatpush1.msra.mxu0 0.0
      %3394 = vmatprep.subr.mxu0 0.0
      %3395 = vmatpush1.msra.mxu0 0.0
      %3396 = vmatprep.subr.mxu0 0.0
      %3397 = vmatpush1.msra.mxu0 0.0
      %3398 = vmatprep.subr.mxu0 0.0
      %3399 = vmatpush1.msra.mxu0 0.0
      %3400 = vmatprep.subr.mxu0 0.0
      %3401 = vmatpush1.msra.mxu0 0.0
      %3402 = vmatprep.mubr.f32.mxu0 0.0
      %3403 = vmatmul.mubr.f32.gmra.mrb[0].mxu0 %v3243
      %v3404 = vpop.f32.mrb[0].mxu0
      %v3405 = vadd.f32 0.0, %v3404
      %v3406 = vpop.f32.mrb[0].mxu0
      %3407 = vmatprep.mubr.f32.mxu0 0.0
      %3408 = vmatmul.mubr.f32.gmra.mrb[0].mxu0 %v3246
      %v3409 = vpop.f32.mrb[0].mxu0
      %v3410 = vadd.f32 0.0, %v3409
      %v3411 = vpop.f32.mrb[0].mxu0
      %3412 = vmatprep.mubr.f32.mxu0 0.0
      %3413 = vmatmul.mubr.f32.gmra.mrb[0].mxu0 %v3249
      %v3414 = vpop.f32.mrb[0].mxu0
      %v3415 = vadd.f32 0.0, %v3414
      %v3416 = vpop.f32.mrb[0].mxu0
      %3417 = vmatprep.mubr.f32.mxu0 0.0
      %3418 = vmatmul.mubr.f32.gmra.mrb[0].mxu0 %v3252
      %v3419 = vpop.f32.mrb[0].mxu0
      %v3420 = vadd.f32 0.0, %v3419
      %v3421 = vpop.f32.mrb[0].mxu0
      %3422 = vmatprep.mubr.f32.mxu0 0.0
      %3423 = vmatmul.mubr.f32.gmra.mrb[0].mxu0 %v3255
      %v3424 = vpop.f32.mrb[0].mxu0
      %v3425 = vadd.f32 0.0, %v3424
      %v3426 = vpop.f32.mrb[0].mxu0
      %3427 = vmatprep.mubr.f32.mxu0 0.0
      %3428 = vmatmul.mubr.f32.gmra.mrb[0].mxu0 %v3258
      %v3429 = vpop.f32.mrb[0].mxu0
      %v3430 = vadd.f32 0.0, %v3429
      %v3431 = vpop.f32.mrb[0].mxu0
      %3432 = vmatprep.mubr.f32.mxu0 0.0
      %3433 = vmatmul.mubr.f32.gmra.mrb[0].mxu0 %v3261
      %v3434 = vpop.f32.mrb[0].mxu0
      %v3435 = vadd.f32 0.0, %v3434
      %v3436 = vpop.f32.mrb[0].mxu0
      %3437 = vmatprep.mubr.f32.mxu0 0.0
      %3438 = vmatmul.mubr.f32.gmra.mrb[0].mxu0 %v3264
      %v3439 = vpop.f32.mrb[0].mxu0
      %v3440 = vadd.f32 0.0, %v3439
      %v3441 = vpop.f32.mrb[0].mxu0
      %3442 = vmatprep.mubr.f32.mxu0 0.0
      %3443 = vmatmul.mubr.f32.gmra.mrb[0].mxu0 %v3267
      %v3444 = vpop.f32.mrb[0].mxu0
      %v3445 = vadd.f32 0.0, %v3444
      %v3446 = vpop.f32.mrb[0].mxu0
      %3447 = vmatprep.mubr.f32.mxu0 0.0
      %3448 = vmatmul.mubr.f32.gmra.mrb[0].mxu0 %v3270
      %v3449 = vpop.f32.mrb[0].mxu0
      %v3450 = vadd.f32 0.0, %v3449
      %v3451 = vpop.f32.mrb[0].mxu0
      %3452 = vmatprep.mubr.f32.mxu0 0.0
      %3453 = vmatmul.mubr.f32.gmra.mrb[0].mxu0 %v3273
      %v3454 = vpop.f32.mrb[0].mxu0
      %v3455 = vadd.f32 0.0, %v3454
      %v3456 = vpop.f32.mrb[0].mxu0
      %3457 = vmatprep.mubr.f32.mxu0 0.0
      %3458 = vmatmul.mubr.f32.gmra.mrb[0].mxu0 %v3276
      %v3459 = vpop.f32.mrb[0].mxu0
      %v3460 = vadd.f32 0.0, %v3459
      %v3461 = vpop.f32.mrb[0].mxu0
      %3462 = vmatprep.mubr.f32.mxu0 0.0
      %3463 = vmatmul.mubr.f32.gmra.mrb[0].mxu0 %v3279
      %v3464 = vpop.f32.mrb[0].mxu0
      %v3465 = vadd.f32 0.0, %v3464
      %v3466 = vpop.f32.mrb[0].mxu0
      %3467 = vmatprep.mubr.f32.mxu0 0.0
      %3468 = vmatmul.mubr.f32.gmra.mrb[0].mxu0 %v3282
      %v3469 = vpop.f32.mrb[0].mxu0
      %v3470 = vadd.f32 0.0, %v3469
      %v3471 = vpop.f32.mrb[0].mxu0
      %3472 = vmatprep.mubr.f32.mxu0 0.0
      %3473 = vmatmul.mubr.f32.gmra.mrb[0].mxu0 %v3285
      %v3474 = vpop.f32.mrb[0].mxu0
      %v3475 = vadd.f32 0.0, %v3474
      %v3476 = vpop.f32.mrb[0].mxu0
      %3477 = vmatprep.mubr.f32.mxu0 0.0
      %3478 = vmatmul.mubr.f32.gmra.mrb[0].mxu0 %v3288
      %v3479 = vpop.f32.mrb[0].mxu0
      %v3480 = vadd.f32 0.0, %v3479
      %v3481 = vpop.f32.mrb[0].mxu0
      %3482 = vmatprep.mubr.f32.mxu0 0.0
      %3483 = vmatmul.mubr.f32.gmra.mrb[0].mxu0 %v3291
      %v3484 = vpop.f32.mrb[0].mxu0
      %v3485 = vadd.f32 0.0, %v3484
      %v3486 = vpop.f32.mrb[0].mxu0
      %3487 = vmatprep.mubr.f32.mxu0 0.0
      %3488 = vmatmul.mubr.f32.gmra.mrb[0].mxu0 %v3294
      %v3489 = vpop.f32.mrb[0].mxu0
      %v3490 = vadd.f32 0.0, %v3489
      %v3491 = vpop.f32.mrb[0].mxu0
      %3492 = vmatprep.mubr.f32.mxu0 0.0
      %3493 = vmatmul.mubr.f32.gmra.mrb[0].mxu0 %v3297
      %v3494 = vpop.f32.mrb[0].mxu0
      %v3495 = vadd.f32 0.0, %v3494
      %v3496 = vpop.f32.mrb[0].mxu0
      %3497 = vmatprep.mubr.f32.mxu0 0.0
      %3498 = vmatmul.mubr.f32.gmra.mrb[0].mxu0 %v3300
      %v3499 = vpop.f32.mrb[0].mxu0
      %v3500 = vadd.f32 0.0, %v3499
      %v3501 = vpop.f32.mrb[0].mxu0
      %3502 = vmatprep.mubr.f32.mxu0 0.0
      %3503 = vmatmul.mubr.f32.gmra.mrb[0].mxu0 %v3303
      %v3504 = vpop.f32.mrb[0].mxu0
      %v3505 = vadd.f32 0.0, %v3504
      %v3506 = vpop.f32.mrb[0].mxu0
      %3507 = vmatprep.mubr.f32.mxu0 0.0
      %3508 = vmatmul.mubr.f32.gmra.mrb[0].mxu0 %v3306
      %v3509 = vpop.f32.mrb[0].mxu0
      %v3510 = vadd.f32 0.0, %v3509
      %v3511 = vpop.f32.mrb[0].mxu0
      %3512 = vmatprep.mubr.f32.mxu0 0.0
      %3513 = vmatmul.mubr.f32.gmra.mrb[0].mxu0 %v3309
      %v3514 = vpop.f32.mrb[0].mxu0
      %v3515 = vadd.f32 0.0, %v3514
      %v3516 = vpop.f32.mrb[0].mxu0
      %3517 = vmatprep.mubr.f32.mxu0 0.0
      %3518 = vmatmul.mubr.f32.gmra.mrb[0].mxu0 %v3312
      %v3519 = vpop.f32.mrb[0].mxu0
      %v3520 = vadd.f32 0.0, %v3519
      %v3521 = vpop.f32.mrb[0].mxu0
      %3522 = vmatprep.mubr.f32.mxu0 0.0
      %3523 = vmatmul.mubr.f32.gmra.mrb[0].mxu0 %v3315
      %v3524 = vpop.f32.mrb[0].mxu0
      %v3525 = vadd.f32 0.0, %v3524
      %v3526 = vpop.f32.mrb[0].mxu0
      %3527 = vmatprep.mubr.f32.mxu0 0.0
      %3528 = vmatmul.mubr.f32.gmra.mrb[0].mxu0 %v3318
      %v3529 = vpop.f32.mrb[0].mxu0
      %v3530 = vadd.f32 0.0, %v3529
      %v3531 = vpop.f32.mrb[0].mxu0
      %3532 = vmatprep.mubr.f32.mxu0 0.0
      %3533 = vmatmul.mubr.f32.gmra.mrb[0].mxu0 %v3321
      %v3534 = vpop.f32.mrb[0].mxu0
      %v3535 = vadd.f32 0.0, %v3534
      %v3536 = vpop.f32.mrb[0].mxu0
      %3537 = vmatprep.mubr.f32.mxu0 0.0
      %3538 = vmatmul.mubr.f32.gmra.mrb[0].mxu0 %v3324
      %v3539 = vpop.f32.mrb[0].mxu0
      %v3540 = vadd.f32 0.0, %v3539
      %v3541 = vpop.f32.mrb[0].mxu0
      %3542 = vmatprep.mubr.f32.mxu0 0.0
      %3543 = vmatmul.mubr.f32.gmra.mrb[0].mxu0 %v3327
      %v3544 = vpop.f32.mrb[0].mxu0
      %v3545 = vadd.f32 0.0, %v3544
      %v3546 = vpop.f32.mrb[0].mxu0
      %3547 = vmatprep.mubr.f32.mxu0 0.0
      %3548 = vmatmul.mubr.f32.gmra.mrb[0].mxu0 %v3330
      %v3549 = vpop.f32.mrb[0].mxu0
      %v3550 = vadd.f32 0.0, %v3549
      %v3551 = vpop.f32.mrb[0].mxu0
      %3552 = vmatprep.mubr.f32.mxu0 0.0
      %3553 = vmatmul.mubr.f32.gmra.mrb[0].mxu0 %v3333
      %v3554 = vpop.f32.mrb[0].mxu0
      %v3555 = vadd.f32 0.0, %v3554
      %v3556 = vpop.f32.mrb[0].mxu0
      %3557 = vmatprep.mubr.f32.mxu0 0.0
      %3558 = vmatmul.mubr.f32.gmra.mrb[0].mxu0 %v3336
      %v3559 = vpop.f32.mrb[0].mxu0
      %v3560 = vadd.f32 0.0, %v3559
      %v3561 = vpop.f32.mrb[0].mxu0
      %3562 = vdwg.mxu0
      %v3563 = vadd.f32 %v3050, %v3405
      %v3564 = vadd.f32 %v3055, %v3410
      %v3565 = vadd.f32 %v3060, %v3415
      %v3566 = vadd.f32 %v3065, %v3420
      %v3567 = vadd.f32 %v3070, %v3425
      %v3568 = vadd.f32 %v3075, %v3430
      %v3569 = vadd.f32 %v3080, %v3435
      %v3570 = vadd.f32 %v3085, %v3440
      %v3571 = vadd.f32 %v3090, %v3445
      %v3572 = vadd.f32 %v3095, %v3450
      %v3573 = vadd.f32 %v3100, %v3455
      %v3574 = vadd.f32 %v3105, %v3460
      %v3575 = vadd.f32 %v3110, %v3465
      %v3576 = vadd.f32 %v3115, %v3470
      %v3577 = vadd.f32 %v3120, %v3475
      %v3578 = vadd.f32 %v3125, %v3480
      %v3579 = vadd.f32 %v3130, %v3485
      %v3580 = vadd.f32 %v3135, %v3490
      %v3581 = vadd.f32 %v3140, %v3495
      %v3582 = vadd.f32 %v3145, %v3500
      %v3583 = vadd.f32 %v3150, %v3505
      %v3584 = vadd.f32 %v3155, %v3510
      %v3585 = vadd.f32 %v3160, %v3515
      %v3586 = vadd.f32 %v3165, %v3520
      %v3587 = vadd.f32 %v3170, %v3525
      %v3588 = vadd.f32 %v3175, %v3530
      %v3589 = vadd.f32 %v3180, %v3535
      %v3590 = vadd.f32 %v3185, %v3540
      %v3591 = vadd.f32 %v3190, %v3545
      %v3592 = vadd.f32 %v3195, %v3550
      %v3593 = vadd.f32 %v3200, %v3555
      %v3594 = vadd.f32 %v3205, %v3560
      %v3595 = vld [vmem:[%s807 + $0x10] sm:$0xff]
      %v3596 = vld [vmem:[%s807 + $0x18] sm:$0xff]
      %v3597 = vld [vmem:[%s807 + $0x20] sm:$0xff]
      %v3598 = vld [vmem:[%s807 + $0x28] sm:$0xff]
      %v3599 = vld [vmem:[%s807 + $0x30] sm:$0xff]
      %v3600 = vld [vmem:[%s807 + $0x38] sm:$0xff]
      %v3601 = vld [vmem:[%s807 + $0x40] sm:$0xff]
      %v3602 = vld [vmem:[%s807 + $0x48] sm:$0xff]
      %v3603 = vld [vmem:[%s807 + $0x50] sm:$0xff]
      %v3604 = vld [vmem:[%s807 + $0x58] sm:$0xff]
      %v3605 = vld [vmem:[%s807 + $0x60] sm:$0xff]
      %v3606 = vld [vmem:[%s807 + $0x68] sm:$0xff]
      %v3607 = vld [vmem:[%s807 + $0x70] sm:$0xff]
      %v3608 = vld [vmem:[%s807 + $0x78] sm:$0xff]
      %v3609 = vld [vmem:[%s807 + $0x80] sm:$0xff]
      %v3610 = vld [vmem:[%s807 + $0x88] sm:$0xff]
      %v3611 = vld [vmem:[%s807 + $0x90] sm:$0xff]
      %v3612 = vld [vmem:[%s807 + $0x98] sm:$0xff]
      %v3613 = vld [vmem:[%s807 + $0xa0] sm:$0xff]
      %v3614 = vld [vmem:[%s807 + $0xa8] sm:$0xff]
      %v3615 = vld [vmem:[%s807 + $0xb0] sm:$0xff]
      %v3616 = vld [vmem:[%s807 + $0xb8] sm:$0xff]
      %v3617 = vld [vmem:[%s807 + $0xc0] sm:$0xff]
      %v3618 = vld [vmem:[%s807 + $0xc8] sm:$0xff]
      %v3619 = vld [vmem:[%s807 + $0xd0] sm:$0xff]
      %v3620 = vld [vmem:[%s807 + $0xd8] sm:$0xff]
      %v3621 = vld [vmem:[%s807 + $0xe0] sm:$0xff]
      %v3622 = vld [vmem:[%s807 + $0xe8] sm:$0xff]
      %v3623 = vld [vmem:[%s807 + $0xf0] sm:$0xff]
      %v3624 = vld [vmem:[%s807 + $0xf8] sm:$0xff]
      %v3625 = vld [vmem:[%s807 + $0x100] sm:$0xff]
      %v3626 = vld [vmem:[%s807 + $0x108] sm:$0xff]
      %s3627 = scalar_lea.vmem %s3, 56
      %v3628 = vld [vmem:[%s3627] sm:$0xff]
      %v3630 = vsel %vm455, %v3595, 0
      %v3633 = vsel %vm455, %v3596, 0
      %v3636 = vsel %vm455, %v3597, 0
      %v3639 = vsel %vm455, %v3598, 0
      %v3642 = vsel %vm455, %v3599, 0
      %v3645 = vsel %vm455, %v3600, 0
      %v3648 = vsel %vm455, %v3601, 0
      %v3651 = vsel %vm455, %v3602, 0
      %v3654 = vsel %vm455, %v3603, 0
      %v3657 = vsel %vm455, %v3604, 0
      %v3660 = vsel %vm455, %v3605, 0
      %v3663 = vsel %vm455, %v3606, 0
      %v3666 = vsel %vm455, %v3607, 0
      %v3669 = vsel %vm455, %v3608, 0
      %v3672 = vsel %vm455, %v3609, 0
      %v3675 = vsel %vm455, %v3610, 0
      %v3678 = vsel %vm455, %v3611, 0
      %v3681 = vsel %vm455, %v3612, 0
      %v3684 = vsel %vm455, %v3613, 0
      %v3687 = vsel %vm455, %v3614, 0
      %v3690 = vsel %vm455, %v3615, 0
      %v3693 = vsel %vm455, %v3616, 0
      %v3696 = vsel %vm455, %v3617, 0
      %v3699 = vsel %vm455, %v3618, 0
      %v3702 = vsel %vm455, %v3619, 0
      %v3705 = vsel %vm455, %v3620, 0
      %v3708 = vsel %vm455, %v3621, 0
      %v3711 = vsel %vm455, %v3622, 0
      %v3714 = vsel %vm455, %v3623, 0
      %v3717 = vsel %vm455, %v3624, 0
      %v3720 = vsel %vm455, %v3625, 0
      %v3723 = vsel %vm455, %v3626, 0
      %3725 = vmatprep.subr.mxu0 0.0
      %3726 = vmatpush1.msra.mxu0 %v3628
      %3727 = vmatprep.subr.mxu0 0.0
      %3728 = vmatpush1.msra.mxu0 0.0
      %3729 = vmatprep.subr.mxu0 0.0
      %3730 = vmatpush1.msra.mxu0 0.0
      %3731 = vmatprep.subr.mxu0 0.0
      %3732 = vmatpush1.msra.mxu0 0.0
      %3733 = vmatprep.subr.mxu0 0.0
      %3734 = vmatpush1.msra.mxu0 0.0
      %3735 = vmatprep.subr.mxu0 0.0
      %3736 = vmatpush1.msra.mxu0 0.0
      %3737 = vmatprep.subr.mxu0 0.0
      %3738 = vmatpush1.msra.mxu0 0.0
      %3739 = vmatprep.subr.mxu0 0.0
      %3740 = vmatpush1.msra.mxu0 0.0
      %3741 = vmatprep.subr.mxu0 0.0
      %3742 = vmatpush1.msra.mxu0 0.0
      %3743 = vmatprep.subr.mxu0 0.0
      %3744 = vmatpush1.msra.mxu0 0.0
      %3745 = vmatprep.subr.mxu0 0.0
      %3746 = vmatpush1.msra.mxu0 0.0
      %3747 = vmatprep.subr.mxu0 0.0
      %3748 = vmatpush1.msra.mxu0 0.0
      %3749 = vmatprep.subr.mxu0 0.0
      %3750 = vmatpush1.msra.mxu0 0.0
      %3751 = vmatprep.subr.mxu0 0.0
      %3752 = vmatpush1.msra.mxu0 0.0
      %3753 = vmatprep.subr.mxu0 0.0
      %3754 = vmatpush1.msra.mxu0 0.0
      %3755 = vmatprep.subr.mxu0 0.0
      %3756 = vmatpush1.msra.mxu0 0.0
      %3757 = vmatprep.subr.mxu0 0.0
      %3758 = vmatpush1.msra.mxu0 0.0
      %3759 = vmatprep.subr.mxu0 0.0
      %3760 = vmatpush1.msra.mxu0 0.0
      %3761 = vmatprep.subr.mxu0 0.0
      %3762 = vmatpush1.msra.mxu0 0.0
      %3763 = vmatprep.subr.mxu0 0.0
      %3764 = vmatpush1.msra.mxu0 0.0
      %3765 = vmatprep.subr.mxu0 0.0
      %3766 = vmatpush1.msra.mxu0 0.0
      %3767 = vmatprep.subr.mxu0 0.0
      %3768 = vmatpush1.msra.mxu0 0.0
      %3769 = vmatprep.subr.mxu0 0.0
      %3770 = vmatpush1.msra.mxu0 0.0
      %3771 = vmatprep.subr.mxu0 0.0
      %3772 = vmatpush1.msra.mxu0 0.0
      %3773 = vmatprep.subr.mxu0 0.0
      %3774 = vmatpush1.msra.mxu0 0.0
      %3775 = vmatprep.subr.mxu0 0.0
      %3776 = vmatpush1.msra.mxu0 0.0
      %3777 = vmatprep.subr.mxu0 0.0
      %3778 = vmatpush1.msra.mxu0 0.0
      %3779 = vmatprep.subr.mxu0 0.0
      %3780 = vmatpush1.msra.mxu0 0.0
      %3781 = vmatprep.subr.mxu0 0.0
      %3782 = vmatpush1.msra.mxu0 0.0
      %3783 = vmatprep.subr.mxu0 0.0
      %3784 = vmatpush1.msra.mxu0 0.0
      %3785 = vmatprep.subr.mxu0 0.0
      %3786 = vmatpush1.msra.mxu0 0.0
      %3787 = vmatprep.subr.mxu0 0.0
      %3788 = vmatpush1.msra.mxu0 0.0
      %3789 = vmatprep.mubr.f32.mxu0 0.0
      %3790 = vmatmul.mubr.f32.gmra.mrb[0].mxu0 %v3630
      %v3791 = vpop.f32.mrb[0].mxu0
      %v3792 = vadd.f32 0.0, %v3791
      %v3793 = vpop.f32.mrb[0].mxu0
      %3794 = vmatprep.mubr.f32.mxu0 0.0
      %3795 = vmatmul.mubr.f32.gmra.mrb[0].mxu0 %v3633
      %v3796 = vpop.f32.mrb[0].mxu0
      %v3797 = vadd.f32 0.0, %v3796
      %v3798 = vpop.f32.mrb[0].mxu0
      %3799 = vmatprep.mubr.f32.mxu0 0.0
      %3800 = vmatmul.mubr.f32.gmra.mrb[0].mxu0 %v3636
      %v3801 = vpop.f32.mrb[0].mxu0
      %v3802 = vadd.f32 0.0, %v3801
      %v3803 = vpop.f32.mrb[0].mxu0
      %3804 = vmatprep.mubr.f32.mxu0 0.0
      %3805 = vmatmul.mubr.f32.gmra.mrb[0].mxu0 %v3639
      %v3806 = vpop.f32.mrb[0].mxu0
      %v3807 = vadd.f32 0.0, %v3806
      %v3808 = vpop.f32.mrb[0].mxu0
      %3809 = vmatprep.mubr.f32.mxu0 0.0
      %3810 = vmatmul.mubr.f32.gmra.mrb[0].mxu0 %v3642
      %v3811 = vpop.f32.mrb[0].mxu0
      %v3812 = vadd.f32 0.0, %v3811
      %v3813 = vpop.f32.mrb[0].mxu0
      %3814 = vmatprep.mubr.f32.mxu0 0.0
      %3815 = vmatmul.mubr.f32.gmra.mrb[0].mxu0 %v3645
      %v3816 = vpop.f32.mrb[0].mxu0
      %v3817 = vadd.f32 0.0, %v3816
      %v3818 = vpop.f32.mrb[0].mxu0
      %3819 = vmatprep.mubr.f32.mxu0 0.0
      %3820 = vmatmul.mubr.f32.gmra.mrb[0].mxu0 %v3648
      %v3821 = vpop.f32.mrb[0].mxu0
      %v3822 = vadd.f32 0.0, %v3821
      %v3823 = vpop.f32.mrb[0].mxu0
      %3824 = vmatprep.mubr.f32.mxu0 0.0
      %3825 = vmatmul.mubr.f32.gmra.mrb[0].mxu0 %v3651
      %v3826 = vpop.f32.mrb[0].mxu0
      %v3827 = vadd.f32 0.0, %v3826
      %v3828 = vpop.f32.mrb[0].mxu0
      %3829 = vmatprep.mubr.f32.mxu0 0.0
      %3830 = vmatmul.mubr.f32.gmra.mrb[0].mxu0 %v3654
      %v3831 = vpop.f32.mrb[0].mxu0
      %v3832 = vadd.f32 0.0, %v3831
      %v3833 = vpop.f32.mrb[0].mxu0
      %3834 = vmatprep.mubr.f32.mxu0 0.0
      %3835 = vmatmul.mubr.f32.gmra.mrb[0].mxu0 %v3657
      %v3836 = vpop.f32.mrb[0].mxu0
      %v3837 = vadd.f32 0.0, %v3836
      %v3838 = vpop.f32.mrb[0].mxu0
      %3839 = vmatprep.mubr.f32.mxu0 0.0
      %3840 = vmatmul.mubr.f32.gmra.mrb[0].mxu0 %v3660
      %v3841 = vpop.f32.mrb[0].mxu0
      %v3842 = vadd.f32 0.0, %v3841
      %v3843 = vpop.f32.mrb[0].mxu0
      %3844 = vmatprep.mubr.f32.mxu0 0.0
      %3845 = vmatmul.mubr.f32.gmra.mrb[0].mxu0 %v3663
      %v3846 = vpop.f32.mrb[0].mxu0
      %v3847 = vadd.f32 0.0, %v3846
      %v3848 = vpop.f32.mrb[0].mxu0
      %3849 = vmatprep.mubr.f32.mxu0 0.0
      %3850 = vmatmul.mubr.f32.gmra.mrb[0].mxu0 %v3666
      %v3851 = vpop.f32.mrb[0].mxu0
      %v3852 = vadd.f32 0.0, %v3851
      %v3853 = vpop.f32.mrb[0].mxu0
      %3854 = vmatprep.mubr.f32.mxu0 0.0
      %3855 = vmatmul.mubr.f32.gmra.mrb[0].mxu0 %v3669
      %v3856 = vpop.f32.mrb[0].mxu0
      %v3857 = vadd.f32 0.0, %v3856
      %v3858 = vpop.f32.mrb[0].mxu0
      %3859 = vmatprep.mubr.f32.mxu0 0.0
      %3860 = vmatmul.mubr.f32.gmra.mrb[0].mxu0 %v3672
      %v3861 = vpop.f32.mrb[0].mxu0
      %v3862 = vadd.f32 0.0, %v3861
      %v3863 = vpop.f32.mrb[0].mxu0
      %3864 = vmatprep.mubr.f32.mxu0 0.0
      %3865 = vmatmul.mubr.f32.gmra.mrb[0].mxu0 %v3675
      %v3866 = vpop.f32.mrb[0].mxu0
      %v3867 = vadd.f32 0.0, %v3866
      %v3868 = vpop.f32.mrb[0].mxu0
      %3869 = vmatprep.mubr.f32.mxu0 0.0
      %3870 = vmatmul.mubr.f32.gmra.mrb[0].mxu0 %v3678
      %v3871 = vpop.f32.mrb[0].mxu0
      %v3872 = vadd.f32 0.0, %v3871
      %v3873 = vpop.f32.mrb[0].mxu0
      %3874 = vmatprep.mubr.f32.mxu0 0.0
      %3875 = vmatmul.mubr.f32.gmra.mrb[0].mxu0 %v3681
      %v3876 = vpop.f32.mrb[0].mxu0
      %v3877 = vadd.f32 0.0, %v3876
      %v3878 = vpop.f32.mrb[0].mxu0
      %3879 = vmatprep.mubr.f32.mxu0 0.0
      %3880 = vmatmul.mubr.f32.gmra.mrb[0].mxu0 %v3684
      %v3881 = vpop.f32.mrb[0].mxu0
      %v3882 = vadd.f32 0.0, %v3881
      %v3883 = vpop.f32.mrb[0].mxu0
      %3884 = vmatprep.mubr.f32.mxu0 0.0
      %3885 = vmatmul.mubr.f32.gmra.mrb[0].mxu0 %v3687
      %v3886 = vpop.f32.mrb[0].mxu0
      %v3887 = vadd.f32 0.0, %v3886
      %v3888 = vpop.f32.mrb[0].mxu0
      %3889 = vmatprep.mubr.f32.mxu0 0.0
      %3890 = vmatmul.mubr.f32.gmra.mrb[0].mxu0 %v3690
      %v3891 = vpop.f32.mrb[0].mxu0
      %v3892 = vadd.f32 0.0, %v3891
      %v3893 = vpop.f32.mrb[0].mxu0
      %3894 = vmatprep.mubr.f32.mxu0 0.0
      %3895 = vmatmul.mubr.f32.gmra.mrb[0].mxu0 %v3693
      %v3896 = vpop.f32.mrb[0].mxu0
      %v3897 = vadd.f32 0.0, %v3896
      %v3898 = vpop.f32.mrb[0].mxu0
      %3899 = vmatprep.mubr.f32.mxu0 0.0
      %3900 = vmatmul.mubr.f32.gmra.mrb[0].mxu0 %v3696
      %v3901 = vpop.f32.mrb[0].mxu0
      %v3902 = vadd.f32 0.0, %v3901
      %v3903 = vpop.f32.mrb[0].mxu0
      %3904 = vmatprep.mubr.f32.mxu0 0.0
      %3905 = vmatmul.mubr.f32.gmra.mrb[0].mxu0 %v3699
      %v3906 = vpop.f32.mrb[0].mxu0
      %v3907 = vadd.f32 0.0, %v3906
      %v3908 = vpop.f32.mrb[0].mxu0
      %3909 = vmatprep.mubr.f32.mxu0 0.0
      %3910 = vmatmul.mubr.f32.gmra.mrb[0].mxu0 %v3702
      %v3911 = vpop.f32.mrb[0].mxu0
      %v3912 = vadd.f32 0.0, %v3911
      %v3913 = vpop.f32.mrb[0].mxu0
      %3914 = vmatprep.mubr.f32.mxu0 0.0
      %3915 = vmatmul.mubr.f32.gmra.mrb[0].mxu0 %v3705
      %v3916 = vpop.f32.mrb[0].mxu0
      %v3917 = vadd.f32 0.0, %v3916
      %v3918 = vpop.f32.mrb[0].mxu0
      %3919 = vmatprep.mubr.f32.mxu0 0.0
      %3920 = vmatmul.mubr.f32.gmra.mrb[0].mxu0 %v3708
      %v3921 = vpop.f32.mrb[0].mxu0
      %v3922 = vadd.f32 0.0, %v3921
      %v3923 = vpop.f32.mrb[0].mxu0
      %3924 = vmatprep.mubr.f32.mxu0 0.0
      %3925 = vmatmul.mubr.f32.gmra.mrb[0].mxu0 %v3711
      %v3926 = vpop.f32.mrb[0].mxu0
      %v3927 = vadd.f32 0.0, %v3926
      %v3928 = vpop.f32.mrb[0].mxu0
      %3929 = vmatprep.mubr.f32.mxu0 0.0
      %3930 = vmatmul.mubr.f32.gmra.mrb[0].mxu0 %v3714
      %v3931 = vpop.f32.mrb[0].mxu0
      %v3932 = vadd.f32 0.0, %v3931
      %v3933 = vpop.f32.mrb[0].mxu0
      %3934 = vmatprep.mubr.f32.mxu0 0.0
      %3935 = vmatmul.mubr.f32.gmra.mrb[0].mxu0 %v3717
      %v3936 = vpop.f32.mrb[0].mxu0
      %v3937 = vadd.f32 0.0, %v3936
      %v3938 = vpop.f32.mrb[0].mxu0
      %3939 = vmatprep.mubr.f32.mxu0 0.0
      %3940 = vmatmul.mubr.f32.gmra.mrb[0].mxu0 %v3720
      %v3941 = vpop.f32.mrb[0].mxu0
      %v3942 = vadd.f32 0.0, %v3941
      %v3943 = vpop.f32.mrb[0].mxu0
      %3944 = vmatprep.mubr.f32.mxu0 0.0
      %3945 = vmatmul.mubr.f32.gmra.mrb[0].mxu0 %v3723
      %v3946 = vpop.f32.mrb[0].mxu0
      %v3947 = vadd.f32 0.0, %v3946
      %v3948 = vpop.f32.mrb[0].mxu0
      %3949 = vdwg.mxu0
      %v3950 = vadd.f32 %v3563, %v3792
      %v3951 = vadd.f32 %v3564, %v3797
      %v3952 = vadd.f32 %v3565, %v3802
      %v3953 = vadd.f32 %v3566, %v3807
      %v3954 = vadd.f32 %v3567, %v3812
      %v3955 = vadd.f32 %v3568, %v3817
      %v3956 = vadd.f32 %v3569, %v3822
      %v3957 = vadd.f32 %v3570, %v3827
      %v3958 = vadd.f32 %v3571, %v3832
      %v3959 = vadd.f32 %v3572, %v3837
      %v3960 = vadd.f32 %v3573, %v3842
      %v3961 = vadd.f32 %v3574, %v3847
      %v3962 = vadd.f32 %v3575, %v3852
      %v3963 = vadd.f32 %v3576, %v3857
      %v3964 = vadd.f32 %v3577, %v3862
      %v3965 = vadd.f32 %v3578, %v3867
      %v3966 = vadd.f32 %v3579, %v3872
      %v3967 = vadd.f32 %v3580, %v3877
      %v3968 = vadd.f32 %v3581, %v3882
      %v3969 = vadd.f32 %v3582, %v3887
      %v3970 = vadd.f32 %v3583, %v3892
      %v3971 = vadd.f32 %v3584, %v3897
      %v3972 = vadd.f32 %v3585, %v3902
      %v3973 = vadd.f32 %v3586, %v3907
      %v3974 = vadd.f32 %v3587, %v3912
      %v3975 = vadd.f32 %v3588, %v3917
      %v3976 = vadd.f32 %v3589, %v3922
      %v3977 = vadd.f32 %v3590, %v3927
      %v3978 = vadd.f32 %v3591, %v3932
      %v3979 = vadd.f32 %v3592, %v3937
      %v3980 = vadd.f32 %v3593, %v3942
      %v3981 = vadd.f32 %v3594, %v3947
      %v3982 = vadd.f32 %v3950, %v2335
      %v3983 = vadd.f32 %v3951, %v2335
      %v3984 = vadd.f32 %v3952, %v2335
      %v3985 = vadd.f32 %v3953, %v2335
      %v3986 = vadd.f32 %v3954, %v2335
      %v3987 = vadd.f32 %v3955, %v2335
      %v3988 = vadd.f32 %v3956, %v2335
      %v3989 = vadd.f32 %v3957, %v2335
      %v3990 = vadd.f32 %v3958, %v2335
      %v3991 = vadd.f32 %v3959, %v2335
      %v3992 = vadd.f32 %v3960, %v2335
      %v3993 = vadd.f32 %v3961, %v2335
      %v3994 = vadd.f32 %v3962, %v2335
      %v3995 = vadd.f32 %v3963, %v2335
      %v3996 = vadd.f32 %v3964, %v2335
      %v3997 = vadd.f32 %v3965, %v2335
      %v3998 = vadd.f32 %v3966, %v2335
      %v3999 = vadd.f32 %v3967, %v2335
      %v4000 = vadd.f32 %v3968, %v2335
      %v4001 = vadd.f32 %v3969, %v2335
      %v4002 = vadd.f32 %v3970, %v2335
      %v4003 = vadd.f32 %v3971, %v2335
      %v4004 = vadd.f32 %v3972, %v2335
      %v4005 = vadd.f32 %v3973, %v2335
      %v4006 = vadd.f32 %v3974, %v2335
      %v4007 = vadd.f32 %v3975, %v2335
      %v4008 = vadd.f32 %v3976, %v2335
      %v4009 = vadd.f32 %v3977, %v2335
      %v4010 = vadd.f32 %v3978, %v2335
      %v4011 = vadd.f32 %v3979, %v2335
      %v4012 = vadd.f32 %v3980, %v2335
      %v4013 = vadd.f32 %v3981, %v2335
      %vm4014 = vcmp.gt.f32.partialorder %v3982, 0.0
      %vm4015 = vcmp.gt.f32.partialorder %v3983, 0.0
      %vm4016 = vcmp.gt.f32.partialorder %v3984, 0.0
      %vm4017 = vcmp.gt.f32.partialorder %v3985, 0.0
      %vm4018 = vcmp.gt.f32.partialorder %v3986, 0.0
      %vm4019 = vcmp.gt.f32.partialorder %v3987, 0.0
      %vm4020 = vcmp.gt.f32.partialorder %v3988, 0.0
      %vm4021 = vcmp.gt.f32.partialorder %v3989, 0.0
      %vm4022 = vcmp.gt.f32.partialorder %v3990, 0.0
      %vm4023 = vcmp.gt.f32.partialorder %v3991, 0.0
      %vm4024 = vcmp.gt.f32.partialorder %v3992, 0.0
      %vm4025 = vcmp.gt.f32.partialorder %v3993, 0.0
      %vm4026 = vcmp.gt.f32.partialorder %v3994, 0.0
      %vm4027 = vcmp.gt.f32.partialorder %v3995, 0.0
      %vm4028 = vcmp.gt.f32.partialorder %v3996, 0.0
      %vm4029 = vcmp.gt.f32.partialorder %v3997, 0.0
      %vm4030 = vcmp.gt.f32.partialorder %v3998, 0.0
      %vm4031 = vcmp.gt.f32.partialorder %v3999, 0.0
      %vm4032 = vcmp.gt.f32.partialorder %v4000, 0.0
      %vm4033 = vcmp.gt.f32.partialorder %v4001, 0.0
      %vm4034 = vcmp.gt.f32.partialorder %v4002, 0.0
      %vm4035 = vcmp.gt.f32.partialorder %v4003, 0.0
      %vm4036 = vcmp.gt.f32.partialorder %v4004, 0.0
      %vm4037 = vcmp.gt.f32.partialorder %v4005, 0.0
      %vm4038 = vcmp.gt.f32.partialorder %v4006, 0.0
      %vm4039 = vcmp.gt.f32.partialorder %v4007, 0.0
      %vm4040 = vcmp.gt.f32.partialorder %v4008, 0.0
      %vm4041 = vcmp.gt.f32.partialorder %v4009, 0.0
      %vm4042 = vcmp.gt.f32.partialorder %v4010, 0.0
      %vm4043 = vcmp.gt.f32.partialorder %v4011, 0.0
      %vm4044 = vcmp.gt.f32.partialorder %v4012, 0.0
      %vm4045 = vcmp.gt.f32.partialorder %v4013, 0.0
      %v4046 = vmul.f32 %v3982, 0.2
      %v4047 = vmul.f32 %v3983, 0.2
      %v4048 = vmul.f32 %v3984, 0.2
      %v4049 = vmul.f32 %v3985, 0.2
      %v4050 = vmul.f32 %v3986, 0.2
      %v4051 = vmul.f32 %v3987, 0.2
      %v4052 = vmul.f32 %v3988, 0.2
      %v4053 = vmul.f32 %v3989, 0.2
      %v4054 = vmul.f32 %v3990, 0.2
      %v4055 = vmul.f32 %v3991, 0.2
      %v4056 = vmul.f32 %v3992, 0.2
      %v4057 = vmul.f32 %v3993, 0.2
      %v4058 = vmul.f32 %v3994, 0.2
      %v4059 = vmul.f32 %v3995, 0.2
      %v4060 = vmul.f32 %v3996, 0.2
      %v4061 = vmul.f32 %v3997, 0.2
      %v4062 = vmul.f32 %v3998, 0.2
      %v4063 = vmul.f32 %v3999, 0.2
      %v4064 = vmul.f32 %v4000, 0.2
      %v4065 = vmul.f32 %v4001, 0.2
      %v4066 = vmul.f32 %v4002, 0.2
      %v4067 = vmul.f32 %v4003, 0.2
      %v4068 = vmul.f32 %v4004, 0.2
      %v4069 = vmul.f32 %v4005, 0.2
      %v4070 = vmul.f32 %v4006, 0.2
      %v4071 = vmul.f32 %v4007, 0.2
      %v4072 = vmul.f32 %v4008, 0.2
      %v4073 = vmul.f32 %v4009, 0.2
      %v4074 = vmul.f32 %v4010, 0.2
      %v4075 = vmul.f32 %v4011, 0.2
      %v4076 = vmul.f32 %v4012, 0.2
      %v4077 = vmul.f32 %v4013, 0.2
      %v4078 = vsel %vm4014, %v3982, %v4046
      %v4079 = vsel %vm4015, %v3983, %v4047
      %v4080 = vsel %vm4016, %v3984, %v4048
      %v4081 = vsel %vm4017, %v3985, %v4049
      %v4082 = vsel %vm4018, %v3986, %v4050
      %v4083 = vsel %vm4019, %v3987, %v4051
      %v4084 = vsel %vm4020, %v3988, %v4052
      %v4085 = vsel %vm4021, %v3989, %v4053
      %v4086 = vsel %vm4022, %v3990, %v4054
      %v4087 = vsel %vm4023, %v3991, %v4055
      %v4088 = vsel %vm4024, %v3992, %v4056
      %v4089 = vsel %vm4025, %v3993, %v4057
      %v4090 = vsel %vm4026, %v3994, %v4058
      %v4091 = vsel %vm4027, %v3995, %v4059
      %v4092 = vsel %vm4028, %v3996, %v4060
      %v4093 = vsel %vm4029, %v3997, %v4061
      %v4094 = vsel %vm4030, %v3998, %v4062
      %v4095 = vsel %vm4031, %v3999, %v4063
      %v4096 = vsel %vm4032, %v4000, %v4064
      %v4097 = vsel %vm4033, %v4001, %v4065
      %v4098 = vsel %vm4034, %v4002, %v4066
      %v4099 = vsel %vm4035, %v4003, %v4067
      %v4100 = vsel %vm4036, %v4004, %v4068
      %v4101 = vsel %vm4037, %v4005, %v4069
      %v4102 = vsel %vm4038, %v4006, %v4070
      %v4103 = vsel %vm4039, %v4007, %v4071
      %v4104 = vsel %vm4040, %v4008, %v4072
      %v4105 = vsel %vm4041, %v4009, %v4073
      %v4106 = vsel %vm4042, %v4010, %v4074
      %v4107 = vsel %vm4043, %v4011, %v4075
      %v4108 = vsel %vm4044, %v4012, %v4076
      %v4109 = vsel %vm4045, %v4013, %v4077
      %s4110 = scalar_lea.vmem %s397, 256
      %4111 = vst.msk [vmem:[%s4110] sm:$0xff] %vm2465, %v4078
      %4112 = vst.msk [vmem:[%s4110 + $0x8] sm:$0xff] %vm2465, %v4079
      %4113 = vst.msk [vmem:[%s4110 + $0x10] sm:$0xff] %vm2465, %v4080
      %4114 = vst.msk [vmem:[%s4110 + $0x18] sm:$0xff] %vm2465, %v4081
      %4115 = vst.msk [vmem:[%s4110 + $0x20] sm:$0xff] %vm2465, %v4082
      %4116 = vst.msk [vmem:[%s4110 + $0x28] sm:$0xff] %vm2465, %v4083
      %4117 = vst.msk [vmem:[%s4110 + $0x30] sm:$0xff] %vm2465, %v4084
      %4118 = vst.msk [vmem:[%s4110 + $0x38] sm:$0xff] %vm2465, %v4085
      %4119 = vst.msk [vmem:[%s4110 + $0x40] sm:$0xff] %vm2465, %v4086
      %4120 = vst.msk [vmem:[%s4110 + $0x48] sm:$0xff] %vm2465, %v4087
      %4121 = vst.msk [vmem:[%s4110 + $0x50] sm:$0xff] %vm2465, %v4088
      %4122 = vst.msk [vmem:[%s4110 + $0x58] sm:$0xff] %vm2465, %v4089
      %4123 = vst.msk [vmem:[%s4110 + $0x60] sm:$0xff] %vm2465, %v4090
      %4124 = vst.msk [vmem:[%s4110 + $0x68] sm:$0xff] %vm2465, %v4091
      %4125 = vst.msk [vmem:[%s4110 + $0x70] sm:$0xff] %vm2465, %v4092
      %4126 = vst.msk [vmem:[%s4110 + $0x78] sm:$0xff] %vm2465, %v4093
      %4127 = vst.msk [vmem:[%s4110 + $0x80] sm:$0xff] %vm2465, %v4094
      %4128 = vst.msk [vmem:[%s4110 + $0x88] sm:$0xff] %vm2465, %v4095
      %4129 = vst.msk [vmem:[%s4110 + $0x90] sm:$0xff] %vm2465, %v4096
      %4130 = vst.msk [vmem:[%s4110 + $0x98] sm:$0xff] %vm2465, %v4097
      %4131 = vst.msk [vmem:[%s4110 + $0xa0] sm:$0xff] %vm2465, %v4098
      %4132 = vst.msk [vmem:[%s4110 + $0xa8] sm:$0xff] %vm2465, %v4099
      %4133 = vst.msk [vmem:[%s4110 + $0xb0] sm:$0xff] %vm2465, %v4100
      %4134 = vst.msk [vmem:[%s4110 + $0xb8] sm:$0xff] %vm2465, %v4101
      %4135 = vst.msk [vmem:[%s4110 + $0xc0] sm:$0xff] %vm2465, %v4102
      %4136 = vst.msk [vmem:[%s4110 + $0xc8] sm:$0xff] %vm2465, %v4103
      %4137 = vst.msk [vmem:[%s4110 + $0xd0] sm:$0xff] %vm2465, %v4104
      %4138 = vst.msk [vmem:[%s4110 + $0xd8] sm:$0xff] %vm2465, %v4105
      %4139 = vst.msk [vmem:[%s4110 + $0xe0] sm:$0xff] %vm2465, %v4106
      %4140 = vst.msk [vmem:[%s4110 + $0xe8] sm:$0xff] %vm2465, %v4107
      %4141 = vst.msk [vmem:[%s4110 + $0xf0] sm:$0xff] %vm2465, %v4108
      %4142 = vst.msk [vmem:[%s4110 + $0xf8] sm:$0xff] %vm2465, %v4109
      %v4143 = vld [vmem:[#allocation2 + $0x10] sm:$0xff]
      %v4144 = vld [vmem:[#allocation2 + $0x18] sm:$0xff]
      %v4145 = vld [vmem:[#allocation2 + $0x20] sm:$0xff]
      %v4146 = vld [vmem:[#allocation2 + $0x28] sm:$0xff]
      %v4147 = vld [vmem:[#allocation2 + $0x30] sm:$0xff]
      %v4148 = vld [vmem:[#allocation2 + $0x38] sm:$0xff]
      %v4149 = vld [vmem:[#allocation2 + $0x40] sm:$0xff]
      %v4150 = vld [vmem:[#allocation2 + $0x48] sm:$0xff]
      %v4151 = vld [vmem:[#allocation2 + $0x50] sm:$0xff]
      %v4152 = vld [vmem:[#allocation2 + $0x58] sm:$0xff]
      %v4153 = vld [vmem:[#allocation2 + $0x60] sm:$0xff]
      %v4154 = vld [vmem:[#allocation2 + $0x68] sm:$0xff]
      %v4155 = vld [vmem:[#allocation2 + $0x70] sm:$0xff]
      %v4156 = vld [vmem:[#allocation2 + $0x78] sm:$0xff]
      %v4157 = vld [vmem:[#allocation2 + $0x80] sm:$0xff]
      %v4158 = vld [vmem:[#allocation2 + $0x88] sm:$0xff]
      %v4159 = vld [vmem:[#allocation2 + $0x90] sm:$0xff]
      %v4160 = vld [vmem:[#allocation2 + $0x98] sm:$0xff]
      %v4161 = vld [vmem:[#allocation2 + $0xa0] sm:$0xff]
      %v4162 = vld [vmem:[#allocation2 + $0xa8] sm:$0xff]
      %v4163 = vld [vmem:[#allocation2 + $0xb0] sm:$0xff]
      %v4164 = vld [vmem:[#allocation2 + $0xb8] sm:$0xff]
      %v4165 = vld [vmem:[#allocation2 + $0xc0] sm:$0xff]
      %v4166 = vld [vmem:[#allocation2 + $0xc8] sm:$0xff]
      %v4167 = vld [vmem:[#allocation2 + $0xd0] sm:$0xff]
      %v4168 = vld [vmem:[#allocation2 + $0xd8] sm:$0xff]
      %v4169 = vld [vmem:[#allocation2 + $0xe0] sm:$0xff]
      %v4170 = vld [vmem:[#allocation2 + $0xe8] sm:$0xff]
      %v4171 = vld [vmem:[#allocation2 + $0xf0] sm:$0xff]
      %v4172 = vld [vmem:[#allocation2 + $0xf8] sm:$0xff]
      %v4173 = vld [vmem:[#allocation2 + $0x100] sm:$0xff]
      %v4174 = vld [vmem:[#allocation2 + $0x108] sm:$0xff]
      %s4175 = scalar_lea.vmem %s3, 64
      %v4176 = vld [vmem:[%s4175] sm:$0xff]
      %v4177 = vld [vmem:[%s653 + $0x10] sm:$0xff]
      %v4178 = vld [vmem:[%s653 + $0x18] sm:$0xff]
      %v4179 = vld [vmem:[%s653 + $0x20] sm:$0xff]
      %v4180 = vld [vmem:[%s653 + $0x28] sm:$0xff]
      %v4181 = vld [vmem:[%s653 + $0x30] sm:$0xff]
      %v4182 = vld [vmem:[%s653 + $0x38] sm:$0xff]
      %v4183 = vld [vmem:[%s653 + $0x40] sm:$0xff]
      %v4184 = vld [vmem:[%s653 + $0x48] sm:$0xff]
      %v4185 = vld [vmem:[%s653 + $0x50] sm:$0xff]
      %v4186 = vld [vmem:[%s653 + $0x58] sm:$0xff]
      %v4187 = vld [vmem:[%s653 + $0x60] sm:$0xff]
      %v4188 = vld [vmem:[%s653 + $0x68] sm:$0xff]
      %v4189 = vld [vmem:[%s653 + $0x70] sm:$0xff]
      %v4190 = vld [vmem:[%s653 + $0x78] sm:$0xff]
      %v4191 = vld [vmem:[%s653 + $0x80] sm:$0xff]
      %v4192 = vld [vmem:[%s653 + $0x88] sm:$0xff]
      %v4193 = vld [vmem:[%s653 + $0x90] sm:$0xff]
      %v4194 = vld [vmem:[%s653 + $0x98] sm:$0xff]
      %v4195 = vld [vmem:[%s653 + $0xa0] sm:$0xff]
      %v4196 = vld [vmem:[%s653 + $0xa8] sm:$0xff]
      %v4197 = vld [vmem:[%s653 + $0xb0] sm:$0xff]
      %v4198 = vld [vmem:[%s653 + $0xb8] sm:$0xff]
      %v4199 = vld [vmem:[%s653 + $0xc0] sm:$0xff]
      %v4200 = vld [vmem:[%s653 + $0xc8] sm:$0xff]
      %v4201 = vld [vmem:[%s653 + $0xd0] sm:$0xff]
      %v4202 = vld [vmem:[%s653 + $0xd8] sm:$0xff]
      %v4203 = vld [vmem:[%s653 + $0xe0] sm:$0xff]
      %v4204 = vld [vmem:[%s653 + $0xe8] sm:$0xff]
      %v4205 = vld [vmem:[%s653 + $0xf0] sm:$0xff]
      %v4206 = vld [vmem:[%s653 + $0xf8] sm:$0xff]
      %v4207 = vld [vmem:[%s653 + $0x100] sm:$0xff]
      %v4208 = vld [vmem:[%s653 + $0x108] sm:$0xff]
      %s4209 = scalar_lea.vmem %s3, 72
      %v4210 = vld [vmem:[%s4209] sm:$0xff]
      %v4212 = vsel %vm455, %v4177, 0
      %v4215 = vsel %vm455, %v4178, 0
      %v4218 = vsel %vm455, %v4179, 0
      %v4221 = vsel %vm455, %v4180, 0
      %v4224 = vsel %vm455, %v4181, 0
      %v4227 = vsel %vm455, %v4182, 0
      %v4230 = vsel %vm455, %v4183, 0
      %v4233 = vsel %vm455, %v4184, 0
      %v4236 = vsel %vm455, %v4185, 0
      %v4239 = vsel %vm455, %v4186, 0
      %v4242 = vsel %vm455, %v4187, 0
      %v4245 = vsel %vm455, %v4188, 0
      %v4248 = vsel %vm455, %v4189, 0
      %v4251 = vsel %vm455, %v4190, 0
      %v4254 = vsel %vm455, %v4191, 0
      %v4257 = vsel %vm455, %v4192, 0
      %v4260 = vsel %vm455, %v4193, 0
      %v4263 = vsel %vm455, %v4194, 0
      %v4266 = vsel %vm455, %v4195, 0
      %v4269 = vsel %vm455, %v4196, 0
      %v4272 = vsel %vm455, %v4197, 0
      %v4275 = vsel %vm455, %v4198, 0
      %v4278 = vsel %vm455, %v4199, 0
      %v4281 = vsel %vm455, %v4200, 0
      %v4284 = vsel %vm455, %v4201, 0
      %v4287 = vsel %vm455, %v4202, 0
      %v4290 = vsel %vm455, %v4203, 0
      %v4293 = vsel %vm455, %v4204, 0
      %v4296 = vsel %vm455, %v4205, 0
      %v4299 = vsel %vm455, %v4206, 0
      %v4302 = vsel %vm455, %v4207, 0
      %v4305 = vsel %vm455, %v4208, 0
      %4307 = vmatprep.subr.mxu0 0.0
      %4308 = vmatpush1.msra.mxu0 %v4210
      %4309 = vmatprep.subr.mxu0 0.0
      %4310 = vmatpush1.msra.mxu0 0.0
      %4311 = vmatprep.subr.mxu0 0.0
      %4312 = vmatpush1.msra.mxu0 0.0
      %4313 = vmatprep.subr.mxu0 0.0
      %4314 = vmatpush1.msra.mxu0 0.0
      %4315 = vmatprep.subr.mxu0 0.0
      %4316 = vmatpush1.msra.mxu0 0.0
      %4317 = vmatprep.subr.mxu0 0.0
      %4318 = vmatpush1.msra.mxu0 0.0
      %4319 = vmatprep.subr.mxu0 0.0
      %4320 = vmatpush1.msra.mxu0 0.0
      %4321 = vmatprep.subr.mxu0 0.0
      %4322 = vmatpush1.msra.mxu0 0.0
      %4323 = vmatprep.subr.mxu0 0.0
      %4324 = vmatpush1.msra.mxu0 0.0
      %4325 = vmatprep.subr.mxu0 0.0
      %4326 = vmatpush1.msra.mxu0 0.0
      %4327 = vmatprep.subr.mxu0 0.0
      %4328 = vmatpush1.msra.mxu0 0.0
      %4329 = vmatprep.subr.mxu0 0.0
      %4330 = vmatpush1.msra.mxu0 0.0
      %4331 = vmatprep.subr.mxu0 0.0
      %4332 = vmatpush1.msra.mxu0 0.0
      %4333 = vmatprep.subr.mxu0 0.0
      %4334 = vmatpush1.msra.mxu0 0.0
      %4335 = vmatprep.subr.mxu0 0.0
      %4336 = vmatpush1.msra.mxu0 0.0
      %4337 = vmatprep.subr.mxu0 0.0
      %4338 = vmatpush1.msra.mxu0 0.0
      %4339 = vmatprep.subr.mxu0 0.0
      %4340 = vmatpush1.msra.mxu0 0.0
      %4341 = vmatprep.subr.mxu0 0.0
      %4342 = vmatpush1.msra.mxu0 0.0
      %4343 = vmatprep.subr.mxu0 0.0
      %4344 = vmatpush1.msra.mxu0 0.0
      %4345 = vmatprep.subr.mxu0 0.0
      %4346 = vmatpush1.msra.mxu0 0.0
      %4347 = vmatprep.subr.mxu0 0.0
      %4348 = vmatpush1.msra.mxu0 0.0
      %4349 = vmatprep.subr.mxu0 0.0
      %4350 = vmatpush1.msra.mxu0 0.0
      %4351 = vmatprep.subr.mxu0 0.0
      %4352 = vmatpush1.msra.mxu0 0.0
      %4353 = vmatprep.subr.mxu0 0.0
      %4354 = vmatpush1.msra.mxu0 0.0
      %4355 = vmatprep.subr.mxu0 0.0
      %4356 = vmatpush1.msra.mxu0 0.0
      %4357 = vmatprep.subr.mxu0 0.0
      %4358 = vmatpush1.msra.mxu0 0.0
      %4359 = vmatprep.subr.mxu0 0.0
      %4360 = vmatpush1.msra.mxu0 0.0
      %4361 = vmatprep.subr.mxu0 0.0
      %4362 = vmatpush1.msra.mxu0 0.0
      %4363 = vmatprep.subr.mxu0 0.0
      %4364 = vmatpush1.msra.mxu0 0.0
      %4365 = vmatprep.subr.mxu0 0.0
      %4366 = vmatpush1.msra.mxu0 0.0
      %4367 = vmatprep.subr.mxu0 0.0
      %4368 = vmatpush1.msra.mxu0 0.0
      %4369 = vmatprep.subr.mxu0 0.0
      %4370 = vmatpush1.msra.mxu0 0.0
      %4371 = vmatprep.mubr.f32.mxu0 0.0
      %4372 = vmatmul.mubr.f32.gmra.mrb[0].mxu0 %v4212
      %v4373 = vpop.f32.mrb[0].mxu0
      %v4374 = vadd.f32 0.0, %v4373
      %v4375 = vpop.f32.mrb[0].mxu0
      %4376 = vmatprep.mubr.f32.mxu0 0.0
      %4377 = vmatmul.mubr.f32.gmra.mrb[0].mxu0 %v4215
      %v4378 = vpop.f32.mrb[0].mxu0
      %v4379 = vadd.f32 0.0, %v4378
      %v4380 = vpop.f32.mrb[0].mxu0
      %4381 = vmatprep.mubr.f32.mxu0 0.0
      %4382 = vmatmul.mubr.f32.gmra.mrb[0].mxu0 %v4218
      %v4383 = vpop.f32.mrb[0].mxu0
      %v4384 = vadd.f32 0.0, %v4383
      %v4385 = vpop.f32.mrb[0].mxu0
      %4386 = vmatprep.mubr.f32.mxu0 0.0
      %4387 = vmatmul.mubr.f32.gmra.mrb[0].mxu0 %v4221
      %v4388 = vpop.f32.mrb[0].mxu0
      %v4389 = vadd.f32 0.0, %v4388
      %v4390 = vpop.f32.mrb[0].mxu0
      %4391 = vmatprep.mubr.f32.mxu0 0.0
      %4392 = vmatmul.mubr.f32.gmra.mrb[0].mxu0 %v4224
      %v4393 = vpop.f32.mrb[0].mxu0
      %v4394 = vadd.f32 0.0, %v4393
      %v4395 = vpop.f32.mrb[0].mxu0
      %4396 = vmatprep.mubr.f32.mxu0 0.0
      %4397 = vmatmul.mubr.f32.gmra.mrb[0].mxu0 %v4227
      %v4398 = vpop.f32.mrb[0].mxu0
      %v4399 = vadd.f32 0.0, %v4398
      %v4400 = vpop.f32.mrb[0].mxu0
      %4401 = vmatprep.mubr.f32.mxu0 0.0
      %4402 = vmatmul.mubr.f32.gmra.mrb[0].mxu0 %v4230
      %v4403 = vpop.f32.mrb[0].mxu0
      %v4404 = vadd.f32 0.0, %v4403
      %v4405 = vpop.f32.mrb[0].mxu0
      %4406 = vmatprep.mubr.f32.mxu0 0.0
      %4407 = vmatmul.mubr.f32.gmra.mrb[0].mxu0 %v4233
      %v4408 = vpop.f32.mrb[0].mxu0
      %v4409 = vadd.f32 0.0, %v4408
      %v4410 = vpop.f32.mrb[0].mxu0
      %4411 = vmatprep.mubr.f32.mxu0 0.0
      %4412 = vmatmul.mubr.f32.gmra.mrb[0].mxu0 %v4236
      %v4413 = vpop.f32.mrb[0].mxu0
      %v4414 = vadd.f32 0.0, %v4413
      %v4415 = vpop.f32.mrb[0].mxu0
      %4416 = vmatprep.mubr.f32.mxu0 0.0
      %4417 = vmatmul.mubr.f32.gmra.mrb[0].mxu0 %v4239
      %v4418 = vpop.f32.mrb[0].mxu0
      %v4419 = vadd.f32 0.0, %v4418
      %v4420 = vpop.f32.mrb[0].mxu0
      %4421 = vmatprep.mubr.f32.mxu0 0.0
      %4422 = vmatmul.mubr.f32.gmra.mrb[0].mxu0 %v4242
      %v4423 = vpop.f32.mrb[0].mxu0
      %v4424 = vadd.f32 0.0, %v4423
      %v4425 = vpop.f32.mrb[0].mxu0
      %4426 = vmatprep.mubr.f32.mxu0 0.0
      %4427 = vmatmul.mubr.f32.gmra.mrb[0].mxu0 %v4245
      %v4428 = vpop.f32.mrb[0].mxu0
      %v4429 = vadd.f32 0.0, %v4428
      %v4430 = vpop.f32.mrb[0].mxu0
      %4431 = vmatprep.mubr.f32.mxu0 0.0
      %4432 = vmatmul.mubr.f32.gmra.mrb[0].mxu0 %v4248
      %v4433 = vpop.f32.mrb[0].mxu0
      %v4434 = vadd.f32 0.0, %v4433
      %v4435 = vpop.f32.mrb[0].mxu0
      %4436 = vmatprep.mubr.f32.mxu0 0.0
      %4437 = vmatmul.mubr.f32.gmra.mrb[0].mxu0 %v4251
      %v4438 = vpop.f32.mrb[0].mxu0
      %v4439 = vadd.f32 0.0, %v4438
      %v4440 = vpop.f32.mrb[0].mxu0
      %4441 = vmatprep.mubr.f32.mxu0 0.0
      %4442 = vmatmul.mubr.f32.gmra.mrb[0].mxu0 %v4254
      %v4443 = vpop.f32.mrb[0].mxu0
      %v4444 = vadd.f32 0.0, %v4443
      %v4445 = vpop.f32.mrb[0].mxu0
      %4446 = vmatprep.mubr.f32.mxu0 0.0
      %4447 = vmatmul.mubr.f32.gmra.mrb[0].mxu0 %v4257
      %v4448 = vpop.f32.mrb[0].mxu0
      %v4449 = vadd.f32 0.0, %v4448
      %v4450 = vpop.f32.mrb[0].mxu0
      %4451 = vmatprep.mubr.f32.mxu0 0.0
      %4452 = vmatmul.mubr.f32.gmra.mrb[0].mxu0 %v4260
      %v4453 = vpop.f32.mrb[0].mxu0
      %v4454 = vadd.f32 0.0, %v4453
      %v4455 = vpop.f32.mrb[0].mxu0
      %4456 = vmatprep.mubr.f32.mxu0 0.0
      %4457 = vmatmul.mubr.f32.gmra.mrb[0].mxu0 %v4263
      %v4458 = vpop.f32.mrb[0].mxu0
      %v4459 = vadd.f32 0.0, %v4458
      %v4460 = vpop.f32.mrb[0].mxu0
      %4461 = vmatprep.mubr.f32.mxu0 0.0
      %4462 = vmatmul.mubr.f32.gmra.mrb[0].mxu0 %v4266
      %v4463 = vpop.f32.mrb[0].mxu0
      %v4464 = vadd.f32 0.0, %v4463
      %v4465 = vpop.f32.mrb[0].mxu0
      %4466 = vmatprep.mubr.f32.mxu0 0.0
      %4467 = vmatmul.mubr.f32.gmra.mrb[0].mxu0 %v4269
      %v4468 = vpop.f32.mrb[0].mxu0
      %v4469 = vadd.f32 0.0, %v4468
      %v4470 = vpop.f32.mrb[0].mxu0
      %4471 = vmatprep.mubr.f32.mxu0 0.0
      %4472 = vmatmul.mubr.f32.gmra.mrb[0].mxu0 %v4272
      %v4473 = vpop.f32.mrb[0].mxu0
      %v4474 = vadd.f32 0.0, %v4473
      %v4475 = vpop.f32.mrb[0].mxu0
      %4476 = vmatprep.mubr.f32.mxu0 0.0
      %4477 = vmatmul.mubr.f32.gmra.mrb[0].mxu0 %v4275
      %v4478 = vpop.f32.mrb[0].mxu0
      %v4479 = vadd.f32 0.0, %v4478
      %v4480 = vpop.f32.mrb[0].mxu0
      %4481 = vmatprep.mubr.f32.mxu0 0.0
      %4482 = vmatmul.mubr.f32.gmra.mrb[0].mxu0 %v4278
      %v4483 = vpop.f32.mrb[0].mxu0
      %v4484 = vadd.f32 0.0, %v4483
      %v4485 = vpop.f32.mrb[0].mxu0
      %4486 = vmatprep.mubr.f32.mxu0 0.0
      %4487 = vmatmul.mubr.f32.gmra.mrb[0].mxu0 %v4281
      %v4488 = vpop.f32.mrb[0].mxu0
      %v4489 = vadd.f32 0.0, %v4488
      %v4490 = vpop.f32.mrb[0].mxu0
      %4491 = vmatprep.mubr.f32.mxu0 0.0
      %4492 = vmatmul.mubr.f32.gmra.mrb[0].mxu0 %v4284
      %v4493 = vpop.f32.mrb[0].mxu0
      %v4494 = vadd.f32 0.0, %v4493
      %v4495 = vpop.f32.mrb[0].mxu0
      %4496 = vmatprep.mubr.f32.mxu0 0.0
      %4497 = vmatmul.mubr.f32.gmra.mrb[0].mxu0 %v4287
      %v4498 = vpop.f32.mrb[0].mxu0
      %v4499 = vadd.f32 0.0, %v4498
      %v4500 = vpop.f32.mrb[0].mxu0
      %4501 = vmatprep.mubr.f32.mxu0 0.0
      %4502 = vmatmul.mubr.f32.gmra.mrb[0].mxu0 %v4290
      %v4503 = vpop.f32.mrb[0].mxu0
      %v4504 = vadd.f32 0.0, %v4503
      %v4505 = vpop.f32.mrb[0].mxu0
      %4506 = vmatprep.mubr.f32.mxu0 0.0
      %4507 = vmatmul.mubr.f32.gmra.mrb[0].mxu0 %v4293
      %v4508 = vpop.f32.mrb[0].mxu0
      %v4509 = vadd.f32 0.0, %v4508
      %v4510 = vpop.f32.mrb[0].mxu0
      %4511 = vmatprep.mubr.f32.mxu0 0.0
      %4512 = vmatmul.mubr.f32.gmra.mrb[0].mxu0 %v4296
      %v4513 = vpop.f32.mrb[0].mxu0
      %v4514 = vadd.f32 0.0, %v4513
      %v4515 = vpop.f32.mrb[0].mxu0
      %4516 = vmatprep.mubr.f32.mxu0 0.0
      %4517 = vmatmul.mubr.f32.gmra.mrb[0].mxu0 %v4299
      %v4518 = vpop.f32.mrb[0].mxu0
      %v4519 = vadd.f32 0.0, %v4518
      %v4520 = vpop.f32.mrb[0].mxu0
      %4521 = vmatprep.mubr.f32.mxu0 0.0
      %4522 = vmatmul.mubr.f32.gmra.mrb[0].mxu0 %v4302
      %v4523 = vpop.f32.mrb[0].mxu0
      %v4524 = vadd.f32 0.0, %v4523
      %v4525 = vpop.f32.mrb[0].mxu0
      %4526 = vmatprep.mubr.f32.mxu0 0.0
      %4527 = vmatmul.mubr.f32.gmra.mrb[0].mxu0 %v4305
      %v4528 = vpop.f32.mrb[0].mxu0
      %v4529 = vadd.f32 0.0, %v4528
      %v4530 = vpop.f32.mrb[0].mxu0
      %4531 = vdwg.mxu0
      %v4533 = vsel %vm455, %v4143, 0
      %v4536 = vsel %vm455, %v4144, 0
      %v4539 = vsel %vm455, %v4145, 0
      %v4542 = vsel %vm455, %v4146, 0
      %v4545 = vsel %vm455, %v4147, 0
      %v4548 = vsel %vm455, %v4148, 0
      %v4551 = vsel %vm455, %v4149, 0
      %v4554 = vsel %vm455, %v4150, 0
      %v4557 = vsel %vm455, %v4151, 0
      %v4560 = vsel %vm455, %v4152, 0
      %v4563 = vsel %vm455, %v4153, 0
      %v4566 = vsel %vm455, %v4154, 0
      %v4569 = vsel %vm455, %v4155, 0
      %v4572 = vsel %vm455, %v4156, 0
      %v4575 = vsel %vm455, %v4157, 0
      %v4578 = vsel %vm455, %v4158, 0
      %v4581 = vsel %vm455, %v4159, 0
      %v4584 = vsel %vm455, %v4160, 0
      %v4587 = vsel %vm455, %v4161, 0
      %v4590 = vsel %vm455, %v4162, 0
      %v4593 = vsel %vm455, %v4163, 0
      %v4596 = vsel %vm455, %v4164, 0
      %v4599 = vsel %vm455, %v4165, 0
      %v4602 = vsel %vm455, %v4166, 0
      %v4605 = vsel %vm455, %v4167, 0
      %v4608 = vsel %vm455, %v4168, 0
      %v4611 = vsel %vm455, %v4169, 0
      %v4614 = vsel %vm455, %v4170, 0
      %v4617 = vsel %vm455, %v4171, 0
      %v4620 = vsel %vm455, %v4172, 0
      %v4623 = vsel %vm455, %v4173, 0
      %v4626 = vsel %vm455, %v4174, 0
      %4628 = vmatprep.subr.mxu0 0.0
      %4629 = vmatpush1.msra.mxu0 %v4176
      %4630 = vmatprep.subr.mxu0 0.0
      %4631 = vmatpush1.msra.mxu0 0.0
      %4632 = vmatprep.subr.mxu0 0.0
      %4633 = vmatpush1.msra.mxu0 0.0
      %4634 = vmatprep.subr.mxu0 0.0
      %4635 = vmatpush1.msra.mxu0 0.0
      %4636 = vmatprep.subr.mxu0 0.0
      %4637 = vmatpush1.msra.mxu0 0.0
      %4638 = vmatprep.subr.mxu0 0.0
      %4639 = vmatpush1.msra.mxu0 0.0
      %4640 = vmatprep.subr.mxu0 0.0
      %4641 = vmatpush1.msra.mxu0 0.0
      %4642 = vmatprep.subr.mxu0 0.0
      %4643 = vmatpush1.msra.mxu0 0.0
      %4644 = vmatprep.subr.mxu0 0.0
      %4645 = vmatpush1.msra.mxu0 0.0
      %4646 = vmatprep.subr.mxu0 0.0
      %4647 = vmatpush1.msra.mxu0 0.0
      %4648 = vmatprep.subr.mxu0 0.0
      %4649 = vmatpush1.msra.mxu0 0.0
      %4650 = vmatprep.subr.mxu0 0.0
      %4651 = vmatpush1.msra.mxu0 0.0
      %4652 = vmatprep.subr.mxu0 0.0
      %4653 = vmatpush1.msra.mxu0 0.0
      %4654 = vmatprep.subr.mxu0 0.0
      %4655 = vmatpush1.msra.mxu0 0.0
      %4656 = vmatprep.subr.mxu0 0.0
      %4657 = vmatpush1.msra.mxu0 0.0
      %4658 = vmatprep.subr.mxu0 0.0
      %4659 = vmatpush1.msra.mxu0 0.0
      %4660 = vmatprep.subr.mxu0 0.0
      %4661 = vmatpush1.msra.mxu0 0.0
      %4662 = vmatprep.subr.mxu0 0.0
      %4663 = vmatpush1.msra.mxu0 0.0
      %4664 = vmatprep.subr.mxu0 0.0
      %4665 = vmatpush1.msra.mxu0 0.0
      %4666 = vmatprep.subr.mxu0 0.0
      %4667 = vmatpush1.msra.mxu0 0.0
      %4668 = vmatprep.subr.mxu0 0.0
      %4669 = vmatpush1.msra.mxu0 0.0
      %4670 = vmatprep.subr.mxu0 0.0
      %4671 = vmatpush1.msra.mxu0 0.0
      %4672 = vmatprep.subr.mxu0 0.0
      %4673 = vmatpush1.msra.mxu0 0.0
      %4674 = vmatprep.subr.mxu0 0.0
      %4675 = vmatpush1.msra.mxu0 0.0
      %4676 = vmatprep.subr.mxu0 0.0
      %4677 = vmatpush1.msra.mxu0 0.0
      %4678 = vmatprep.subr.mxu0 0.0
      %4679 = vmatpush1.msra.mxu0 0.0
      %4680 = vmatprep.subr.mxu0 0.0
      %4681 = vmatpush1.msra.mxu0 0.0
      %4682 = vmatprep.subr.mxu0 0.0
      %4683 = vmatpush1.msra.mxu0 0.0
      %4684 = vmatprep.subr.mxu0 0.0
      %4685 = vmatpush1.msra.mxu0 0.0
      %4686 = vmatprep.subr.mxu0 0.0
      %4687 = vmatpush1.msra.mxu0 0.0
      %4688 = vmatprep.subr.mxu0 0.0
      %4689 = vmatpush1.msra.mxu0 0.0
      %4690 = vmatprep.subr.mxu0 0.0
      %4691 = vmatpush1.msra.mxu0 0.0
      %4692 = vmatprep.mubr.f32.mxu0 0.0
      %4693 = vmatmul.mubr.f32.gmra.mrb[0].mxu0 %v4533
      %v4694 = vpop.f32.mrb[0].mxu0
      %v4695 = vadd.f32 %v4374, %v4694
      %v4696 = vpop.f32.mrb[0].mxu0
      %4697 = vmatprep.mubr.f32.mxu0 0.0
      %4698 = vmatmul.mubr.f32.gmra.mrb[0].mxu0 %v4536
      %v4699 = vpop.f32.mrb[0].mxu0
      %v4700 = vadd.f32 %v4379, %v4699
      %v4701 = vpop.f32.mrb[0].mxu0
      %4702 = vmatprep.mubr.f32.mxu0 0.0
      %4703 = vmatmul.mubr.f32.gmra.mrb[0].mxu0 %v4539
      %v4704 = vpop.f32.mrb[0].mxu0
      %v4705 = vadd.f32 %v4384, %v4704
      %v4706 = vpop.f32.mrb[0].mxu0
      %4707 = vmatprep.mubr.f32.mxu0 0.0
      %4708 = vmatmul.mubr.f32.gmra.mrb[0].mxu0 %v4542
      %v4709 = vpop.f32.mrb[0].mxu0
      %v4710 = vadd.f32 %v4389, %v4709
      %v4711 = vpop.f32.mrb[0].mxu0
      %4712 = vmatprep.mubr.f32.mxu0 0.0
      %4713 = vmatmul.mubr.f32.gmra.mrb[0].mxu0 %v4545
      %v4714 = vpop.f32.mrb[0].mxu0
      %v4715 = vadd.f32 %v4394, %v4714
      %v4716 = vpop.f32.mrb[0].mxu0
      %4717 = vmatprep.mubr.f32.mxu0 0.0
      %4718 = vmatmul.mubr.f32.gmra.mrb[0].mxu0 %v4548
      %v4719 = vpop.f32.mrb[0].mxu0
      %v4720 = vadd.f32 %v4399, %v4719
      %v4721 = vpop.f32.mrb[0].mxu0
      %4722 = vmatprep.mubr.f32.mxu0 0.0
      %4723 = vmatmul.mubr.f32.gmra.mrb[0].mxu0 %v4551
      %v4724 = vpop.f32.mrb[0].mxu0
      %v4725 = vadd.f32 %v4404, %v4724
      %v4726 = vpop.f32.mrb[0].mxu0
      %4727 = vmatprep.mubr.f32.mxu0 0.0
      %4728 = vmatmul.mubr.f32.gmra.mrb[0].mxu0 %v4554
      %v4729 = vpop.f32.mrb[0].mxu0
      %v4730 = vadd.f32 %v4409, %v4729
      %v4731 = vpop.f32.mrb[0].mxu0
      %4732 = vmatprep.mubr.f32.mxu0 0.0
      %4733 = vmatmul.mubr.f32.gmra.mrb[0].mxu0 %v4557
      %v4734 = vpop.f32.mrb[0].mxu0
      %v4735 = vadd.f32 %v4414, %v4734
      %v4736 = vpop.f32.mrb[0].mxu0
      %4737 = vmatprep.mubr.f32.mxu0 0.0
      %4738 = vmatmul.mubr.f32.gmra.mrb[0].mxu0 %v4560
      %v4739 = vpop.f32.mrb[0].mxu0
      %v4740 = vadd.f32 %v4419, %v4739
      %v4741 = vpop.f32.mrb[0].mxu0
      %4742 = vmatprep.mubr.f32.mxu0 0.0
      %4743 = vmatmul.mubr.f32.gmra.mrb[0].mxu0 %v4563
      %v4744 = vpop.f32.mrb[0].mxu0
      %v4745 = vadd.f32 %v4424, %v4744
      %v4746 = vpop.f32.mrb[0].mxu0
      %4747 = vmatprep.mubr.f32.mxu0 0.0
      %4748 = vmatmul.mubr.f32.gmra.mrb[0].mxu0 %v4566
      %v4749 = vpop.f32.mrb[0].mxu0
      %v4750 = vadd.f32 %v4429, %v4749
      %v4751 = vpop.f32.mrb[0].mxu0
      %4752 = vmatprep.mubr.f32.mxu0 0.0
      %4753 = vmatmul.mubr.f32.gmra.mrb[0].mxu0 %v4569
      %v4754 = vpop.f32.mrb[0].mxu0
      %v4755 = vadd.f32 %v4434, %v4754
      %v4756 = vpop.f32.mrb[0].mxu0
      %4757 = vmatprep.mubr.f32.mxu0 0.0
      %4758 = vmatmul.mubr.f32.gmra.mrb[0].mxu0 %v4572
      %v4759 = vpop.f32.mrb[0].mxu0
      %v4760 = vadd.f32 %v4439, %v4759
      %v4761 = vpop.f32.mrb[0].mxu0
      %4762 = vmatprep.mubr.f32.mxu0 0.0
      %4763 = vmatmul.mubr.f32.gmra.mrb[0].mxu0 %v4575
      %v4764 = vpop.f32.mrb[0].mxu0
      %v4765 = vadd.f32 %v4444, %v4764
      %v4766 = vpop.f32.mrb[0].mxu0
      %4767 = vmatprep.mubr.f32.mxu0 0.0
      %4768 = vmatmul.mubr.f32.gmra.mrb[0].mxu0 %v4578
      %v4769 = vpop.f32.mrb[0].mxu0
      %v4770 = vadd.f32 %v4449, %v4769
      %v4771 = vpop.f32.mrb[0].mxu0
      %4772 = vmatprep.mubr.f32.mxu0 0.0
      %4773 = vmatmul.mubr.f32.gmra.mrb[0].mxu0 %v4581
      %v4774 = vpop.f32.mrb[0].mxu0
      %v4775 = vadd.f32 %v4454, %v4774
      %v4776 = vpop.f32.mrb[0].mxu0
      %4777 = vmatprep.mubr.f32.mxu0 0.0
      %4778 = vmatmul.mubr.f32.gmra.mrb[0].mxu0 %v4584
      %v4779 = vpop.f32.mrb[0].mxu0
      %v4780 = vadd.f32 %v4459, %v4779
      %v4781 = vpop.f32.mrb[0].mxu0
      %4782 = vmatprep.mubr.f32.mxu0 0.0
      %4783 = vmatmul.mubr.f32.gmra.mrb[0].mxu0 %v4587
      %v4784 = vpop.f32.mrb[0].mxu0
      %v4785 = vadd.f32 %v4464, %v4784
      %v4786 = vpop.f32.mrb[0].mxu0
      %4787 = vmatprep.mubr.f32.mxu0 0.0
      %4788 = vmatmul.mubr.f32.gmra.mrb[0].mxu0 %v4590
      %v4789 = vpop.f32.mrb[0].mxu0
      %v4790 = vadd.f32 %v4469, %v4789
      %v4791 = vpop.f32.mrb[0].mxu0
      %4792 = vmatprep.mubr.f32.mxu0 0.0
      %4793 = vmatmul.mubr.f32.gmra.mrb[0].mxu0 %v4593
      %v4794 = vpop.f32.mrb[0].mxu0
      %v4795 = vadd.f32 %v4474, %v4794
      %v4796 = vpop.f32.mrb[0].mxu0
      %4797 = vmatprep.mubr.f32.mxu0 0.0
      %4798 = vmatmul.mubr.f32.gmra.mrb[0].mxu0 %v4596
      %v4799 = vpop.f32.mrb[0].mxu0
      %v4800 = vadd.f32 %v4479, %v4799
      %v4801 = vpop.f32.mrb[0].mxu0
      %4802 = vmatprep.mubr.f32.mxu0 0.0
      %4803 = vmatmul.mubr.f32.gmra.mrb[0].mxu0 %v4599
      %v4804 = vpop.f32.mrb[0].mxu0
      %v4805 = vadd.f32 %v4484, %v4804
      %v4806 = vpop.f32.mrb[0].mxu0
      %4807 = vmatprep.mubr.f32.mxu0 0.0
      %4808 = vmatmul.mubr.f32.gmra.mrb[0].mxu0 %v4602
      %v4809 = vpop.f32.mrb[0].mxu0
      %v4810 = vadd.f32 %v4489, %v4809
      %v4811 = vpop.f32.mrb[0].mxu0
      %4812 = vmatprep.mubr.f32.mxu0 0.0
      %4813 = vmatmul.mubr.f32.gmra.mrb[0].mxu0 %v4605
      %v4814 = vpop.f32.mrb[0].mxu0
      %v4815 = vadd.f32 %v4494, %v4814
      %v4816 = vpop.f32.mrb[0].mxu0
      %4817 = vmatprep.mubr.f32.mxu0 0.0
      %4818 = vmatmul.mubr.f32.gmra.mrb[0].mxu0 %v4608
      %v4819 = vpop.f32.mrb[0].mxu0
      %v4820 = vadd.f32 %v4499, %v4819
      %v4821 = vpop.f32.mrb[0].mxu0
      %4822 = vmatprep.mubr.f32.mxu0 0.0
      %4823 = vmatmul.mubr.f32.gmra.mrb[0].mxu0 %v4611
      %v4824 = vpop.f32.mrb[0].mxu0
      %v4825 = vadd.f32 %v4504, %v4824
      %v4826 = vpop.f32.mrb[0].mxu0
      %4827 = vmatprep.mubr.f32.mxu0 0.0
      %4828 = vmatmul.mubr.f32.gmra.mrb[0].mxu0 %v4614
      %v4829 = vpop.f32.mrb[0].mxu0
      %v4830 = vadd.f32 %v4509, %v4829
      %v4831 = vpop.f32.mrb[0].mxu0
      %4832 = vmatprep.mubr.f32.mxu0 0.0
      %4833 = vmatmul.mubr.f32.gmra.mrb[0].mxu0 %v4617
      %v4834 = vpop.f32.mrb[0].mxu0
      %v4835 = vadd.f32 %v4514, %v4834
      %v4836 = vpop.f32.mrb[0].mxu0
      %4837 = vmatprep.mubr.f32.mxu0 0.0
      %4838 = vmatmul.mubr.f32.gmra.mrb[0].mxu0 %v4620
      %v4839 = vpop.f32.mrb[0].mxu0
      %v4840 = vadd.f32 %v4519, %v4839
      %v4841 = vpop.f32.mrb[0].mxu0
      %4842 = vmatprep.mubr.f32.mxu0 0.0
      %4843 = vmatmul.mubr.f32.gmra.mrb[0].mxu0 %v4623
      %v4844 = vpop.f32.mrb[0].mxu0
      %v4845 = vadd.f32 %v4524, %v4844
      %v4846 = vpop.f32.mrb[0].mxu0
      %4847 = vmatprep.mubr.f32.mxu0 0.0
      %4848 = vmatmul.mubr.f32.gmra.mrb[0].mxu0 %v4626
      %v4849 = vpop.f32.mrb[0].mxu0
      %v4850 = vadd.f32 %v4529, %v4849
      %v4851 = vpop.f32.mrb[0].mxu0
      %4852 = vdwg.mxu0
      %v4853 = vld [vmem:[#allocation2 + $0x20] sm:$0xff]
      %v4854 = vld [vmem:[#allocation2 + $0x28] sm:$0xff]
      %v4855 = vld [vmem:[#allocation2 + $0x30] sm:$0xff]
      %v4856 = vld [vmem:[#allocation2 + $0x38] sm:$0xff]
      %v4857 = vld [vmem:[#allocation2 + $0x40] sm:$0xff]
      %v4858 = vld [vmem:[#allocation2 + $0x48] sm:$0xff]
      %v4859 = vld [vmem:[#allocation2 + $0x50] sm:$0xff]
      %v4860 = vld [vmem:[#allocation2 + $0x58] sm:$0xff]
      %v4861 = vld [vmem:[#allocation2 + $0x60] sm:$0xff]
      %v4862 = vld [vmem:[#allocation2 + $0x68] sm:$0xff]
      %v4863 = vld [vmem:[#allocation2 + $0x70] sm:$0xff]
      %v4864 = vld [vmem:[#allocation2 + $0x78] sm:$0xff]
      %v4865 = vld [vmem:[#allocation2 + $0x80] sm:$0xff]
      %v4866 = vld [vmem:[#allocation2 + $0x88] sm:$0xff]
      %v4867 = vld [vmem:[#allocation2 + $0x90] sm:$0xff]
      %v4868 = vld [vmem:[#allocation2 + $0x98] sm:$0xff]
      %v4869 = vld [vmem:[#allocation2 + $0xa0] sm:$0xff]
      %v4870 = vld [vmem:[#allocation2 + $0xa8] sm:$0xff]
      %v4871 = vld [vmem:[#allocation2 + $0xb0] sm:$0xff]
      %v4872 = vld [vmem:[#allocation2 + $0xb8] sm:$0xff]
      %v4873 = vld [vmem:[#allocation2 + $0xc0] sm:$0xff]
      %v4874 = vld [vmem:[#allocation2 + $0xc8] sm:$0xff]
      %v4875 = vld [vmem:[#allocation2 + $0xd0] sm:$0xff]
      %v4876 = vld [vmem:[#allocation2 + $0xd8] sm:$0xff]
      %v4877 = vld [vmem:[#allocation2 + $0xe0] sm:$0xff]
      %v4878 = vld [vmem:[#allocation2 + $0xe8] sm:$0xff]
      %v4879 = vld [vmem:[#allocation2 + $0xf0] sm:$0xff]
      %v4880 = vld [vmem:[#allocation2 + $0xf8] sm:$0xff]
      %v4881 = vld [vmem:[#allocation2 + $0x100] sm:$0xff]
      %v4882 = vld [vmem:[#allocation2 + $0x108] sm:$0xff]
      %v4883 = vld [vmem:[#allocation2 + $0x110] sm:$0xff]
      %v4884 = vld [vmem:[#allocation2 + $0x118] sm:$0xff]
      %s4885 = scalar_lea.vmem %s3, 80
      %v4886 = vld [vmem:[%s4885] sm:$0xff]
      %v4888 = vsel %vm455, %v4853, 0
      %v4891 = vsel %vm455, %v4854, 0
      %v4894 = vsel %vm455, %v4855, 0
      %v4897 = vsel %vm455, %v4856, 0
      %v4900 = vsel %vm455, %v4857, 0
      %v4903 = vsel %vm455, %v4858, 0
      %v4906 = vsel %vm455, %v4859, 0
      %v4909 = vsel %vm455, %v4860, 0
      %v4912 = vsel %vm455, %v4861, 0
      %v4915 = vsel %vm455, %v4862, 0
      %v4918 = vsel %vm455, %v4863, 0
      %v4921 = vsel %vm455, %v4864, 0
      %v4924 = vsel %vm455, %v4865, 0
      %v4927 = vsel %vm455, %v4866, 0
      %v4930 = vsel %vm455, %v4867, 0
      %v4933 = vsel %vm455, %v4868, 0
      %v4936 = vsel %vm455, %v4869, 0
      %v4939 = vsel %vm455, %v4870, 0
      %v4942 = vsel %vm455, %v4871, 0
      %v4945 = vsel %vm455, %v4872, 0
      %v4948 = vsel %vm455, %v4873, 0
      %v4951 = vsel %vm455, %v4874, 0
      %v4954 = vsel %vm455, %v4875, 0
      %v4957 = vsel %vm455, %v4876, 0
      %v4960 = vsel %vm455, %v4877, 0
      %v4963 = vsel %vm455, %v4878, 0
      %v4966 = vsel %vm455, %v4879, 0
      %v4969 = vsel %vm455, %v4880, 0
      %v4972 = vsel %vm455, %v4881, 0
      %v4975 = vsel %vm455, %v4882, 0
      %v4978 = vsel %vm455, %v4883, 0
      %v4981 = vsel %vm455, %v4884, 0
      %4983 = vmatprep.subr.mxu0 0.0
      %4984 = vmatpush1.msra.mxu0 %v4886
      %4985 = vmatprep.subr.mxu0 0.0
      %4986 = vmatpush1.msra.mxu0 0.0
      %4987 = vmatprep.subr.mxu0 0.0
      %4988 = vmatpush1.msra.mxu0 0.0
      %4989 = vmatprep.subr.mxu0 0.0
      %4990 = vmatpush1.msra.mxu0 0.0
      %4991 = vmatprep.subr.mxu0 0.0
      %4992 = vmatpush1.msra.mxu0 0.0
      %4993 = vmatprep.subr.mxu0 0.0
      %4994 = vmatpush1.msra.mxu0 0.0
      %4995 = vmatprep.subr.mxu0 0.0
      %4996 = vmatpush1.msra.mxu0 0.0
      %4997 = vmatprep.subr.mxu0 0.0
      %4998 = vmatpush1.msra.mxu0 0.0
      %4999 = vmatprep.subr.mxu0 0.0
      %5000 = vmatpush1.msra.mxu0 0.0
      %5001 = vmatprep.subr.mxu0 0.0
      %5002 = vmatpush1.msra.mxu0 0.0
      %5003 = vmatprep.subr.mxu0 0.0
      %5004 = vmatpush1.msra.mxu0 0.0
      %5005 = vmatprep.subr.mxu0 0.0
      %5006 = vmatpush1.msra.mxu0 0.0
      %5007 = vmatprep.subr.mxu0 0.0
      %5008 = vmatpush1.msra.mxu0 0.0
      %5009 = vmatprep.subr.mxu0 0.0
      %5010 = vmatpush1.msra.mxu0 0.0
      %5011 = vmatprep.subr.mxu0 0.0
      %5012 = vmatpush1.msra.mxu0 0.0
      %5013 = vmatprep.subr.mxu0 0.0
      %5014 = vmatpush1.msra.mxu0 0.0
      %5015 = vmatprep.subr.mxu0 0.0
      %5016 = vmatpush1.msra.mxu0 0.0
      %5017 = vmatprep.subr.mxu0 0.0
      %5018 = vmatpush1.msra.mxu0 0.0
      %5019 = vmatprep.subr.mxu0 0.0
      %5020 = vmatpush1.msra.mxu0 0.0
      %5021 = vmatprep.subr.mxu0 0.0
      %5022 = vmatpush1.msra.mxu0 0.0
      %5023 = vmatprep.subr.mxu0 0.0
      %5024 = vmatpush1.msra.mxu0 0.0
      %5025 = vmatprep.subr.mxu0 0.0
      %5026 = vmatpush1.msra.mxu0 0.0
      %5027 = vmatprep.subr.mxu0 0.0
      %5028 = vmatpush1.msra.mxu0 0.0
      %5029 = vmatprep.subr.mxu0 0.0
      %5030 = vmatpush1.msra.mxu0 0.0
      %5031 = vmatprep.subr.mxu0 0.0
      %5032 = vmatpush1.msra.mxu0 0.0
      %5033 = vmatprep.subr.mxu0 0.0
      %5034 = vmatpush1.msra.mxu0 0.0
      %5035 = vmatprep.subr.mxu0 0.0
      %5036 = vmatpush1.msra.mxu0 0.0
      %5037 = vmatprep.subr.mxu0 0.0
      %5038 = vmatpush1.msra.mxu0 0.0
      %5039 = vmatprep.subr.mxu0 0.0
      %5040 = vmatpush1.msra.mxu0 0.0
      %5041 = vmatprep.subr.mxu0 0.0
      %5042 = vmatpush1.msra.mxu0 0.0
      %5043 = vmatprep.subr.mxu0 0.0
      %5044 = vmatpush1.msra.mxu0 0.0
      %5045 = vmatprep.subr.mxu0 0.0
      %5046 = vmatpush1.msra.mxu0 0.0
      %5047 = vmatprep.mubr.f32.mxu0 0.0
      %5048 = vmatmul.mubr.f32.gmra.mrb[0].mxu0 %v4888
      %v5049 = vpop.f32.mrb[0].mxu0
      %v5050 = vadd.f32 0.0, %v5049
      %v5051 = vpop.f32.mrb[0].mxu0
      %5052 = vmatprep.mubr.f32.mxu0 0.0
      %5053 = vmatmul.mubr.f32.gmra.mrb[0].mxu0 %v4891
      %v5054 = vpop.f32.mrb[0].mxu0
      %v5055 = vadd.f32 0.0, %v5054
      %v5056 = vpop.f32.mrb[0].mxu0
      %5057 = vmatprep.mubr.f32.mxu0 0.0
      %5058 = vmatmul.mubr.f32.gmra.mrb[0].mxu0 %v4894
      %v5059 = vpop.f32.mrb[0].mxu0
      %v5060 = vadd.f32 0.0, %v5059
      %v5061 = vpop.f32.mrb[0].mxu0
      %5062 = vmatprep.mubr.f32.mxu0 0.0
      %5063 = vmatmul.mubr.f32.gmra.mrb[0].mxu0 %v4897
      %v5064 = vpop.f32.mrb[0].mxu0
      %v5065 = vadd.f32 0.0, %v5064
      %v5066 = vpop.f32.mrb[0].mxu0
      %5067 = vmatprep.mubr.f32.mxu0 0.0
      %5068 = vmatmul.mubr.f32.gmra.mrb[0].mxu0 %v4900
      %v5069 = vpop.f32.mrb[0].mxu0
      %v5070 = vadd.f32 0.0, %v5069
      %v5071 = vpop.f32.mrb[0].mxu0
      %5072 = vmatprep.mubr.f32.mxu0 0.0
      %5073 = vmatmul.mubr.f32.gmra.mrb[0].mxu0 %v4903
      %v5074 = vpop.f32.mrb[0].mxu0
      %v5075 = vadd.f32 0.0, %v5074
      %v5076 = vpop.f32.mrb[0].mxu0
      %5077 = vmatprep.mubr.f32.mxu0 0.0
      %5078 = vmatmul.mubr.f32.gmra.mrb[0].mxu0 %v4906
      %v5079 = vpop.f32.mrb[0].mxu0
      %v5080 = vadd.f32 0.0, %v5079
      %v5081 = vpop.f32.mrb[0].mxu0
      %5082 = vmatprep.mubr.f32.mxu0 0.0
      %5083 = vmatmul.mubr.f32.gmra.mrb[0].mxu0 %v4909
      %v5084 = vpop.f32.mrb[0].mxu0
      %v5085 = vadd.f32 0.0, %v5084
      %v5086 = vpop.f32.mrb[0].mxu0
      %5087 = vmatprep.mubr.f32.mxu0 0.0
      %5088 = vmatmul.mubr.f32.gmra.mrb[0].mxu0 %v4912
      %v5089 = vpop.f32.mrb[0].mxu0
      %v5090 = vadd.f32 0.0, %v5089
      %v5091 = vpop.f32.mrb[0].mxu0
      %5092 = vmatprep.mubr.f32.mxu0 0.0
      %5093 = vmatmul.mubr.f32.gmra.mrb[0].mxu0 %v4915
      %v5094 = vpop.f32.mrb[0].mxu0
      %v5095 = vadd.f32 0.0, %v5094
      %v5096 = vpop.f32.mrb[0].mxu0
      %5097 = vmatprep.mubr.f32.mxu0 0.0
      %5098 = vmatmul.mubr.f32.gmra.mrb[0].mxu0 %v4918
      %v5099 = vpop.f32.mrb[0].mxu0
      %v5100 = vadd.f32 0.0, %v5099
      %v5101 = vpop.f32.mrb[0].mxu0
      %5102 = vmatprep.mubr.f32.mxu0 0.0
      %5103 = vmatmul.mubr.f32.gmra.mrb[0].mxu0 %v4921
      %v5104 = vpop.f32.mrb[0].mxu0
      %v5105 = vadd.f32 0.0, %v5104
      %v5106 = vpop.f32.mrb[0].mxu0
      %5107 = vmatprep.mubr.f32.mxu0 0.0
      %5108 = vmatmul.mubr.f32.gmra.mrb[0].mxu0 %v4924
      %v5109 = vpop.f32.mrb[0].mxu0
      %v5110 = vadd.f32 0.0, %v5109
      %v5111 = vpop.f32.mrb[0].mxu0
      %5112 = vmatprep.mubr.f32.mxu0 0.0
      %5113 = vmatmul.mubr.f32.gmra.mrb[0].mxu0 %v4927
      %v5114 = vpop.f32.mrb[0].mxu0
      %v5115 = vadd.f32 0.0, %v5114
      %v5116 = vpop.f32.mrb[0].mxu0
      %5117 = vmatprep.mubr.f32.mxu0 0.0
      %5118 = vmatmul.mubr.f32.gmra.mrb[0].mxu0 %v4930
      %v5119 = vpop.f32.mrb[0].mxu0
      %v5120 = vadd.f32 0.0, %v5119
      %v5121 = vpop.f32.mrb[0].mxu0
      %5122 = vmatprep.mubr.f32.mxu0 0.0
      %5123 = vmatmul.mubr.f32.gmra.mrb[0].mxu0 %v4933
      %v5124 = vpop.f32.mrb[0].mxu0
      %v5125 = vadd.f32 0.0, %v5124
      %v5126 = vpop.f32.mrb[0].mxu0
      %5127 = vmatprep.mubr.f32.mxu0 0.0
      %5128 = vmatmul.mubr.f32.gmra.mrb[0].mxu0 %v4936
      %v5129 = vpop.f32.mrb[0].mxu0
      %v5130 = vadd.f32 0.0, %v5129
      %v5131 = vpop.f32.mrb[0].mxu0
      %5132 = vmatprep.mubr.f32.mxu0 0.0
      %5133 = vmatmul.mubr.f32.gmra.mrb[0].mxu0 %v4939
      %v5134 = vpop.f32.mrb[0].mxu0
      %v5135 = vadd.f32 0.0, %v5134
      %v5136 = vpop.f32.mrb[0].mxu0
      %5137 = vmatprep.mubr.f32.mxu0 0.0
      %5138 = vmatmul.mubr.f32.gmra.mrb[0].mxu0 %v4942
      %v5139 = vpop.f32.mrb[0].mxu0
      %v5140 = vadd.f32 0.0, %v5139
      %v5141 = vpop.f32.mrb[0].mxu0
      %5142 = vmatprep.mubr.f32.mxu0 0.0
      %5143 = vmatmul.mubr.f32.gmra.mrb[0].mxu0 %v4945
      %v5144 = vpop.f32.mrb[0].mxu0
      %v5145 = vadd.f32 0.0, %v5144
      %v5146 = vpop.f32.mrb[0].mxu0
      %5147 = vmatprep.mubr.f32.mxu0 0.0
      %5148 = vmatmul.mubr.f32.gmra.mrb[0].mxu0 %v4948
      %v5149 = vpop.f32.mrb[0].mxu0
      %v5150 = vadd.f32 0.0, %v5149
      %v5151 = vpop.f32.mrb[0].mxu0
      %5152 = vmatprep.mubr.f32.mxu0 0.0
      %5153 = vmatmul.mubr.f32.gmra.mrb[0].mxu0 %v4951
      %v5154 = vpop.f32.mrb[0].mxu0
      %v5155 = vadd.f32 0.0, %v5154
      %v5156 = vpop.f32.mrb[0].mxu0
      %5157 = vmatprep.mubr.f32.mxu0 0.0
      %5158 = vmatmul.mubr.f32.gmra.mrb[0].mxu0 %v4954
      %v5159 = vpop.f32.mrb[0].mxu0
      %v5160 = vadd.f32 0.0, %v5159
      %v5161 = vpop.f32.mrb[0].mxu0
      %5162 = vmatprep.mubr.f32.mxu0 0.0
      %5163 = vmatmul.mubr.f32.gmra.mrb[0].mxu0 %v4957
      %v5164 = vpop.f32.mrb[0].mxu0
      %v5165 = vadd.f32 0.0, %v5164
      %v5166 = vpop.f32.mrb[0].mxu0
      %5167 = vmatprep.mubr.f32.mxu0 0.0
      %5168 = vmatmul.mubr.f32.gmra.mrb[0].mxu0 %v4960
      %v5169 = vpop.f32.mrb[0].mxu0
      %v5170 = vadd.f32 0.0, %v5169
      %v5171 = vpop.f32.mrb[0].mxu0
      %5172 = vmatprep.mubr.f32.mxu0 0.0
      %5173 = vmatmul.mubr.f32.gmra.mrb[0].mxu0 %v4963
      %v5174 = vpop.f32.mrb[0].mxu0
      %v5175 = vadd.f32 0.0, %v5174
      %v5176 = vpop.f32.mrb[0].mxu0
      %5177 = vmatprep.mubr.f32.mxu0 0.0
      %5178 = vmatmul.mubr.f32.gmra.mrb[0].mxu0 %v4966
      %v5179 = vpop.f32.mrb[0].mxu0
      %v5180 = vadd.f32 0.0, %v5179
      %v5181 = vpop.f32.mrb[0].mxu0
      %5182 = vmatprep.mubr.f32.mxu0 0.0
      %5183 = vmatmul.mubr.f32.gmra.mrb[0].mxu0 %v4969
      %v5184 = vpop.f32.mrb[0].mxu0
      %v5185 = vadd.f32 0.0, %v5184
      %v5186 = vpop.f32.mrb[0].mxu0
      %5187 = vmatprep.mubr.f32.mxu0 0.0
      %5188 = vmatmul.mubr.f32.gmra.mrb[0].mxu0 %v4972
      %v5189 = vpop.f32.mrb[0].mxu0
      %v5190 = vadd.f32 0.0, %v5189
      %v5191 = vpop.f32.mrb[0].mxu0
      %5192 = vmatprep.mubr.f32.mxu0 0.0
      %5193 = vmatmul.mubr.f32.gmra.mrb[0].mxu0 %v4975
      %v5194 = vpop.f32.mrb[0].mxu0
      %v5195 = vadd.f32 0.0, %v5194
      %v5196 = vpop.f32.mrb[0].mxu0
      %5197 = vmatprep.mubr.f32.mxu0 0.0
      %5198 = vmatmul.mubr.f32.gmra.mrb[0].mxu0 %v4978
      %v5199 = vpop.f32.mrb[0].mxu0
      %v5200 = vadd.f32 0.0, %v5199
      %v5201 = vpop.f32.mrb[0].mxu0
      %5202 = vmatprep.mubr.f32.mxu0 0.0
      %5203 = vmatmul.mubr.f32.gmra.mrb[0].mxu0 %v4981
      %v5204 = vpop.f32.mrb[0].mxu0
      %v5205 = vadd.f32 0.0, %v5204
      %v5206 = vpop.f32.mrb[0].mxu0
      %5207 = vdwg.mxu0
      %v5208 = vadd.f32 %v4695, %v5050
      %v5209 = vadd.f32 %v4700, %v5055
      %v5210 = vadd.f32 %v4705, %v5060
      %v5211 = vadd.f32 %v4710, %v5065
      %v5212 = vadd.f32 %v4715, %v5070
      %v5213 = vadd.f32 %v4720, %v5075
      %v5214 = vadd.f32 %v4725, %v5080
      %v5215 = vadd.f32 %v4730, %v5085
      %v5216 = vadd.f32 %v4735, %v5090
      %v5217 = vadd.f32 %v4740, %v5095
      %v5218 = vadd.f32 %v4745, %v5100
      %v5219 = vadd.f32 %v4750, %v5105
      %v5220 = vadd.f32 %v4755, %v5110
      %v5221 = vadd.f32 %v4760, %v5115
      %v5222 = vadd.f32 %v4765, %v5120
      %v5223 = vadd.f32 %v4770, %v5125
      %v5224 = vadd.f32 %v4775, %v5130
      %v5225 = vadd.f32 %v4780, %v5135
      %v5226 = vadd.f32 %v4785, %v5140
      %v5227 = vadd.f32 %v4790, %v5145
      %v5228 = vadd.f32 %v4795, %v5150
      %v5229 = vadd.f32 %v4800, %v5155
      %v5230 = vadd.f32 %v4805, %v5160
      %v5231 = vadd.f32 %v4810, %v5165
      %v5232 = vadd.f32 %v4815, %v5170
      %v5233 = vadd.f32 %v4820, %v5175
      %v5234 = vadd.f32 %v4825, %v5180
      %v5235 = vadd.f32 %v4830, %v5185
      %v5236 = vadd.f32 %v4835, %v5190
      %v5237 = vadd.f32 %v4840, %v5195
      %v5238 = vadd.f32 %v4845, %v5200
      %v5239 = vadd.f32 %v4850, %v5205
      %v5240 = vld [vmem:[%s653 + $0x20] sm:$0xff]
      %v5241 = vld [vmem:[%s653 + $0x28] sm:$0xff]
      %v5242 = vld [vmem:[%s653 + $0x30] sm:$0xff]
      %v5243 = vld [vmem:[%s653 + $0x38] sm:$0xff]
      %v5244 = vld [vmem:[%s653 + $0x40] sm:$0xff]
      %v5245 = vld [vmem:[%s653 + $0x48] sm:$0xff]
      %v5246 = vld [vmem:[%s653 + $0x50] sm:$0xff]
      %v5247 = vld [vmem:[%s653 + $0x58] sm:$0xff]
      %v5248 = vld [vmem:[%s653 + $0x60] sm:$0xff]
      %v5249 = vld [vmem:[%s653 + $0x68] sm:$0xff]
      %v5250 = vld [vmem:[%s653 + $0x70] sm:$0xff]
      %v5251 = vld [vmem:[%s653 + $0x78] sm:$0xff]
      %v5252 = vld [vmem:[%s653 + $0x80] sm:$0xff]
      %v5253 = vld [vmem:[%s653 + $0x88] sm:$0xff]
      %v5254 = vld [vmem:[%s653 + $0x90] sm:$0xff]
      %v5255 = vld [vmem:[%s653 + $0x98] sm:$0xff]
      %v5256 = vld [vmem:[%s653 + $0xa0] sm:$0xff]
      %v5257 = vld [vmem:[%s653 + $0xa8] sm:$0xff]
      %v5258 = vld [vmem:[%s653 + $0xb0] sm:$0xff]
      %v5259 = vld [vmem:[%s653 + $0xb8] sm:$0xff]
      %v5260 = vld [vmem:[%s653 + $0xc0] sm:$0xff]
      %v5261 = vld [vmem:[%s653 + $0xc8] sm:$0xff]
      %v5262 = vld [vmem:[%s653 + $0xd0] sm:$0xff]
      %v5263 = vld [vmem:[%s653 + $0xd8] sm:$0xff]
      %v5264 = vld [vmem:[%s653 + $0xe0] sm:$0xff]
      %v5265 = vld [vmem:[%s653 + $0xe8] sm:$0xff]
      %v5266 = vld [vmem:[%s653 + $0xf0] sm:$0xff]
      %v5267 = vld [vmem:[%s653 + $0xf8] sm:$0xff]
      %v5268 = vld [vmem:[%s653 + $0x100] sm:$0xff]
      %v5269 = vld [vmem:[%s653 + $0x108] sm:$0xff]
      %v5270 = vld [vmem:[%s653 + $0x110] sm:$0xff]
      %v5271 = vld [vmem:[%s653 + $0x118] sm:$0xff]
      %s5272 = scalar_lea.vmem %s3, 88
      %v5273 = vld [vmem:[%s5272] sm:$0xff]
      %v5275 = vsel %vm455, %v5240, 0
      %v5278 = vsel %vm455, %v5241, 0
      %v5281 = vsel %vm455, %v5242, 0
      %v5284 = vsel %vm455, %v5243, 0
      %v5287 = vsel %vm455, %v5244, 0
      %v5290 = vsel %vm455, %v5245, 0
      %v5293 = vsel %vm455, %v5246, 0
      %v5296 = vsel %vm455, %v5247, 0
      %v5299 = vsel %vm455, %v5248, 0
      %v5302 = vsel %vm455, %v5249, 0
      %v5305 = vsel %vm455, %v5250, 0
      %v5308 = vsel %vm455, %v5251, 0
      %v5311 = vsel %vm455, %v5252, 0
      %v5314 = vsel %vm455, %v5253, 0
      %v5317 = vsel %vm455, %v5254, 0
      %v5320 = vsel %vm455, %v5255, 0
      %v5323 = vsel %vm455, %v5256, 0
      %v5326 = vsel %vm455, %v5257, 0
      %v5329 = vsel %vm455, %v5258, 0
      %v5332 = vsel %vm455, %v5259, 0
      %v5335 = vsel %vm455, %v5260, 0
      %v5338 = vsel %vm455, %v5261, 0
      %v5341 = vsel %vm455, %v5262, 0
      %v5344 = vsel %vm455, %v5263, 0
      %v5347 = vsel %vm455, %v5264, 0
      %v5350 = vsel %vm455, %v5265, 0
      %v5353 = vsel %vm455, %v5266, 0
      %v5356 = vsel %vm455, %v5267, 0
      %v5359 = vsel %vm455, %v5268, 0
      %v5362 = vsel %vm455, %v5269, 0
      %v5365 = vsel %vm455, %v5270, 0
      %v5368 = vsel %vm455, %v5271, 0
      %5370 = vmatprep.subr.mxu0 0.0
      %5371 = vmatpush1.msra.mxu0 %v5273
      %5372 = vmatprep.subr.mxu0 0.0
      %5373 = vmatpush1.msra.mxu0 0.0
      %5374 = vmatprep.subr.mxu0 0.0
      %5375 = vmatpush1.msra.mxu0 0.0
      %5376 = vmatprep.subr.mxu0 0.0
      %5377 = vmatpush1.msra.mxu0 0.0
      %5378 = vmatprep.subr.mxu0 0.0
      %5379 = vmatpush1.msra.mxu0 0.0
      %5380 = vmatprep.subr.mxu0 0.0
      %5381 = vmatpush1.msra.mxu0 0.0
      %5382 = vmatprep.subr.mxu0 0.0
      %5383 = vmatpush1.msra.mxu0 0.0
      %5384 = vmatprep.subr.mxu0 0.0
      %5385 = vmatpush1.msra.mxu0 0.0
      %5386 = vmatprep.subr.mxu0 0.0
      %5387 = vmatpush1.msra.mxu0 0.0
      %5388 = vmatprep.subr.mxu0 0.0
      %5389 = vmatpush1.msra.mxu0 0.0
      %5390 = vmatprep.subr.mxu0 0.0
      %5391 = vmatpush1.msra.mxu0 0.0
      %5392 = vmatprep.subr.mxu0 0.0
      %5393 = vmatpush1.msra.mxu0 0.0
      %5394 = vmatprep.subr.mxu0 0.0
      %5395 = vmatpush1.msra.mxu0 0.0
      %5396 = vmatprep.subr.mxu0 0.0
      %5397 = vmatpush1.msra.mxu0 0.0
      %5398 = vmatprep.subr.mxu0 0.0
      %5399 = vmatpush1.msra.mxu0 0.0
      %5400 = vmatprep.subr.mxu0 0.0
      %5401 = vmatpush1.msra.mxu0 0.0
      %5402 = vmatprep.subr.mxu0 0.0
      %5403 = vmatpush1.msra.mxu0 0.0
      %5404 = vmatprep.subr.mxu0 0.0
      %5405 = vmatpush1.msra.mxu0 0.0
      %5406 = vmatprep.subr.mxu0 0.0
      %5407 = vmatpush1.msra.mxu0 0.0
      %5408 = vmatprep.subr.mxu0 0.0
      %5409 = vmatpush1.msra.mxu0 0.0
      %5410 = vmatprep.subr.mxu0 0.0
      %5411 = vmatpush1.msra.mxu0 0.0
      %5412 = vmatprep.subr.mxu0 0.0
      %5413 = vmatpush1.msra.mxu0 0.0
      %5414 = vmatprep.subr.mxu0 0.0
      %5415 = vmatpush1.msra.mxu0 0.0
      %5416 = vmatprep.subr.mxu0 0.0
      %5417 = vmatpush1.msra.mxu0 0.0
      %5418 = vmatprep.subr.mxu0 0.0
      %5419 = vmatpush1.msra.mxu0 0.0
      %5420 = vmatprep.subr.mxu0 0.0
      %5421 = vmatpush1.msra.mxu0 0.0
      %5422 = vmatprep.subr.mxu0 0.0
      %5423 = vmatpush1.msra.mxu0 0.0
      %5424 = vmatprep.subr.mxu0 0.0
      %5425 = vmatpush1.msra.mxu0 0.0
      %5426 = vmatprep.subr.mxu0 0.0
      %5427 = vmatpush1.msra.mxu0 0.0
      %5428 = vmatprep.subr.mxu0 0.0
      %5429 = vmatpush1.msra.mxu0 0.0
      %5430 = vmatprep.subr.mxu0 0.0
      %5431 = vmatpush1.msra.mxu0 0.0
      %5432 = vmatprep.subr.mxu0 0.0
      %5433 = vmatpush1.msra.mxu0 0.0
      %5434 = vmatprep.mubr.f32.mxu0 0.0
      %5435 = vmatmul.mubr.f32.gmra.mrb[0].mxu0 %v5275
      %v5436 = vpop.f32.mrb[0].mxu0
      %v5437 = vadd.f32 0.0, %v5436
      %v5438 = vpop.f32.mrb[0].mxu0
      %5439 = vmatprep.mubr.f32.mxu0 0.0
      %5440 = vmatmul.mubr.f32.gmra.mrb[0].mxu0 %v5278
      %v5441 = vpop.f32.mrb[0].mxu0
      %v5442 = vadd.f32 0.0, %v5441
      %v5443 = vpop.f32.mrb[0].mxu0
      %5444 = vmatprep.mubr.f32.mxu0 0.0
      %5445 = vmatmul.mubr.f32.gmra.mrb[0].mxu0 %v5281
      %v5446 = vpop.f32.mrb[0].mxu0
      %v5447 = vadd.f32 0.0, %v5446
      %v5448 = vpop.f32.mrb[0].mxu0
      %5449 = vmatprep.mubr.f32.mxu0 0.0
      %5450 = vmatmul.mubr.f32.gmra.mrb[0].mxu0 %v5284
      %v5451 = vpop.f32.mrb[0].mxu0
      %v5452 = vadd.f32 0.0, %v5451
      %v5453 = vpop.f32.mrb[0].mxu0
      %5454 = vmatprep.mubr.f32.mxu0 0.0
      %5455 = vmatmul.mubr.f32.gmra.mrb[0].mxu0 %v5287
      %v5456 = vpop.f32.mrb[0].mxu0
      %v5457 = vadd.f32 0.0, %v5456
      %v5458 = vpop.f32.mrb[0].mxu0
      %5459 = vmatprep.mubr.f32.mxu0 0.0
      %5460 = vmatmul.mubr.f32.gmra.mrb[0].mxu0 %v5290
      %v5461 = vpop.f32.mrb[0].mxu0
      %v5462 = vadd.f32 0.0, %v5461
      %v5463 = vpop.f32.mrb[0].mxu0
      %5464 = vmatprep.mubr.f32.mxu0 0.0
      %5465 = vmatmul.mubr.f32.gmra.mrb[0].mxu0 %v5293
      %v5466 = vpop.f32.mrb[0].mxu0
      %v5467 = vadd.f32 0.0, %v5466
      %v5468 = vpop.f32.mrb[0].mxu0
      %5469 = vmatprep.mubr.f32.mxu0 0.0
      %5470 = vmatmul.mubr.f32.gmra.mrb[0].mxu0 %v5296
      %v5471 = vpop.f32.mrb[0].mxu0
      %v5472 = vadd.f32 0.0, %v5471
      %v5473 = vpop.f32.mrb[0].mxu0
      %5474 = vmatprep.mubr.f32.mxu0 0.0
      %5475 = vmatmul.mubr.f32.gmra.mrb[0].mxu0 %v5299
      %v5476 = vpop.f32.mrb[0].mxu0
      %v5477 = vadd.f32 0.0, %v5476
      %v5478 = vpop.f32.mrb[0].mxu0
      %5479 = vmatprep.mubr.f32.mxu0 0.0
      %5480 = vmatmul.mubr.f32.gmra.mrb[0].mxu0 %v5302
      %v5481 = vpop.f32.mrb[0].mxu0
      %v5482 = vadd.f32 0.0, %v5481
      %v5483 = vpop.f32.mrb[0].mxu0
      %5484 = vmatprep.mubr.f32.mxu0 0.0
      %5485 = vmatmul.mubr.f32.gmra.mrb[0].mxu0 %v5305
      %v5486 = vpop.f32.mrb[0].mxu0
      %v5487 = vadd.f32 0.0, %v5486
      %v5488 = vpop.f32.mrb[0].mxu0
      %5489 = vmatprep.mubr.f32.mxu0 0.0
      %5490 = vmatmul.mubr.f32.gmra.mrb[0].mxu0 %v5308
      %v5491 = vpop.f32.mrb[0].mxu0
      %v5492 = vadd.f32 0.0, %v5491
      %v5493 = vpop.f32.mrb[0].mxu0
      %5494 = vmatprep.mubr.f32.mxu0 0.0
      %5495 = vmatmul.mubr.f32.gmra.mrb[0].mxu0 %v5311
      %v5496 = vpop.f32.mrb[0].mxu0
      %v5497 = vadd.f32 0.0, %v5496
      %v5498 = vpop.f32.mrb[0].mxu0
      %5499 = vmatprep.mubr.f32.mxu0 0.0
      %5500 = vmatmul.mubr.f32.gmra.mrb[0].mxu0 %v5314
      %v5501 = vpop.f32.mrb[0].mxu0
      %v5502 = vadd.f32 0.0, %v5501
      %v5503 = vpop.f32.mrb[0].mxu0
      %5504 = vmatprep.mubr.f32.mxu0 0.0
      %5505 = vmatmul.mubr.f32.gmra.mrb[0].mxu0 %v5317
      %v5506 = vpop.f32.mrb[0].mxu0
      %v5507 = vadd.f32 0.0, %v5506
      %v5508 = vpop.f32.mrb[0].mxu0
      %5509 = vmatprep.mubr.f32.mxu0 0.0
      %5510 = vmatmul.mubr.f32.gmra.mrb[0].mxu0 %v5320
      %v5511 = vpop.f32.mrb[0].mxu0
      %v5512 = vadd.f32 0.0, %v5511
      %v5513 = vpop.f32.mrb[0].mxu0
      %5514 = vmatprep.mubr.f32.mxu0 0.0
      %5515 = vmatmul.mubr.f32.gmra.mrb[0].mxu0 %v5323
      %v5516 = vpop.f32.mrb[0].mxu0
      %v5517 = vadd.f32 0.0, %v5516
      %v5518 = vpop.f32.mrb[0].mxu0
      %5519 = vmatprep.mubr.f32.mxu0 0.0
      %5520 = vmatmul.mubr.f32.gmra.mrb[0].mxu0 %v5326
      %v5521 = vpop.f32.mrb[0].mxu0
      %v5522 = vadd.f32 0.0, %v5521
      %v5523 = vpop.f32.mrb[0].mxu0
      %5524 = vmatprep.mubr.f32.mxu0 0.0
      %5525 = vmatmul.mubr.f32.gmra.mrb[0].mxu0 %v5329
      %v5526 = vpop.f32.mrb[0].mxu0
      %v5527 = vadd.f32 0.0, %v5526
      %v5528 = vpop.f32.mrb[0].mxu0
      %5529 = vmatprep.mubr.f32.mxu0 0.0
      %5530 = vmatmul.mubr.f32.gmra.mrb[0].mxu0 %v5332
      %v5531 = vpop.f32.mrb[0].mxu0
      %v5532 = vadd.f32 0.0, %v5531
      %v5533 = vpop.f32.mrb[0].mxu0
      %5534 = vmatprep.mubr.f32.mxu0 0.0
      %5535 = vmatmul.mubr.f32.gmra.mrb[0].mxu0 %v5335
      %v5536 = vpop.f32.mrb[0].mxu0
      %v5537 = vadd.f32 0.0, %v5536
      %v5538 = vpop.f32.mrb[0].mxu0
      %5539 = vmatprep.mubr.f32.mxu0 0.0
      %5540 = vmatmul.mubr.f32.gmra.mrb[0].mxu0 %v5338
      %v5541 = vpop.f32.mrb[0].mxu0
      %v5542 = vadd.f32 0.0, %v5541
      %v5543 = vpop.f32.mrb[0].mxu0
      %5544 = vmatprep.mubr.f32.mxu0 0.0
      %5545 = vmatmul.mubr.f32.gmra.mrb[0].mxu0 %v5341
      %v5546 = vpop.f32.mrb[0].mxu0
      %v5547 = vadd.f32 0.0, %v5546
      %v5548 = vpop.f32.mrb[0].mxu0
      %5549 = vmatprep.mubr.f32.mxu0 0.0
      %5550 = vmatmul.mubr.f32.gmra.mrb[0].mxu0 %v5344
      %v5551 = vpop.f32.mrb[0].mxu0
      %v5552 = vadd.f32 0.0, %v5551
      %v5553 = vpop.f32.mrb[0].mxu0
      %5554 = vmatprep.mubr.f32.mxu0 0.0
      %5555 = vmatmul.mubr.f32.gmra.mrb[0].mxu0 %v5347
      %v5556 = vpop.f32.mrb[0].mxu0
      %v5557 = vadd.f32 0.0, %v5556
      %v5558 = vpop.f32.mrb[0].mxu0
      %5559 = vmatprep.mubr.f32.mxu0 0.0
      %5560 = vmatmul.mubr.f32.gmra.mrb[0].mxu0 %v5350
      %v5561 = vpop.f32.mrb[0].mxu0
      %v5562 = vadd.f32 0.0, %v5561
      %v5563 = vpop.f32.mrb[0].mxu0
      %5564 = vmatprep.mubr.f32.mxu0 0.0
      %5565 = vmatmul.mubr.f32.gmra.mrb[0].mxu0 %v5353
      %v5566 = vpop.f32.mrb[0].mxu0
      %v5567 = vadd.f32 0.0, %v5566
      %v5568 = vpop.f32.mrb[0].mxu0
      %5569 = vmatprep.mubr.f32.mxu0 0.0
      %5570 = vmatmul.mubr.f32.gmra.mrb[0].mxu0 %v5356
      %v5571 = vpop.f32.mrb[0].mxu0
      %v5572 = vadd.f32 0.0, %v5571
      %v5573 = vpop.f32.mrb[0].mxu0
      %5574 = vmatprep.mubr.f32.mxu0 0.0
      %5575 = vmatmul.mubr.f32.gmra.mrb[0].mxu0 %v5359
      %v5576 = vpop.f32.mrb[0].mxu0
      %v5577 = vadd.f32 0.0, %v5576
      %v5578 = vpop.f32.mrb[0].mxu0
      %5579 = vmatprep.mubr.f32.mxu0 0.0
      %5580 = vmatmul.mubr.f32.gmra.mrb[0].mxu0 %v5362
      %v5581 = vpop.f32.mrb[0].mxu0
      %v5582 = vadd.f32 0.0, %v5581
      %v5583 = vpop.f32.mrb[0].mxu0
      %5584 = vmatprep.mubr.f32.mxu0 0.0
      %5585 = vmatmul.mubr.f32.gmra.mrb[0].mxu0 %v5365
      %v5586 = vpop.f32.mrb[0].mxu0
      %v5587 = vadd.f32 0.0, %v5586
      %v5588 = vpop.f32.mrb[0].mxu0
      %5589 = vmatprep.mubr.f32.mxu0 0.0
      %5590 = vmatmul.mubr.f32.gmra.mrb[0].mxu0 %v5368
      %v5591 = vpop.f32.mrb[0].mxu0
      %v5592 = vadd.f32 0.0, %v5591
      %v5593 = vpop.f32.mrb[0].mxu0
      %5594 = vdwg.mxu0
      %v5595 = vadd.f32 %v5208, %v5437
      %v5596 = vadd.f32 %v5209, %v5442
      %v5597 = vadd.f32 %v5210, %v5447
      %v5598 = vadd.f32 %v5211, %v5452
      %v5599 = vadd.f32 %v5212, %v5457
      %v5600 = vadd.f32 %v5213, %v5462
      %v5601 = vadd.f32 %v5214, %v5467
      %v5602 = vadd.f32 %v5215, %v5472
      %v5603 = vadd.f32 %v5216, %v5477
      %v5604 = vadd.f32 %v5217, %v5482
      %v5605 = vadd.f32 %v5218, %v5487
      %v5606 = vadd.f32 %v5219, %v5492
      %v5607 = vadd.f32 %v5220, %v5497
      %v5608 = vadd.f32 %v5221, %v5502
      %v5609 = vadd.f32 %v5222, %v5507
      %v5610 = vadd.f32 %v5223, %v5512
      %v5611 = vadd.f32 %v5224, %v5517
      %v5612 = vadd.f32 %v5225, %v5522
      %v5613 = vadd.f32 %v5226, %v5527
      %v5614 = vadd.f32 %v5227, %v5532
      %v5615 = vadd.f32 %v5228, %v5537
      %v5616 = vadd.f32 %v5229, %v5542
      %v5617 = vadd.f32 %v5230, %v5547
      %v5618 = vadd.f32 %v5231, %v5552
      %v5619 = vadd.f32 %v5232, %v5557
      %v5620 = vadd.f32 %v5233, %v5562
      %v5621 = vadd.f32 %v5234, %v5567
      %v5622 = vadd.f32 %v5235, %v5572
      %v5623 = vadd.f32 %v5236, %v5577
      %v5624 = vadd.f32 %v5237, %v5582
      %v5625 = vadd.f32 %v5238, %v5587
      %v5626 = vadd.f32 %v5239, %v5592
      %v5627 = vadd.f32 %v5595, %v2335
      %v5628 = vadd.f32 %v5596, %v2335
      %v5629 = vadd.f32 %v5597, %v2335
      %v5630 = vadd.f32 %v5598, %v2335
      %v5631 = vadd.f32 %v5599, %v2335
      %v5632 = vadd.f32 %v5600, %v2335
      %v5633 = vadd.f32 %v5601, %v2335
      %v5634 = vadd.f32 %v5602, %v2335
      %v5635 = vadd.f32 %v5603, %v2335
      %v5636 = vadd.f32 %v5604, %v2335
      %v5637 = vadd.f32 %v5605, %v2335
      %v5638 = vadd.f32 %v5606, %v2335
      %v5639 = vadd.f32 %v5607, %v2335
      %v5640 = vadd.f32 %v5608, %v2335
      %v5641 = vadd.f32 %v5609, %v2335
      %v5642 = vadd.f32 %v5610, %v2335
      %v5643 = vadd.f32 %v5611, %v2335
      %v5644 = vadd.f32 %v5612, %v2335
      %v5645 = vadd.f32 %v5613, %v2335
      %v5646 = vadd.f32 %v5614, %v2335
      %v5647 = vadd.f32 %v5615, %v2335
      %v5648 = vadd.f32 %v5616, %v2335
      %v5649 = vadd.f32 %v5617, %v2335
      %v5650 = vadd.f32 %v5618, %v2335
      %v5651 = vadd.f32 %v5619, %v2335
      %v5652 = vadd.f32 %v5620, %v2335
      %v5653 = vadd.f32 %v5621, %v2335
      %v5654 = vadd.f32 %v5622, %v2335
      %v5655 = vadd.f32 %v5623, %v2335
      %v5656 = vadd.f32 %v5624, %v2335
      %v5657 = vadd.f32 %v5625, %v2335
      %v5658 = vadd.f32 %v5626, %v2335
      %vm5659 = vcmp.gt.f32.partialorder %v5627, 0.0
      %vm5660 = vcmp.gt.f32.partialorder %v5628, 0.0
      %vm5661 = vcmp.gt.f32.partialorder %v5629, 0.0
      %vm5662 = vcmp.gt.f32.partialorder %v5630, 0.0
      %vm5663 = vcmp.gt.f32.partialorder %v5631, 0.0
      %vm5664 = vcmp.gt.f32.partialorder %v5632, 0.0
      %vm5665 = vcmp.gt.f32.partialorder %v5633, 0.0
      %vm5666 = vcmp.gt.f32.partialorder %v5634, 0.0
      %vm5667 = vcmp.gt.f32.partialorder %v5635, 0.0
      %vm5668 = vcmp.gt.f32.partialorder %v5636, 0.0
      %vm5669 = vcmp.gt.f32.partialorder %v5637, 0.0
      %vm5670 = vcmp.gt.f32.partialorder %v5638, 0.0
      %vm5671 = vcmp.gt.f32.partialorder %v5639, 0.0
      %vm5672 = vcmp.gt.f32.partialorder %v5640, 0.0
      %vm5673 = vcmp.gt.f32.partialorder %v5641, 0.0
      %vm5674 = vcmp.gt.f32.partialorder %v5642, 0.0
      %vm5675 = vcmp.gt.f32.partialorder %v5643, 0.0
      %vm5676 = vcmp.gt.f32.partialorder %v5644, 0.0
      %vm5677 = vcmp.gt.f32.partialorder %v5645, 0.0
      %vm5678 = vcmp.gt.f32.partialorder %v5646, 0.0
      %vm5679 = vcmp.gt.f32.partialorder %v5647, 0.0
      %vm5680 = vcmp.gt.f32.partialorder %v5648, 0.0
      %vm5681 = vcmp.gt.f32.partialorder %v5649, 0.0
      %vm5682 = vcmp.gt.f32.partialorder %v5650, 0.0
      %vm5683 = vcmp.gt.f32.partialorder %v5651, 0.0
      %vm5684 = vcmp.gt.f32.partialorder %v5652, 0.0
      %vm5685 = vcmp.gt.f32.partialorder %v5653, 0.0
      %vm5686 = vcmp.gt.f32.partialorder %v5654, 0.0
      %vm5687 = vcmp.gt.f32.partialorder %v5655, 0.0
      %vm5688 = vcmp.gt.f32.partialorder %v5656, 0.0
      %vm5689 = vcmp.gt.f32.partialorder %v5657, 0.0
      %vm5690 = vcmp.gt.f32.partialorder %v5658, 0.0
      %v5691 = vmul.f32 %v5627, 0.2
      %v5692 = vmul.f32 %v5628, 0.2
      %v5693 = vmul.f32 %v5629, 0.2
      %v5694 = vmul.f32 %v5630, 0.2
      %v5695 = vmul.f32 %v5631, 0.2
      %v5696 = vmul.f32 %v5632, 0.2
      %v5697 = vmul.f32 %v5633, 0.2
      %v5698 = vmul.f32 %v5634, 0.2
      %v5699 = vmul.f32 %v5635, 0.2
      %v5700 = vmul.f32 %v5636, 0.2
      %v5701 = vmul.f32 %v5637, 0.2
      %v5702 = vmul.f32 %v5638, 0.2
      %v5703 = vmul.f32 %v5639, 0.2
      %v5704 = vmul.f32 %v5640, 0.2
      %v5705 = vmul.f32 %v5641, 0.2
      %v5706 = vmul.f32 %v5642, 0.2
      %v5707 = vmul.f32 %v5643, 0.2
      %v5708 = vmul.f32 %v5644, 0.2
      %v5709 = vmul.f32 %v5645, 0.2
      %v5710 = vmul.f32 %v5646, 0.2
      %v5711 = vmul.f32 %v5647, 0.2
      %v5712 = vmul.f32 %v5648, 0.2
      %v5713 = vmul.f32 %v5649, 0.2
      %v5714 = vmul.f32 %v5650, 0.2
      %v5715 = vmul.f32 %v5651, 0.2
      %v5716 = vmul.f32 %v5652, 0.2
      %v5717 = vmul.f32 %v5653, 0.2
      %v5718 = vmul.f32 %v5654, 0.2
      %v5719 = vmul.f32 %v5655, 0.2
      %v5720 = vmul.f32 %v5656, 0.2
      %v5721 = vmul.f32 %v5657, 0.2
      %v5722 = vmul.f32 %v5658, 0.2
      %v5723 = vsel %vm5659, %v5627, %v5691
      %v5724 = vsel %vm5660, %v5628, %v5692
      %v5725 = vsel %vm5661, %v5629, %v5693
      %v5726 = vsel %vm5662, %v5630, %v5694
      %v5727 = vsel %vm5663, %v5631, %v5695
      %v5728 = vsel %vm5664, %v5632, %v5696
      %v5729 = vsel %vm5665, %v5633, %v5697
      %v5730 = vsel %vm5666, %v5634, %v5698
      %v5731 = vsel %vm5667, %v5635, %v5699
      %v5732 = vsel %vm5668, %v5636, %v5700
      %v5733 = vsel %vm5669, %v5637, %v5701
      %v5734 = vsel %vm5670, %v5638, %v5702
      %v5735 = vsel %vm5671, %v5639, %v5703
      %v5736 = vsel %vm5672, %v5640, %v5704
      %v5737 = vsel %vm5673, %v5641, %v5705
      %v5738 = vsel %vm5674, %v5642, %v5706
      %v5739 = vsel %vm5675, %v5643, %v5707
      %v5740 = vsel %vm5676, %v5644, %v5708
      %v5741 = vsel %vm5677, %v5645, %v5709
      %v5742 = vsel %vm5678, %v5646, %v5710
      %v5743 = vsel %vm5679, %v5647, %v5711
      %v5744 = vsel %vm5680, %v5648, %v5712
      %v5745 = vsel %vm5681, %v5649, %v5713
      %v5746 = vsel %vm5682, %v5650, %v5714
      %v5747 = vsel %vm5683, %v5651, %v5715
      %v5748 = vsel %vm5684, %v5652, %v5716
      %v5749 = vsel %vm5685, %v5653, %v5717
      %v5750 = vsel %vm5686, %v5654, %v5718
      %v5751 = vsel %vm5687, %v5655, %v5719
      %v5752 = vsel %vm5688, %v5656, %v5720
      %v5753 = vsel %vm5689, %v5657, %v5721
      %v5754 = vsel %vm5690, %v5658, %v5722
      %s5755 = scalar_lea.vmem %s397, 512
      %5756 = vst.msk [vmem:[%s5755] sm:$0xff] %vm2465, %v5723
      %5757 = vst.msk [vmem:[%s5755 + $0x8] sm:$0xff] %vm2465, %v5724
      %5758 = vst.msk [vmem:[%s5755 + $0x10] sm:$0xff] %vm2465, %v5725
      %5759 = vst.msk [vmem:[%s5755 + $0x18] sm:$0xff] %vm2465, %v5726
      %5760 = vst.msk [vmem:[%s5755 + $0x20] sm:$0xff] %vm2465, %v5727
      %5761 = vst.msk [vmem:[%s5755 + $0x28] sm:$0xff] %vm2465, %v5728
      %5762 = vst.msk [vmem:[%s5755 + $0x30] sm:$0xff] %vm2465, %v5729
      %5763 = vst.msk [vmem:[%s5755 + $0x38] sm:$0xff] %vm2465, %v5730
      %5764 = vst.msk [vmem:[%s5755 + $0x40] sm:$0xff] %vm2465, %v5731
      %5765 = vst.msk [vmem:[%s5755 + $0x48] sm:$0xff] %vm2465, %v5732
      %5766 = vst.msk [vmem:[%s5755 + $0x50] sm:$0xff] %vm2465, %v5733
      %5767 = vst.msk [vmem:[%s5755 + $0x58] sm:$0xff] %vm2465, %v5734
      %5768 = vst.msk [vmem:[%s5755 + $0x60] sm:$0xff] %vm2465, %v5735
      %5769 = vst.msk [vmem:[%s5755 + $0x68] sm:$0xff] %vm2465, %v5736
      %5770 = vst.msk [vmem:[%s5755 + $0x70] sm:$0xff] %vm2465, %v5737
      %5771 = vst.msk [vmem:[%s5755 + $0x78] sm:$0xff] %vm2465, %v5738
      %5772 = vst.msk [vmem:[%s5755 + $0x80] sm:$0xff] %vm2465, %v5739
      %5773 = vst.msk [vmem:[%s5755 + $0x88] sm:$0xff] %vm2465, %v5740
      %5774 = vst.msk [vmem:[%s5755 + $0x90] sm:$0xff] %vm2465, %v5741
      %5775 = vst.msk [vmem:[%s5755 + $0x98] sm:$0xff] %vm2465, %v5742
      %5776 = vst.msk [vmem:[%s5755 + $0xa0] sm:$0xff] %vm2465, %v5743
      %5777 = vst.msk [vmem:[%s5755 + $0xa8] sm:$0xff] %vm2465, %v5744
      %5778 = vst.msk [vmem:[%s5755 + $0xb0] sm:$0xff] %vm2465, %v5745
      %5779 = vst.msk [vmem:[%s5755 + $0xb8] sm:$0xff] %vm2465, %v5746
      %5780 = vst.msk [vmem:[%s5755 + $0xc0] sm:$0xff] %vm2465, %v5747
      %5781 = vst.msk [vmem:[%s5755 + $0xc8] sm:$0xff] %vm2465, %v5748
      %5782 = vst.msk [vmem:[%s5755 + $0xd0] sm:$0xff] %vm2465, %v5749
      %5783 = vst.msk [vmem:[%s5755 + $0xd8] sm:$0xff] %vm2465, %v5750
      %5784 = vst.msk [vmem:[%s5755 + $0xe0] sm:$0xff] %vm2465, %v5751
      %5785 = vst.msk [vmem:[%s5755 + $0xe8] sm:$0xff] %vm2465, %v5752
      %5786 = vst.msk [vmem:[%s5755 + $0xf0] sm:$0xff] %vm2465, %v5753
      %5787 = vst.msk [vmem:[%s5755 + $0xf8] sm:$0xff] %vm2465, %v5754
      %v5788 = vld [vmem:[%s653 + $0x10] sm:$0xff]
      %v5789 = vld [vmem:[%s653 + $0x18] sm:$0xff]
      %v5790 = vld [vmem:[%s653 + $0x20] sm:$0xff]
      %v5791 = vld [vmem:[%s653 + $0x28] sm:$0xff]
      %v5792 = vld [vmem:[%s653 + $0x30] sm:$0xff]
      %v5793 = vld [vmem:[%s653 + $0x38] sm:$0xff]
      %v5794 = vld [vmem:[%s653 + $0x40] sm:$0xff]
      %v5795 = vld [vmem:[%s653 + $0x48] sm:$0xff]
      %v5796 = vld [vmem:[%s653 + $0x50] sm:$0xff]
      %v5797 = vld [vmem:[%s653 + $0x58] sm:$0xff]
      %v5798 = vld [vmem:[%s653 + $0x60] sm:$0xff]
      %v5799 = vld [vmem:[%s653 + $0x68] sm:$0xff]
      %v5800 = vld [vmem:[%s653 + $0x70] sm:$0xff]
      %v5801 = vld [vmem:[%s653 + $0x78] sm:$0xff]
      %v5802 = vld [vmem:[%s653 + $0x80] sm:$0xff]
      %v5803 = vld [vmem:[%s653 + $0x88] sm:$0xff]
      %v5804 = vld [vmem:[%s653 + $0x90] sm:$0xff]
      %v5805 = vld [vmem:[%s653 + $0x98] sm:$0xff]
      %v5806 = vld [vmem:[%s653 + $0xa0] sm:$0xff]
      %v5807 = vld [vmem:[%s653 + $0xa8] sm:$0xff]
      %v5808 = vld [vmem:[%s653 + $0xb0] sm:$0xff]
      %v5809 = vld [vmem:[%s653 + $0xb8] sm:$0xff]
      %v5810 = vld [vmem:[%s653 + $0xc0] sm:$0xff]
      %v5811 = vld [vmem:[%s653 + $0xc8] sm:$0xff]
      %v5812 = vld [vmem:[%s653 + $0xd0] sm:$0xff]
      %v5813 = vld [vmem:[%s653 + $0xd8] sm:$0xff]
      %v5814 = vld [vmem:[%s653 + $0xe0] sm:$0xff]
      %v5815 = vld [vmem:[%s653 + $0xe8] sm:$0xff]
      %v5816 = vld [vmem:[%s653 + $0xf0] sm:$0xff]
      %v5817 = vld [vmem:[%s653 + $0xf8] sm:$0xff]
      %v5818 = vld [vmem:[%s653 + $0x100] sm:$0xff]
      %v5819 = vld [vmem:[%s653 + $0x108] sm:$0xff]
      %s5820 = scalar_lea.vmem %s3, 96
      %v5821 = vld [vmem:[%s5820] sm:$0xff]
      %v5822 = vld [vmem:[%s807 + $0x10] sm:$0xff]
      %v5823 = vld [vmem:[%s807 + $0x18] sm:$0xff]
      %v5824 = vld [vmem:[%s807 + $0x20] sm:$0xff]
      %v5825 = vld [vmem:[%s807 + $0x28] sm:$0xff]
      %v5826 = vld [vmem:[%s807 + $0x30] sm:$0xff]
      %v5827 = vld [vmem:[%s807 + $0x38] sm:$0xff]
      %v5828 = vld [vmem:[%s807 + $0x40] sm:$0xff]
      %v5829 = vld [vmem:[%s807 + $0x48] sm:$0xff]
      %v5830 = vld [vmem:[%s807 + $0x50] sm:$0xff]
      %v5831 = vld [vmem:[%s807 + $0x58] sm:$0xff]
      %v5832 = vld [vmem:[%s807 + $0x60] sm:$0xff]
      %v5833 = vld [vmem:[%s807 + $0x68] sm:$0xff]
      %v5834 = vld [vmem:[%s807 + $0x70] sm:$0xff]
      %v5835 = vld [vmem:[%s807 + $0x78] sm:$0xff]
      %v5836 = vld [vmem:[%s807 + $0x80] sm:$0xff]
      %v5837 = vld [vmem:[%s807 + $0x88] sm:$0xff]
      %v5838 = vld [vmem:[%s807 + $0x90] sm:$0xff]
      %v5839 = vld [vmem:[%s807 + $0x98] sm:$0xff]
      %v5840 = vld [vmem:[%s807 + $0xa0] sm:$0xff]
      %v5841 = vld [vmem:[%s807 + $0xa8] sm:$0xff]
      %v5842 = vld [vmem:[%s807 + $0xb0] sm:$0xff]
      %v5843 = vld [vmem:[%s807 + $0xb8] sm:$0xff]
      %v5844 = vld [vmem:[%s807 + $0xc0] sm:$0xff]
      %v5845 = vld [vmem:[%s807 + $0xc8] sm:$0xff]
      %v5846 = vld [vmem:[%s807 + $0xd0] sm:$0xff]
      %v5847 = vld [vmem:[%s807 + $0xd8] sm:$0xff]
      %v5848 = vld [vmem:[%s807 + $0xe0] sm:$0xff]
      %v5849 = vld [vmem:[%s807 + $0xe8] sm:$0xff]
      %v5850 = vld [vmem:[%s807 + $0xf0] sm:$0xff]
      %v5851 = vld [vmem:[%s807 + $0xf8] sm:$0xff]
      %v5852 = vld [vmem:[%s807 + $0x100] sm:$0xff]
      %v5853 = vld [vmem:[%s807 + $0x108] sm:$0xff]
      %s5854 = scalar_lea.vmem %s3, 104
      %v5855 = vld [vmem:[%s5854] sm:$0xff]
      %v5857 = vsel %vm455, %v5822, 0
      %v5860 = vsel %vm455, %v5823, 0
      %v5863 = vsel %vm455, %v5824, 0
      %v5866 = vsel %vm455, %v5825, 0
      %v5869 = vsel %vm455, %v5826, 0
      %v5872 = vsel %vm455, %v5827, 0
      %v5875 = vsel %vm455, %v5828, 0
      %v5878 = vsel %vm455, %v5829, 0
      %v5881 = vsel %vm455, %v5830, 0
      %v5884 = vsel %vm455, %v5831, 0
      %v5887 = vsel %vm455, %v5832, 0
      %v5890 = vsel %vm455, %v5833, 0
      %v5893 = vsel %vm455, %v5834, 0
      %v5896 = vsel %vm455, %v5835, 0
      %v5899 = vsel %vm455, %v5836, 0
      %v5902 = vsel %vm455, %v5837, 0
      %v5905 = vsel %vm455, %v5838, 0
      %v5908 = vsel %vm455, %v5839, 0
      %v5911 = vsel %vm455, %v5840, 0
      %v5914 = vsel %vm455, %v5841, 0
      %v5917 = vsel %vm455, %v5842, 0
      %v5920 = vsel %vm455, %v5843, 0
      %v5923 = vsel %vm455, %v5844, 0
      %v5926 = vsel %vm455, %v5845, 0
      %v5929 = vsel %vm455, %v5846, 0
      %v5932 = vsel %vm455, %v5847, 0
      %v5935 = vsel %vm455, %v5848, 0
      %v5938 = vsel %vm455, %v5849, 0
      %v5941 = vsel %vm455, %v5850, 0
      %v5944 = vsel %vm455, %v5851, 0
      %v5947 = vsel %vm455, %v5852, 0
      %v5950 = vsel %vm455, %v5853, 0
      %5952 = vmatprep.subr.mxu0 0.0
      %5953 = vmatpush1.msra.mxu0 %v5855
      %5954 = vmatprep.subr.mxu0 0.0
      %5955 = vmatpush1.msra.mxu0 0.0
      %5956 = vmatprep.subr.mxu0 0.0
      %5957 = vmatpush1.msra.mxu0 0.0
      %5958 = vmatprep.subr.mxu0 0.0
      %5959 = vmatpush1.msra.mxu0 0.0
      %5960 = vmatprep.subr.mxu0 0.0
      %5961 = vmatpush1.msra.mxu0 0.0
      %5962 = vmatprep.subr.mxu0 0.0
      %5963 = vmatpush1.msra.mxu0 0.0
      %5964 = vmatprep.subr.mxu0 0.0
      %5965 = vmatpush1.msra.mxu0 0.0
      %5966 = vmatprep.subr.mxu0 0.0
      %5967 = vmatpush1.msra.mxu0 0.0
      %5968 = vmatprep.subr.mxu0 0.0
      %5969 = vmatpush1.msra.mxu0 0.0
      %5970 = vmatprep.subr.mxu0 0.0
      %5971 = vmatpush1.msra.mxu0 0.0
      %5972 = vmatprep.subr.mxu0 0.0
      %5973 = vmatpush1.msra.mxu0 0.0
      %5974 = vmatprep.subr.mxu0 0.0
      %5975 = vmatpush1.msra.mxu0 0.0
      %5976 = vmatprep.subr.mxu0 0.0
      %5977 = vmatpush1.msra.mxu0 0.0
      %5978 = vmatprep.subr.mxu0 0.0
      %5979 = vmatpush1.msra.mxu0 0.0
      %5980 = vmatprep.subr.mxu0 0.0
      %5981 = vmatpush1.msra.mxu0 0.0
      %5982 = vmatprep.subr.mxu0 0.0
      %5983 = vmatpush1.msra.mxu0 0.0
      %5984 = vmatprep.subr.mxu0 0.0
      %5985 = vmatpush1.msra.mxu0 0.0
      %5986 = vmatprep.subr.mxu0 0.0
      %5987 = vmatpush1.msra.mxu0 0.0
      %5988 = vmatprep.subr.mxu0 0.0
      %5989 = vmatpush1.msra.mxu0 0.0
      %5990 = vmatprep.subr.mxu0 0.0
      %5991 = vmatpush1.msra.mxu0 0.0
      %5992 = vmatprep.subr.mxu0 0.0
      %5993 = vmatpush1.msra.mxu0 0.0
      %5994 = vmatprep.subr.mxu0 0.0
      %5995 = vmatpush1.msra.mxu0 0.0
      %5996 = vmatprep.subr.mxu0 0.0
      %5997 = vmatpush1.msra.mxu0 0.0
      %5998 = vmatprep.subr.mxu0 0.0
      %5999 = vmatpush1.msra.mxu0 0.0
      %6000 = vmatprep.subr.mxu0 0.0
      %6001 = vmatpush1.msra.mxu0 0.0
      %6002 = vmatprep.subr.mxu0 0.0
      %6003 = vmatpush1.msra.mxu0 0.0
      %6004 = vmatprep.subr.mxu0 0.0
      %6005 = vmatpush1.msra.mxu0 0.0
      %6006 = vmatprep.subr.mxu0 0.0
      %6007 = vmatpush1.msra.mxu0 0.0
      %6008 = vmatprep.subr.mxu0 0.0
      %6009 = vmatpush1.msra.mxu0 0.0
      %6010 = vmatprep.subr.mxu0 0.0
      %6011 = vmatpush1.msra.mxu0 0.0
      %6012 = vmatprep.subr.mxu0 0.0
      %6013 = vmatpush1.msra.mxu0 0.0
      %6014 = vmatprep.subr.mxu0 0.0
      %6015 = vmatpush1.msra.mxu0 0.0
      %6016 = vmatprep.mubr.f32.mxu0 0.0
      %6017 = vmatmul.mubr.f32.gmra.mrb[0].mxu0 %v5857
      %v6018 = vpop.f32.mrb[0].mxu0
      %v6019 = vadd.f32 0.0, %v6018
      %v6020 = vpop.f32.mrb[0].mxu0
      %6021 = vmatprep.mubr.f32.mxu0 0.0
      %6022 = vmatmul.mubr.f32.gmra.mrb[0].mxu0 %v5860
      %v6023 = vpop.f32.mrb[0].mxu0
      %v6024 = vadd.f32 0.0, %v6023
      %v6025 = vpop.f32.mrb[0].mxu0
      %6026 = vmatprep.mubr.f32.mxu0 0.0
      %6027 = vmatmul.mubr.f32.gmra.mrb[0].mxu0 %v5863
      %v6028 = vpop.f32.mrb[0].mxu0
      %v6029 = vadd.f32 0.0, %v6028
      %v6030 = vpop.f32.mrb[0].mxu0
      %6031 = vmatprep.mubr.f32.mxu0 0.0
      %6032 = vmatmul.mubr.f32.gmra.mrb[0].mxu0 %v5866
      %v6033 = vpop.f32.mrb[0].mxu0
      %v6034 = vadd.f32 0.0, %v6033
      %v6035 = vpop.f32.mrb[0].mxu0
      %6036 = vmatprep.mubr.f32.mxu0 0.0
      %6037 = vmatmul.mubr.f32.gmra.mrb[0].mxu0 %v5869
      %v6038 = vpop.f32.mrb[0].mxu0
      %v6039 = vadd.f32 0.0, %v6038
      %v6040 = vpop.f32.mrb[0].mxu0
      %6041 = vmatprep.mubr.f32.mxu0 0.0
      %6042 = vmatmul.mubr.f32.gmra.mrb[0].mxu0 %v5872
      %v6043 = vpop.f32.mrb[0].mxu0
      %v6044 = vadd.f32 0.0, %v6043
      %v6045 = vpop.f32.mrb[0].mxu0
      %6046 = vmatprep.mubr.f32.mxu0 0.0
      %6047 = vmatmul.mubr.f32.gmra.mrb[0].mxu0 %v5875
      %v6048 = vpop.f32.mrb[0].mxu0
      %v6049 = vadd.f32 0.0, %v6048
      %v6050 = vpop.f32.mrb[0].mxu0
      %6051 = vmatprep.mubr.f32.mxu0 0.0
      %6052 = vmatmul.mubr.f32.gmra.mrb[0].mxu0 %v5878
      %v6053 = vpop.f32.mrb[0].mxu0
      %v6054 = vadd.f32 0.0, %v6053
      %v6055 = vpop.f32.mrb[0].mxu0
      %6056 = vmatprep.mubr.f32.mxu0 0.0
      %6057 = vmatmul.mubr.f32.gmra.mrb[0].mxu0 %v5881
      %v6058 = vpop.f32.mrb[0].mxu0
      %v6059 = vadd.f32 0.0, %v6058
      %v6060 = vpop.f32.mrb[0].mxu0
      %6061 = vmatprep.mubr.f32.mxu0 0.0
      %6062 = vmatmul.mubr.f32.gmra.mrb[0].mxu0 %v5884
      %v6063 = vpop.f32.mrb[0].mxu0
      %v6064 = vadd.f32 0.0, %v6063
      %v6065 = vpop.f32.mrb[0].mxu0
      %6066 = vmatprep.mubr.f32.mxu0 0.0
      %6067 = vmatmul.mubr.f32.gmra.mrb[0].mxu0 %v5887
      %v6068 = vpop.f32.mrb[0].mxu0
      %v6069 = vadd.f32 0.0, %v6068
      %v6070 = vpop.f32.mrb[0].mxu0
      %6071 = vmatprep.mubr.f32.mxu0 0.0
      %6072 = vmatmul.mubr.f32.gmra.mrb[0].mxu0 %v5890
      %v6073 = vpop.f32.mrb[0].mxu0
      %v6074 = vadd.f32 0.0, %v6073
      %v6075 = vpop.f32.mrb[0].mxu0
      %6076 = vmatprep.mubr.f32.mxu0 0.0
      %6077 = vmatmul.mubr.f32.gmra.mrb[0].mxu0 %v5893
      %v6078 = vpop.f32.mrb[0].mxu0
      %v6079 = vadd.f32 0.0, %v6078
      %v6080 = vpop.f32.mrb[0].mxu0
      %6081 = vmatprep.mubr.f32.mxu0 0.0
      %6082 = vmatmul.mubr.f32.gmra.mrb[0].mxu0 %v5896
      %v6083 = vpop.f32.mrb[0].mxu0
      %v6084 = vadd.f32 0.0, %v6083
      %v6085 = vpop.f32.mrb[0].mxu0
      %6086 = vmatprep.mubr.f32.mxu0 0.0
      %6087 = vmatmul.mubr.f32.gmra.mrb[0].mxu0 %v5899
      %v6088 = vpop.f32.mrb[0].mxu0
      %v6089 = vadd.f32 0.0, %v6088
      %v6090 = vpop.f32.mrb[0].mxu0
      %6091 = vmatprep.mubr.f32.mxu0 0.0
      %6092 = vmatmul.mubr.f32.gmra.mrb[0].mxu0 %v5902
      %v6093 = vpop.f32.mrb[0].mxu0
      %v6094 = vadd.f32 0.0, %v6093
      %v6095 = vpop.f32.mrb[0].mxu0
      %6096 = vmatprep.mubr.f32.mxu0 0.0
      %6097 = vmatmul.mubr.f32.gmra.mrb[0].mxu0 %v5905
      %v6098 = vpop.f32.mrb[0].mxu0
      %v6099 = vadd.f32 0.0, %v6098
      %v6100 = vpop.f32.mrb[0].mxu0
      %6101 = vmatprep.mubr.f32.mxu0 0.0
      %6102 = vmatmul.mubr.f32.gmra.mrb[0].mxu0 %v5908
      %v6103 = vpop.f32.mrb[0].mxu0
      %v6104 = vadd.f32 0.0, %v6103
      %v6105 = vpop.f32.mrb[0].mxu0
      %6106 = vmatprep.mubr.f32.mxu0 0.0
      %6107 = vmatmul.mubr.f32.gmra.mrb[0].mxu0 %v5911
      %v6108 = vpop.f32.mrb[0].mxu0
      %v6109 = vadd.f32 0.0, %v6108
      %v6110 = vpop.f32.mrb[0].mxu0
      %6111 = vmatprep.mubr.f32.mxu0 0.0
      %6112 = vmatmul.mubr.f32.gmra.mrb[0].mxu0 %v5914
      %v6113 = vpop.f32.mrb[0].mxu0
      %v6114 = vadd.f32 0.0, %v6113
      %v6115 = vpop.f32.mrb[0].mxu0
      %6116 = vmatprep.mubr.f32.mxu0 0.0
      %6117 = vmatmul.mubr.f32.gmra.mrb[0].mxu0 %v5917
      %v6118 = vpop.f32.mrb[0].mxu0
      %v6119 = vadd.f32 0.0, %v6118
      %v6120 = vpop.f32.mrb[0].mxu0
      %6121 = vmatprep.mubr.f32.mxu0 0.0
      %6122 = vmatmul.mubr.f32.gmra.mrb[0].mxu0 %v5920
      %v6123 = vpop.f32.mrb[0].mxu0
      %v6124 = vadd.f32 0.0, %v6123
      %v6125 = vpop.f32.mrb[0].mxu0
      %6126 = vmatprep.mubr.f32.mxu0 0.0
      %6127 = vmatmul.mubr.f32.gmra.mrb[0].mxu0 %v5923
      %v6128 = vpop.f32.mrb[0].mxu0
      %v6129 = vadd.f32 0.0, %v6128
      %v6130 = vpop.f32.mrb[0].mxu0
      %6131 = vmatprep.mubr.f32.mxu0 0.0
      %6132 = vmatmul.mubr.f32.gmra.mrb[0].mxu0 %v5926
      %v6133 = vpop.f32.mrb[0].mxu0
      %v6134 = vadd.f32 0.0, %v6133
      %v6135 = vpop.f32.mrb[0].mxu0
      %6136 = vmatprep.mubr.f32.mxu0 0.0
      %6137 = vmatmul.mubr.f32.gmra.mrb[0].mxu0 %v5929
      %v6138 = vpop.f32.mrb[0].mxu0
      %v6139 = vadd.f32 0.0, %v6138
      %v6140 = vpop.f32.mrb[0].mxu0
      %6141 = vmatprep.mubr.f32.mxu0 0.0
      %6142 = vmatmul.mubr.f32.gmra.mrb[0].mxu0 %v5932
      %v6143 = vpop.f32.mrb[0].mxu0
      %v6144 = vadd.f32 0.0, %v6143
      %v6145 = vpop.f32.mrb[0].mxu0
      %6146 = vmatprep.mubr.f32.mxu0 0.0
      %6147 = vmatmul.mubr.f32.gmra.mrb[0].mxu0 %v5935
      %v6148 = vpop.f32.mrb[0].mxu0
      %v6149 = vadd.f32 0.0, %v6148
      %v6150 = vpop.f32.mrb[0].mxu0
      %6151 = vmatprep.mubr.f32.mxu0 0.0
      %6152 = vmatmul.mubr.f32.gmra.mrb[0].mxu0 %v5938
      %v6153 = vpop.f32.mrb[0].mxu0
      %v6154 = vadd.f32 0.0, %v6153
      %v6155 = vpop.f32.mrb[0].mxu0
      %6156 = vmatprep.mubr.f32.mxu0 0.0
      %6157 = vmatmul.mubr.f32.gmra.mrb[0].mxu0 %v5941
      %v6158 = vpop.f32.mrb[0].mxu0
      %v6159 = vadd.f32 0.0, %v6158
      %v6160 = vpop.f32.mrb[0].mxu0
      %6161 = vmatprep.mubr.f32.mxu0 0.0
      %6162 = vmatmul.mubr.f32.gmra.mrb[0].mxu0 %v5944
      %v6163 = vpop.f32.mrb[0].mxu0
      %v6164 = vadd.f32 0.0, %v6163
      %v6165 = vpop.f32.mrb[0].mxu0
      %6166 = vmatprep.mubr.f32.mxu0 0.0
      %6167 = vmatmul.mubr.f32.gmra.mrb[0].mxu0 %v5947
      %v6168 = vpop.f32.mrb[0].mxu0
      %v6169 = vadd.f32 0.0, %v6168
      %v6170 = vpop.f32.mrb[0].mxu0
      %6171 = vmatprep.mubr.f32.mxu0 0.0
      %6172 = vmatmul.mubr.f32.gmra.mrb[0].mxu0 %v5950
      %v6173 = vpop.f32.mrb[0].mxu0
      %v6174 = vadd.f32 0.0, %v6173
      %v6175 = vpop.f32.mrb[0].mxu0
      %6176 = vdwg.mxu0
      %v6178 = vsel %vm455, %v5788, 0
      %v6181 = vsel %vm455, %v5789, 0
      %v6184 = vsel %vm455, %v5790, 0
      %v6187 = vsel %vm455, %v5791, 0
      %v6190 = vsel %vm455, %v5792, 0
      %v6193 = vsel %vm455, %v5793, 0
      %v6196 = vsel %vm455, %v5794, 0
      %v6199 = vsel %vm455, %v5795, 0
      %v6202 = vsel %vm455, %v5796, 0
      %v6205 = vsel %vm455, %v5797, 0
      %v6208 = vsel %vm455, %v5798, 0
      %v6211 = vsel %vm455, %v5799, 0
      %v6214 = vsel %vm455, %v5800, 0
      %v6217 = vsel %vm455, %v5801, 0
      %v6220 = vsel %vm455, %v5802, 0
      %v6223 = vsel %vm455, %v5803, 0
      %v6226 = vsel %vm455, %v5804, 0
      %v6229 = vsel %vm455, %v5805, 0
      %v6232 = vsel %vm455, %v5806, 0
      %v6235 = vsel %vm455, %v5807, 0
      %v6238 = vsel %vm455, %v5808, 0
      %v6241 = vsel %vm455, %v5809, 0
      %v6244 = vsel %vm455, %v5810, 0
      %v6247 = vsel %vm455, %v5811, 0
      %v6250 = vsel %vm455, %v5812, 0
      %v6253 = vsel %vm455, %v5813, 0
      %v6256 = vsel %vm455, %v5814, 0
      %v6259 = vsel %vm455, %v5815, 0
      %v6262 = vsel %vm455, %v5816, 0
      %v6265 = vsel %vm455, %v5817, 0
      %v6268 = vsel %vm455, %v5818, 0
      %v6271 = vsel %vm455, %v5819, 0
      %6273 = vmatprep.subr.mxu0 0.0
      %6274 = vmatpush1.msra.mxu0 %v5821
      %6275 = vmatprep.subr.mxu0 0.0
      %6276 = vmatpush1.msra.mxu0 0.0
      %6277 = vmatprep.subr.mxu0 0.0
      %6278 = vmatpush1.msra.mxu0 0.0
      %6279 = vmatprep.subr.mxu0 0.0
      %6280 = vmatpush1.msra.mxu0 0.0
      %6281 = vmatprep.subr.mxu0 0.0
      %6282 = vmatpush1.msra.mxu0 0.0
      %6283 = vmatprep.subr.mxu0 0.0
      %6284 = vmatpush1.msra.mxu0 0.0
      %6285 = vmatprep.subr.mxu0 0.0
      %6286 = vmatpush1.msra.mxu0 0.0
      %6287 = vmatprep.subr.mxu0 0.0
      %6288 = vmatpush1.msra.mxu0 0.0
      %6289 = vmatprep.subr.mxu0 0.0
      %6290 = vmatpush1.msra.mxu0 0.0
      %6291 = vmatprep.subr.mxu0 0.0
      %6292 = vmatpush1.msra.mxu0 0.0
      %6293 = vmatprep.subr.mxu0 0.0
      %6294 = vmatpush1.msra.mxu0 0.0
      %6295 = vmatprep.subr.mxu0 0.0
      %6296 = vmatpush1.msra.mxu0 0.0
      %6297 = vmatprep.subr.mxu0 0.0
      %6298 = vmatpush1.msra.mxu0 0.0
      %6299 = vmatprep.subr.mxu0 0.0
      %6300 = vmatpush1.msra.mxu0 0.0
      %6301 = vmatprep.subr.mxu0 0.0
      %6302 = vmatpush1.msra.mxu0 0.0
      %6303 = vmatprep.subr.mxu0 0.0
      %6304 = vmatpush1.msra.mxu0 0.0
      %6305 = vmatprep.subr.mxu0 0.0
      %6306 = vmatpush1.msra.mxu0 0.0
      %6307 = vmatprep.subr.mxu0 0.0
      %6308 = vmatpush1.msra.mxu0 0.0
      %6309 = vmatprep.subr.mxu0 0.0
      %6310 = vmatpush1.msra.mxu0 0.0
      %6311 = vmatprep.subr.mxu0 0.0
      %6312 = vmatpush1.msra.mxu0 0.0
      %6313 = vmatprep.subr.mxu0 0.0
      %6314 = vmatpush1.msra.mxu0 0.0
      %6315 = vmatprep.subr.mxu0 0.0
      %6316 = vmatpush1.msra.mxu0 0.0
      %6317 = vmatprep.subr.mxu0 0.0
      %6318 = vmatpush1.msra.mxu0 0.0
      %6319 = vmatprep.subr.mxu0 0.0
      %6320 = vmatpush1.msra.mxu0 0.0
      %6321 = vmatprep.subr.mxu0 0.0
      %6322 = vmatpush1.msra.mxu0 0.0
      %6323 = vmatprep.subr.mxu0 0.0
      %6324 = vmatpush1.msra.mxu0 0.0
      %6325 = vmatprep.subr.mxu0 0.0
      %6326 = vmatpush1.msra.mxu0 0.0
      %6327 = vmatprep.subr.mxu0 0.0
      %6328 = vmatpush1.msra.mxu0 0.0
      %6329 = vmatprep.subr.mxu0 0.0
      %6330 = vmatpush1.msra.mxu0 0.0
      %6331 = vmatprep.subr.mxu0 0.0
      %6332 = vmatpush1.msra.mxu0 0.0
      %6333 = vmatprep.subr.mxu0 0.0
      %6334 = vmatpush1.msra.mxu0 0.0
      %6335 = vmatprep.subr.mxu0 0.0
      %6336 = vmatpush1.msra.mxu0 0.0
      %6337 = vmatprep.mubr.f32.mxu0 0.0
      %6338 = vmatmul.mubr.f32.gmra.mrb[0].mxu0 %v6178
      %v6339 = vpop.f32.mrb[0].mxu0
      %v6340 = vadd.f32 %v6019, %v6339
      %v6341 = vpop.f32.mrb[0].mxu0
      %6342 = vmatprep.mubr.f32.mxu0 0.0
      %6343 = vmatmul.mubr.f32.gmra.mrb[0].mxu0 %v6181
      %v6344 = vpop.f32.mrb[0].mxu0
      %v6345 = vadd.f32 %v6024, %v6344
      %v6346 = vpop.f32.mrb[0].mxu0
      %6347 = vmatprep.mubr.f32.mxu0 0.0
      %6348 = vmatmul.mubr.f32.gmra.mrb[0].mxu0 %v6184
      %v6349 = vpop.f32.mrb[0].mxu0
      %v6350 = vadd.f32 %v6029, %v6349
      %v6351 = vpop.f32.mrb[0].mxu0
      %6352 = vmatprep.mubr.f32.mxu0 0.0
      %6353 = vmatmul.mubr.f32.gmra.mrb[0].mxu0 %v6187
      %v6354 = vpop.f32.mrb[0].mxu0
      %v6355 = vadd.f32 %v6034, %v6354
      %v6356 = vpop.f32.mrb[0].mxu0
      %6357 = vmatprep.mubr.f32.mxu0 0.0
      %6358 = vmatmul.mubr.f32.gmra.mrb[0].mxu0 %v6190
      %v6359 = vpop.f32.mrb[0].mxu0
      %v6360 = vadd.f32 %v6039, %v6359
      %v6361 = vpop.f32.mrb[0].mxu0
      %6362 = vmatprep.mubr.f32.mxu0 0.0
      %6363 = vmatmul.mubr.f32.gmra.mrb[0].mxu0 %v6193
      %v6364 = vpop.f32.mrb[0].mxu0
      %v6365 = vadd.f32 %v6044, %v6364
      %v6366 = vpop.f32.mrb[0].mxu0
      %6367 = vmatprep.mubr.f32.mxu0 0.0
      %6368 = vmatmul.mubr.f32.gmra.mrb[0].mxu0 %v6196
      %v6369 = vpop.f32.mrb[0].mxu0
      %v6370 = vadd.f32 %v6049, %v6369
      %v6371 = vpop.f32.mrb[0].mxu0
      %6372 = vmatprep.mubr.f32.mxu0 0.0
      %6373 = vmatmul.mubr.f32.gmra.mrb[0].mxu0 %v6199
      %v6374 = vpop.f32.mrb[0].mxu0
      %v6375 = vadd.f32 %v6054, %v6374
      %v6376 = vpop.f32.mrb[0].mxu0
      %6377 = vmatprep.mubr.f32.mxu0 0.0
      %6378 = vmatmul.mubr.f32.gmra.mrb[0].mxu0 %v6202
      %v6379 = vpop.f32.mrb[0].mxu0
      %v6380 = vadd.f32 %v6059, %v6379
      %v6381 = vpop.f32.mrb[0].mxu0
      %6382 = vmatprep.mubr.f32.mxu0 0.0
      %6383 = vmatmul.mubr.f32.gmra.mrb[0].mxu0 %v6205
      %v6384 = vpop.f32.mrb[0].mxu0
      %v6385 = vadd.f32 %v6064, %v6384
      %v6386 = vpop.f32.mrb[0].mxu0
      %6387 = vmatprep.mubr.f32.mxu0 0.0
      %6388 = vmatmul.mubr.f32.gmra.mrb[0].mxu0 %v6208
      %v6389 = vpop.f32.mrb[0].mxu0
      %v6390 = vadd.f32 %v6069, %v6389
      %v6391 = vpop.f32.mrb[0].mxu0
      %6392 = vmatprep.mubr.f32.mxu0 0.0
      %6393 = vmatmul.mubr.f32.gmra.mrb[0].mxu0 %v6211
      %v6394 = vpop.f32.mrb[0].mxu0
      %v6395 = vadd.f32 %v6074, %v6394
      %v6396 = vpop.f32.mrb[0].mxu0
      %6397 = vmatprep.mubr.f32.mxu0 0.0
      %6398 = vmatmul.mubr.f32.gmra.mrb[0].mxu0 %v6214
      %v6399 = vpop.f32.mrb[0].mxu0
      %v6400 = vadd.f32 %v6079, %v6399
      %v6401 = vpop.f32.mrb[0].mxu0
      %6402 = vmatprep.mubr.f32.mxu0 0.0
      %6403 = vmatmul.mubr.f32.gmra.mrb[0].mxu0 %v6217
      %v6404 = vpop.f32.mrb[0].mxu0
      %v6405 = vadd.f32 %v6084, %v6404
      %v6406 = vpop.f32.mrb[0].mxu0
      %6407 = vmatprep.mubr.f32.mxu0 0.0
      %6408 = vmatmul.mubr.f32.gmra.mrb[0].mxu0 %v6220
      %v6409 = vpop.f32.mrb[0].mxu0
      %v6410 = vadd.f32 %v6089, %v6409
      %v6411 = vpop.f32.mrb[0].mxu0
      %6412 = vmatprep.mubr.f32.mxu0 0.0
      %6413 = vmatmul.mubr.f32.gmra.mrb[0].mxu0 %v6223
      %v6414 = vpop.f32.mrb[0].mxu0
      %v6415 = vadd.f32 %v6094, %v6414
      %v6416 = vpop.f32.mrb[0].mxu0
      %6417 = vmatprep.mubr.f32.mxu0 0.0
      %6418 = vmatmul.mubr.f32.gmra.mrb[0].mxu0 %v6226
      %v6419 = vpop.f32.mrb[0].mxu0
      %v6420 = vadd.f32 %v6099, %v6419
      %v6421 = vpop.f32.mrb[0].mxu0
      %6422 = vmatprep.mubr.f32.mxu0 0.0
      %6423 = vmatmul.mubr.f32.gmra.mrb[0].mxu0 %v6229
      %v6424 = vpop.f32.mrb[0].mxu0
      %v6425 = vadd.f32 %v6104, %v6424
      %v6426 = vpop.f32.mrb[0].mxu0
      %6427 = vmatprep.mubr.f32.mxu0 0.0
      %6428 = vmatmul.mubr.f32.gmra.mrb[0].mxu0 %v6232
      %v6429 = vpop.f32.mrb[0].mxu0
      %v6430 = vadd.f32 %v6109, %v6429
      %v6431 = vpop.f32.mrb[0].mxu0
      %6432 = vmatprep.mubr.f32.mxu0 0.0
      %6433 = vmatmul.mubr.f32.gmra.mrb[0].mxu0 %v6235
      %v6434 = vpop.f32.mrb[0].mxu0
      %v6435 = vadd.f32 %v6114, %v6434
      %v6436 = vpop.f32.mrb[0].mxu0
      %6437 = vmatprep.mubr.f32.mxu0 0.0
      %6438 = vmatmul.mubr.f32.gmra.mrb[0].mxu0 %v6238
      %v6439 = vpop.f32.mrb[0].mxu0
      %v6440 = vadd.f32 %v6119, %v6439
      %v6441 = vpop.f32.mrb[0].mxu0
      %6442 = vmatprep.mubr.f32.mxu0 0.0
      %6443 = vmatmul.mubr.f32.gmra.mrb[0].mxu0 %v6241
      %v6444 = vpop.f32.mrb[0].mxu0
      %v6445 = vadd.f32 %v6124, %v6444
      %v6446 = vpop.f32.mrb[0].mxu0
      %6447 = vmatprep.mubr.f32.mxu0 0.0
      %6448 = vmatmul.mubr.f32.gmra.mrb[0].mxu0 %v6244
      %v6449 = vpop.f32.mrb[0].mxu0
      %v6450 = vadd.f32 %v6129, %v6449
      %v6451 = vpop.f32.mrb[0].mxu0
      %6452 = vmatprep.mubr.f32.mxu0 0.0
      %6453 = vmatmul.mubr.f32.gmra.mrb[0].mxu0 %v6247
      %v6454 = vpop.f32.mrb[0].mxu0
      %v6455 = vadd.f32 %v6134, %v6454
      %v6456 = vpop.f32.mrb[0].mxu0
      %6457 = vmatprep.mubr.f32.mxu0 0.0
      %6458 = vmatmul.mubr.f32.gmra.mrb[0].mxu0 %v6250
      %v6459 = vpop.f32.mrb[0].mxu0
      %v6460 = vadd.f32 %v6139, %v6459
      %v6461 = vpop.f32.mrb[0].mxu0
      %6462 = vmatprep.mubr.f32.mxu0 0.0
      %6463 = vmatmul.mubr.f32.gmra.mrb[0].mxu0 %v6253
      %v6464 = vpop.f32.mrb[0].mxu0
      %v6465 = vadd.f32 %v6144, %v6464
      %v6466 = vpop.f32.mrb[0].mxu0
      %6467 = vmatprep.mubr.f32.mxu0 0.0
      %6468 = vmatmul.mubr.f32.gmra.mrb[0].mxu0 %v6256
      %v6469 = vpop.f32.mrb[0].mxu0
      %v6470 = vadd.f32 %v6149, %v6469
      %v6471 = vpop.f32.mrb[0].mxu0
      %6472 = vmatprep.mubr.f32.mxu0 0.0
      %6473 = vmatmul.mubr.f32.gmra.mrb[0].mxu0 %v6259
      %v6474 = vpop.f32.mrb[0].mxu0
      %v6475 = vadd.f32 %v6154, %v6474
      %v6476 = vpop.f32.mrb[0].mxu0
      %6477 = vmatprep.mubr.f32.mxu0 0.0
      %6478 = vmatmul.mubr.f32.gmra.mrb[0].mxu0 %v6262
      %v6479 = vpop.f32.mrb[0].mxu0
      %v6480 = vadd.f32 %v6159, %v6479
      %v6481 = vpop.f32.mrb[0].mxu0
      %6482 = vmatprep.mubr.f32.mxu0 0.0
      %6483 = vmatmul.mubr.f32.gmra.mrb[0].mxu0 %v6265
      %v6484 = vpop.f32.mrb[0].mxu0
      %v6485 = vadd.f32 %v6164, %v6484
      %v6486 = vpop.f32.mrb[0].mxu0
      %6487 = vmatprep.mubr.f32.mxu0 0.0
      %6488 = vmatmul.mubr.f32.gmra.mrb[0].mxu0 %v6268
      %v6489 = vpop.f32.mrb[0].mxu0
      %v6490 = vadd.f32 %v6169, %v6489
      %v6491 = vpop.f32.mrb[0].mxu0
      %6492 = vmatprep.mubr.f32.mxu0 0.0
      %6493 = vmatmul.mubr.f32.gmra.mrb[0].mxu0 %v6271
      %v6494 = vpop.f32.mrb[0].mxu0
      %v6495 = vadd.f32 %v6174, %v6494
      %v6496 = vpop.f32.mrb[0].mxu0
      %6497 = vdwg.mxu0
      %v6498 = vld [vmem:[%s653 + $0x20] sm:$0xff]
      %v6499 = vld [vmem:[%s653 + $0x28] sm:$0xff]
      %v6500 = vld [vmem:[%s653 + $0x30] sm:$0xff]
      %v6501 = vld [vmem:[%s653 + $0x38] sm:$0xff]
      %v6502 = vld [vmem:[%s653 + $0x40] sm:$0xff]
      %v6503 = vld [vmem:[%s653 + $0x48] sm:$0xff]
      %v6504 = vld [vmem:[%s653 + $0x50] sm:$0xff]
      %v6505 = vld [vmem:[%s653 + $0x58] sm:$0xff]
      %v6506 = vld [vmem:[%s653 + $0x60] sm:$0xff]
      %v6507 = vld [vmem:[%s653 + $0x68] sm:$0xff]
      %v6508 = vld [vmem:[%s653 + $0x70] sm:$0xff]
      %v6509 = vld [vmem:[%s653 + $0x78] sm:$0xff]
      %v6510 = vld [vmem:[%s653 + $0x80] sm:$0xff]
      %v6511 = vld [vmem:[%s653 + $0x88] sm:$0xff]
      %v6512 = vld [vmem:[%s653 + $0x90] sm:$0xff]
      %v6513 = vld [vmem:[%s653 + $0x98] sm:$0xff]
      %v6514 = vld [vmem:[%s653 + $0xa0] sm:$0xff]
      %v6515 = vld [vmem:[%s653 + $0xa8] sm:$0xff]
      %v6516 = vld [vmem:[%s653 + $0xb0] sm:$0xff]
      %v6517 = vld [vmem:[%s653 + $0xb8] sm:$0xff]
      %v6518 = vld [vmem:[%s653 + $0xc0] sm:$0xff]
      %v6519 = vld [vmem:[%s653 + $0xc8] sm:$0xff]
      %v6520 = vld [vmem:[%s653 + $0xd0] sm:$0xff]
      %v6521 = vld [vmem:[%s653 + $0xd8] sm:$0xff]
      %v6522 = vld [vmem:[%s653 + $0xe0] sm:$0xff]
      %v6523 = vld [vmem:[%s653 + $0xe8] sm:$0xff]
      %v6524 = vld [vmem:[%s653 + $0xf0] sm:$0xff]
      %v6525 = vld [vmem:[%s653 + $0xf8] sm:$0xff]
      %v6526 = vld [vmem:[%s653 + $0x100] sm:$0xff]
      %v6527 = vld [vmem:[%s653 + $0x108] sm:$0xff]
      %v6528 = vld [vmem:[%s653 + $0x110] sm:$0xff]
      %v6529 = vld [vmem:[%s653 + $0x118] sm:$0xff]
      %s6530 = scalar_lea.vmem %s3, 112
      %v6531 = vld [vmem:[%s6530] sm:$0xff]
      %v6533 = vsel %vm455, %v6498, 0
      %v6536 = vsel %vm455, %v6499, 0
      %v6539 = vsel %vm455, %v6500, 0
      %v6542 = vsel %vm455, %v6501, 0
      %v6545 = vsel %vm455, %v6502, 0
      %v6548 = vsel %vm455, %v6503, 0
      %v6551 = vsel %vm455, %v6504, 0
      %v6554 = vsel %vm455, %v6505, 0
      %v6557 = vsel %vm455, %v6506, 0
      %v6560 = vsel %vm455, %v6507, 0
      %v6563 = vsel %vm455, %v6508, 0
      %v6566 = vsel %vm455, %v6509, 0
      %v6569 = vsel %vm455, %v6510, 0
      %v6572 = vsel %vm455, %v6511, 0
      %v6575 = vsel %vm455, %v6512, 0
      %v6578 = vsel %vm455, %v6513, 0
      %v6581 = vsel %vm455, %v6514, 0
      %v6584 = vsel %vm455, %v6515, 0
      %v6587 = vsel %vm455, %v6516, 0
      %v6590 = vsel %vm455, %v6517, 0
      %v6593 = vsel %vm455, %v6518, 0
      %v6596 = vsel %vm455, %v6519, 0
      %v6599 = vsel %vm455, %v6520, 0
      %v6602 = vsel %vm455, %v6521, 0
      %v6605 = vsel %vm455, %v6522, 0
      %v6608 = vsel %vm455, %v6523, 0
      %v6611 = vsel %vm455, %v6524, 0
      %v6614 = vsel %vm455, %v6525, 0
      %v6617 = vsel %vm455, %v6526, 0
      %v6620 = vsel %vm455, %v6527, 0
      %v6623 = vsel %vm455, %v6528, 0
      %v6626 = vsel %vm455, %v6529, 0
      %6628 = vmatprep.subr.mxu0 0.0
      %6629 = vmatpush1.msra.mxu0 %v6531
      %6630 = vmatprep.subr.mxu0 0.0
      %6631 = vmatpush1.msra.mxu0 0.0
      %6632 = vmatprep.subr.mxu0 0.0
      %6633 = vmatpush1.msra.mxu0 0.0
      %6634 = vmatprep.subr.mxu0 0.0
      %6635 = vmatpush1.msra.mxu0 0.0
      %6636 = vmatprep.subr.mxu0 0.0
      %6637 = vmatpush1.msra.mxu0 0.0
      %6638 = vmatprep.subr.mxu0 0.0
      %6639 = vmatpush1.msra.mxu0 0.0
      %6640 = vmatprep.subr.mxu0 0.0
      %6641 = vmatpush1.msra.mxu0 0.0
      %6642 = vmatprep.subr.mxu0 0.0
      %6643 = vmatpush1.msra.mxu0 0.0
      %6644 = vmatprep.subr.mxu0 0.0
      %6645 = vmatpush1.msra.mxu0 0.0
      %6646 = vmatprep.subr.mxu0 0.0
      %6647 = vmatpush1.msra.mxu0 0.0
      %6648 = vmatprep.subr.mxu0 0.0
      %6649 = vmatpush1.msra.mxu0 0.0
      %6650 = vmatprep.subr.mxu0 0.0
      %6651 = vmatpush1.msra.mxu0 0.0
      %6652 = vmatprep.subr.mxu0 0.0
      %6653 = vmatpush1.msra.mxu0 0.0
      %6654 = vmatprep.subr.mxu0 0.0
      %6655 = vmatpush1.msra.mxu0 0.0
      %6656 = vmatprep.subr.mxu0 0.0
      %6657 = vmatpush1.msra.mxu0 0.0
      %6658 = vmatprep.subr.mxu0 0.0
      %6659 = vmatpush1.msra.mxu0 0.0
      %6660 = vmatprep.subr.mxu0 0.0
      %6661 = vmatpush1.msra.mxu0 0.0
      %6662 = vmatprep.subr.mxu0 0.0
      %6663 = vmatpush1.msra.mxu0 0.0
      %6664 = vmatprep.subr.mxu0 0.0
      %6665 = vmatpush1.msra.mxu0 0.0
      %6666 = vmatprep.subr.mxu0 0.0
      %6667 = vmatpush1.msra.mxu0 0.0
      %6668 = vmatprep.subr.mxu0 0.0
      %6669 = vmatpush1.msra.mxu0 0.0
      %6670 = vmatprep.subr.mxu0 0.0
      %6671 = vmatpush1.msra.mxu0 0.0
      %6672 = vmatprep.subr.mxu0 0.0
      %6673 = vmatpush1.msra.mxu0 0.0
      %6674 = vmatprep.subr.mxu0 0.0
      %6675 = vmatpush1.msra.mxu0 0.0
      %6676 = vmatprep.subr.mxu0 0.0
      %6677 = vmatpush1.msra.mxu0 0.0
      %6678 = vmatprep.subr.mxu0 0.0
      %6679 = vmatpush1.msra.mxu0 0.0
      %6680 = vmatprep.subr.mxu0 0.0
      %6681 = vmatpush1.msra.mxu0 0.0
      %6682 = vmatprep.subr.mxu0 0.0
      %6683 = vmatpush1.msra.mxu0 0.0
      %6684 = vmatprep.subr.mxu0 0.0
      %6685 = vmatpush1.msra.mxu0 0.0
      %6686 = vmatprep.subr.mxu0 0.0
      %6687 = vmatpush1.msra.mxu0 0.0
      %6688 = vmatprep.subr.mxu0 0.0
      %6689 = vmatpush1.msra.mxu0 0.0
      %6690 = vmatprep.subr.mxu0 0.0
      %6691 = vmatpush1.msra.mxu0 0.0
      %6692 = vmatprep.mubr.f32.mxu0 0.0
      %6693 = vmatmul.mubr.f32.gmra.mrb[0].mxu0 %v6533
      %v6694 = vpop.f32.mrb[0].mxu0
      %v6695 = vadd.f32 0.0, %v6694
      %v6696 = vpop.f32.mrb[0].mxu0
      %6697 = vmatprep.mubr.f32.mxu0 0.0
      %6698 = vmatmul.mubr.f32.gmra.mrb[0].mxu0 %v6536
      %v6699 = vpop.f32.mrb[0].mxu0
      %v6700 = vadd.f32 0.0, %v6699
      %v6701 = vpop.f32.mrb[0].mxu0
      %6702 = vmatprep.mubr.f32.mxu0 0.0
      %6703 = vmatmul.mubr.f32.gmra.mrb[0].mxu0 %v6539
      %v6704 = vpop.f32.mrb[0].mxu0
      %v6705 = vadd.f32 0.0, %v6704
      %v6706 = vpop.f32.mrb[0].mxu0
      %6707 = vmatprep.mubr.f32.mxu0 0.0
      %6708 = vmatmul.mubr.f32.gmra.mrb[0].mxu0 %v6542
      %v6709 = vpop.f32.mrb[0].mxu0
      %v6710 = vadd.f32 0.0, %v6709
      %v6711 = vpop.f32.mrb[0].mxu0
      %6712 = vmatprep.mubr.f32.mxu0 0.0
      %6713 = vmatmul.mubr.f32.gmra.mrb[0].mxu0 %v6545
      %v6714 = vpop.f32.mrb[0].mxu0
      %v6715 = vadd.f32 0.0, %v6714
      %v6716 = vpop.f32.mrb[0].mxu0
      %6717 = vmatprep.mubr.f32.mxu0 0.0
      %6718 = vmatmul.mubr.f32.gmra.mrb[0].mxu0 %v6548
      %v6719 = vpop.f32.mrb[0].mxu0
      %v6720 = vadd.f32 0.0, %v6719
      %v6721 = vpop.f32.mrb[0].mxu0
      %6722 = vmatprep.mubr.f32.mxu0 0.0
      %6723 = vmatmul.mubr.f32.gmra.mrb[0].mxu0 %v6551
      %v6724 = vpop.f32.mrb[0].mxu0
      %v6725 = vadd.f32 0.0, %v6724
      %v6726 = vpop.f32.mrb[0].mxu0
      %6727 = vmatprep.mubr.f32.mxu0 0.0
      %6728 = vmatmul.mubr.f32.gmra.mrb[0].mxu0 %v6554
      %v6729 = vpop.f32.mrb[0].mxu0
      %v6730 = vadd.f32 0.0, %v6729
      %v6731 = vpop.f32.mrb[0].mxu0
      %6732 = vmatprep.mubr.f32.mxu0 0.0
      %6733 = vmatmul.mubr.f32.gmra.mrb[0].mxu0 %v6557
      %v6734 = vpop.f32.mrb[0].mxu0
      %v6735 = vadd.f32 0.0, %v6734
      %v6736 = vpop.f32.mrb[0].mxu0
      %6737 = vmatprep.mubr.f32.mxu0 0.0
      %6738 = vmatmul.mubr.f32.gmra.mrb[0].mxu0 %v6560
      %v6739 = vpop.f32.mrb[0].mxu0
      %v6740 = vadd.f32 0.0, %v6739
      %v6741 = vpop.f32.mrb[0].mxu0
      %6742 = vmatprep.mubr.f32.mxu0 0.0
      %6743 = vmatmul.mubr.f32.gmra.mrb[0].mxu0 %v6563
      %v6744 = vpop.f32.mrb[0].mxu0
      %v6745 = vadd.f32 0.0, %v6744
      %v6746 = vpop.f32.mrb[0].mxu0
      %6747 = vmatprep.mubr.f32.mxu0 0.0
      %6748 = vmatmul.mubr.f32.gmra.mrb[0].mxu0 %v6566
      %v6749 = vpop.f32.mrb[0].mxu0
      %v6750 = vadd.f32 0.0, %v6749
      %v6751 = vpop.f32.mrb[0].mxu0
      %6752 = vmatprep.mubr.f32.mxu0 0.0
      %6753 = vmatmul.mubr.f32.gmra.mrb[0].mxu0 %v6569
      %v6754 = vpop.f32.mrb[0].mxu0
      %v6755 = vadd.f32 0.0, %v6754
      %v6756 = vpop.f32.mrb[0].mxu0
      %6757 = vmatprep.mubr.f32.mxu0 0.0
      %6758 = vmatmul.mubr.f32.gmra.mrb[0].mxu0 %v6572
      %v6759 = vpop.f32.mrb[0].mxu0
      %v6760 = vadd.f32 0.0, %v6759
      %v6761 = vpop.f32.mrb[0].mxu0
      %6762 = vmatprep.mubr.f32.mxu0 0.0
      %6763 = vmatmul.mubr.f32.gmra.mrb[0].mxu0 %v6575
      %v6764 = vpop.f32.mrb[0].mxu0
      %v6765 = vadd.f32 0.0, %v6764
      %v6766 = vpop.f32.mrb[0].mxu0
      %6767 = vmatprep.mubr.f32.mxu0 0.0
      %6768 = vmatmul.mubr.f32.gmra.mrb[0].mxu0 %v6578
      %v6769 = vpop.f32.mrb[0].mxu0
      %v6770 = vadd.f32 0.0, %v6769
      %v6771 = vpop.f32.mrb[0].mxu0
      %6772 = vmatprep.mubr.f32.mxu0 0.0
      %6773 = vmatmul.mubr.f32.gmra.mrb[0].mxu0 %v6581
      %v6774 = vpop.f32.mrb[0].mxu0
      %v6775 = vadd.f32 0.0, %v6774
      %v6776 = vpop.f32.mrb[0].mxu0
      %6777 = vmatprep.mubr.f32.mxu0 0.0
      %6778 = vmatmul.mubr.f32.gmra.mrb[0].mxu0 %v6584
      %v6779 = vpop.f32.mrb[0].mxu0
      %v6780 = vadd.f32 0.0, %v6779
      %v6781 = vpop.f32.mrb[0].mxu0
      %6782 = vmatprep.mubr.f32.mxu0 0.0
      %6783 = vmatmul.mubr.f32.gmra.mrb[0].mxu0 %v6587
      %v6784 = vpop.f32.mrb[0].mxu0
      %v6785 = vadd.f32 0.0, %v6784
      %v6786 = vpop.f32.mrb[0].mxu0
      %6787 = vmatprep.mubr.f32.mxu0 0.0
      %6788 = vmatmul.mubr.f32.gmra.mrb[0].mxu0 %v6590
      %v6789 = vpop.f32.mrb[0].mxu0
      %v6790 = vadd.f32 0.0, %v6789
      %v6791 = vpop.f32.mrb[0].mxu0
      %6792 = vmatprep.mubr.f32.mxu0 0.0
      %6793 = vmatmul.mubr.f32.gmra.mrb[0].mxu0 %v6593
      %v6794 = vpop.f32.mrb[0].mxu0
      %v6795 = vadd.f32 0.0, %v6794
      %v6796 = vpop.f32.mrb[0].mxu0
      %6797 = vmatprep.mubr.f32.mxu0 0.0
      %6798 = vmatmul.mubr.f32.gmra.mrb[0].mxu0 %v6596
      %v6799 = vpop.f32.mrb[0].mxu0
      %v6800 = vadd.f32 0.0, %v6799
      %v6801 = vpop.f32.mrb[0].mxu0
      %6802 = vmatprep.mubr.f32.mxu0 0.0
      %6803 = vmatmul.mubr.f32.gmra.mrb[0].mxu0 %v6599
      %v6804 = vpop.f32.mrb[0].mxu0
      %v6805 = vadd.f32 0.0, %v6804
      %v6806 = vpop.f32.mrb[0].mxu0
      %6807 = vmatprep.mubr.f32.mxu0 0.0
      %6808 = vmatmul.mubr.f32.gmra.mrb[0].mxu0 %v6602
      %v6809 = vpop.f32.mrb[0].mxu0
      %v6810 = vadd.f32 0.0, %v6809
      %v6811 = vpop.f32.mrb[0].mxu0
      %6812 = vmatprep.mubr.f32.mxu0 0.0
      %6813 = vmatmul.mubr.f32.gmra.mrb[0].mxu0 %v6605
      %v6814 = vpop.f32.mrb[0].mxu0
      %v6815 = vadd.f32 0.0, %v6814
      %v6816 = vpop.f32.mrb[0].mxu0
      %6817 = vmatprep.mubr.f32.mxu0 0.0
      %6818 = vmatmul.mubr.f32.gmra.mrb[0].mxu0 %v6608
      %v6819 = vpop.f32.mrb[0].mxu0
      %v6820 = vadd.f32 0.0, %v6819
      %v6821 = vpop.f32.mrb[0].mxu0
      %6822 = vmatprep.mubr.f32.mxu0 0.0
      %6823 = vmatmul.mubr.f32.gmra.mrb[0].mxu0 %v6611
      %v6824 = vpop.f32.mrb[0].mxu0
      %v6825 = vadd.f32 0.0, %v6824
      %v6826 = vpop.f32.mrb[0].mxu0
      %6827 = vmatprep.mubr.f32.mxu0 0.0
      %6828 = vmatmul.mubr.f32.gmra.mrb[0].mxu0 %v6614
      %v6829 = vpop.f32.mrb[0].mxu0
      %v6830 = vadd.f32 0.0, %v6829
      %v6831 = vpop.f32.mrb[0].mxu0
      %6832 = vmatprep.mubr.f32.mxu0 0.0
      %6833 = vmatmul.mubr.f32.gmra.mrb[0].mxu0 %v6617
      %v6834 = vpop.f32.mrb[0].mxu0
      %v6835 = vadd.f32 0.0, %v6834
      %v6836 = vpop.f32.mrb[0].mxu0
      %6837 = vmatprep.mubr.f32.mxu0 0.0
      %6838 = vmatmul.mubr.f32.gmra.mrb[0].mxu0 %v6620
      %v6839 = vpop.f32.mrb[0].mxu0
      %v6840 = vadd.f32 0.0, %v6839
      %v6841 = vpop.f32.mrb[0].mxu0
      %6842 = vmatprep.mubr.f32.mxu0 0.0
      %6843 = vmatmul.mubr.f32.gmra.mrb[0].mxu0 %v6623
      %v6844 = vpop.f32.mrb[0].mxu0
      %v6845 = vadd.f32 0.0, %v6844
      %v6846 = vpop.f32.mrb[0].mxu0
      %6847 = vmatprep.mubr.f32.mxu0 0.0
      %6848 = vmatmul.mubr.f32.gmra.mrb[0].mxu0 %v6626
      %v6849 = vpop.f32.mrb[0].mxu0
      %v6850 = vadd.f32 0.0, %v6849
      %v6851 = vpop.f32.mrb[0].mxu0
      %6852 = vdwg.mxu0
      %v6853 = vadd.f32 %v6340, %v6695
      %v6854 = vadd.f32 %v6345, %v6700
      %v6855 = vadd.f32 %v6350, %v6705
      %v6856 = vadd.f32 %v6355, %v6710
      %v6857 = vadd.f32 %v6360, %v6715
      %v6858 = vadd.f32 %v6365, %v6720
      %v6859 = vadd.f32 %v6370, %v6725
      %v6860 = vadd.f32 %v6375, %v6730
      %v6861 = vadd.f32 %v6380, %v6735
      %v6862 = vadd.f32 %v6385, %v6740
      %v6863 = vadd.f32 %v6390, %v6745
      %v6864 = vadd.f32 %v6395, %v6750
      %v6865 = vadd.f32 %v6400, %v6755
      %v6866 = vadd.f32 %v6405, %v6760
      %v6867 = vadd.f32 %v6410, %v6765
      %v6868 = vadd.f32 %v6415, %v6770
      %v6869 = vadd.f32 %v6420, %v6775
      %v6870 = vadd.f32 %v6425, %v6780
      %v6871 = vadd.f32 %v6430, %v6785
      %v6872 = vadd.f32 %v6435, %v6790
      %v6873 = vadd.f32 %v6440, %v6795
      %v6874 = vadd.f32 %v6445, %v6800
      %v6875 = vadd.f32 %v6450, %v6805
      %v6876 = vadd.f32 %v6455, %v6810
      %v6877 = vadd.f32 %v6460, %v6815
      %v6878 = vadd.f32 %v6465, %v6820
      %v6879 = vadd.f32 %v6470, %v6825
      %v6880 = vadd.f32 %v6475, %v6830
      %v6881 = vadd.f32 %v6480, %v6835
      %v6882 = vadd.f32 %v6485, %v6840
      %v6883 = vadd.f32 %v6490, %v6845
      %v6884 = vadd.f32 %v6495, %v6850
      %v6885 = vld [vmem:[%s807 + $0x20] sm:$0xff]
      %v6886 = vld [vmem:[%s807 + $0x28] sm:$0xff]
      %v6887 = vld [vmem:[%s807 + $0x30] sm:$0xff]
      %v6888 = vld [vmem:[%s807 + $0x38] sm:$0xff]
      %v6889 = vld [vmem:[%s807 + $0x40] sm:$0xff]
      %v6890 = vld [vmem:[%s807 + $0x48] sm:$0xff]
      %v6891 = vld [vmem:[%s807 + $0x50] sm:$0xff]
      %v6892 = vld [vmem:[%s807 + $0x58] sm:$0xff]
      %v6893 = vld [vmem:[%s807 + $0x60] sm:$0xff]
      %v6894 = vld [vmem:[%s807 + $0x68] sm:$0xff]
      %v6895 = vld [vmem:[%s807 + $0x70] sm:$0xff]
      %v6896 = vld [vmem:[%s807 + $0x78] sm:$0xff]
      %v6897 = vld [vmem:[%s807 + $0x80] sm:$0xff]
      %v6898 = vld [vmem:[%s807 + $0x88] sm:$0xff]
      %v6899 = vld [vmem:[%s807 + $0x90] sm:$0xff]
      %v6900 = vld [vmem:[%s807 + $0x98] sm:$0xff]
      %v6901 = vld [vmem:[%s807 + $0xa0] sm:$0xff]
      %v6902 = vld [vmem:[%s807 + $0xa8] sm:$0xff]
      %v6903 = vld [vmem:[%s807 + $0xb0] sm:$0xff]
      %v6904 = vld [vmem:[%s807 + $0xb8] sm:$0xff]
      %v6905 = vld [vmem:[%s807 + $0xc0] sm:$0xff]
      %v6906 = vld [vmem:[%s807 + $0xc8] sm:$0xff]
      %v6907 = vld [vmem:[%s807 + $0xd0] sm:$0xff]
      %v6908 = vld [vmem:[%s807 + $0xd8] sm:$0xff]
      %v6909 = vld [vmem:[%s807 + $0xe0] sm:$0xff]
      %v6910 = vld [vmem:[%s807 + $0xe8] sm:$0xff]
      %v6911 = vld [vmem:[%s807 + $0xf0] sm:$0xff]
      %v6912 = vld [vmem:[%s807 + $0xf8] sm:$0xff]
      %v6913 = vld [vmem:[%s807 + $0x100] sm:$0xff]
      %v6914 = vld [vmem:[%s807 + $0x108] sm:$0xff]
      %v6915 = vld [vmem:[%s807 + $0x110] sm:$0xff]
      %v6916 = vld [vmem:[%s807 + $0x118] sm:$0xff]
      %s6917 = scalar_lea.vmem %s3, 120
      %v6918 = vld [vmem:[%s6917] sm:$0xff]
      %v6920 = vsel %vm455, %v6885, 0
      %v6923 = vsel %vm455, %v6886, 0
      %v6926 = vsel %vm455, %v6887, 0
      %v6929 = vsel %vm455, %v6888, 0
      %v6932 = vsel %vm455, %v6889, 0
      %v6935 = vsel %vm455, %v6890, 0
      %v6938 = vsel %vm455, %v6891, 0
      %v6941 = vsel %vm455, %v6892, 0
      %v6944 = vsel %vm455, %v6893, 0
      %v6947 = vsel %vm455, %v6894, 0
      %v6950 = vsel %vm455, %v6895, 0
      %v6953 = vsel %vm455, %v6896, 0
      %v6956 = vsel %vm455, %v6897, 0
      %v6959 = vsel %vm455, %v6898, 0
      %v6962 = vsel %vm455, %v6899, 0
      %v6965 = vsel %vm455, %v6900, 0
      %v6968 = vsel %vm455, %v6901, 0
      %v6971 = vsel %vm455, %v6902, 0
      %v6974 = vsel %vm455, %v6903, 0
      %v6977 = vsel %vm455, %v6904, 0
      %v6980 = vsel %vm455, %v6905, 0
      %v6983 = vsel %vm455, %v6906, 0
      %v6986 = vsel %vm455, %v6907, 0
      %v6989 = vsel %vm455, %v6908, 0
      %v6992 = vsel %vm455, %v6909, 0
      %v6995 = vsel %vm455, %v6910, 0
      %v6998 = vsel %vm455, %v6911, 0
      %v7001 = vsel %vm455, %v6912, 0
      %v7004 = vsel %vm455, %v6913, 0
      %v7007 = vsel %vm455, %v6914, 0
      %v7010 = vsel %vm455, %v6915, 0
      %v7013 = vsel %vm455, %v6916, 0
      %7015 = vmatprep.subr.mxu0 0.0
      %7016 = vmatpush1.msra.mxu0 %v6918
      %7017 = vmatprep.subr.mxu0 0.0
      %7018 = vmatpush1.msra.mxu0 0.0
      %7019 = vmatprep.subr.mxu0 0.0
      %7020 = vmatpush1.msra.mxu0 0.0
      %7021 = vmatprep.subr.mxu0 0.0
      %7022 = vmatpush1.msra.mxu0 0.0
      %7023 = vmatprep.subr.mxu0 0.0
      %7024 = vmatpush1.msra.mxu0 0.0
      %7025 = vmatprep.subr.mxu0 0.0
      %7026 = vmatpush1.msra.mxu0 0.0
      %7027 = vmatprep.subr.mxu0 0.0
      %7028 = vmatpush1.msra.mxu0 0.0
      %7029 = vmatprep.subr.mxu0 0.0
      %7030 = vmatpush1.msra.mxu0 0.0
      %7031 = vmatprep.subr.mxu0 0.0
      %7032 = vmatpush1.msra.mxu0 0.0
      %7033 = vmatprep.subr.mxu0 0.0
      %7034 = vmatpush1.msra.mxu0 0.0
      %7035 = vmatprep.subr.mxu0 0.0
      %7036 = vmatpush1.msra.mxu0 0.0
      %7037 = vmatprep.subr.mxu0 0.0
      %7038 = vmatpush1.msra.mxu0 0.0
      %7039 = vmatprep.subr.mxu0 0.0
      %7040 = vmatpush1.msra.mxu0 0.0
      %7041 = vmatprep.subr.mxu0 0.0
      %7042 = vmatpush1.msra.mxu0 0.0
      %7043 = vmatprep.subr.mxu0 0.0
      %7044 = vmatpush1.msra.mxu0 0.0
      %7045 = vmatprep.subr.mxu0 0.0
      %7046 = vmatpush1.msra.mxu0 0.0
      %7047 = vmatprep.subr.mxu0 0.0
      %7048 = vmatpush1.msra.mxu0 0.0
      %7049 = vmatprep.subr.mxu0 0.0
      %7050 = vmatpush1.msra.mxu0 0.0
      %7051 = vmatprep.subr.mxu0 0.0
      %7052 = vmatpush1.msra.mxu0 0.0
      %7053 = vmatprep.subr.mxu0 0.0
      %7054 = vmatpush1.msra.mxu0 0.0
      %7055 = vmatprep.subr.mxu0 0.0
      %7056 = vmatpush1.msra.mxu0 0.0
      %7057 = vmatprep.subr.mxu0 0.0
      %7058 = vmatpush1.msra.mxu0 0.0
      %7059 = vmatprep.subr.mxu0 0.0
      %7060 = vmatpush1.msra.mxu0 0.0
      %7061 = vmatprep.subr.mxu0 0.0
      %7062 = vmatpush1.msra.mxu0 0.0
      %7063 = vmatprep.subr.mxu0 0.0
      %7064 = vmatpush1.msra.mxu0 0.0
      %7065 = vmatprep.subr.mxu0 0.0
      %7066 = vmatpush1.msra.mxu0 0.0
      %7067 = vmatprep.subr.mxu0 0.0
      %7068 = vmatpush1.msra.mxu0 0.0
      %7069 = vmatprep.subr.mxu0 0.0
      %7070 = vmatpush1.msra.mxu0 0.0
      %7071 = vmatprep.subr.mxu0 0.0
      %7072 = vmatpush1.msra.mxu0 0.0
      %7073 = vmatprep.subr.mxu0 0.0
      %7074 = vmatpush1.msra.mxu0 0.0
      %7075 = vmatprep.subr.mxu0 0.0
      %7076 = vmatpush1.msra.mxu0 0.0
      %7077 = vmatprep.subr.mxu0 0.0
      %7078 = vmatpush1.msra.mxu0 0.0
      %7079 = vmatprep.mubr.f32.mxu0 0.0
      %7080 = vmatmul.mubr.f32.gmra.mrb[0].mxu0 %v6920
      %v7081 = vpop.f32.mrb[0].mxu0
      %v7082 = vadd.f32 0.0, %v7081
      %v7083 = vpop.f32.mrb[0].mxu0
      %7084 = vmatprep.mubr.f32.mxu0 0.0
      %7085 = vmatmul.mubr.f32.gmra.mrb[0].mxu0 %v6923
      %v7086 = vpop.f32.mrb[0].mxu0
      %v7087 = vadd.f32 0.0, %v7086
      %v7088 = vpop.f32.mrb[0].mxu0
      %7089 = vmatprep.mubr.f32.mxu0 0.0
      %7090 = vmatmul.mubr.f32.gmra.mrb[0].mxu0 %v6926
      %v7091 = vpop.f32.mrb[0].mxu0
      %v7092 = vadd.f32 0.0, %v7091
      %v7093 = vpop.f32.mrb[0].mxu0
      %7094 = vmatprep.mubr.f32.mxu0 0.0
      %7095 = vmatmul.mubr.f32.gmra.mrb[0].mxu0 %v6929
      %v7096 = vpop.f32.mrb[0].mxu0
      %v7097 = vadd.f32 0.0, %v7096
      %v7098 = vpop.f32.mrb[0].mxu0
      %7099 = vmatprep.mubr.f32.mxu0 0.0
      %7100 = vmatmul.mubr.f32.gmra.mrb[0].mxu0 %v6932
      %v7101 = vpop.f32.mrb[0].mxu0
      %v7102 = vadd.f32 0.0, %v7101
      %v7103 = vpop.f32.mrb[0].mxu0
      %7104 = vmatprep.mubr.f32.mxu0 0.0
      %7105 = vmatmul.mubr.f32.gmra.mrb[0].mxu0 %v6935
      %v7106 = vpop.f32.mrb[0].mxu0
      %v7107 = vadd.f32 0.0, %v7106
      %v7108 = vpop.f32.mrb[0].mxu0
      %7109 = vmatprep.mubr.f32.mxu0 0.0
      %7110 = vmatmul.mubr.f32.gmra.mrb[0].mxu0 %v6938
      %v7111 = vpop.f32.mrb[0].mxu0
      %v7112 = vadd.f32 0.0, %v7111
      %v7113 = vpop.f32.mrb[0].mxu0
      %7114 = vmatprep.mubr.f32.mxu0 0.0
      %7115 = vmatmul.mubr.f32.gmra.mrb[0].mxu0 %v6941
      %v7116 = vpop.f32.mrb[0].mxu0
      %v7117 = vadd.f32 0.0, %v7116
      %v7118 = vpop.f32.mrb[0].mxu0
      %7119 = vmatprep.mubr.f32.mxu0 0.0
      %7120 = vmatmul.mubr.f32.gmra.mrb[0].mxu0 %v6944
      %v7121 = vpop.f32.mrb[0].mxu0
      %v7122 = vadd.f32 0.0, %v7121
      %v7123 = vpop.f32.mrb[0].mxu0
      %7124 = vmatprep.mubr.f32.mxu0 0.0
      %7125 = vmatmul.mubr.f32.gmra.mrb[0].mxu0 %v6947
      %v7126 = vpop.f32.mrb[0].mxu0
      %v7127 = vadd.f32 0.0, %v7126
      %v7128 = vpop.f32.mrb[0].mxu0
      %7129 = vmatprep.mubr.f32.mxu0 0.0
      %7130 = vmatmul.mubr.f32.gmra.mrb[0].mxu0 %v6950
      %v7131 = vpop.f32.mrb[0].mxu0
      %v7132 = vadd.f32 0.0, %v7131
      %v7133 = vpop.f32.mrb[0].mxu0
      %7134 = vmatprep.mubr.f32.mxu0 0.0
      %7135 = vmatmul.mubr.f32.gmra.mrb[0].mxu0 %v6953
      %v7136 = vpop.f32.mrb[0].mxu0
      %v7137 = vadd.f32 0.0, %v7136
      %v7138 = vpop.f32.mrb[0].mxu0
      %7139 = vmatprep.mubr.f32.mxu0 0.0
      %7140 = vmatmul.mubr.f32.gmra.mrb[0].mxu0 %v6956
      %v7141 = vpop.f32.mrb[0].mxu0
      %v7142 = vadd.f32 0.0, %v7141
      %v7143 = vpop.f32.mrb[0].mxu0
      %7144 = vmatprep.mubr.f32.mxu0 0.0
      %7145 = vmatmul.mubr.f32.gmra.mrb[0].mxu0 %v6959
      %v7146 = vpop.f32.mrb[0].mxu0
      %v7147 = vadd.f32 0.0, %v7146
      %v7148 = vpop.f32.mrb[0].mxu0
      %7149 = vmatprep.mubr.f32.mxu0 0.0
      %7150 = vmatmul.mubr.f32.gmra.mrb[0].mxu0 %v6962
      %v7151 = vpop.f32.mrb[0].mxu0
      %v7152 = vadd.f32 0.0, %v7151
      %v7153 = vpop.f32.mrb[0].mxu0
      %7154 = vmatprep.mubr.f32.mxu0 0.0
      %7155 = vmatmul.mubr.f32.gmra.mrb[0].mxu0 %v6965
      %v7156 = vpop.f32.mrb[0].mxu0
      %v7157 = vadd.f32 0.0, %v7156
      %v7158 = vpop.f32.mrb[0].mxu0
      %7159 = vmatprep.mubr.f32.mxu0 0.0
      %7160 = vmatmul.mubr.f32.gmra.mrb[0].mxu0 %v6968
      %v7161 = vpop.f32.mrb[0].mxu0
      %v7162 = vadd.f32 0.0, %v7161
      %v7163 = vpop.f32.mrb[0].mxu0
      %7164 = vmatprep.mubr.f32.mxu0 0.0
      %7165 = vmatmul.mubr.f32.gmra.mrb[0].mxu0 %v6971
      %v7166 = vpop.f32.mrb[0].mxu0
      %v7167 = vadd.f32 0.0, %v7166
      %v7168 = vpop.f32.mrb[0].mxu0
      %7169 = vmatprep.mubr.f32.mxu0 0.0
      %7170 = vmatmul.mubr.f32.gmra.mrb[0].mxu0 %v6974
      %v7171 = vpop.f32.mrb[0].mxu0
      %v7172 = vadd.f32 0.0, %v7171
      %v7173 = vpop.f32.mrb[0].mxu0
      %7174 = vmatprep.mubr.f32.mxu0 0.0
      %7175 = vmatmul.mubr.f32.gmra.mrb[0].mxu0 %v6977
      %v7176 = vpop.f32.mrb[0].mxu0
      %v7177 = vadd.f32 0.0, %v7176
      %v7178 = vpop.f32.mrb[0].mxu0
      %7179 = vmatprep.mubr.f32.mxu0 0.0
      %7180 = vmatmul.mubr.f32.gmra.mrb[0].mxu0 %v6980
      %v7181 = vpop.f32.mrb[0].mxu0
      %v7182 = vadd.f32 0.0, %v7181
      %v7183 = vpop.f32.mrb[0].mxu0
      %7184 = vmatprep.mubr.f32.mxu0 0.0
      %7185 = vmatmul.mubr.f32.gmra.mrb[0].mxu0 %v6983
      %v7186 = vpop.f32.mrb[0].mxu0
      %v7187 = vadd.f32 0.0, %v7186
      %v7188 = vpop.f32.mrb[0].mxu0
      %7189 = vmatprep.mubr.f32.mxu0 0.0
      %7190 = vmatmul.mubr.f32.gmra.mrb[0].mxu0 %v6986
      %v7191 = vpop.f32.mrb[0].mxu0
      %v7192 = vadd.f32 0.0, %v7191
      %v7193 = vpop.f32.mrb[0].mxu0
      %7194 = vmatprep.mubr.f32.mxu0 0.0
      %7195 = vmatmul.mubr.f32.gmra.mrb[0].mxu0 %v6989
      %v7196 = vpop.f32.mrb[0].mxu0
      %v7197 = vadd.f32 0.0, %v7196
      %v7198 = vpop.f32.mrb[0].mxu0
      %7199 = vmatprep.mubr.f32.mxu0 0.0
      %7200 = vmatmul.mubr.f32.gmra.mrb[0].mxu0 %v6992
      %v7201 = vpop.f32.mrb[0].mxu0
      %v7202 = vadd.f32 0.0, %v7201
      %v7203 = vpop.f32.mrb[0].mxu0
      %7204 = vmatprep.mubr.f32.mxu0 0.0
      %7205 = vmatmul.mubr.f32.gmra.mrb[0].mxu0 %v6995
      %v7206 = vpop.f32.mrb[0].mxu0
      %v7207 = vadd.f32 0.0, %v7206
      %v7208 = vpop.f32.mrb[0].mxu0
      %7209 = vmatprep.mubr.f32.mxu0 0.0
      %7210 = vmatmul.mubr.f32.gmra.mrb[0].mxu0 %v6998
      %v7211 = vpop.f32.mrb[0].mxu0
      %v7212 = vadd.f32 0.0, %v7211
      %v7213 = vpop.f32.mrb[0].mxu0
      %7214 = vmatprep.mubr.f32.mxu0 0.0
      %7215 = vmatmul.mubr.f32.gmra.mrb[0].mxu0 %v7001
      %v7216 = vpop.f32.mrb[0].mxu0
      %v7217 = vadd.f32 0.0, %v7216
      %v7218 = vpop.f32.mrb[0].mxu0
      %7219 = vmatprep.mubr.f32.mxu0 0.0
      %7220 = vmatmul.mubr.f32.gmra.mrb[0].mxu0 %v7004
      %v7221 = vpop.f32.mrb[0].mxu0
      %v7222 = vadd.f32 0.0, %v7221
      %v7223 = vpop.f32.mrb[0].mxu0
      %7224 = vmatprep.mubr.f32.mxu0 0.0
      %7225 = vmatmul.mubr.f32.gmra.mrb[0].mxu0 %v7007
      %v7226 = vpop.f32.mrb[0].mxu0
      %v7227 = vadd.f32 0.0, %v7226
      %v7228 = vpop.f32.mrb[0].mxu0
      %7229 = vmatprep.mubr.f32.mxu0 0.0
      %7230 = vmatmul.mubr.f32.gmra.mrb[0].mxu0 %v7010
      %v7231 = vpop.f32.mrb[0].mxu0
      %v7232 = vadd.f32 0.0, %v7231
      %v7233 = vpop.f32.mrb[0].mxu0
      %7234 = vmatprep.mubr.f32.mxu0 0.0
      %7235 = vmatmul.mubr.f32.gmra.mrb[0].mxu0 %v7013
      %v7236 = vpop.f32.mrb[0].mxu0
      %v7237 = vadd.f32 0.0, %v7236
      %v7238 = vpop.f32.mrb[0].mxu0
      %7239 = vdwg.mxu0
      %v7240 = vadd.f32 %v6853, %v7082
      %v7241 = vadd.f32 %v6854, %v7087
      %v7242 = vadd.f32 %v6855, %v7092
      %v7243 = vadd.f32 %v6856, %v7097
      %v7244 = vadd.f32 %v6857, %v7102
      %v7245 = vadd.f32 %v6858, %v7107
      %v7246 = vadd.f32 %v6859, %v7112
      %v7247 = vadd.f32 %v6860, %v7117
      %v7248 = vadd.f32 %v6861, %v7122
      %v7249 = vadd.f32 %v6862, %v7127
      %v7250 = vadd.f32 %v6863, %v7132
      %v7251 = vadd.f32 %v6864, %v7137
      %v7252 = vadd.f32 %v6865, %v7142
      %v7253 = vadd.f32 %v6866, %v7147
      %v7254 = vadd.f32 %v6867, %v7152
      %v7255 = vadd.f32 %v6868, %v7157
      %v7256 = vadd.f32 %v6869, %v7162
      %v7257 = vadd.f32 %v6870, %v7167
      %v7258 = vadd.f32 %v6871, %v7172
      %v7259 = vadd.f32 %v6872, %v7177
      %v7260 = vadd.f32 %v6873, %v7182
      %v7261 = vadd.f32 %v6874, %v7187
      %v7262 = vadd.f32 %v6875, %v7192
      %v7263 = vadd.f32 %v6876, %v7197
      %v7264 = vadd.f32 %v6877, %v7202
      %v7265 = vadd.f32 %v6878, %v7207
      %v7266 = vadd.f32 %v6879, %v7212
      %v7267 = vadd.f32 %v6880, %v7217
      %v7268 = vadd.f32 %v6881, %v7222
      %v7269 = vadd.f32 %v6882, %v7227
      %v7270 = vadd.f32 %v6883, %v7232
      %v7271 = vadd.f32 %v6884, %v7237
      %v7272 = vadd.f32 %v7240, %v2335
      %v7273 = vadd.f32 %v7241, %v2335
      %v7274 = vadd.f32 %v7242, %v2335
      %v7275 = vadd.f32 %v7243, %v2335
      %v7276 = vadd.f32 %v7244, %v2335
      %v7277 = vadd.f32 %v7245, %v2335
      %v7278 = vadd.f32 %v7246, %v2335
      %v7279 = vadd.f32 %v7247, %v2335
      %v7280 = vadd.f32 %v7248, %v2335
      %v7281 = vadd.f32 %v7249, %v2335
      %v7282 = vadd.f32 %v7250, %v2335
      %v7283 = vadd.f32 %v7251, %v2335
      %v7284 = vadd.f32 %v7252, %v2335
      %v7285 = vadd.f32 %v7253, %v2335
      %v7286 = vadd.f32 %v7254, %v2335
      %v7287 = vadd.f32 %v7255, %v2335
      %v7288 = vadd.f32 %v7256, %v2335
      %v7289 = vadd.f32 %v7257, %v2335
      %v7290 = vadd.f32 %v7258, %v2335
      %v7291 = vadd.f32 %v7259, %v2335
      %v7292 = vadd.f32 %v7260, %v2335
      %v7293 = vadd.f32 %v7261, %v2335
      %v7294 = vadd.f32 %v7262, %v2335
      %v7295 = vadd.f32 %v7263, %v2335
      %v7296 = vadd.f32 %v7264, %v2335
      %v7297 = vadd.f32 %v7265, %v2335
      %v7298 = vadd.f32 %v7266, %v2335
      %v7299 = vadd.f32 %v7267, %v2335
      %v7300 = vadd.f32 %v7268, %v2335
      %v7301 = vadd.f32 %v7269, %v2335
      %v7302 = vadd.f32 %v7270, %v2335
      %v7303 = vadd.f32 %v7271, %v2335
      %vm7304 = vcmp.gt.f32.partialorder %v7272, 0.0
      %vm7305 = vcmp.gt.f32.partialorder %v7273, 0.0
      %vm7306 = vcmp.gt.f32.partialorder %v7274, 0.0
      %vm7307 = vcmp.gt.f32.partialorder %v7275, 0.0
      %vm7308 = vcmp.gt.f32.partialorder %v7276, 0.0
      %vm7309 = vcmp.gt.f32.partialorder %v7277, 0.0
      %vm7310 = vcmp.gt.f32.partialorder %v7278, 0.0
      %vm7311 = vcmp.gt.f32.partialorder %v7279, 0.0
      %vm7312 = vcmp.gt.f32.partialorder %v7280, 0.0
      %vm7313 = vcmp.gt.f32.partialorder %v7281, 0.0
      %vm7314 = vcmp.gt.f32.partialorder %v7282, 0.0
      %vm7315 = vcmp.gt.f32.partialorder %v7283, 0.0
      %vm7316 = vcmp.gt.f32.partialorder %v7284, 0.0
      %vm7317 = vcmp.gt.f32.partialorder %v7285, 0.0
      %vm7318 = vcmp.gt.f32.partialorder %v7286, 0.0
      %vm7319 = vcmp.gt.f32.partialorder %v7287, 0.0
      %vm7320 = vcmp.gt.f32.partialorder %v7288, 0.0
      %vm7321 = vcmp.gt.f32.partialorder %v7289, 0.0
      %vm7322 = vcmp.gt.f32.partialorder %v7290, 0.0
      %vm7323 = vcmp.gt.f32.partialorder %v7291, 0.0
      %vm7324 = vcmp.gt.f32.partialorder %v7292, 0.0
      %vm7325 = vcmp.gt.f32.partialorder %v7293, 0.0
      %vm7326 = vcmp.gt.f32.partialorder %v7294, 0.0
      %vm7327 = vcmp.gt.f32.partialorder %v7295, 0.0
      %vm7328 = vcmp.gt.f32.partialorder %v7296, 0.0
      %vm7329 = vcmp.gt.f32.partialorder %v7297, 0.0
      %vm7330 = vcmp.gt.f32.partialorder %v7298, 0.0
      %vm7331 = vcmp.gt.f32.partialorder %v7299, 0.0
      %vm7332 = vcmp.gt.f32.partialorder %v7300, 0.0
      %vm7333 = vcmp.gt.f32.partialorder %v7301, 0.0
      %vm7334 = vcmp.gt.f32.partialorder %v7302, 0.0
      %vm7335 = vcmp.gt.f32.partialorder %v7303, 0.0
      %v7336 = vmul.f32 %v7272, 0.2
      %v7337 = vmul.f32 %v7273, 0.2
      %v7338 = vmul.f32 %v7274, 0.2
      %v7339 = vmul.f32 %v7275, 0.2
      %v7340 = vmul.f32 %v7276, 0.2
      %v7341 = vmul.f32 %v7277, 0.2
      %v7342 = vmul.f32 %v7278, 0.2
      %v7343 = vmul.f32 %v7279, 0.2
      %v7344 = vmul.f32 %v7280, 0.2
      %v7345 = vmul.f32 %v7281, 0.2
      %v7346 = vmul.f32 %v7282, 0.2
      %v7347 = vmul.f32 %v7283, 0.2
      %v7348 = vmul.f32 %v7284, 0.2
      %v7349 = vmul.f32 %v7285, 0.2
      %v7350 = vmul.f32 %v7286, 0.2
      %v7351 = vmul.f32 %v7287, 0.2
      %v7352 = vmul.f32 %v7288, 0.2
      %v7353 = vmul.f32 %v7289, 0.2
      %v7354 = vmul.f32 %v7290, 0.2
      %v7355 = vmul.f32 %v7291, 0.2
      %v7356 = vmul.f32 %v7292, 0.2
      %v7357 = vmul.f32 %v7293, 0.2
      %v7358 = vmul.f32 %v7294, 0.2
      %v7359 = vmul.f32 %v7295, 0.2
      %v7360 = vmul.f32 %v7296, 0.2
      %v7361 = vmul.f32 %v7297, 0.2
      %v7362 = vmul.f32 %v7298, 0.2
      %v7363 = vmul.f32 %v7299, 0.2
      %v7364 = vmul.f32 %v7300, 0.2
      %v7365 = vmul.f32 %v7301, 0.2
      %v7366 = vmul.f32 %v7302, 0.2
      %v7367 = vmul.f32 %v7303, 0.2
      %v7368 = vsel %vm7304, %v7272, %v7336
      %v7369 = vsel %vm7305, %v7273, %v7337
      %v7370 = vsel %vm7306, %v7274, %v7338
      %v7371 = vsel %vm7307, %v7275, %v7339
      %v7372 = vsel %vm7308, %v7276, %v7340
      %v7373 = vsel %vm7309, %v7277, %v7341
      %v7374 = vsel %vm7310, %v7278, %v7342
      %v7375 = vsel %vm7311, %v7279, %v7343
      %v7376 = vsel %vm7312, %v7280, %v7344
      %v7377 = vsel %vm7313, %v7281, %v7345
      %v7378 = vsel %vm7314, %v7282, %v7346
      %v7379 = vsel %vm7315, %v7283, %v7347
      %v7380 = vsel %vm7316, %v7284, %v7348
      %v7381 = vsel %vm7317, %v7285, %v7349
      %v7382 = vsel %vm7318, %v7286, %v7350
      %v7383 = vsel %vm7319, %v7287, %v7351
      %v7384 = vsel %vm7320, %v7288, %v7352
      %v7385 = vsel %vm7321, %v7289, %v7353
      %v7386 = vsel %vm7322, %v7290, %v7354
      %v7387 = vsel %vm7323, %v7291, %v7355
      %v7388 = vsel %vm7324, %v7292, %v7356
      %v7389 = vsel %vm7325, %v7293, %v7357
      %v7390 = vsel %vm7326, %v7294, %v7358
      %v7391 = vsel %vm7327, %v7295, %v7359
      %v7392 = vsel %vm7328, %v7296, %v7360
      %v7393 = vsel %vm7329, %v7297, %v7361
      %v7394 = vsel %vm7330, %v7298, %v7362
      %v7395 = vsel %vm7331, %v7299, %v7363
      %v7396 = vsel %vm7332, %v7300, %v7364
      %v7397 = vsel %vm7333, %v7301, %v7365
      %v7398 = vsel %vm7334, %v7302, %v7366
      %v7399 = vsel %vm7335, %v7303, %v7367
      %s7400 = scalar_lea.vmem %s397, 768
      %7401 = vst.msk [vmem:[%s7400] sm:$0xff] %vm2465, %v7368
      %7402 = vst.msk [vmem:[%s7400 + $0x8] sm:$0xff] %vm2465, %v7369
      %7403 = vst.msk [vmem:[%s7400 + $0x10] sm:$0xff] %vm2465, %v7370
      %7404 = vst.msk [vmem:[%s7400 + $0x18] sm:$0xff] %vm2465, %v7371
      %7405 = vst.msk [vmem:[%s7400 + $0x20] sm:$0xff] %vm2465, %v7372
      %7406 = vst.msk [vmem:[%s7400 + $0x28] sm:$0xff] %vm2465, %v7373
      %7407 = vst.msk [vmem:[%s7400 + $0x30] sm:$0xff] %vm2465, %v7374
      %7408 = vst.msk [vmem:[%s7400 + $0x38] sm:$0xff] %vm2465, %v7375
      %7409 = vst.msk [vmem:[%s7400 + $0x40] sm:$0xff] %vm2465, %v7376
      %7410 = vst.msk [vmem:[%s7400 + $0x48] sm:$0xff] %vm2465, %v7377
      %7411 = vst.msk [vmem:[%s7400 + $0x50] sm:$0xff] %vm2465, %v7378
      %7412 = vst.msk [vmem:[%s7400 + $0x58] sm:$0xff] %vm2465, %v7379
      %7413 = vst.msk [vmem:[%s7400 + $0x60] sm:$0xff] %vm2465, %v7380
      %7414 = vst.msk [vmem:[%s7400 + $0x68] sm:$0xff] %vm2465, %v7381
      %7415 = vst.msk [vmem:[%s7400 + $0x70] sm:$0xff] %vm2465, %v7382
      %7416 = vst.msk [vmem:[%s7400 + $0x78] sm:$0xff] %vm2465, %v7383
      %7417 = vst.msk [vmem:[%s7400 + $0x80] sm:$0xff] %vm2465, %v7384
      %7418 = vst.msk [vmem:[%s7400 + $0x88] sm:$0xff] %vm2465, %v7385
      %7419 = vst.msk [vmem:[%s7400 + $0x90] sm:$0xff] %vm2465, %v7386
      %7420 = vst.msk [vmem:[%s7400 + $0x98] sm:$0xff] %vm2465, %v7387
      %7421 = vst.msk [vmem:[%s7400 + $0xa0] sm:$0xff] %vm2465, %v7388
      %7422 = vst.msk [vmem:[%s7400 + $0xa8] sm:$0xff] %vm2465, %v7389
      %7423 = vst.msk [vmem:[%s7400 + $0xb0] sm:$0xff] %vm2465, %v7390
      %7424 = vst.msk [vmem:[%s7400 + $0xb8] sm:$0xff] %vm2465, %v7391
      %7425 = vst.msk [vmem:[%s7400 + $0xc0] sm:$0xff] %vm2465, %v7392
      %7426 = vst.msk [vmem:[%s7400 + $0xc8] sm:$0xff] %vm2465, %v7393
      %7427 = vst.msk [vmem:[%s7400 + $0xd0] sm:$0xff] %vm2465, %v7394
      %7428 = vst.msk [vmem:[%s7400 + $0xd8] sm:$0xff] %vm2465, %v7395
      %7429 = vst.msk [vmem:[%s7400 + $0xe0] sm:$0xff] %vm2465, %v7396
      %7430 = vst.msk [vmem:[%s7400 + $0xe8] sm:$0xff] %vm2465, %v7397
      %7431 = vst.msk [vmem:[%s7400 + $0xf0] sm:$0xff] %vm2465, %v7398
      %7432 = vst.msk [vmem:[%s7400 + $0xf8] sm:$0xff] %vm2465, %v7399
      %s7433 = smul.u32 4, %s20
      %s7434 = smul.u32 16, %s21
      %p7435 = scmp.lt.s32.totalorder %s7433, 7
      %s7436 = scalar_select %p7435, %s7433, 7
      %p7437 = scmp.lt.s32.totalorder %s7434, 15
      %s7438 = scalar_select %p7437, %s7434, 15
      %s7439 = smul.addr %s7438, 2
      %s7440 = smul.addr %s7436, 32
      %s7441 = sadd.s32 %s7439, %s7440
      %s7442 = smul.addr %s7441, 8
      %s7443 = scalar_lea.vmem %s5, %s7442
      // Predicated region
      $region41: #{up_forward.1} parent=39 // pred_check
        %p7444 = pneg %p184
      $region42: #{up_forward.1} parent=39 // pred_check_branch
        %7446 = sbr.rel (%p7444) target = $region44
      $region43: #{up_forward.1} parent=39 // pred_region
        %s7447 = smul.u32 4, %s20
        %s7448 = smul.u32 16, %s21
      $region44: #{up_forward.1} parent=39 // pred_fallthru
        _
    $region40: #{up_forward.1} parent=5 // pred_fallthru
      _
    %p7449 = scmp.le.s32.totalorder 2, %s11
    // Predicated region
    $region45: #{up_forward.1} parent=5 // pred_check
      %p7450 = pneg %p7449
    $region46: #{up_forward.1} parent=5 // pred_check_branch
      %7452 = sbr.rel (%p7450) target = $region48
    $region47: #{up_forward.1} parent=5 // pred_region
      %s7453 = ssub.s32 %s11, 2
      // Predicated region
      $region49: #{up_forward.1} parent=47 // pred_check
        %p7454 = pneg %p190
      $region50: #{up_forward.1} parent=47 // pred_check_branch
        %7456 = sbr.rel (%p7454) target = $region52
      $region51: #{up_forward.1} parent=47 // pred_region
        %s7457 = smul.u32 4, %s22
        %s7458 = smul.u32 16, %s23
        %p7459 = scmp.lt.s32.totalorder %s7457, 7
        %s7460 = scalar_select %p7459, %s7457, 7
        %p7461 = scmp.lt.s32.totalorder %s7458, 15
        %s7462 = scalar_select %p7461, %s7458, 15
        %s7463 = smul.addr %s7462, 2
        %s7464 = smul.addr %s7460, 32
        %s7465 = sadd.s32 %s7463, %s7464
        %s7466 = smul.addr %s7465, 8
        %s7467 = scalar_lea.vmem %s5, %s7466
      $region52: #{up_forward.1} parent=47 // pred_fallthru
        _
    $region48: #{up_forward.1} parent=5 // pred_fallthru
      _
  $region6: #{up_forward.1} parent=0 // loop_footer
    %s15 = sadd.s32 1, %s11
  $region7: #{up_forward.1} parent=0 // loop_footer_branch
    %10 = sbr.rel target = $region3
  $region8: #{up_forward.1} parent=0 // loop_exit
    _

</llo_original>
